<compile_context>
chip_gen: v6e
topology: v6e:2x2x1
jax: 0.10.0
libtpu: 0.0.40
codegen_flags: <defaults>
</compile_context>

<pallas_src>
import math
import jax
import jax.numpy as jnp
from jax import lax
from jax.experimental import pallas as pl
from jax.experimental.pallas import tpu as pltpu

INPUT_DIMS = 13
CNN_OUTPUT = 64
LSTM_UNITS = 64
FEATURES = 2 * LSTM_UNITS      # 128
BATCH_BLOCK = 8                # batch elements per grid step (fills the 8-sublane dim)


def _attention_model_kernel(
    x_ref,       # (T, Bb, C)     time-major input block, channels last
    cw_ref,      # (C, 64)        conv1d (k=1) weight, transposed
    cb_ref,      # (1, 64)        conv1d bias
    wih_ref,     # (64, 512)      both-direction W_ih^T, gates interleaved [i_f i_r f_f f_r g_f g_r o_f o_r]
    whh_ref,     # (128, 512)     block-diagonal both-direction W_hh^T, same interleaved gate layout
    b_ref,       # (1, 512)       (b_ih + b_hh) for both directions, interleaved
    perm_ref,    # (T*Bb, T*Bb)   0/1 permutation: batch-major row <- time-major row
    fcw_ref,     # (1, 128)       fc weight (row vector)
    fcb_ref,     # (1, 1)         fc bias
    out_ref,     # (Bb, T)        lane-dense output block
    xproj_scr,   # VMEM (T*Bb, 512)  hoisted gate projections (bias folded in)
    h_scr,       # VMEM (T*Bb, 128)  BiLSTM hidden states, time-major rows, [fwd | rev] lanes
):
    T, Bb, C = x_ref.shape
    H = LSTM_UNITS
    G = 8 * H                                   # 512 combined gate lanes

    # --- Conv1d(kernel_size=1) + ReLU as one matmul over all (time, batch) rows ---
    x2 = x_ref[...].reshape(T * Bb, C)
    hin = jnp.maximum(
        jnp.dot(x2, cw_ref[...], preferred_element_type=jnp.float32) + cb_ref[...],
        0.0)
    # dropout1: eval-mode identity

    # --- Hoisted, time-invariant input projection for BOTH directions (one MXU matmul) ---
    xproj_scr[...] = (
        jnp.dot(hin, wih_ref[...], preferred_element_type=jnp.float32) + b_ref[...])

    # lanes [k*128, k*128+64) of each gate pair belong to the forward direction
    # (hoisted out of the recurrence — JAX does not CSE broadcasts inside loops)
    fwd_mask = (lax.broadcasted_iota(jnp.int32, (Bb, G), 1) % (2 * H)) < H

    # --- BiLSTM: fwd and rev chains advance together; one (Bb,128)x(128,512) matmul/step ---
    def step(i, carry):
        h, c = carry                            # (Bb, 128) each: [fwd | rev]
        row_f = i * Bb                          # forward time  t = i
        row_r = (T - 1 - i) * Bb                # reverse time  t = T - 1 - i
        xf = xproj_scr[pl.ds(row_f, Bb), :]
        xr = xproj_scr[pl.ds(row_r, Bb), :]
        g = jnp.where(fwd_mask, xf, xr) + jnp.dot(
            h, whh_ref[...], preferred_element_type=jnp.float32)        # (Bb, 512)
        # 128-lane aligned gate slices (PyTorch order i, f, g, o)
        i_g = jax.nn.sigmoid(g[:, 0 * 2 * H:1 * 2 * H])
        f_g = jax.nn.sigmoid(g[:, 1 * 2 * H:2 * 2 * H])
        g_g = jnp.tanh(g[:, 2 * 2 * H:3 * 2 * H])
        o_g = jax.nn.sigmoid(g[:, 3 * 2 * H:4 * 2 * H])
        c_n = f_g * c + i_g * g_g
        h_n = o_g * jnp.tanh(c_n)
        # sublane-dense stores: fwd half at time i, rev half at time T-1-i
        h_scr[pl.ds(row_f, Bb), 0:H] = h_n[:, 0:H]
        h_scr[pl.ds(row_r, Bb), H:2 * H] = h_n[:, H:2 * H]
        return (h_n, c_n)

    init = (jnp.zeros((Bb, 2 * H), jnp.float32),
            jnp.zeros((Bb, 2 * H), jnp.float32))
    lax.fori_loop(0, T, step, init, unroll=True)
    # dropout2: eval-mode identity

    # --- time-major -> batch-major relayout via an exact 0/1 permutation matmul (MXU) ---
    hbm2 = jnp.dot(perm_ref[...], h_scr[...],
                   preferred_element_type=jnp.float32)                   # (Bb*T, 128) batch-major
    hb = hbm2.reshape(Bb, T, 2 * H)

    # --- Scaled dot-product self-attention weights, batched over the block (no transpose) ---
    scale = 1.0 / math.sqrt(float(2 * H))
    s = jnp.einsum('bqd,bkd->bqk', hb, hb,
                   preferred_element_type=jnp.float32) * scale            # (Bb, T, T)
    s = s - jnp.max(s, axis=-1, keepdims=True)
    e = jnp.exp(s)
    p = e * pl.reciprocal(jnp.sum(e, axis=-1, keepdims=True), approx=True)

    # --- Linear(128 -> 1) folded through the attention sum: (p @ h) @ w == p @ (h @ w) ---
    hproj = jnp.sum(hbm2 * fcw_ref[...], axis=-1).reshape(Bb, T)          # (Bb, T)
    logit = jnp.sum(p * hproj[:, None, :], axis=-1) + fcb_ref[...]        # (Bb, T)
    out_ref[...] = jax.nn.sigmoid(logit)


def _interleave_gate_cols(a_fwd, a_rev):
    """(R, 4H) fwd and rev -> (R, 8H) with per-gate 128-lane pairs [gate_fwd | gate_rev]."""
    rows = a_fwd.shape[0]
    H = a_fwd.shape[1] // 4
    af = a_fwd.reshape(rows, 4, 1, H)
    ar = a_rev.reshape(rows, 4, 1, H)
    return jnp.concatenate([af, ar], axis=2).reshape(rows, 8 * H)


def attention_model_pallas(x_ncl, params):
    """x_ncl: (B, C, L) float32 (PyTorch NCL conv layout). Returns (B, L, 1)."""
    B, C, L = x_ncl.shape
    T = L
    H = LSTM_UNITS
    Bb = BATCH_BLOCK
    B_pad = ((B + Bb - 1) // Bb) * Bb

    # time-major, channels-last layout for the kernel; pad batch to a sublane multiple
    x = jnp.transpose(x_ncl, (2, 0, 1))                               # (T, B, C)
    if B_pad != B:
        x = jnp.pad(x, ((0, 0), (0, B_pad - B), (0, 0)))

    cw = params["conv_w"].T                                           # (C, 64)
    cb = params["conv_b"][None, :]                                    # (1, 64)

    wih = _interleave_gate_cols(params["w_ih_f"].T, params["w_ih_r"].T)      # (64, 512)
    bias = _interleave_gate_cols(
        (params["b_ih_f"] + params["b_hh_f"])[None, :],
        (params["b_ih_r"] + params["b_hh_r"])[None, :])                      # (1, 512)
    zeros_hh = jnp.zeros((H, 4 * H), jnp.float32)
    whh = jnp.concatenate(
        [_interleave_gate_cols(params["w_hh_f"].T, zeros_hh),    # rows 0:64   (h_fwd)
         _interleave_gate_cols(zeros_hh, params["w_hh_r"].T)],   # rows 64:128 (h_rev)
        axis=0)                                                          # (128, 512)

    # permutation matrix: batch-major row b*T+t takes time-major row t*Bb+b
    r = jnp.arange(T * Bb)
    perm = jax.nn.one_hot((r % T) * Bb + (r // T), T * Bb, dtype=jnp.float32)

    fcw = params["fc_w"]                                              # (1, 128)
    fcb = params["fc_b"].reshape(1, 1)                                # (1, 1)

    def full(a):
        nd = a.ndim
        return pl.BlockSpec(a.shape, lambda g, _nd=nd: (0,) * _nd)

    out2d = pl.pallas_call(
        _attention_model_kernel,
        out_shape=jax.ShapeDtypeStruct((B_pad, T), jnp.float32),
        grid_spec=pltpu.PrefetchScalarGridSpec(
            num_scalar_prefetch=0,
            grid=(B_pad // Bb,),
            in_specs=[
                pl.BlockSpec((T, Bb, C), lambda g: (0, g, 0)),
                full(cw), full(cb), full(wih), full(whh), full(bias),
                full(perm), full(fcw), full(fcb),
            ],
            out_specs=pl.BlockSpec((Bb, T), lambda g: (g, 0)),
            scratch_shapes=[
                pltpu.VMEM((T * Bb, 8 * H), jnp.float32),   # hoisted gate projections
                pltpu.VMEM((T * Bb, 2 * H), jnp.float32),   # BiLSTM hidden states
            ],
        ),
        compiler_params=pltpu.CompilerParams(dimension_semantics=("parallel",)),
    )(x, cw, cb, wih, whh, bias, perm, fcw, fcb)

    return out2d[:B, :, None]                                         # (B, T, 1)


# ---------- deterministic parameter init (PyTorch-style uniform bounds) ----------
def init_params(key):
    ks = jax.random.split(key, 12)
    u = lambda k, shape, bound: jax.random.uniform(k, shape, jnp.float32, -bound, bound)
    cb = 1.0 / math.sqrt(INPUT_DIMS)
    lb = 1.0 / math.sqrt(LSTM_UNITS)
    fb = 1.0 / math.sqrt(FEATURES)
    return {
        "conv_w": u(ks[0], (CNN_OUTPUT, INPUT_DIMS), cb),
        "conv_b": u(ks[1], (CNN_OUTPUT,), cb),
        "w_ih_f": u(ks[2], (4 * LSTM_UNITS, CNN_OUTPUT), lb),
        "w_hh_f": u(ks[3], (4 * LSTM_UNITS, LSTM_UNITS), lb),
        "b_ih_f": u(ks[4], (4 * LSTM_UNITS,), lb),
        "b_hh_f": u(ks[5], (4 * LSTM_UNITS,), lb),
        "w_ih_r": u(ks[6], (4 * LSTM_UNITS, CNN_OUTPUT), lb),
        "w_hh_r": u(ks[7], (4 * LSTM_UNITS, LSTM_UNITS), lb),
        "b_ih_r": u(ks[8], (4 * LSTM_UNITS,), lb),
        "b_hh_r": u(ks[9], (4 * LSTM_UNITS,), lb),
        "fc_w": u(ks[10], (1, FEATURES), fb),
        "fc_b": u(ks[11], (1,), fb),
    }


# ---------- plain-JAX reference (for the sanity check) ----------
def reference(x_ncl, p):
    x = jnp.transpose(x_ncl, (0, 2, 1))                               # (B, T, C)
    hin = jax.nn.relu(jnp.einsum("btc,oc->bto", x, p["conv_w"]) + p["conv_b"])

    def lstm_dir(seq, wih, whh, bias, reverse):
        H = LSTM_UNITS

        def step(carry, xt):
            hp, cp = carry
            g = wih @ xt + whh @ hp + bias
            i = jax.nn.sigmoid(g[0:H]); f = jax.nn.sigmoid(g[H:2 * H])
            gg = jnp.tanh(g[2 * H:3 * H]); o = jax.nn.sigmoid(g[3 * H:4 * H])
            c = f * cp + i * gg
            h = o * jnp.tanh(c)
            return (h, c), h

        xs = seq[::-1] if reverse else seq
        _, hs = lax.scan(step, (jnp.zeros(H), jnp.zeros(H)), xs)
        return hs[::-1] if reverse else hs

    def per_batch(seq):
        hf = lstm_dir(seq, p["w_ih_f"], p["w_hh_f"], p["b_ih_f"] + p["b_hh_f"], False)
        hr = lstm_dir(seq, p["w_ih_r"], p["w_hh_r"], p["b_ih_r"] + p["b_hh_r"], True)
        h = jnp.concatenate([hf, hr], axis=-1)                        # (T, 128)
        s = (h @ h.T) * (1.0 / math.sqrt(float(FEATURES)))
        w = jax.nn.softmax(s, axis=-1)
        ctx = w @ h
        return jax.nn.sigmoid(ctx @ p["fc_w"].T + p["fc_b"])          # (T, 1)

    return jax.vmap(per_batch)(hin)


if __name__ == "__main__":
    key = jax.random.PRNGKey(0)
    pkey, xkey = jax.random.split(key)
    params = init_params(pkey)

    B, C, L = 8, INPUT_DIMS, 16
    x = jax.random.normal(xkey, (B, C, L), jnp.float32)               # NCL, as nn.Conv1d expects

    out = jax.jit(attention_model_pallas)(x, params)
    out = jax.block_until_ready(out)

    ref = jax.block_until_ready(reference(x, params))
    assert out.shape == (B, L, 1), out.shape
    assert bool(jnp.all(jnp.isfinite(out)))
    max_err = float(jnp.max(jnp.abs(out - ref)))
    assert max_err < 1e-2, f"mismatch vs reference: {max_err}"

    print("KERNEL_OK")
</pallas_src>

<mosaic_0001>
module attributes {stable_mosaic.version = 11 : i64} {
  func.func @_attention_model_kernel(%arg0: i32, %arg1: memref<16x8x13xf32, #tpu.memory_space<vmem>>, %arg2: memref<13x64xf32, #tpu.memory_space<vmem>>, %arg3: memref<1x64xf32, #tpu.memory_space<vmem>>, %arg4: memref<64x512xf32, #tpu.memory_space<vmem>>, %arg5: memref<128x512xf32, #tpu.memory_space<vmem>>, %arg6: memref<1x512xf32, #tpu.memory_space<vmem>>, %arg7: memref<128x128xf32, #tpu.memory_space<vmem>>, %arg8: memref<1x128xf32, #tpu.memory_space<vmem>>, %arg9: memref<1x1xf32, #tpu.memory_space<vmem>>, %arg10: memref<8x16xf32, #tpu.memory_space<vmem>>, %arg11: memref<128x512xf32, #tpu.memory_space<vmem>>, %arg12: memref<128x128xf32, #tpu.memory_space<vmem>>) attributes {dimension_semantics = [#tpu.dimension_semantics<parallel>], iteration_bounds = array<i64: 1>, scalar_prefetch = 0 : i64, scratch_operands = 2 : i64, tpu.core_type = #tpu.core_type<tc>, window_params = [{transform_indices = @transform_0, window_bounds = array<i64: 16, 8, 13>}, {pipeline_mode = #tpu.pipeline_mode<synchronous>, transform_indices = @transform_1, window_bounds = array<i64: 13, 64>}, {pipeline_mode = #tpu.pipeline_mode<synchronous>, transform_indices = @transform_2, window_bounds = array<i64: 1, 64>}, {pipeline_mode = #tpu.pipeline_mode<synchronous>, transform_indices = @transform_3, window_bounds = array<i64: 64, 512>}, {pipeline_mode = #tpu.pipeline_mode<synchronous>, transform_indices = @transform_4, window_bounds = array<i64: 128, 512>}, {pipeline_mode = #tpu.pipeline_mode<synchronous>, transform_indices = @transform_5, window_bounds = array<i64: 1, 512>}, {pipeline_mode = #tpu.pipeline_mode<synchronous>, transform_indices = @transform_6, window_bounds = array<i64: 128, 128>}, {pipeline_mode = #tpu.pipeline_mode<synchronous>, transform_indices = @transform_7, window_bounds = array<i64: 1, 128>}, {pipeline_mode = #tpu.pipeline_mode<synchronous>, transform_indices = @transform_8, window_bounds = array<i64: 1, 1>}, {transform_indices = @transform_9, window_bounds = array<i64: 8, 16>}]} {
    %c0 = arith.constant 0 : index
    %c0_0 = arith.constant 0 : index
    %c0_1 = arith.constant 0 : index
    %0 = vector.load %arg1[%c0, %c0_0, %c0_1] : memref<16x8x13xf32, #tpu.memory_space<vmem>>, vector<16x8x13xf32>
    %1 = vector.shape_cast %0 : vector<16x8x13xf32> to vector<128x13xf32>
    %c0_2 = arith.constant 0 : index
    %c0_3 = arith.constant 0 : index
    %2 = vector.load %arg2[%c0_2, %c0_3] : memref<13x64xf32, #tpu.memory_space<vmem>>, vector<13x64xf32>
    %cst = arith.constant dense<0.000000e+00> : vector<128x64xf32>
    %3 = tpu.matmul %1, %2, %cst {dimension_numbers = #tpu.dot_dimension_numbers<[1], [0], [0], [1], [0, 0, 1, 1], [], []>} : vector<128x13xf32>, vector<13x64xf32>, vector<128x64xf32> -> vector<128x64xf32>
    %c0_4 = arith.constant 0 : index
    %c0_5 = arith.constant 0 : index
    %4 = vector.load %arg3[%c0_4, %c0_5] : memref<1x64xf32, #tpu.memory_space<vmem>>, vector<1x64xf32>
    %5 = vector.broadcast %4 : vector<1x64xf32> to vector<128x64xf32>
    %6 = arith.addf %3, %5 : vector<128x64xf32>
    %cst_6 = arith.constant 0.000000e+00 : f32
    %7 = vector.broadcast %cst_6 : f32 to vector<128x64xf32>
    %8 = arith.maximumf %6, %7 : vector<128x64xf32>
    %c0_7 = arith.constant 0 : index
    %c0_8 = arith.constant 0 : index
    %9 = vector.load %arg4[%c0_7, %c0_8] : memref<64x512xf32, #tpu.memory_space<vmem>>, vector<64x512xf32>
    %cst_9 = arith.constant dense<0.000000e+00> : vector<128x512xf32>
    %10 = tpu.matmul %8, %9, %cst_9 {dimension_numbers = #tpu.dot_dimension_numbers<[1], [0], [0], [1], [0, 0, 1, 1], [], []>} : vector<128x64xf32>, vector<64x512xf32>, vector<128x512xf32> -> vector<128x512xf32>
    %c0_10 = arith.constant 0 : index
    %c0_11 = arith.constant 0 : index
    %11 = vector.load %arg6[%c0_10, %c0_11] : memref<1x512xf32, #tpu.memory_space<vmem>>, vector<1x512xf32>
    %12 = vector.broadcast %11 : vector<1x512xf32> to vector<128x512xf32>
    %13 = arith.addf %10, %12 : vector<128x512xf32>
    %c0_12 = arith.constant 0 : index
    %c0_13 = arith.constant 0 : index
    %14 = vector.load %arg11[%c0_12, %c0_13] : memref<128x512xf32, #tpu.memory_space<vmem>>, vector<128x512xf32>
    tpu.vector_store %arg11[%c0_12, %c0_13], %13 {strides = array<i32>} : memref<128x512xf32, #tpu.memory_space<vmem>>, vector<128x512xf32>,
    %15 = tpu.iota {dimensions = array<i32: 1>} : vector<8x512xi32>
    %c128_i32 = arith.constant 128 : i32
    %c0_i32 = arith.constant 0 : i32
    %16 = arith.cmpi eq, %c128_i32, %c0_i32 : i32
    %c1_i32 = arith.constant 1 : i32
    %17 = arith.select %16, %c1_i32, %c128_i32 : i32
    %18 = vector.broadcast %17 : i32 to vector<8x512xi32>
    %19 = arith.remsi %15, %18 : vector<8x512xi32>
    %c0_i32_14 = arith.constant 0 : i32
    %20 = vector.broadcast %c0_i32_14 : i32 to vector<8x512xi32>
    %21 = arith.cmpi ne, %19, %20 : vector<8x512xi32>
    %c0_i32_15 = arith.constant 0 : i32
    %22 = vector.broadcast %c0_i32_15 : i32 to vector<8x512xi32>
    %23 = arith.cmpi slt, %19, %22 : vector<8x512xi32>
    %c0_i32_16 = arith.constant 0 : i32
    %24 = arith.cmpi slt, %17, %c0_i32_16 : i32
    %25 = vector.broadcast %24 : i1 to vector<8x512xi1>
    %26 = vector.broadcast %25 : vector<8x512xi1> to vector<8x512xi1>
    %27 = arith.xori %23, %26 : vector<8x512xi1>
    %28 = arith.andi %27, %21 : vector<8x512xi1>
    %29 = vector.broadcast %17 : i32 to vector<8x512xi32>
    %30 = arith.addi %19, %29 : vector<8x512xi32>
    %31 = arith.select %28, %30, %19 : vector<8x512xi1>, vector<8x512xi32>
    %c64_i32 = arith.constant 64 : i32
    %32 = vector.broadcast %c64_i32 : i32 to vector<8x512xi32>
    %33 = arith.cmpi slt, %31, %32 : vector<8x512xi32>
    %cst_17 = arith.constant 0.000000e+00 : f32
    %34 = vector.broadcast %cst_17 : f32 to vector<8x128xf32>
    %cst_18 = arith.constant 0.000000e+00 : f32
    %35 = vector.broadcast %cst_18 : f32 to vector<8x128xf32>
    %c0_i32_19 = arith.constant 0 : i32
    %c8_i32 = arith.constant 8 : i32
    %36 = arith.muli %c0_i32_19, %c8_i32 : i32
    %c15_i32 = arith.constant 15 : i32
    %37 = arith.subi %c15_i32, %c0_i32_19 : i32
    %c8_i32_20 = arith.constant 8 : i32
    %38 = arith.muli %37, %c8_i32_20 : i32
    %39 = arith.index_cast %36 : i32 to index
    %c0_21 = arith.constant 0 : index
    %40 = vector.load %arg11[%39, %c0_21] : memref<128x512xf32, #tpu.memory_space<vmem>>, vector<8x512xf32>
    %41 = arith.index_cast %38 : i32 to index
    %c0_22 = arith.constant 0 : index
    %42 = vector.load %arg11[%41, %c0_22] : memref<128x512xf32, #tpu.memory_space<vmem>>, vector<8x512xf32>
    %43 = arith.select %33, %40, %42 : vector<8x512xi1>, vector<8x512xf32>
    %c0_23 = arith.constant 0 : index
    %c0_24 = arith.constant 0 : index
    %44 = vector.load %arg5[%c0_23, %c0_24] : memref<128x512xf32, #tpu.memory_space<vmem>>, vector<128x512xf32>
    %cst_25 = arith.constant dense<0.000000e+00> : vector<8x512xf32>
    %45 = tpu.matmul %34, %44, %cst_25 {dimension_numbers = #tpu.dot_dimension_numbers<[1], [0], [0], [1], [0, 0, 1, 1], [], []>} : vector<8x128xf32>, vector<128x512xf32>, vector<8x512xf32> -> vector<8x512xf32>
    %46 = arith.addf %43, %45 : vector<8x512xf32>
    %47 = vector.extract_strided_slice %46 {offsets = [0, 0], sizes = [8, 128], strides = [1, 1]} : vector<8x512xf32> to vector<8x128xf32>
    %48 = arith.negf %47 : vector<8x128xf32>
    %49 = math.exp %48 : vector<8x128xf32>
    %cst_26 = arith.constant 1.000000e+00 : f32
    %50 = vector.broadcast %cst_26 : f32 to vector<8x128xf32>
    %51 = arith.addf %50, %49 : vector<8x128xf32>
    %52 = arith.divf %50, %51 : vector<8x128xf32>
    %53 = vector.extract_strided_slice %46 {offsets = [0, 128], sizes = [8, 128], strides = [1, 1]} : vector<8x512xf32> to vector<8x128xf32>
    %54 = arith.negf %53 : vector<8x128xf32>
    %55 = math.exp %54 : vector<8x128xf32>
    %cst_27 = arith.constant 1.000000e+00 : f32
    %56 = vector.broadcast %cst_27 : f32 to vector<8x128xf32>
    %57 = arith.addf %56, %55 : vector<8x128xf32>
    %58 = arith.divf %56, %57 : vector<8x128xf32>
    %59 = vector.extract_strided_slice %46 {offsets = [0, 256], sizes = [8, 128], strides = [1, 1]} : vector<8x512xf32> to vector<8x128xf32>
    %60 = math.tanh %59 : vector<8x128xf32>
    %61 = vector.extract_strided_slice %46 {offsets = [0, 384], sizes = [8, 128], strides = [1, 1]} : vector<8x512xf32> to vector<8x128xf32>
    %62 = arith.negf %61 : vector<8x128xf32>
    %63 = math.exp %62 : vector<8x128xf32>
    %cst_28 = arith.constant 1.000000e+00 : f32
    %64 = vector.broadcast %cst_28 : f32 to vector<8x128xf32>
    %65 = arith.addf %64, %63 : vector<8x128xf32>
    %66 = arith.divf %64, %65 : vector<8x128xf32>
    %67 = arith.mulf %58, %35 : vector<8x128xf32>
    %68 = arith.mulf %52, %60 : vector<8x128xf32>
    %69 = arith.addf %67, %68 : vector<8x128xf32>
    %70 = math.tanh %69 : vector<8x128xf32>
    %71 = arith.mulf %66, %70 : vector<8x128xf32>
    %72 = vector.extract_strided_slice %71 {offsets = [0, 0], sizes = [8, 64], strides = [1, 1]} : vector<8x128xf32> to vector<8x64xf32>
    %73 = arith.index_cast %36 : i32 to index
    %c0_29 = arith.constant 0 : index
    %74 = vector.load %arg12[%73, %c0_29] : memref<128x128xf32, #tpu.memory_space<vmem>>, vector<8x64xf32>
    tpu.vector_store %arg12[%73, %c0_29], %72 {strides = array<i32>} : memref<128x128xf32, #tpu.memory_space<vmem>>, vector<8x64xf32>,
    %75 = vector.extract_strided_slice %71 {offsets = [0, 64], sizes = [8, 64], strides = [1, 1]} : vector<8x128xf32> to vector<8x64xf32>
    %76 = arith.index_cast %38 : i32 to index
    %c64 = arith.constant 64 : index
    %77 = vector.load %arg12[%76, %c64] : memref<128x128xf32, #tpu.memory_space<vmem>>, vector<8x64xf32>
    tpu.vector_store %arg12[%76, %c64], %75 {strides = array<i32>} : memref<128x128xf32, #tpu.memory_space<vmem>>, vector<8x64xf32>,
    %c1_i32_30 = arith.constant 1 : i32
    %c8_i32_31 = arith.constant 8 : i32
    %78 = arith.muli %c1_i32_30, %c8_i32_31 : i32
    %c15_i32_32 = arith.constant 15 : i32
    %79 = arith.subi %c15_i32_32, %c1_i32_30 : i32
    %c8_i32_33 = arith.constant 8 : i32
    %80 = arith.muli %79, %c8_i32_33 : i32
    %81 = arith.index_cast %78 : i32 to index
    %c0_34 = arith.constant 0 : index
    %82 = vector.load %arg11[%81, %c0_34] : memref<128x512xf32, #tpu.memory_space<vmem>>, vector<8x512xf32>
    %83 = arith.index_cast %80 : i32 to index
    %c0_35 = arith.constant 0 : index
    %84 = vector.load %arg11[%83, %c0_35] : memref<128x512xf32, #tpu.memory_space<vmem>>, vector<8x512xf32>
    %85 = arith.select %33, %82, %84 : vector<8x512xi1>, vector<8x512xf32>
    %c0_36 = arith.constant 0 : index
    %c0_37 = arith.constant 0 : index
    %86 = vector.load %arg5[%c0_36, %c0_37] : memref<128x512xf32, #tpu.memory_space<vmem>>, vector<128x512xf32>
    %cst_38 = arith.constant dense<0.000000e+00> : vector<8x512xf32>
    %87 = tpu.matmul %71, %86, %cst_38 {dimension_numbers = #tpu.dot_dimension_numbers<[1], [0], [0], [1], [0, 0, 1, 1], [], []>} : vector<8x128xf32>, vector<128x512xf32>, vector<8x512xf32> -> vector<8x512xf32>
    %88 = arith.addf %85, %87 : vector<8x512xf32>
    %89 = vector.extract_strided_slice %88 {offsets = [0, 0], sizes = [8, 128], strides = [1, 1]} : vector<8x512xf32> to vector<8x128xf32>
    %90 = arith.negf %89 : vector<8x128xf32>
    %91 = math.exp %90 : vector<8x128xf32>
    %cst_39 = arith.constant 1.000000e+00 : f32
    %92 = vector.broadcast %cst_39 : f32 to vector<8x128xf32>
    %93 = arith.addf %92, %91 : vector<8x128xf32>
    %94 = arith.divf %92, %93 : vector<8x128xf32>
    %95 = vector.extract_strided_slice %88 {offsets = [0, 128], sizes = [8, 128], strides = [1, 1]} : vector<8x512xf32> to vector<8x128xf32>
    %96 = arith.negf %95 : vector<8x128xf32>
    %97 = math.exp %96 : vector<8x128xf32>
    %cst_40 = arith.constant 1.000000e+00 : f32
    %98 = vector.broadcast %cst_40 : f32 to vector<8x128xf32>
    %99 = arith.addf %98, %97 : vector<8x128xf32>
    %100 = arith.divf %98, %99 : vector<8x128xf32>
    %101 = vector.extract_strided_slice %88 {offsets = [0, 256], sizes = [8, 128], strides = [1, 1]} : vector<8x512xf32> to vector<8x128xf32>
    %102 = math.tanh %101 : vector<8x128xf32>
    %103 = vector.extract_strided_slice %88 {offsets = [0, 384], sizes = [8, 128], strides = [1, 1]} : vector<8x512xf32> to vector<8x128xf32>
    %104 = arith.negf %103 : vector<8x128xf32>
    %105 = math.exp %104 : vector<8x128xf32>
    %cst_41 = arith.constant 1.000000e+00 : f32
    %106 = vector.broadcast %cst_41 : f32 to vector<8x128xf32>
    %107 = arith.addf %106, %105 : vector<8x128xf32>
    %108 = arith.divf %106, %107 : vector<8x128xf32>
    %109 = arith.mulf %100, %69 : vector<8x128xf32>
    %110 = arith.mulf %94, %102 : vector<8x128xf32>
    %111 = arith.addf %109, %110 : vector<8x128xf32>
    %112 = math.tanh %111 : vector<8x128xf32>
    %113 = arith.mulf %108, %112 : vector<8x128xf32>
    %114 = vector.extract_strided_slice %113 {offsets = [0, 0], sizes = [8, 64], strides = [1, 1]} : vector<8x128xf32> to vector<8x64xf32>
    %115 = arith.index_cast %78 : i32 to index
    %c0_42 = arith.constant 0 : index
    %116 = vector.load %arg12[%115, %c0_42] : memref<128x128xf32, #tpu.memory_space<vmem>>, vector<8x64xf32>
    tpu.vector_store %arg12[%115, %c0_42], %114 {strides = array<i32>} : memref<128x128xf32, #tpu.memory_space<vmem>>, vector<8x64xf32>,
    %117 = vector.extract_strided_slice %113 {offsets = [0, 64], sizes = [8, 64], strides = [1, 1]} : vector<8x128xf32> to vector<8x64xf32>
    %118 = arith.index_cast %80 : i32 to index
    %c64_43 = arith.constant 64 : index
    %119 = vector.load %arg12[%118, %c64_43] : memref<128x128xf32, #tpu.memory_space<vmem>>, vector<8x64xf32>
    tpu.vector_store %arg12[%118, %c64_43], %117 {strides = array<i32>} : memref<128x128xf32, #tpu.memory_space<vmem>>, vector<8x64xf32>,
    %c2_i32 = arith.constant 2 : i32
    %c8_i32_44 = arith.constant 8 : i32
    %120 = arith.muli %c2_i32, %c8_i32_44 : i32
    %c15_i32_45 = arith.constant 15 : i32
    %121 = arith.subi %c15_i32_45, %c2_i32 : i32
    %c8_i32_46 = arith.constant 8 : i32
    %122 = arith.muli %121, %c8_i32_46 : i32
    %123 = arith.index_cast %120 : i32 to index
    %c0_47 = arith.constant 0 : index
    %124 = vector.load %arg11[%123, %c0_47] : memref<128x512xf32, #tpu.memory_space<vmem>>, vector<8x512xf32>
    %125 = arith.index_cast %122 : i32 to index
    %c0_48 = arith.constant 0 : index
    %126 = vector.load %arg11[%125, %c0_48] : memref<128x512xf32, #tpu.memory_space<vmem>>, vector<8x512xf32>
    %127 = arith.select %33, %124, %126 : vector<8x512xi1>, vector<8x512xf32>
    %c0_49 = arith.constant 0 : index
    %c0_50 = arith.constant 0 : index
    %128 = vector.load %arg5[%c0_49, %c0_50] : memref<128x512xf32, #tpu.memory_space<vmem>>, vector<128x512xf32>
    %cst_51 = arith.constant dense<0.000000e+00> : vector<8x512xf32>
    %129 = tpu.matmul %113, %128, %cst_51 {dimension_numbers = #tpu.dot_dimension_numbers<[1], [0], [0], [1], [0, 0, 1, 1], [], []>} : vector<8x128xf32>, vector<128x512xf32>, vector<8x512xf32> -> vector<8x512xf32>
    %130 = arith.addf %127, %129 : vector<8x512xf32>
    %131 = vector.extract_strided_slice %130 {offsets = [0, 0], sizes = [8, 128], strides = [1, 1]} : vector<8x512xf32> to vector<8x128xf32>
    %132 = arith.negf %131 : vector<8x128xf32>
    %133 = math.exp %132 : vector<8x128xf32>
    %cst_52 = arith.constant 1.000000e+00 : f32
    %134 = vector.broadcast %cst_52 : f32 to vector<8x128xf32>
    %135 = arith.addf %134, %133 : vector<8x128xf32>
    %136 = arith.divf %134, %135 : vector<8x128xf32>
    %137 = vector.extract_strided_slice %130 {offsets = [0, 128], sizes = [8, 128], strides = [1, 1]} : vector<8x512xf32> to vector<8x128xf32>
    %138 = arith.negf %137 : vector<8x128xf32>
    %139 = math.exp %138 : vector<8x128xf32>
    %cst_53 = arith.constant 1.000000e+00 : f32
    %140 = vector.broadcast %cst_53 : f32 to vector<8x128xf32>
    %141 = arith.addf %140, %139 : vector<8x128xf32>
    %142 = arith.divf %140, %141 : vector<8x128xf32>
    %143 = vector.extract_strided_slice %130 {offsets = [0, 256], sizes = [8, 128], strides = [1, 1]} : vector<8x512xf32> to vector<8x128xf32>
    %144 = math.tanh %143 : vector<8x128xf32>
    %145 = vector.extract_strided_slice %130 {offsets = [0, 384], sizes = [8, 128], strides = [1, 1]} : vector<8x512xf32> to vector<8x128xf32>
    %146 = arith.negf %145 : vector<8x128xf32>
    %147 = math.exp %146 : vector<8x128xf32>
    %cst_54 = arith.constant 1.000000e+00 : f32
    %148 = vector.broadcast %cst_54 : f32 to vector<8x128xf32>
    %149 = arith.addf %148, %147 : vector<8x128xf32>
    %150 = arith.divf %148, %149 : vector<8x128xf32>
    %151 = arith.mulf %142, %111 : vector<8x128xf32>
    %152 = arith.mulf %136, %144 : vector<8x128xf32>
    %153 = arith.addf %151, %152 : vector<8x128xf32>
    %154 = math.tanh %153 : vector<8x128xf32>
    %155 = arith.mulf %150, %154 : vector<8x128xf32>
    %156 = vector.extract_strided_slice %155 {offsets = [0, 0], sizes = [8, 64], strides = [1, 1]} : vector<8x128xf32> to vector<8x64xf32>
    %157 = arith.index_cast %120 : i32 to index
    %c0_55 = arith.constant 0 : index
    %158 = vector.load %arg12[%157, %c0_55] : memref<128x128xf32, #tpu.memory_space<vmem>>, vector<8x64xf32>
    tpu.vector_store %arg12[%157, %c0_55], %156 {strides = array<i32>} : memref<128x128xf32, #tpu.memory_space<vmem>>, vector<8x64xf32>,
    %159 = vector.extract_strided_slice %155 {offsets = [0, 64], sizes = [8, 64], strides = [1, 1]} : vector<8x128xf32> to vector<8x64xf32>
    %160 = arith.index_cast %122 : i32 to index
    %c64_56 = arith.constant 64 : index
    %161 = vector.load %arg12[%160, %c64_56] : memref<128x128xf32, #tpu.memory_space<vmem>>, vector<8x64xf32>
    tpu.vector_store %arg12[%160, %c64_56], %159 {strides = array<i32>} : memref<128x128xf32, #tpu.memory_space<vmem>>, vector<8x64xf32>,
    %c3_i32 = arith.constant 3 : i32
    %c8_i32_57 = arith.constant 8 : i32
    %162 = arith.muli %c3_i32, %c8_i32_57 : i32
    %c15_i32_58 = arith.constant 15 : i32
    %163 = arith.subi %c15_i32_58, %c3_i32 : i32
    %c8_i32_59 = arith.constant 8 : i32
    %164 = arith.muli %163, %c8_i32_59 : i32
    %165 = arith.index_cast %162 : i32 to index
    %c0_60 = arith.constant 0 : index
    %166 = vector.load %arg11[%165, %c0_60] : memref<128x512xf32, #tpu.memory_space<vmem>>, vector<8x512xf32>
    %167 = arith.index_cast %164 : i32 to index
    %c0_61 = arith.constant 0 : index
    %168 = vector.load %arg11[%167, %c0_61] : memref<128x512xf32, #tpu.memory_space<vmem>>, vector<8x512xf32>
    %169 = arith.select %33, %166, %168 : vector<8x512xi1>, vector<8x512xf32>
    %c0_62 = arith.constant 0 : index
    %c0_63 = arith.constant 0 : index
    %170 = vector.load %arg5[%c0_62, %c0_63] : memref<128x512xf32, #tpu.memory_space<vmem>>, vector<128x512xf32>
    %cst_64 = arith.constant dense<0.000000e+00> : vector<8x512xf32>
    %171 = tpu.matmul %155, %170, %cst_64 {dimension_numbers = #tpu.dot_dimension_numbers<[1], [0], [0], [1], [0, 0, 1, 1], [], []>} : vector<8x128xf32>, vector<128x512xf32>, vector<8x512xf32> -> vector<8x512xf32>
    %172 = arith.addf %169, %171 : vector<8x512xf32>
    %173 = vector.extract_strided_slice %172 {offsets = [0, 0], sizes = [8, 128], strides = [1, 1]} : vector<8x512xf32> to vector<8x128xf32>
    %174 = arith.negf %173 : vector<8x128xf32>
    %175 = math.exp %174 : vector<8x128xf32>
    %cst_65 = arith.constant 1.000000e+00 : f32
    %176 = vector.broadcast %cst_65 : f32 to vector<8x128xf32>
    %177 = arith.addf %176, %175 : vector<8x128xf32>
    %178 = arith.divf %176, %177 : vector<8x128xf32>
    %179 = vector.extract_strided_slice %172 {offsets = [0, 128], sizes = [8, 128], strides = [1, 1]} : vector<8x512xf32> to vector<8x128xf32>
    %180 = arith.negf %179 : vector<8x128xf32>
    %181 = math.exp %180 : vector<8x128xf32>
    %cst_66 = arith.constant 1.000000e+00 : f32
    %182 = vector.broadcast %cst_66 : f32 to vector<8x128xf32>
    %183 = arith.addf %182, %181 : vector<8x128xf32>
    %184 = arith.divf %182, %183 : vector<8x128xf32>
    %185 = vector.extract_strided_slice %172 {offsets = [0, 256], sizes = [8, 128], strides = [1, 1]} : vector<8x512xf32> to vector<8x128xf32>
    %186 = math.tanh %185 : vector<8x128xf32>
    %187 = vector.extract_strided_slice %172 {offsets = [0, 384], sizes = [8, 128], strides = [1, 1]} : vector<8x512xf32> to vector<8x128xf32>
    %188 = arith.negf %187 : vector<8x128xf32>
    %189 = math.exp %188 : vector<8x128xf32>
    %cst_67 = arith.constant 1.000000e+00 : f32
    %190 = vector.broadcast %cst_67 : f32 to vector<8x128xf32>
    %191 = arith.addf %190, %189 : vector<8x128xf32>
    %192 = arith.divf %190, %191 : vector<8x128xf32>
    %193 = arith.mulf %184, %153 : vector<8x128xf32>
    %194 = arith.mulf %178, %186 : vector<8x128xf32>
    %195 = arith.addf %193, %194 : vector<8x128xf32>
    %196 = math.tanh %195 : vector<8x128xf32>
    %197 = arith.mulf %192, %196 : vector<8x128xf32>
    %198 = vector.extract_strided_slice %197 {offsets = [0, 0], sizes = [8, 64], strides = [1, 1]} : vector<8x128xf32> to vector<8x64xf32>
    %199 = arith.index_cast %162 : i32 to index
    %c0_68 = arith.constant 0 : index
    %200 = vector.load %arg12[%199, %c0_68] : memref<128x128xf32, #tpu.memory_space<vmem>>, vector<8x64xf32>
    tpu.vector_store %arg12[%199, %c0_68], %198 {strides = array<i32>} : memref<128x128xf32, #tpu.memory_space<vmem>>, vector<8x64xf32>,
    %201 = vector.extract_strided_slice %197 {offsets = [0, 64], sizes = [8, 64], strides = [1, 1]} : vector<8x128xf32> to vector<8x64xf32>
    %202 = arith.index_cast %164 : i32 to index
    %c64_69 = arith.constant 64 : index
    %203 = vector.load %arg12[%202, %c64_69] : memref<128x128xf32, #tpu.memory_space<vmem>>, vector<8x64xf32>
    tpu.vector_store %arg12[%202, %c64_69], %201 {strides = array<i32>} : memref<128x128xf32, #tpu.memory_space<vmem>>, vector<8x64xf32>,
    %c4_i32 = arith.constant 4 : i32
    %c8_i32_70 = arith.constant 8 : i32
    %204 = arith.muli %c4_i32, %c8_i32_70 : i32
    %c15_i32_71 = arith.constant 15 : i32
    %205 = arith.subi %c15_i32_71, %c4_i32 : i32
    %c8_i32_72 = arith.constant 8 : i32
    %206 = arith.muli %205, %c8_i32_72 : i32
    %207 = arith.index_cast %204 : i32 to index
    %c0_73 = arith.constant 0 : index
    %208 = vector.load %arg11[%207, %c0_73] : memref<128x512xf32, #tpu.memory_space<vmem>>, vector<8x512xf32>
    %209 = arith.index_cast %206 : i32 to index
    %c0_74 = arith.constant 0 : index
    %210 = vector.load %arg11[%209, %c0_74] : memref<128x512xf32, #tpu.memory_space<vmem>>, vector<8x512xf32>
    %211 = arith.select %33, %208, %210 : vector<8x512xi1>, vector<8x512xf32>
    %c0_75 = arith.constant 0 : index
    %c0_76 = arith.constant 0 : index
    %212 = vector.load %arg5[%c0_75, %c0_76] : memref<128x512xf32, #tpu.memory_space<vmem>>, vector<128x512xf32>
    %cst_77 = arith.constant dense<0.000000e+00> : vector<8x512xf32>
    %213 = tpu.matmul %197, %212, %cst_77 {dimension_numbers = #tpu.dot_dimension_numbers<[1], [0], [0], [1], [0, 0, 1, 1], [], []>} : vector<8x128xf32>, vector<128x512xf32>, vector<8x512xf32> -> vector<8x512xf32>
    %214 = arith.addf %211, %213 : vector<8x512xf32>
    %215 = vector.extract_strided_slice %214 {offsets = [0, 0], sizes = [8, 128], strides = [1, 1]} : vector<8x512xf32> to vector<8x128xf32>
    %216 = arith.negf %215 : vector<8x128xf32>
    %217 = math.exp %216 : vector<8x128xf32>
    %cst_78 = arith.constant 1.000000e+00 : f32
    %218 = vector.broadcast %cst_78 : f32 to vector<8x128xf32>
    %219 = arith.addf %218, %217 : vector<8x128xf32>
    %220 = arith.divf %218, %219 : vector<8x128xf32>
    %221 = vector.extract_strided_slice %214 {offsets = [0, 128], sizes = [8, 128], strides = [1, 1]} : vector<8x512xf32> to vector<8x128xf32>
    %222 = arith.negf %221 : vector<8x128xf32>
    %223 = math.exp %222 : vector<8x128xf32>
    %cst_79 = arith.constant 1.000000e+00 : f32
    %224 = vector.broadcast %cst_79 : f32 to vector<8x128xf32>
    %225 = arith.addf %224, %223 : vector<8x128xf32>
    %226 = arith.divf %224, %225 : vector<8x128xf32>
    %227 = vector.extract_strided_slice %214 {offsets = [0, 256], sizes = [8, 128], strides = [1, 1]} : vector<8x512xf32> to vector<8x128xf32>
    %228 = math.tanh %227 : vector<8x128xf32>
    %229 = vector.extract_strided_slice %214 {offsets = [0, 384], sizes = [8, 128], strides = [1, 1]} : vector<8x512xf32> to vector<8x128xf32>
    %230 = arith.negf %229 : vector<8x128xf32>
    %231 = math.exp %230 : vector<8x128xf32>
    %cst_80 = arith.constant 1.000000e+00 : f32
    %232 = vector.broadcast %cst_80 : f32 to vector<8x128xf32>
    %233 = arith.addf %232, %231 : vector<8x128xf32>
    %234 = arith.divf %232, %233 : vector<8x128xf32>
    %235 = arith.mulf %226, %195 : vector<8x128xf32>
    %236 = arith.mulf %220, %228 : vector<8x128xf32>
    %237 = arith.addf %235, %236 : vector<8x128xf32>
    %238 = math.tanh %237 : vector<8x128xf32>
    %239 = arith.mulf %234, %238 : vector<8x128xf32>
    %240 = vector.extract_strided_slice %239 {offsets = [0, 0], sizes = [8, 64], strides = [1, 1]} : vector<8x128xf32> to vector<8x64xf32>
    %241 = arith.index_cast %204 : i32 to index
    %c0_81 = arith.constant 0 : index
    %242 = vector.load %arg12[%241, %c0_81] : memref<128x128xf32, #tpu.memory_space<vmem>>, vector<8x64xf32>
    tpu.vector_store %arg12[%241, %c0_81], %240 {strides = array<i32>} : memref<128x128xf32, #tpu.memory_space<vmem>>, vector<8x64xf32>,
    %243 = vector.extract_strided_slice %239 {offsets = [0, 64], sizes = [8, 64], strides = [1, 1]} : vector<8x128xf32> to vector<8x64xf32>
    %244 = arith.index_cast %206 : i32 to index
    %c64_82 = arith.constant 64 : index
    %245 = vector.load %arg12[%244, %c64_82] : memref<128x128xf32, #tpu.memory_space<vmem>>, vector<8x64xf32>
    tpu.vector_store %arg12[%244, %c64_82], %243 {strides = array<i32>} : memref<128x128xf32, #tpu.memory_space<vmem>>, vector<8x64xf32>,
    %c5_i32 = arith.constant 5 : i32
    %c8_i32_83 = arith.constant 8 : i32
    %246 = arith.muli %c5_i32, %c8_i32_83 : i32
    %c15_i32_84 = arith.constant 15 : i32
    %247 = arith.subi %c15_i32_84, %c5_i32 : i32
    %c8_i32_85 = arith.constant 8 : i32
    %248 = arith.muli %247, %c8_i32_85 : i32
    %249 = arith.index_cast %246 : i32 to index
    %c0_86 = arith.constant 0 : index
    %250 = vector.load %arg11[%249, %c0_86] : memref<128x512xf32, #tpu.memory_space<vmem>>, vector<8x512xf32>
    %251 = arith.index_cast %248 : i32 to index
    %c0_87 = arith.constant 0 : index
    %252 = vector.load %arg11[%251, %c0_87] : memref<128x512xf32, #tpu.memory_space<vmem>>, vector<8x512xf32>
    %253 = arith.select %33, %250, %252 : vector<8x512xi1>, vector<8x512xf32>
    %c0_88 = arith.constant 0 : index
    %c0_89 = arith.constant 0 : index
    %254 = vector.load %arg5[%c0_88, %c0_89] : memref<128x512xf32, #tpu.memory_space<vmem>>, vector<128x512xf32>
    %cst_90 = arith.constant dense<0.000000e+00> : vector<8x512xf32>
    %255 = tpu.matmul %239, %254, %cst_90 {dimension_numbers = #tpu.dot_dimension_numbers<[1], [0], [0], [1], [0, 0, 1, 1], [], []>} : vector<8x128xf32>, vector<128x512xf32>, vector<8x512xf32> -> vector<8x512xf32>
    %256 = arith.addf %253, %255 : vector<8x512xf32>
    %257 = vector.extract_strided_slice %256 {offsets = [0, 0], sizes = [8, 128], strides = [1, 1]} : vector<8x512xf32> to vector<8x128xf32>
    %258 = arith.negf %257 : vector<8x128xf32>
    %259 = math.exp %258 : vector<8x128xf32>
    %cst_91 = arith.constant 1.000000e+00 : f32
    %260 = vector.broadcast %cst_91 : f32 to vector<8x128xf32>
    %261 = arith.addf %260, %259 : vector<8x128xf32>
    %262 = arith.divf %260, %261 : vector<8x128xf32>
    %263 = vector.extract_strided_slice %256 {offsets = [0, 128], sizes = [8, 128], strides = [1, 1]} : vector<8x512xf32> to vector<8x128xf32>
    %264 = arith.negf %263 : vector<8x128xf32>
    %265 = math.exp %264 : vector<8x128xf32>
    %cst_92 = arith.constant 1.000000e+00 : f32
    %266 = vector.broadcast %cst_92 : f32 to vector<8x128xf32>
    %267 = arith.addf %266, %265 : vector<8x128xf32>
    %268 = arith.divf %266, %267 : vector<8x128xf32>
    %269 = vector.extract_strided_slice %256 {offsets = [0, 256], sizes = [8, 128], strides = [1, 1]} : vector<8x512xf32> to vector<8x128xf32>
    %270 = math.tanh %269 : vector<8x128xf32>
    %271 = vector.extract_strided_slice %256 {offsets = [0, 384], sizes = [8, 128], strides = [1, 1]} : vector<8x512xf32> to vector<8x128xf32>
    %272 = arith.negf %271 : vector<8x128xf32>
    %273 = math.exp %272 : vector<8x128xf32>
    %cst_93 = arith.constant 1.000000e+00 : f32
    %274 = vector.broadcast %cst_93 : f32 to vector<8x128xf32>
    %275 = arith.addf %274, %273 : vector<8x128xf32>
    %276 = arith.divf %274, %275 : vector<8x128xf32>
    %277 = arith.mulf %268, %237 : vector<8x128xf32>
    %278 = arith.mulf %262, %270 : vector<8x128xf32>
    %279 = arith.addf %277, %278 : vector<8x128xf32>
    %280 = math.tanh %279 : vector<8x128xf32>
    %281 = arith.mulf %276, %280 : vector<8x128xf32>
    %282 = vector.extract_strided_slice %281 {offsets = [0, 0], sizes = [8, 64], strides = [1, 1]} : vector<8x128xf32> to vector<8x64xf32>
    %283 = arith.index_cast %246 : i32 to index
    %c0_94 = arith.constant 0 : index
    %284 = vector.load %arg12[%283, %c0_94] : memref<128x128xf32, #tpu.memory_space<vmem>>, vector<8x64xf32>
    tpu.vector_store %arg12[%283, %c0_94], %282 {strides = array<i32>} : memref<128x128xf32, #tpu.memory_space<vmem>>, vector<8x64xf32>,
    %285 = vector.extract_strided_slice %281 {offsets = [0, 64], sizes = [8, 64], strides = [1, 1]} : vector<8x128xf32> to vector<8x64xf32>
    %286 = arith.index_cast %248 : i32 to index
    %c64_95 = arith.constant 64 : index
    %287 = vector.load %arg12[%286, %c64_95] : memref<128x128xf32, #tpu.memory_space<vmem>>, vector<8x64xf32>
    tpu.vector_store %arg12[%286, %c64_95], %285 {strides = array<i32>} : memref<128x128xf32, #tpu.memory_space<vmem>>, vector<8x64xf32>,
    %c6_i32 = arith.constant 6 : i32
    %c8_i32_96 = arith.constant 8 : i32
    %288 = arith.muli %c6_i32, %c8_i32_96 : i32
    %c15_i32_97 = arith.constant 15 : i32
    %289 = arith.subi %c15_i32_97, %c6_i32 : i32
    %c8_i32_98 = arith.constant 8 : i32
    %290 = arith.muli %289, %c8_i32_98 : i32
    %291 = arith.index_cast %288 : i32 to index
    %c0_99 = arith.constant 0 : index
    %292 = vector.load %arg11[%291, %c0_99] : memref<128x512xf32, #tpu.memory_space<vmem>>, vector<8x512xf32>
    %293 = arith.index_cast %290 : i32 to index
    %c0_100 = arith.constant 0 : index
    %294 = vector.load %arg11[%293, %c0_100] : memref<128x512xf32, #tpu.memory_space<vmem>>, vector<8x512xf32>
    %295 = arith.select %33, %292, %294 : vector<8x512xi1>, vector<8x512xf32>
    %c0_101 = arith.constant 0 : index
    %c0_102 = arith.constant 0 : index
    %296 = vector.load %arg5[%c0_101, %c0_102] : memref<128x512xf32, #tpu.memory_space<vmem>>, vector<128x512xf32>
    %cst_103 = arith.constant dense<0.000000e+00> : vector<8x512xf32>
    %297 = tpu.matmul %281, %296, %cst_103 {dimension_numbers = #tpu.dot_dimension_numbers<[1], [0], [0], [1], [0, 0, 1, 1], [], []>} : vector<8x128xf32>, vector<128x512xf32>, vector<8x512xf32> -> vector<8x512xf32>
    %298 = arith.addf %295, %297 : vector<8x512xf32>
    %299 = vector.extract_strided_slice %298 {offsets = [0, 0], sizes = [8, 128], strides = [1, 1]} : vector<8x512xf32> to vector<8x128xf32>
    %300 = arith.negf %299 : vector<8x128xf32>
    %301 = math.exp %300 : vector<8x128xf32>
    %cst_104 = arith.constant 1.000000e+00 : f32
    %302 = vector.broadcast %cst_104 : f32 to vector<8x128xf32>
    %303 = arith.addf %302, %301 : vector<8x128xf32>
    %304 = arith.divf %302, %303 : vector<8x128xf32>
    %305 = vector.extract_strided_slice %298 {offsets = [0, 128], sizes = [8, 128], strides = [1, 1]} : vector<8x512xf32> to vector<8x128xf32>
    %306 = arith.negf %305 : vector<8x128xf32>
    %307 = math.exp %306 : vector<8x128xf32>
    %cst_105 = arith.constant 1.000000e+00 : f32
    %308 = vector.broadcast %cst_105 : f32 to vector<8x128xf32>
    %309 = arith.addf %308, %307 : vector<8x128xf32>
    %310 = arith.divf %308, %309 : vector<8x128xf32>
    %311 = vector.extract_strided_slice %298 {offsets = [0, 256], sizes = [8, 128], strides = [1, 1]} : vector<8x512xf32> to vector<8x128xf32>
    %312 = math.tanh %311 : vector<8x128xf32>
    %313 = vector.extract_strided_slice %298 {offsets = [0, 384], sizes = [8, 128], strides = [1, 1]} : vector<8x512xf32> to vector<8x128xf32>
    %314 = arith.negf %313 : vector<8x128xf32>
    %315 = math.exp %314 : vector<8x128xf32>
    %cst_106 = arith.constant 1.000000e+00 : f32
    %316 = vector.broadcast %cst_106 : f32 to vector<8x128xf32>
    %317 = arith.addf %316, %315 : vector<8x128xf32>
    %318 = arith.divf %316, %317 : vector<8x128xf32>
    %319 = arith.mulf %310, %279 : vector<8x128xf32>
    %320 = arith.mulf %304, %312 : vector<8x128xf32>
    %321 = arith.addf %319, %320 : vector<8x128xf32>
    %322 = math.tanh %321 : vector<8x128xf32>
    %323 = arith.mulf %318, %322 : vector<8x128xf32>
    %324 = vector.extract_strided_slice %323 {offsets = [0, 0], sizes = [8, 64], strides = [1, 1]} : vector<8x128xf32> to vector<8x64xf32>
    %325 = arith.index_cast %288 : i32 to index
    %c0_107 = arith.constant 0 : index
    %326 = vector.load %arg12[%325, %c0_107] : memref<128x128xf32, #tpu.memory_space<vmem>>, vector<8x64xf32>
    tpu.vector_store %arg12[%325, %c0_107], %324 {strides = array<i32>} : memref<128x128xf32, #tpu.memory_space<vmem>>, vector<8x64xf32>,
    %327 = vector.extract_strided_slice %323 {offsets = [0, 64], sizes = [8, 64], strides = [1, 1]} : vector<8x128xf32> to vector<8x64xf32>
    %328 = arith.index_cast %290 : i32 to index
    %c64_108 = arith.constant 64 : index
    %329 = vector.load %arg12[%328, %c64_108] : memref<128x128xf32, #tpu.memory_space<vmem>>, vector<8x64xf32>
    tpu.vector_store %arg12[%328, %c64_108], %327 {strides = array<i32>} : memref<128x128xf32, #tpu.memory_space<vmem>>, vector<8x64xf32>,
    %c7_i32 = arith.constant 7 : i32
    %c8_i32_109 = arith.constant 8 : i32
    %330 = arith.muli %c7_i32, %c8_i32_109 : i32
    %c15_i32_110 = arith.constant 15 : i32
    %331 = arith.subi %c15_i32_110, %c7_i32 : i32
    %c8_i32_111 = arith.constant 8 : i32
    %332 = arith.muli %331, %c8_i32_111 : i32
    %333 = arith.index_cast %330 : i32 to index
    %c0_112 = arith.constant 0 : index
    %334 = vector.load %arg11[%333, %c0_112] : memref<128x512xf32, #tpu.memory_space<vmem>>, vector<8x512xf32>
    %335 = arith.index_cast %332 : i32 to index
    %c0_113 = arith.constant 0 : index
    %336 = vector.load %arg11[%335, %c0_113] : memref<128x512xf32, #tpu.memory_space<vmem>>, vector<8x512xf32>
    %337 = arith.select %33, %334, %336 : vector<8x512xi1>, vector<8x512xf32>
    %c0_114 = arith.constant 0 : index
    %c0_115 = arith.constant 0 : index
    %338 = vector.load %arg5[%c0_114, %c0_115] : memref<128x512xf32, #tpu.memory_space<vmem>>, vector<128x512xf32>
    %cst_116 = arith.constant dense<0.000000e+00> : vector<8x512xf32>
    %339 = tpu.matmul %323, %338, %cst_116 {dimension_numbers = #tpu.dot_dimension_numbers<[1], [0], [0], [1], [0, 0, 1, 1], [], []>} : vector<8x128xf32>, vector<128x512xf32>, vector<8x512xf32> -> vector<8x512xf32>
    %340 = arith.addf %337, %339 : vector<8x512xf32>
    %341 = vector.extract_strided_slice %340 {offsets = [0, 0], sizes = [8, 128], strides = [1, 1]} : vector<8x512xf32> to vector<8x128xf32>
    %342 = arith.negf %341 : vector<8x128xf32>
    %343 = math.exp %342 : vector<8x128xf32>
    %cst_117 = arith.constant 1.000000e+00 : f32
    %344 = vector.broadcast %cst_117 : f32 to vector<8x128xf32>
    %345 = arith.addf %344, %343 : vector<8x128xf32>
    %346 = arith.divf %344, %345 : vector<8x128xf32>
    %347 = vector.extract_strided_slice %340 {offsets = [0, 128], sizes = [8, 128], strides = [1, 1]} : vector<8x512xf32> to vector<8x128xf32>
    %348 = arith.negf %347 : vector<8x128xf32>
    %349 = math.exp %348 : vector<8x128xf32>
    %cst_118 = arith.constant 1.000000e+00 : f32
    %350 = vector.broadcast %cst_118 : f32 to vector<8x128xf32>
    %351 = arith.addf %350, %349 : vector<8x128xf32>
    %352 = arith.divf %350, %351 : vector<8x128xf32>
    %353 = vector.extract_strided_slice %340 {offsets = [0, 256], sizes = [8, 128], strides = [1, 1]} : vector<8x512xf32> to vector<8x128xf32>
    %354 = math.tanh %353 : vector<8x128xf32>
    %355 = vector.extract_strided_slice %340 {offsets = [0, 384], sizes = [8, 128], strides = [1, 1]} : vector<8x512xf32> to vector<8x128xf32>
    %356 = arith.negf %355 : vector<8x128xf32>
    %357 = math.exp %356 : vector<8x128xf32>
    %cst_119 = arith.constant 1.000000e+00 : f32
    %358 = vector.broadcast %cst_119 : f32 to vector<8x128xf32>
    %359 = arith.addf %358, %357 : vector<8x128xf32>
    %360 = arith.divf %358, %359 : vector<8x128xf32>
    %361 = arith.mulf %352, %321 : vector<8x128xf32>
    %362 = arith.mulf %346, %354 : vector<8x128xf32>
    %363 = arith.addf %361, %362 : vector<8x128xf32>
    %364 = math.tanh %363 : vector<8x128xf32>
    %365 = arith.mulf %360, %364 : vector<8x128xf32>
    %366 = vector.extract_strided_slice %365 {offsets = [0, 0], sizes = [8, 64], strides = [1, 1]} : vector<8x128xf32> to vector<8x64xf32>
    %367 = arith.index_cast %330 : i32 to index
    %c0_120 = arith.constant 0 : index
    %368 = vector.load %arg12[%367, %c0_120] : memref<128x128xf32, #tpu.memory_space<vmem>>, vector<8x64xf32>
    tpu.vector_store %arg12[%367, %c0_120], %366 {strides = array<i32>} : memref<128x128xf32, #tpu.memory_space<vmem>>, vector<8x64xf32>,
    %369 = vector.extract_strided_slice %365 {offsets = [0, 64], sizes = [8, 64], strides = [1, 1]} : vector<8x128xf32> to vector<8x64xf32>
    %370 = arith.index_cast %332 : i32 to index
    %c64_121 = arith.constant 64 : index
    %371 = vector.load %arg12[%370, %c64_121] : memref<128x128xf32, #tpu.memory_space<vmem>>, vector<8x64xf32>
    tpu.vector_store %arg12[%370, %c64_121], %369 {strides = array<i32>} : memref<128x128xf32, #tpu.memory_space<vmem>>, vector<8x64xf32>,
    %c8_i32_122 = arith.constant 8 : i32
    %c8_i32_123 = arith.constant 8 : i32
    %372 = arith.muli %c8_i32_122, %c8_i32_123 : i32
    %c15_i32_124 = arith.constant 15 : i32
    %373 = arith.subi %c15_i32_124, %c8_i32_122 : i32
    %c8_i32_125 = arith.constant 8 : i32
    %374 = arith.muli %373, %c8_i32_125 : i32
    %375 = arith.index_cast %372 : i32 to index
    %c0_126 = arith.constant 0 : index
    %376 = vector.load %arg11[%375, %c0_126] : memref<128x512xf32, #tpu.memory_space<vmem>>, vector<8x512xf32>
    %377 = arith.index_cast %374 : i32 to index
    %c0_127 = arith.constant 0 : index
    %378 = vector.load %arg11[%377, %c0_127] : memref<128x512xf32, #tpu.memory_space<vmem>>, vector<8x512xf32>
    %379 = arith.select %33, %376, %378 : vector<8x512xi1>, vector<8x512xf32>
    %c0_128 = arith.constant 0 : index
    %c0_129 = arith.constant 0 : index
    %380 = vector.load %arg5[%c0_128, %c0_129] : memref<128x512xf32, #tpu.memory_space<vmem>>, vector<128x512xf32>
    %cst_130 = arith.constant dense<0.000000e+00> : vector<8x512xf32>
    %381 = tpu.matmul %365, %380, %cst_130 {dimension_numbers = #tpu.dot_dimension_numbers<[1], [0], [0], [1], [0, 0, 1, 1], [], []>} : vector<8x128xf32>, vector<128x512xf32>, vector<8x512xf32> -> vector<8x512xf32>
    %382 = arith.addf %379, %381 : vector<8x512xf32>
    %383 = vector.extract_strided_slice %382 {offsets = [0, 0], sizes = [8, 128], strides = [1, 1]} : vector<8x512xf32> to vector<8x128xf32>
    %384 = arith.negf %383 : vector<8x128xf32>
    %385 = math.exp %384 : vector<8x128xf32>
    %cst_131 = arith.constant 1.000000e+00 : f32
    %386 = vector.broadcast %cst_131 : f32 to vector<8x128xf32>
    %387 = arith.addf %386, %385 : vector<8x128xf32>
    %388 = arith.divf %386, %387 : vector<8x128xf32>
    %389 = vector.extract_strided_slice %382 {offsets = [0, 128], sizes = [8, 128], strides = [1, 1]} : vector<8x512xf32> to vector<8x128xf32>
    %390 = arith.negf %389 : vector<8x128xf32>
    %391 = math.exp %390 : vector<8x128xf32>
    %cst_132 = arith.constant 1.000000e+00 : f32
    %392 = vector.broadcast %cst_132 : f32 to vector<8x128xf32>
    %393 = arith.addf %392, %391 : vector<8x128xf32>
    %394 = arith.divf %392, %393 : vector<8x128xf32>
    %395 = vector.extract_strided_slice %382 {offsets = [0, 256], sizes = [8, 128], strides = [1, 1]} : vector<8x512xf32> to vector<8x128xf32>
    %396 = math.tanh %395 : vector<8x128xf32>
    %397 = vector.extract_strided_slice %382 {offsets = [0, 384], sizes = [8, 128], strides = [1, 1]} : vector<8x512xf32> to vector<8x128xf32>
    %398 = arith.negf %397 : vector<8x128xf32>
    %399 = math.exp %398 : vector<8x128xf32>
    %cst_133 = arith.constant 1.000000e+00 : f32
    %400 = vector.broadcast %cst_133 : f32 to vector<8x128xf32>
    %401 = arith.addf %400, %399 : vector<8x128xf32>
    %402 = arith.divf %400, %401 : vector<8x128xf32>
    %403 = arith.mulf %394, %363 : vector<8x128xf32>
    %404 = arith.mulf %388, %396 : vector<8x128xf32>
    %405 = arith.addf %403, %404 : vector<8x128xf32>
    %406 = math.tanh %405 : vector<8x128xf32>
    %407 = arith.mulf %402, %406 : vector<8x128xf32>
    %408 = vector.extract_strided_slice %407 {offsets = [0, 0], sizes = [8, 64], strides = [1, 1]} : vector<8x128xf32> to vector<8x64xf32>
    %409 = arith.index_cast %372 : i32 to index
    %c0_134 = arith.constant 0 : index
    %410 = vector.load %arg12[%409, %c0_134] : memref<128x128xf32, #tpu.memory_space<vmem>>, vector<8x64xf32>
    tpu.vector_store %arg12[%409, %c0_134], %408 {strides = array<i32>} : memref<128x128xf32, #tpu.memory_space<vmem>>, vector<8x64xf32>,
    %411 = vector.extract_strided_slice %407 {offsets = [0, 64], sizes = [8, 64], strides = [1, 1]} : vector<8x128xf32> to vector<8x64xf32>
    %412 = arith.index_cast %374 : i32 to index
    %c64_135 = arith.constant 64 : index
    %413 = vector.load %arg12[%412, %c64_135] : memref<128x128xf32, #tpu.memory_space<vmem>>, vector<8x64xf32>
    tpu.vector_store %arg12[%412, %c64_135], %411 {strides = array<i32>} : memref<128x128xf32, #tpu.memory_space<vmem>>, vector<8x64xf32>,
    %c9_i32 = arith.constant 9 : i32
    %c8_i32_136 = arith.constant 8 : i32
    %414 = arith.muli %c9_i32, %c8_i32_136 : i32
    %c15_i32_137 = arith.constant 15 : i32
    %415 = arith.subi %c15_i32_137, %c9_i32 : i32
    %c8_i32_138 = arith.constant 8 : i32
    %416 = arith.muli %415, %c8_i32_138 : i32
    %417 = arith.index_cast %414 : i32 to index
    %c0_139 = arith.constant 0 : index
    %418 = vector.load %arg11[%417, %c0_139] : memref<128x512xf32, #tpu.memory_space<vmem>>, vector<8x512xf32>
    %419 = arith.index_cast %416 : i32 to index
    %c0_140 = arith.constant 0 : index
    %420 = vector.load %arg11[%419, %c0_140] : memref<128x512xf32, #tpu.memory_space<vmem>>, vector<8x512xf32>
    %421 = arith.select %33, %418, %420 : vector<8x512xi1>, vector<8x512xf32>
    %c0_141 = arith.constant 0 : index
    %c0_142 = arith.constant 0 : index
    %422 = vector.load %arg5[%c0_141, %c0_142] : memref<128x512xf32, #tpu.memory_space<vmem>>, vector<128x512xf32>
    %cst_143 = arith.constant dense<0.000000e+00> : vector<8x512xf32>
    %423 = tpu.matmul %407, %422, %cst_143 {dimension_numbers = #tpu.dot_dimension_numbers<[1], [0], [0], [1], [0, 0, 1, 1], [], []>} : vector<8x128xf32>, vector<128x512xf32>, vector<8x512xf32> -> vector<8x512xf32>
    %424 = arith.addf %421, %423 : vector<8x512xf32>
    %425 = vector.extract_strided_slice %424 {offsets = [0, 0], sizes = [8, 128], strides = [1, 1]} : vector<8x512xf32> to vector<8x128xf32>
    %426 = arith.negf %425 : vector<8x128xf32>
    %427 = math.exp %426 : vector<8x128xf32>
    %cst_144 = arith.constant 1.000000e+00 : f32
    %428 = vector.broadcast %cst_144 : f32 to vector<8x128xf32>
    %429 = arith.addf %428, %427 : vector<8x128xf32>
    %430 = arith.divf %428, %429 : vector<8x128xf32>
    %431 = vector.extract_strided_slice %424 {offsets = [0, 128], sizes = [8, 128], strides = [1, 1]} : vector<8x512xf32> to vector<8x128xf32>
    %432 = arith.negf %431 : vector<8x128xf32>
    %433 = math.exp %432 : vector<8x128xf32>
    %cst_145 = arith.constant 1.000000e+00 : f32
    %434 = vector.broadcast %cst_145 : f32 to vector<8x128xf32>
    %435 = arith.addf %434, %433 : vector<8x128xf32>
    %436 = arith.divf %434, %435 : vector<8x128xf32>
    %437 = vector.extract_strided_slice %424 {offsets = [0, 256], sizes = [8, 128], strides = [1, 1]} : vector<8x512xf32> to vector<8x128xf32>
    %438 = math.tanh %437 : vector<8x128xf32>
    %439 = vector.extract_strided_slice %424 {offsets = [0, 384], sizes = [8, 128], strides = [1, 1]} : vector<8x512xf32> to vector<8x128xf32>
    %440 = arith.negf %439 : vector<8x128xf32>
    %441 = math.exp %440 : vector<8x128xf32>
    %cst_146 = arith.constant 1.000000e+00 : f32
    %442 = vector.broadcast %cst_146 : f32 to vector<8x128xf32>
    %443 = arith.addf %442, %441 : vector<8x128xf32>
    %444 = arith.divf %442, %443 : vector<8x128xf32>
    %445 = arith.mulf %436, %405 : vector<8x128xf32>
    %446 = arith.mulf %430, %438 : vector<8x128xf32>
    %447 = arith.addf %445, %446 : vector<8x128xf32>
    %448 = math.tanh %447 : vector<8x128xf32>
    %449 = arith.mulf %444, %448 : vector<8x128xf32>
    %450 = vector.extract_strided_slice %449 {offsets = [0, 0], sizes = [8, 64], strides = [1, 1]} : vector<8x128xf32> to vector<8x64xf32>
    %451 = arith.index_cast %414 : i32 to index
    %c0_147 = arith.constant 0 : index
    %452 = vector.load %arg12[%451, %c0_147] : memref<128x128xf32, #tpu.memory_space<vmem>>, vector<8x64xf32>
    tpu.vector_store %arg12[%451, %c0_147], %450 {strides = array<i32>} : memref<128x128xf32, #tpu.memory_space<vmem>>, vector<8x64xf32>,
    %453 = vector.extract_strided_slice %449 {offsets = [0, 64], sizes = [8, 64], strides = [1, 1]} : vector<8x128xf32> to vector<8x64xf32>
    %454 = arith.index_cast %416 : i32 to index
    %c64_148 = arith.constant 64 : index
    %455 = vector.load %arg12[%454, %c64_148] : memref<128x128xf32, #tpu.memory_space<vmem>>, vector<8x64xf32>
    tpu.vector_store %arg12[%454, %c64_148], %453 {strides = array<i32>} : memref<128x128xf32, #tpu.memory_space<vmem>>, vector<8x64xf32>,
    %c10_i32 = arith.constant 10 : i32
    %c8_i32_149 = arith.constant 8 : i32
    %456 = arith.muli %c10_i32, %c8_i32_149 : i32
    %c15_i32_150 = arith.constant 15 : i32
    %457 = arith.subi %c15_i32_150, %c10_i32 : i32
    %c8_i32_151 = arith.constant 8 : i32
    %458 = arith.muli %457, %c8_i32_151 : i32
    %459 = arith.index_cast %456 : i32 to index
    %c0_152 = arith.constant 0 : index
    %460 = vector.load %arg11[%459, %c0_152] : memref<128x512xf32, #tpu.memory_space<vmem>>, vector<8x512xf32>
    %461 = arith.index_cast %458 : i32 to index
    %c0_153 = arith.constant 0 : index
    %462 = vector.load %arg11[%461, %c0_153] : memref<128x512xf32, #tpu.memory_space<vmem>>, vector<8x512xf32>
    %463 = arith.select %33, %460, %462 : vector<8x512xi1>, vector<8x512xf32>
    %c0_154 = arith.constant 0 : index
    %c0_155 = arith.constant 0 : index
    %464 = vector.load %arg5[%c0_154, %c0_155] : memref<128x512xf32, #tpu.memory_space<vmem>>, vector<128x512xf32>
    %cst_156 = arith.constant dense<0.000000e+00> : vector<8x512xf32>
    %465 = tpu.matmul %449, %464, %cst_156 {dimension_numbers = #tpu.dot_dimension_numbers<[1], [0], [0], [1], [0, 0, 1, 1], [], []>} : vector<8x128xf32>, vector<128x512xf32>, vector<8x512xf32> -> vector<8x512xf32>
    %466 = arith.addf %463, %465 : vector<8x512xf32>
    %467 = vector.extract_strided_slice %466 {offsets = [0, 0], sizes = [8, 128], strides = [1, 1]} : vector<8x512xf32> to vector<8x128xf32>
    %468 = arith.negf %467 : vector<8x128xf32>
    %469 = math.exp %468 : vector<8x128xf32>
    %cst_157 = arith.constant 1.000000e+00 : f32
    %470 = vector.broadcast %cst_157 : f32 to vector<8x128xf32>
    %471 = arith.addf %470, %469 : vector<8x128xf32>
    %472 = arith.divf %470, %471 : vector<8x128xf32>
    %473 = vector.extract_strided_slice %466 {offsets = [0, 128], sizes = [8, 128], strides = [1, 1]} : vector<8x512xf32> to vector<8x128xf32>
    %474 = arith.negf %473 : vector<8x128xf32>
    %475 = math.exp %474 : vector<8x128xf32>
    %cst_158 = arith.constant 1.000000e+00 : f32
    %476 = vector.broadcast %cst_158 : f32 to vector<8x128xf32>
    %477 = arith.addf %476, %475 : vector<8x128xf32>
    %478 = arith.divf %476, %477 : vector<8x128xf32>
    %479 = vector.extract_strided_slice %466 {offsets = [0, 256], sizes = [8, 128], strides = [1, 1]} : vector<8x512xf32> to vector<8x128xf32>
    %480 = math.tanh %479 : vector<8x128xf32>
    %481 = vector.extract_strided_slice %466 {offsets = [0, 384], sizes = [8, 128], strides = [1, 1]} : vector<8x512xf32> to vector<8x128xf32>
    %482 = arith.negf %481 : vector<8x128xf32>
    %483 = math.exp %482 : vector<8x128xf32>
    %cst_159 = arith.constant 1.000000e+00 : f32
    %484 = vector.broadcast %cst_159 : f32 to vector<8x128xf32>
    %485 = arith.addf %484, %483 : vector<8x128xf32>
    %486 = arith.divf %484, %485 : vector<8x128xf32>
    %487 = arith.mulf %478, %447 : vector<8x128xf32>
    %488 = arith.mulf %472, %480 : vector<8x128xf32>
    %489 = arith.addf %487, %488 : vector<8x128xf32>
    %490 = math.tanh %489 : vector<8x128xf32>
    %491 = arith.mulf %486, %490 : vector<8x128xf32>
    %492 = vector.extract_strided_slice %491 {offsets = [0, 0], sizes = [8, 64], strides = [1, 1]} : vector<8x128xf32> to vector<8x64xf32>
    %493 = arith.index_cast %456 : i32 to index
    %c0_160 = arith.constant 0 : index
    %494 = vector.load %arg12[%493, %c0_160] : memref<128x128xf32, #tpu.memory_space<vmem>>, vector<8x64xf32>
    tpu.vector_store %arg12[%493, %c0_160], %492 {strides = array<i32>} : memref<128x128xf32, #tpu.memory_space<vmem>>, vector<8x64xf32>,
    %495 = vector.extract_strided_slice %491 {offsets = [0, 64], sizes = [8, 64], strides = [1, 1]} : vector<8x128xf32> to vector<8x64xf32>
    %496 = arith.index_cast %458 : i32 to index
    %c64_161 = arith.constant 64 : index
    %497 = vector.load %arg12[%496, %c64_161] : memref<128x128xf32, #tpu.memory_space<vmem>>, vector<8x64xf32>
    tpu.vector_store %arg12[%496, %c64_161], %495 {strides = array<i32>} : memref<128x128xf32, #tpu.memory_space<vmem>>, vector<8x64xf32>,
    %c11_i32 = arith.constant 11 : i32
    %c8_i32_162 = arith.constant 8 : i32
    %498 = arith.muli %c11_i32, %c8_i32_162 : i32
    %c15_i32_163 = arith.constant 15 : i32
    %499 = arith.subi %c15_i32_163, %c11_i32 : i32
    %c8_i32_164 = arith.constant 8 : i32
    %500 = arith.muli %499, %c8_i32_164 : i32
    %501 = arith.index_cast %498 : i32 to index
    %c0_165 = arith.constant 0 : index
    %502 = vector.load %arg11[%501, %c0_165] : memref<128x512xf32, #tpu.memory_space<vmem>>, vector<8x512xf32>
    %503 = arith.index_cast %500 : i32 to index
    %c0_166 = arith.constant 0 : index
    %504 = vector.load %arg11[%503, %c0_166] : memref<128x512xf32, #tpu.memory_space<vmem>>, vector<8x512xf32>
    %505 = arith.select %33, %502, %504 : vector<8x512xi1>, vector<8x512xf32>
    %c0_167 = arith.constant 0 : index
    %c0_168 = arith.constant 0 : index
    %506 = vector.load %arg5[%c0_167, %c0_168] : memref<128x512xf32, #tpu.memory_space<vmem>>, vector<128x512xf32>
    %cst_169 = arith.constant dense<0.000000e+00> : vector<8x512xf32>
    %507 = tpu.matmul %491, %506, %cst_169 {dimension_numbers = #tpu.dot_dimension_numbers<[1], [0], [0], [1], [0, 0, 1, 1], [], []>} : vector<8x128xf32>, vector<128x512xf32>, vector<8x512xf32> -> vector<8x512xf32>
    %508 = arith.addf %505, %507 : vector<8x512xf32>
    %509 = vector.extract_strided_slice %508 {offsets = [0, 0], sizes = [8, 128], strides = [1, 1]} : vector<8x512xf32> to vector<8x128xf32>
    %510 = arith.negf %509 : vector<8x128xf32>
    %511 = math.exp %510 : vector<8x128xf32>
    %cst_170 = arith.constant 1.000000e+00 : f32
    %512 = vector.broadcast %cst_170 : f32 to vector<8x128xf32>
    %513 = arith.addf %512, %511 : vector<8x128xf32>
    %514 = arith.divf %512, %513 : vector<8x128xf32>
    %515 = vector.extract_strided_slice %508 {offsets = [0, 128], sizes = [8, 128], strides = [1, 1]} : vector<8x512xf32> to vector<8x128xf32>
    %516 = arith.negf %515 : vector<8x128xf32>
    %517 = math.exp %516 : vector<8x128xf32>
    %cst_171 = arith.constant 1.000000e+00 : f32
    %518 = vector.broadcast %cst_171 : f32 to vector<8x128xf32>
    %519 = arith.addf %518, %517 : vector<8x128xf32>
    %520 = arith.divf %518, %519 : vector<8x128xf32>
    %521 = vector.extract_strided_slice %508 {offsets = [0, 256], sizes = [8, 128], strides = [1, 1]} : vector<8x512xf32> to vector<8x128xf32>
    %522 = math.tanh %521 : vector<8x128xf32>
    %523 = vector.extract_strided_slice %508 {offsets = [0, 384], sizes = [8, 128], strides = [1, 1]} : vector<8x512xf32> to vector<8x128xf32>
    %524 = arith.negf %523 : vector<8x128xf32>
    %525 = math.exp %524 : vector<8x128xf32>
    %cst_172 = arith.constant 1.000000e+00 : f32
    %526 = vector.broadcast %cst_172 : f32 to vector<8x128xf32>
    %527 = arith.addf %526, %525 : vector<8x128xf32>
    %528 = arith.divf %526, %527 : vector<8x128xf32>
    %529 = arith.mulf %520, %489 : vector<8x128xf32>
    %530 = arith.mulf %514, %522 : vector<8x128xf32>
    %531 = arith.addf %529, %530 : vector<8x128xf32>
    %532 = math.tanh %531 : vector<8x128xf32>
    %533 = arith.mulf %528, %532 : vector<8x128xf32>
    %534 = vector.extract_strided_slice %533 {offsets = [0, 0], sizes = [8, 64], strides = [1, 1]} : vector<8x128xf32> to vector<8x64xf32>
    %535 = arith.index_cast %498 : i32 to index
    %c0_173 = arith.constant 0 : index
    %536 = vector.load %arg12[%535, %c0_173] : memref<128x128xf32, #tpu.memory_space<vmem>>, vector<8x64xf32>
    tpu.vector_store %arg12[%535, %c0_173], %534 {strides = array<i32>} : memref<128x128xf32, #tpu.memory_space<vmem>>, vector<8x64xf32>,
    %537 = vector.extract_strided_slice %533 {offsets = [0, 64], sizes = [8, 64], strides = [1, 1]} : vector<8x128xf32> to vector<8x64xf32>
    %538 = arith.index_cast %500 : i32 to index
    %c64_174 = arith.constant 64 : index
    %539 = vector.load %arg12[%538, %c64_174] : memref<128x128xf32, #tpu.memory_space<vmem>>, vector<8x64xf32>
    tpu.vector_store %arg12[%538, %c64_174], %537 {strides = array<i32>} : memref<128x128xf32, #tpu.memory_space<vmem>>, vector<8x64xf32>,
    %c12_i32 = arith.constant 12 : i32
    %c8_i32_175 = arith.constant 8 : i32
    %540 = arith.muli %c12_i32, %c8_i32_175 : i32
    %c15_i32_176 = arith.constant 15 : i32
    %541 = arith.subi %c15_i32_176, %c12_i32 : i32
    %c8_i32_177 = arith.constant 8 : i32
    %542 = arith.muli %541, %c8_i32_177 : i32
    %543 = arith.index_cast %540 : i32 to index
    %c0_178 = arith.constant 0 : index
    %544 = vector.load %arg11[%543, %c0_178] : memref<128x512xf32, #tpu.memory_space<vmem>>, vector<8x512xf32>
    %545 = arith.index_cast %542 : i32 to index
    %c0_179 = arith.constant 0 : index
    %546 = vector.load %arg11[%545, %c0_179] : memref<128x512xf32, #tpu.memory_space<vmem>>, vector<8x512xf32>
    %547 = arith.select %33, %544, %546 : vector<8x512xi1>, vector<8x512xf32>
    %c0_180 = arith.constant 0 : index
    %c0_181 = arith.constant 0 : index
    %548 = vector.load %arg5[%c0_180, %c0_181] : memref<128x512xf32, #tpu.memory_space<vmem>>, vector<128x512xf32>
    %cst_182 = arith.constant dense<0.000000e+00> : vector<8x512xf32>
    %549 = tpu.matmul %533, %548, %cst_182 {dimension_numbers = #tpu.dot_dimension_numbers<[1], [0], [0], [1], [0, 0, 1, 1], [], []>} : vector<8x128xf32>, vector<128x512xf32>, vector<8x512xf32> -> vector<8x512xf32>
    %550 = arith.addf %547, %549 : vector<8x512xf32>
    %551 = vector.extract_strided_slice %550 {offsets = [0, 0], sizes = [8, 128], strides = [1, 1]} : vector<8x512xf32> to vector<8x128xf32>
    %552 = arith.negf %551 : vector<8x128xf32>
    %553 = math.exp %552 : vector<8x128xf32>
    %cst_183 = arith.constant 1.000000e+00 : f32
    %554 = vector.broadcast %cst_183 : f32 to vector<8x128xf32>
    %555 = arith.addf %554, %553 : vector<8x128xf32>
    %556 = arith.divf %554, %555 : vector<8x128xf32>
    %557 = vector.extract_strided_slice %550 {offsets = [0, 128], sizes = [8, 128], strides = [1, 1]} : vector<8x512xf32> to vector<8x128xf32>
    %558 = arith.negf %557 : vector<8x128xf32>
    %559 = math.exp %558 : vector<8x128xf32>
    %cst_184 = arith.constant 1.000000e+00 : f32
    %560 = vector.broadcast %cst_184 : f32 to vector<8x128xf32>
    %561 = arith.addf %560, %559 : vector<8x128xf32>
    %562 = arith.divf %560, %561 : vector<8x128xf32>
    %563 = vector.extract_strided_slice %550 {offsets = [0, 256], sizes = [8, 128], strides = [1, 1]} : vector<8x512xf32> to vector<8x128xf32>
    %564 = math.tanh %563 : vector<8x128xf32>
    %565 = vector.extract_strided_slice %550 {offsets = [0, 384], sizes = [8, 128], strides = [1, 1]} : vector<8x512xf32> to vector<8x128xf32>
    %566 = arith.negf %565 : vector<8x128xf32>
    %567 = math.exp %566 : vector<8x128xf32>
    %cst_185 = arith.constant 1.000000e+00 : f32
    %568 = vector.broadcast %cst_185 : f32 to vector<8x128xf32>
    %569 = arith.addf %568, %567 : vector<8x128xf32>
    %570 = arith.divf %568, %569 : vector<8x128xf32>
    %571 = arith.mulf %562, %531 : vector<8x128xf32>
    %572 = arith.mulf %556, %564 : vector<8x128xf32>
    %573 = arith.addf %571, %572 : vector<8x128xf32>
    %574 = math.tanh %573 : vector<8x128xf32>
    %575 = arith.mulf %570, %574 : vector<8x128xf32>
    %576 = vector.extract_strided_slice %575 {offsets = [0, 0], sizes = [8, 64], strides = [1, 1]} : vector<8x128xf32> to vector<8x64xf32>
    %577 = arith.index_cast %540 : i32 to index
    %c0_186 = arith.constant 0 : index
    %578 = vector.load %arg12[%577, %c0_186] : memref<128x128xf32, #tpu.memory_space<vmem>>, vector<8x64xf32>
    tpu.vector_store %arg12[%577, %c0_186], %576 {strides = array<i32>} : memref<128x128xf32, #tpu.memory_space<vmem>>, vector<8x64xf32>,
    %579 = vector.extract_strided_slice %575 {offsets = [0, 64], sizes = [8, 64], strides = [1, 1]} : vector<8x128xf32> to vector<8x64xf32>
    %580 = arith.index_cast %542 : i32 to index
    %c64_187 = arith.constant 64 : index
    %581 = vector.load %arg12[%580, %c64_187] : memref<128x128xf32, #tpu.memory_space<vmem>>, vector<8x64xf32>
    tpu.vector_store %arg12[%580, %c64_187], %579 {strides = array<i32>} : memref<128x128xf32, #tpu.memory_space<vmem>>, vector<8x64xf32>,
    %c13_i32 = arith.constant 13 : i32
    %c8_i32_188 = arith.constant 8 : i32
    %582 = arith.muli %c13_i32, %c8_i32_188 : i32
    %c15_i32_189 = arith.constant 15 : i32
    %583 = arith.subi %c15_i32_189, %c13_i32 : i32
    %c8_i32_190 = arith.constant 8 : i32
    %584 = arith.muli %583, %c8_i32_190 : i32
    %585 = arith.index_cast %582 : i32 to index
    %c0_191 = arith.constant 0 : index
    %586 = vector.load %arg11[%585, %c0_191] : memref<128x512xf32, #tpu.memory_space<vmem>>, vector<8x512xf32>
    %587 = arith.index_cast %584 : i32 to index
    %c0_192 = arith.constant 0 : index
    %588 = vector.load %arg11[%587, %c0_192] : memref<128x512xf32, #tpu.memory_space<vmem>>, vector<8x512xf32>
    %589 = arith.select %33, %586, %588 : vector<8x512xi1>, vector<8x512xf32>
    %c0_193 = arith.constant 0 : index
    %c0_194 = arith.constant 0 : index
    %590 = vector.load %arg5[%c0_193, %c0_194] : memref<128x512xf32, #tpu.memory_space<vmem>>, vector<128x512xf32>
    %cst_195 = arith.constant dense<0.000000e+00> : vector<8x512xf32>
    %591 = tpu.matmul %575, %590, %cst_195 {dimension_numbers = #tpu.dot_dimension_numbers<[1], [0], [0], [1], [0, 0, 1, 1], [], []>} : vector<8x128xf32>, vector<128x512xf32>, vector<8x512xf32> -> vector<8x512xf32>
    %592 = arith.addf %589, %591 : vector<8x512xf32>
    %593 = vector.extract_strided_slice %592 {offsets = [0, 0], sizes = [8, 128], strides = [1, 1]} : vector<8x512xf32> to vector<8x128xf32>
    %594 = arith.negf %593 : vector<8x128xf32>
    %595 = math.exp %594 : vector<8x128xf32>
    %cst_196 = arith.constant 1.000000e+00 : f32
    %596 = vector.broadcast %cst_196 : f32 to vector<8x128xf32>
    %597 = arith.addf %596, %595 : vector<8x128xf32>
    %598 = arith.divf %596, %597 : vector<8x128xf32>
    %599 = vector.extract_strided_slice %592 {offsets = [0, 128], sizes = [8, 128], strides = [1, 1]} : vector<8x512xf32> to vector<8x128xf32>
    %600 = arith.negf %599 : vector<8x128xf32>
    %601 = math.exp %600 : vector<8x128xf32>
    %cst_197 = arith.constant 1.000000e+00 : f32
    %602 = vector.broadcast %cst_197 : f32 to vector<8x128xf32>
    %603 = arith.addf %602, %601 : vector<8x128xf32>
    %604 = arith.divf %602, %603 : vector<8x128xf32>
    %605 = vector.extract_strided_slice %592 {offsets = [0, 256], sizes = [8, 128], strides = [1, 1]} : vector<8x512xf32> to vector<8x128xf32>
    %606 = math.tanh %605 : vector<8x128xf32>
    %607 = vector.extract_strided_slice %592 {offsets = [0, 384], sizes = [8, 128], strides = [1, 1]} : vector<8x512xf32> to vector<8x128xf32>
    %608 = arith.negf %607 : vector<8x128xf32>
    %609 = math.exp %608 : vector<8x128xf32>
    %cst_198 = arith.constant 1.000000e+00 : f32
    %610 = vector.broadcast %cst_198 : f32 to vector<8x128xf32>
    %611 = arith.addf %610, %609 : vector<8x128xf32>
    %612 = arith.divf %610, %611 : vector<8x128xf32>
    %613 = arith.mulf %604, %573 : vector<8x128xf32>
    %614 = arith.mulf %598, %606 : vector<8x128xf32>
    %615 = arith.addf %613, %614 : vector<8x128xf32>
    %616 = math.tanh %615 : vector<8x128xf32>
    %617 = arith.mulf %612, %616 : vector<8x128xf32>
    %618 = vector.extract_strided_slice %617 {offsets = [0, 0], sizes = [8, 64], strides = [1, 1]} : vector<8x128xf32> to vector<8x64xf32>
    %619 = arith.index_cast %582 : i32 to index
    %c0_199 = arith.constant 0 : index
    %620 = vector.load %arg12[%619, %c0_199] : memref<128x128xf32, #tpu.memory_space<vmem>>, vector<8x64xf32>
    tpu.vector_store %arg12[%619, %c0_199], %618 {strides = array<i32>} : memref<128x128xf32, #tpu.memory_space<vmem>>, vector<8x64xf32>,
    %621 = vector.extract_strided_slice %617 {offsets = [0, 64], sizes = [8, 64], strides = [1, 1]} : vector<8x128xf32> to vector<8x64xf32>
    %622 = arith.index_cast %584 : i32 to index
    %c64_200 = arith.constant 64 : index
    %623 = vector.load %arg12[%622, %c64_200] : memref<128x128xf32, #tpu.memory_space<vmem>>, vector<8x64xf32>
    tpu.vector_store %arg12[%622, %c64_200], %621 {strides = array<i32>} : memref<128x128xf32, #tpu.memory_space<vmem>>, vector<8x64xf32>,
    %c14_i32 = arith.constant 14 : i32
    %c8_i32_201 = arith.constant 8 : i32
    %624 = arith.muli %c14_i32, %c8_i32_201 : i32
    %c15_i32_202 = arith.constant 15 : i32
    %625 = arith.subi %c15_i32_202, %c14_i32 : i32
    %c8_i32_203 = arith.constant 8 : i32
    %626 = arith.muli %625, %c8_i32_203 : i32
    %627 = arith.index_cast %624 : i32 to index
    %c0_204 = arith.constant 0 : index
    %628 = vector.load %arg11[%627, %c0_204] : memref<128x512xf32, #tpu.memory_space<vmem>>, vector<8x512xf32>
    %629 = arith.index_cast %626 : i32 to index
    %c0_205 = arith.constant 0 : index
    %630 = vector.load %arg11[%629, %c0_205] : memref<128x512xf32, #tpu.memory_space<vmem>>, vector<8x512xf32>
    %631 = arith.select %33, %628, %630 : vector<8x512xi1>, vector<8x512xf32>
    %c0_206 = arith.constant 0 : index
    %c0_207 = arith.constant 0 : index
    %632 = vector.load %arg5[%c0_206, %c0_207] : memref<128x512xf32, #tpu.memory_space<vmem>>, vector<128x512xf32>
    %cst_208 = arith.constant dense<0.000000e+00> : vector<8x512xf32>
    %633 = tpu.matmul %617, %632, %cst_208 {dimension_numbers = #tpu.dot_dimension_numbers<[1], [0], [0], [1], [0, 0, 1, 1], [], []>} : vector<8x128xf32>, vector<128x512xf32>, vector<8x512xf32> -> vector<8x512xf32>
    %634 = arith.addf %631, %633 : vector<8x512xf32>
    %635 = vector.extract_strided_slice %634 {offsets = [0, 0], sizes = [8, 128], strides = [1, 1]} : vector<8x512xf32> to vector<8x128xf32>
    %636 = arith.negf %635 : vector<8x128xf32>
    %637 = math.exp %636 : vector<8x128xf32>
    %cst_209 = arith.constant 1.000000e+00 : f32
    %638 = vector.broadcast %cst_209 : f32 to vector<8x128xf32>
    %639 = arith.addf %638, %637 : vector<8x128xf32>
    %640 = arith.divf %638, %639 : vector<8x128xf32>
    %641 = vector.extract_strided_slice %634 {offsets = [0, 128], sizes = [8, 128], strides = [1, 1]} : vector<8x512xf32> to vector<8x128xf32>
    %642 = arith.negf %641 : vector<8x128xf32>
    %643 = math.exp %642 : vector<8x128xf32>
    %cst_210 = arith.constant 1.000000e+00 : f32
    %644 = vector.broadcast %cst_210 : f32 to vector<8x128xf32>
    %645 = arith.addf %644, %643 : vector<8x128xf32>
    %646 = arith.divf %644, %645 : vector<8x128xf32>
    %647 = vector.extract_strided_slice %634 {offsets = [0, 256], sizes = [8, 128], strides = [1, 1]} : vector<8x512xf32> to vector<8x128xf32>
    %648 = math.tanh %647 : vector<8x128xf32>
    %649 = vector.extract_strided_slice %634 {offsets = [0, 384], sizes = [8, 128], strides = [1, 1]} : vector<8x512xf32> to vector<8x128xf32>
    %650 = arith.negf %649 : vector<8x128xf32>
    %651 = math.exp %650 : vector<8x128xf32>
    %cst_211 = arith.constant 1.000000e+00 : f32
    %652 = vector.broadcast %cst_211 : f32 to vector<8x128xf32>
    %653 = arith.addf %652, %651 : vector<8x128xf32>
    %654 = arith.divf %652, %653 : vector<8x128xf32>
    %655 = arith.mulf %646, %615 : vector<8x128xf32>
    %656 = arith.mulf %640, %648 : vector<8x128xf32>
    %657 = arith.addf %655, %656 : vector<8x128xf32>
    %658 = math.tanh %657 : vector<8x128xf32>
    %659 = arith.mulf %654, %658 : vector<8x128xf32>
    %660 = vector.extract_strided_slice %659 {offsets = [0, 0], sizes = [8, 64], strides = [1, 1]} : vector<8x128xf32> to vector<8x64xf32>
    %661 = arith.index_cast %624 : i32 to index
    %c0_212 = arith.constant 0 : index
    %662 = vector.load %arg12[%661, %c0_212] : memref<128x128xf32, #tpu.memory_space<vmem>>, vector<8x64xf32>
    tpu.vector_store %arg12[%661, %c0_212], %660 {strides = array<i32>} : memref<128x128xf32, #tpu.memory_space<vmem>>, vector<8x64xf32>,
    %663 = vector.extract_strided_slice %659 {offsets = [0, 64], sizes = [8, 64], strides = [1, 1]} : vector<8x128xf32> to vector<8x64xf32>
    %664 = arith.index_cast %626 : i32 to index
    %c64_213 = arith.constant 64 : index
    %665 = vector.load %arg12[%664, %c64_213] : memref<128x128xf32, #tpu.memory_space<vmem>>, vector<8x64xf32>
    tpu.vector_store %arg12[%664, %c64_213], %663 {strides = array<i32>} : memref<128x128xf32, #tpu.memory_space<vmem>>, vector<8x64xf32>,
    %c15_i32_214 = arith.constant 15 : i32
    %c8_i32_215 = arith.constant 8 : i32
    %666 = arith.muli %c15_i32_214, %c8_i32_215 : i32
    %c15_i32_216 = arith.constant 15 : i32
    %667 = arith.subi %c15_i32_216, %c15_i32_214 : i32
    %c8_i32_217 = arith.constant 8 : i32
    %668 = arith.muli %667, %c8_i32_217 : i32
    %669 = arith.index_cast %666 : i32 to index
    %c0_218 = arith.constant 0 : index
    %670 = vector.load %arg11[%669, %c0_218] : memref<128x512xf32, #tpu.memory_space<vmem>>, vector<8x512xf32>
    %671 = arith.index_cast %668 : i32 to index
    %c0_219 = arith.constant 0 : index
    %672 = vector.load %arg11[%671, %c0_219] : memref<128x512xf32, #tpu.memory_space<vmem>>, vector<8x512xf32>
    %673 = arith.select %33, %670, %672 : vector<8x512xi1>, vector<8x512xf32>
    %c0_220 = arith.constant 0 : index
    %c0_221 = arith.constant 0 : index
    %674 = vector.load %arg5[%c0_220, %c0_221] : memref<128x512xf32, #tpu.memory_space<vmem>>, vector<128x512xf32>
    %cst_222 = arith.constant dense<0.000000e+00> : vector<8x512xf32>
    %675 = tpu.matmul %659, %674, %cst_222 {dimension_numbers = #tpu.dot_dimension_numbers<[1], [0], [0], [1], [0, 0, 1, 1], [], []>} : vector<8x128xf32>, vector<128x512xf32>, vector<8x512xf32> -> vector<8x512xf32>
    %676 = arith.addf %673, %675 : vector<8x512xf32>
    %677 = vector.extract_strided_slice %676 {offsets = [0, 0], sizes = [8, 128], strides = [1, 1]} : vector<8x512xf32> to vector<8x128xf32>
    %678 = arith.negf %677 : vector<8x128xf32>
    %679 = math.exp %678 : vector<8x128xf32>
    %cst_223 = arith.constant 1.000000e+00 : f32
    %680 = vector.broadcast %cst_223 : f32 to vector<8x128xf32>
    %681 = arith.addf %680, %679 : vector<8x128xf32>
    %682 = arith.divf %680, %681 : vector<8x128xf32>
    %683 = vector.extract_strided_slice %676 {offsets = [0, 128], sizes = [8, 128], strides = [1, 1]} : vector<8x512xf32> to vector<8x128xf32>
    %684 = arith.negf %683 : vector<8x128xf32>
    %685 = math.exp %684 : vector<8x128xf32>
    %cst_224 = arith.constant 1.000000e+00 : f32
    %686 = vector.broadcast %cst_224 : f32 to vector<8x128xf32>
    %687 = arith.addf %686, %685 : vector<8x128xf32>
    %688 = arith.divf %686, %687 : vector<8x128xf32>
    %689 = vector.extract_strided_slice %676 {offsets = [0, 256], sizes = [8, 128], strides = [1, 1]} : vector<8x512xf32> to vector<8x128xf32>
    %690 = math.tanh %689 : vector<8x128xf32>
    %691 = vector.extract_strided_slice %676 {offsets = [0, 384], sizes = [8, 128], strides = [1, 1]} : vector<8x512xf32> to vector<8x128xf32>
    %692 = arith.negf %691 : vector<8x128xf32>
    %693 = math.exp %692 : vector<8x128xf32>
    %cst_225 = arith.constant 1.000000e+00 : f32
    %694 = vector.broadcast %cst_225 : f32 to vector<8x128xf32>
    %695 = arith.addf %694, %693 : vector<8x128xf32>
    %696 = arith.divf %694, %695 : vector<8x128xf32>
    %697 = arith.mulf %688, %657 : vector<8x128xf32>
    %698 = arith.mulf %682, %690 : vector<8x128xf32>
    %699 = arith.addf %697, %698 : vector<8x128xf32>
    %700 = math.tanh %699 : vector<8x128xf32>
    %701 = arith.mulf %696, %700 : vector<8x128xf32>
    %702 = vector.extract_strided_slice %701 {offsets = [0, 0], sizes = [8, 64], strides = [1, 1]} : vector<8x128xf32> to vector<8x64xf32>
    %703 = arith.index_cast %666 : i32 to index
    %c0_226 = arith.constant 0 : index
    %704 = vector.load %arg12[%703, %c0_226] : memref<128x128xf32, #tpu.memory_space<vmem>>, vector<8x64xf32>
    tpu.vector_store %arg12[%703, %c0_226], %702 {strides = array<i32>} : memref<128x128xf32, #tpu.memory_space<vmem>>, vector<8x64xf32>,
    %705 = vector.extract_strided_slice %701 {offsets = [0, 64], sizes = [8, 64], strides = [1, 1]} : vector<8x128xf32> to vector<8x64xf32>
    %706 = arith.index_cast %668 : i32 to index
    %c64_227 = arith.constant 64 : index
    %707 = vector.load %arg12[%706, %c64_227] : memref<128x128xf32, #tpu.memory_space<vmem>>, vector<8x64xf32>
    tpu.vector_store %arg12[%706, %c64_227], %705 {strides = array<i32>} : memref<128x128xf32, #tpu.memory_space<vmem>>, vector<8x64xf32>,
    %c16_i32 = arith.constant 16 : i32
    %c0_228 = arith.constant 0 : index
    %c0_229 = arith.constant 0 : index
    %708 = vector.load %arg7[%c0_228, %c0_229] : memref<128x128xf32, #tpu.memory_space<vmem>>, vector<128x128xf32>
    %c0_230 = arith.constant 0 : index
    %c0_231 = arith.constant 0 : index
    %709 = vector.load %arg12[%c0_230, %c0_231] : memref<128x128xf32, #tpu.memory_space<vmem>>, vector<128x128xf32>
    %cst_232 = arith.constant dense<0.000000e+00> : vector<128x128xf32>
    %710 = tpu.matmul %708, %709, %cst_232 {dimension_numbers = #tpu.dot_dimension_numbers<[1], [0], [0], [1], [0, 0, 1, 1], [], []>} : vector<128x128xf32>, vector<128x128xf32>, vector<128x128xf32> -> vector<128x128xf32>
    %711 = vector.shape_cast %710 : vector<128x128xf32> to vector<8x16x128xf32>
    "tpu.trace_start"() <{level = 10 : i32, message = "bqd,bkd->bqk"}> : () -> ()
    %cst_233 = arith.constant dense<0.000000e+00> : vector<8x16x16xf32>
    %712 = tpu.matmul %711, %711, %cst_233 {dimension_numbers = #tpu.dot_dimension_numbers<[2], [2], [1], [1], [0, 0, 0, 1, 1, 1], [0], [0]>} : vector<8x16x128xf32>, vector<8x16x128xf32>, vector<8x16x16xf32> -> vector<8x16x16xf32>
    "tpu.trace_stop"() : () -> ()
    %cst_234 = arith.constant 0.0883883461 : f32
    %713 = vector.broadcast %cst_234 : f32 to vector<8x16x16xf32>
    %714 = arith.mulf %712, %713 : vector<8x16x16xf32>
    %cst_235 = arith.constant dense<0xFF800000> : vector<8x16xf32>
    %715 = vector.multi_reduction <maximumf>, %714, %cst_235 [2] : vector<8x16x16xf32> to vector<8x16xf32>
    %716 = vector.shape_cast %715 : vector<8x16xf32> to vector<8x16x1xf32>
    %717 = vector.broadcast %716 : vector<8x16x1xf32> to vector<8x16x16xf32>
    %718 = arith.subf %714, %717 : vector<8x16x16xf32>
    %719 = math.exp %718 : vector<8x16x16xf32>
    %cst_236 = arith.constant dense<0.000000e+00> : vector<8x16xf32>
    %720 = vector.multi_reduction <add>, %719, %cst_236 [2] : vector<8x16x16xf32> to vector<8x16xf32>
    %721 = vector.shape_cast %720 : vector<8x16xf32> to vector<8x16x1xf32>
    %722 = tpu.reciprocal %721 {approx = true} : vector<8x16x1xf32> -> vector<8x16x1xf32>
    %723 = vector.broadcast %722 : vector<8x16x1xf32> to vector<8x16x16xf32>
    %724 = arith.mulf %719, %723 : vector<8x16x16xf32>
    %c0_237 = arith.constant 0 : index
    %c0_238 = arith.constant 0 : index
    %725 = vector.load %arg8[%c0_237, %c0_238] : memref<1x128xf32, #tpu.memory_space<vmem>>, vector<1x128xf32>
    %726 = vector.broadcast %725 : vector<1x128xf32> to vector<128x128xf32>
    %727 = arith.mulf %710, %726 : vector<128x128xf32>
    %cst_239 = arith.constant dense<0.000000e+00> : vector<128xf32>
    %728 = vector.multi_reduction <add>, %727, %cst_239 [1] : vector<128x128xf32> to vector<128xf32>
    %729 = vector.shape_cast %728 : vector<128xf32> to vector<8x16xf32>
    %730 = vector.shape_cast %729 : vector<8x16xf32> to vector<8x1x16xf32>
    %731 = vector.broadcast %730 : vector<8x1x16xf32> to vector<8x16x16xf32>
    %732 = arith.mulf %724, %731 : vector<8x16x16xf32>
    %cst_240 = arith.constant dense<0.000000e+00> : vector<8x16xf32>
    %733 = vector.multi_reduction <add>, %732, %cst_240 [2] : vector<8x16x16xf32> to vector<8x16xf32>
    %c0_241 = arith.constant 0 : index
    %c0_242 = arith.constant 0 : index
    %734 = vector.load %arg9[%c0_241, %c0_242] : memref<1x1xf32, #tpu.memory_space<vmem>>, vector<1x1xf32>
    %735 = vector.broadcast %734 : vector<1x1xf32> to vector<8x16xf32>
    %736 = arith.addf %733, %735 : vector<8x16xf32>
    %737 = arith.negf %736 : vector<8x16xf32>
    %738 = math.exp %737 : vector<8x16xf32>
    %cst_243 = arith.constant 1.000000e+00 : f32
    %739 = vector.broadcast %cst_243 : f32 to vector<8x16xf32>
    %740 = arith.addf %739, %738 : vector<8x16xf32>
    %741 = arith.divf %739, %740 : vector<8x16xf32>
    %c0_244 = arith.constant 0 : index
    %c0_245 = arith.constant 0 : index
    %742 = vector.load %arg10[%c0_244, %c0_245] : memref<8x16xf32, #tpu.memory_space<vmem>>, vector<8x16xf32>
    tpu.vector_store %arg10[%c0_244, %c0_245], %741 {strides = array<i32>} : memref<8x16xf32, #tpu.memory_space<vmem>>, vector<8x16xf32>,
    return
  }
  func.func @transform_0(%arg0: i32) -> (i32, i32, i32) {
    %c0_i32 = arith.constant 0 : i32
    %c0_i32_0 = arith.constant 0 : i32
    %c0_i32_1 = arith.constant 0 : i32
    return %c0_i32, %arg0, %c0_i32_0 : i32, i32, i32
  }
  func.func @transform_1(%arg0: i32) -> (i32, i32) {
    %c0_i32 = arith.constant 0 : i32
    %c0_i32_0 = arith.constant 0 : i32
    %c0_i32_1 = arith.constant 0 : i32
    return %c0_i32, %c0_i32_0 : i32, i32
  }
  func.func @transform_2(%arg0: i32) -> (i32, i32) {
    %c0_i32 = arith.constant 0 : i32
    %c0_i32_0 = arith.constant 0 : i32
    %c0_i32_1 = arith.constant 0 : i32
    return %c0_i32, %c0_i32_0 : i32, i32
  }
  func.func @transform_3(%arg0: i32) -> (i32, i32) {
    %c0_i32 = arith.constant 0 : i32
    %c0_i32_0 = arith.constant 0 : i32
    %c0_i32_1 = arith.constant 0 : i32
    return %c0_i32, %c0_i32_0 : i32, i32
  }
  func.func @transform_4(%arg0: i32) -> (i32, i32) {
    %c0_i32 = arith.constant 0 : i32
    %c0_i32_0 = arith.constant 0 : i32
    %c0_i32_1 = arith.constant 0 : i32
    return %c0_i32, %c0_i32_0 : i32, i32
  }
  func.func @transform_5(%arg0: i32) -> (i32, i32) {
    %c0_i32 = arith.constant 0 : i32
    %c0_i32_0 = arith.constant 0 : i32
    %c0_i32_1 = arith.constant 0 : i32
    return %c0_i32, %c0_i32_0 : i32, i32
  }
  func.func @transform_6(%arg0: i32) -> (i32, i32) {
    %c0_i32 = arith.constant 0 : i32
    %c0_i32_0 = arith.constant 0 : i32
    %c0_i32_1 = arith.constant 0 : i32
    return %c0_i32, %c0_i32_0 : i32, i32
  }
  func.func @transform_7(%arg0: i32) -> (i32, i32) {
    %c0_i32 = arith.constant 0 : i32
    %c0_i32_0 = arith.constant 0 : i32
    %c0_i32_1 = arith.constant 0 : i32
    return %c0_i32, %c0_i32_0 : i32, i32
  }
  func.func @transform_8(%arg0: i32) -> (i32, i32) {
    %c0_i32 = arith.constant 0 : i32
    %c0_i32_0 = arith.constant 0 : i32
    %c0_i32_1 = arith.constant 0 : i32
    return %c0_i32, %c0_i32_0 : i32, i32
  }
  func.func @transform_9(%arg0: i32) -> (i32, i32) {
    %c0_i32 = arith.constant 0 : i32
    %c0_i32_0 = arith.constant 0 : i32
    return %arg0, %c0_i32 : i32, i32
  }
}

</mosaic_0001>

<llo_original>
// kernel: attention_model_pallas.1
$region0: #{attention_model_pallas.1}
  #allocation0 [shape = 'u32[]', space=smem, size = 0x4, offset = 0x4, fixed_abs, tag = 'smem constant byte address 0x4 - core index']
  #allocation1 [shape = 'u32[144,128]{1,0:T(1,128)}', space=vmem, size = 0x12000, scoped, tag = 'internal scratch']
  #allocation2 [shape = 'f32[128,512]{1,0:T(8,128)}', space=vmem, size = 0x40000, scoped, tag = 'scratch operand']
  #allocation3 [shape = 'f32[128,128]{1,0:T(8,128)}', space=vmem, size = 0x10000, scoped, tag = 'scratch operand']
  #allocation4 [shape = 'f32[1,1]{1,0:T(1,128)S(1)}', space=vmem, size = 0x200, scoped, tag = 'scoped memory for attention_model_pallas.1']
  %s0 = inlined_call_operand.vmem [shape: f32[16,8,13], index: 0, kind: input, shape index: {}]
  %s1 = inlined_call_operand.vmem [shape: f32[13,64], index: 1, kind: input, shape index: {}]
  %s2 = inlined_call_operand.vmem [shape: f32[1,64], index: 2, kind: input, shape index: {}]
  %s3 = inlined_call_operand.vmem [shape: f32[64,512], index: 3, kind: input, shape index: {}]
  %s4 = inlined_call_operand.vmem [shape: f32[128,512], index: 4, kind: input, shape index: {}]
  %s5 = inlined_call_operand.vmem [shape: f32[1,512], index: 5, kind: input, shape index: {}]
  %s6 = inlined_call_operand.vmem [shape: f32[128,128], index: 6, kind: input, shape index: {}]
  %s7 = inlined_call_operand.vmem [shape: f32[1,128], index: 7, kind: input, shape index: {}]
  %s8 = inlined_call_operand.<no memory space> [shape: f32[1,1], index: 8, kind: input, shape index: {}]
  %s9 = inlined_call_operand.hbm [shape: f32[8,16], index: 9, kind: output, shape index: {}]
  %s10 = sld [smem:[#allocation0]]
  $region46: #{attention_model_pallas.1} parent=0
    _
  %s12 = ssub.s32 1, %s10
  %s13 = scalar_select 0, %s12, %s10
  %v14 = vstv %s8
  %15 = vst [vmem:[#allocation4] sm:$0x1] %v14
  $region1: #{attention_model_pallas.1} parent=0
    #allocation5 [shape = 'u8[4096]{0}', space=vmem, size = 0x1000, scoped, tag = 'output window, operand 0, single buffered']
    #allocation6 [shape = 's32[1]{0}', space=sflag, size = 0x4, scoped, tag = 'scoped memory for attention_model_pallas.1']
    %16 = vsyncpa [#allocation6], 0
    // Predicated region
    $region2: #{attention_model_pallas.1} parent=1 // pred_check
      _
    $region3: #{attention_model_pallas.1} parent=1 // pred_check_branch
      %18 = sbr.rel (0) target = $region5
    $region4: #{attention_model_pallas.1} parent=1 // pred_region
      _
    $region5: #{attention_model_pallas.1} parent=1 // pred_fallthru
      _
    // Predicated region
    $region6: #{attention_model_pallas.1} parent=1 // pred_check
      _
    $region7: #{attention_model_pallas.1} parent=1 // pred_check_branch
      %20 = sbr.rel (0) target = $region9
    $region8: #{attention_model_pallas.1} parent=1 // pred_region
      _
    $region9: #{attention_model_pallas.1} parent=1 // pred_fallthru
      _
    // Predicated region
    $region10: #{attention_model_pallas.1} parent=1 // pred_check
      _
    $region11: #{attention_model_pallas.1} parent=1 // pred_check_branch
      %22 = sbr.rel (0) target = $region13
    $region12: #{attention_model_pallas.1} parent=1 // pred_region
      _
    $region13: #{attention_model_pallas.1} parent=1 // pred_fallthru
      _
    // Predicated region
    $region14: #{attention_model_pallas.1} parent=1 // pred_check
      _
    $region15: #{attention_model_pallas.1} parent=1 // pred_check_branch
      %24 = sbr.rel (0) target = $region17
    $region16: #{attention_model_pallas.1} parent=1 // pred_region
      _
    $region17: #{attention_model_pallas.1} parent=1 // pred_fallthru
      _
    // Predicated region
    $region18: #{attention_model_pallas.1} parent=1 // pred_check
      _
    $region19: #{attention_model_pallas.1} parent=1 // pred_check_branch
      %26 = sbr.rel (0) target = $region21
    $region20: #{attention_model_pallas.1} parent=1 // pred_region
      _
    $region21: #{attention_model_pallas.1} parent=1 // pred_fallthru
      _
    // Predicated region
    $region22: #{attention_model_pallas.1} parent=1 // pred_check
      _
    $region23: #{attention_model_pallas.1} parent=1 // pred_check_branch
      %28 = sbr.rel (0) target = $region25
    $region24: #{attention_model_pallas.1} parent=1 // pred_region
      _
    $region25: #{attention_model_pallas.1} parent=1 // pred_fallthru
      _
    // Predicated region
    $region26: #{attention_model_pallas.1} parent=1 // pred_check
      _
    $region27: #{attention_model_pallas.1} parent=1 // pred_check_branch
      %30 = sbr.rel (0) target = $region29
    $region28: #{attention_model_pallas.1} parent=1 // pred_region
      _
    $region29: #{attention_model_pallas.1} parent=1 // pred_fallthru
      _
    // Predicated region
    $region30: #{attention_model_pallas.1} parent=1 // pred_check
      _
    $region31: #{attention_model_pallas.1} parent=1 // pred_check_branch
      %32 = sbr.rel (0) target = $region33
    $region32: #{attention_model_pallas.1} parent=1 // pred_region
      _
    $region33: #{attention_model_pallas.1} parent=1 // pred_fallthru
      _
    // Predicated region
    $region34: #{attention_model_pallas.1} parent=1 // pred_check
      _
    $region35: #{attention_model_pallas.1} parent=1 // pred_check_branch
      %34 = sbr.rel (0) target = $region37
    $region36: #{attention_model_pallas.1} parent=1 // pred_region
      _
    $region37: #{attention_model_pallas.1} parent=1 // pred_fallthru
      _
    %v35 = vld [vmem:[%s0] sm:$0xff]
    %v36 = vld [vmem:[%s0 + $0x8] sm:$0xff]
    %v37 = vld [vmem:[%s0 + $0x10] sm:$0xff]
    %v38 = vld [vmem:[%s0 + $0x18] sm:$0xff]
    %v39 = vld [vmem:[%s0 + $0x20] sm:$0xff]
    %v40 = vld [vmem:[%s0 + $0x28] sm:$0xff]
    %v41 = vld [vmem:[%s0 + $0x30] sm:$0xff]
    %v42 = vld [vmem:[%s0 + $0x38] sm:$0xff]
    %v43 = vld [vmem:[%s0 + $0x40] sm:$0xff]
    %v44 = vld [vmem:[%s0 + $0x48] sm:$0xff]
    %v45 = vld [vmem:[%s0 + $0x50] sm:$0xff]
    %v46 = vld [vmem:[%s0 + $0x58] sm:$0xff]
    %v47 = vld [vmem:[%s0 + $0x60] sm:$0xff]
    %v48 = vld [vmem:[%s0 + $0x68] sm:$0xff]
    %v49 = vld [vmem:[%s0 + $0x70] sm:$0xff]
    %v50 = vld [vmem:[%s0 + $0x78] sm:$0xff]
    %v51 = vld [vmem:[%s1] sm:$0xff]
    %v52 = vld [vmem:[%s1 + $0x8] sm:$0x1f]
    %v53 = vld [vmem:[%s2] sm:$0x1]
    %v55 = vlaneseq
    %v56 = vshrl.u32 %v55, 7
    %v57 = vsub.s32 0, %v56
    %v58 = vrot.slane %v53, %v57
    %vm60 = vcmask 105472
    %v62 = vsel %vm60, %v35, 0
    %v65 = vsel %vm60, %v36, 0
    %v68 = vsel %vm60, %v37, 0
    %v71 = vsel %vm60, %v38, 0
    %v74 = vsel %vm60, %v39, 0
    %v77 = vsel %vm60, %v40, 0
    %v80 = vsel %vm60, %v41, 0
    %v83 = vsel %vm60, %v42, 0
    %v86 = vsel %vm60, %v43, 0
    %v89 = vsel %vm60, %v44, 0
    %v92 = vsel %vm60, %v45, 0
    %v95 = vsel %vm60, %v46, 0
    %v98 = vsel %vm60, %v47, 0
    %v101 = vsel %vm60, %v48, 0
    %v104 = vsel %vm60, %v49, 0
    %v107 = vsel %vm60, %v50, 0
    %vm109 = vcmask 1044480
    %v111 = vsel %vm109, %v52, 0
    %113 = vmatprep.subr.mxu0 0.0
    %114 = vmatpush1.msra.mxu0 0.0
    %115 = vmatprep.subr.mxu0 0.0
    %116 = vmatpush1.msra.mxu0 0.0
    %117 = vmatprep.subr.mxu0 0.0
    %118 = vmatpush1.msra.mxu0 0.0
    %119 = vmatprep.subr.mxu0 0.0
    %120 = vmatpush1.msra.mxu0 0.0
    %121 = vmatprep.subr.mxu0 0.0
    %122 = vmatpush1.msra.mxu0 0.0
    %123 = vmatprep.subr.mxu0 0.0
    %124 = vmatpush1.msra.mxu0 0.0
    %125 = vmatprep.subr.mxu0 0.0
    %126 = vmatpush1.msra.mxu0 0.0
    %127 = vmatprep.subr.mxu0 0.0
    %128 = vmatpush1.msra.mxu0 0.0
    %129 = vmatprep.subr.mxu0 0.0
    %130 = vmatpush1.msra.mxu0 0.0
    %131 = vmatprep.subr.mxu0 0.0
    %132 = vmatpush1.msra.mxu0 0.0
    %133 = vmatprep.subr.mxu0 0.0
    %134 = vmatpush1.msra.mxu0 0.0
    %135 = vmatprep.subr.mxu0 0.0
    %136 = vmatpush1.msra.mxu0 0.0
    %137 = vmatprep.subr.mxu0 0.0
    %138 = vmatpush1.msra.mxu0 0.0
    %139 = vmatprep.subr.mxu0 0.0
    %140 = vmatpush1.msra.mxu0 0.0
    %141 = vmatprep.subr.mxu0 0.0
    %142 = vmatpush1.msra.mxu0 %v111
    %143 = vmatprep.subr.mxu0 0.0
    %144 = vmatpush1.msra.mxu0 %v51
    %145 = vmatprep.subr.mxu0 0.0
    %146 = vmatpush2.msra.mxu0 0.0
    %147 = vmatprep.subr.mxu0 0.0
    %148 = vmatpush2.msra.mxu0 0.0
    %149 = vmatprep.subr.mxu0 0.0
    %150 = vmatpush2.msra.mxu0 0.0
    %151 = vmatprep.subr.mxu0 0.0
    %152 = vmatpush2.msra.mxu0 0.0
    %153 = vmatprep.subr.mxu0 0.0
    %154 = vmatpush2.msra.mxu0 0.0
    %155 = vmatprep.subr.mxu0 0.0
    %156 = vmatpush2.msra.mxu0 0.0
    %157 = vmatprep.subr.mxu0 0.0
    %158 = vmatpush2.msra.mxu0 0.0
    %159 = vmatprep.subr.mxu0 0.0
    %160 = vmatpush2.msra.mxu0 0.0
    %161 = vmatprep.subr.mxu0 0.0
    %162 = vmatpush2.msra.mxu0 0.0
    %163 = vmatprep.subr.mxu0 0.0
    %164 = vmatpush2.msra.mxu0 0.0
    %165 = vmatprep.subr.mxu0 0.0
    %166 = vmatpush2.msra.mxu0 0.0
    %167 = vmatprep.subr.mxu0 0.0
    %168 = vmatpush2.msra.mxu0 0.0
    %169 = vmatprep.subr.mxu0 0.0
    %170 = vmatpush2.msra.mxu0 0.0
    %171 = vmatprep.subr.mxu0 0.0
    %172 = vmatpush2.msra.mxu0 0.0
    %173 = vmatprep.subr.mxu0 0.0
    %174 = vmatpush2.msra.mxu0 0.0
    %175 = vmatprep.subr.mxu0 0.0
    %176 = vmatpush2.msra.mxu0 0.0
    %177 = vmatprep.mubr.f32.mxu0 0.0
    %178 = vmatmul.mubr.f32.gmra.mxu0 %v62
    %v179 = vpop.f32.mrf.mxu0
    %v180 = vadd.f32 %v58, %v179
    %v181 = vpop.f32.mrf.mxu0
    %182 = vmatprep.mubr.f32.mxu0 0.0
    %183 = vmatmul.mubr.f32.gmra.mxu0 %v65
    %v184 = vpop.f32.mrf.mxu0
    %v185 = vadd.f32 %v58, %v184
    %v186 = vpop.f32.mrf.mxu0
    %187 = vmatprep.mubr.f32.mxu0 0.0
    %188 = vmatmul.mubr.f32.gmra.mxu0 %v68
    %v189 = vpop.f32.mrf.mxu0
    %v190 = vadd.f32 %v58, %v189
    %v191 = vpop.f32.mrf.mxu0
    %192 = vmatprep.mubr.f32.mxu0 0.0
    %193 = vmatmul.mubr.f32.gmra.mxu0 %v71
    %v194 = vpop.f32.mrf.mxu0
    %v195 = vadd.f32 %v58, %v194
    %v196 = vpop.f32.mrf.mxu0
    %197 = vmatprep.mubr.f32.mxu0 0.0
    %198 = vmatmul.mubr.f32.gmra.mxu0 %v74
    %v199 = vpop.f32.mrf.mxu0
    %v200 = vadd.f32 %v58, %v199
    %v201 = vpop.f32.mrf.mxu0
    %202 = vmatprep.mubr.f32.mxu0 0.0
    %203 = vmatmul.mubr.f32.gmra.mxu0 %v77
    %v204 = vpop.f32.mrf.mxu0
    %v205 = vadd.f32 %v58, %v204
    %v206 = vpop.f32.mrf.mxu0
    %207 = vmatprep.mubr.f32.mxu0 0.0
    %208 = vmatmul.mubr.f32.gmra.mxu0 %v80
    %v209 = vpop.f32.mrf.mxu0
    %v210 = vadd.f32 %v58, %v209
    %v211 = vpop.f32.mrf.mxu0
    %212 = vmatprep.mubr.f32.mxu0 0.0
    %213 = vmatmul.mubr.f32.gmra.mxu0 %v83
    %v214 = vpop.f32.mrf.mxu0
    %v215 = vadd.f32 %v58, %v214
    %v216 = vpop.f32.mrf.mxu0
    %217 = vmatprep.mubr.f32.mxu0 0.0
    %218 = vmatmul.mubr.f32.gmra.mxu0 %v86
    %v219 = vpop.f32.mrf.mxu0
    %v220 = vadd.f32 %v58, %v219
    %v221 = vpop.f32.mrf.mxu0
    %222 = vmatprep.mubr.f32.mxu0 0.0
    %223 = vmatmul.mubr.f32.gmra.mxu0 %v89
    %v224 = vpop.f32.mrf.mxu0
    %v225 = vadd.f32 %v58, %v224
    %v226 = vpop.f32.mrf.mxu0
    %227 = vmatprep.mubr.f32.mxu0 0.0
    %228 = vmatmul.mubr.f32.gmra.mxu0 %v92
    %v229 = vpop.f32.mrf.mxu0
    %v230 = vadd.f32 %v58, %v229
    %v231 = vpop.f32.mrf.mxu0
    %232 = vmatprep.mubr.f32.mxu0 0.0
    %233 = vmatmul.mubr.f32.gmra.mxu0 %v95
    %v234 = vpop.f32.mrf.mxu0
    %v235 = vadd.f32 %v58, %v234
    %v236 = vpop.f32.mrf.mxu0
    %237 = vmatprep.mubr.f32.mxu0 0.0
    %238 = vmatmul.mubr.f32.gmra.mxu0 %v98
    %v239 = vpop.f32.mrf.mxu0
    %v240 = vadd.f32 %v58, %v239
    %v241 = vpop.f32.mrf.mxu0
    %242 = vmatprep.mubr.f32.mxu0 0.0
    %243 = vmatmul.mubr.f32.gmra.mxu0 %v101
    %v244 = vpop.f32.mrf.mxu0
    %v245 = vadd.f32 %v58, %v244
    %v246 = vpop.f32.mrf.mxu0
    %247 = vmatprep.mubr.f32.mxu0 0.0
    %248 = vmatmul.mubr.f32.gmra.mxu0 %v104
    %v249 = vpop.f32.mrf.mxu0
    %v250 = vadd.f32 %v58, %v249
    %v251 = vpop.f32.mrf.mxu0
    %252 = vmatprep.mubr.f32.mxu0 0.0
    %253 = vmatmul.mubr.f32.gmra.mxu0 %v107
    %v254 = vpop.f32.mrf.mxu0
    %v255 = vadd.f32 %v58, %v254
    %v256 = vpop.f32.mrf.mxu0
    %257 = vdwg.mxu0
    %v258 = vmax.f32 %v180, 0.0
    %v259 = vmax.f32 %v185, 0.0
    %v260 = vmax.f32 %v190, 0.0
    %v261 = vmax.f32 %v195, 0.0
    %v262 = vmax.f32 %v200, 0.0
    %v263 = vmax.f32 %v205, 0.0
    %v264 = vmax.f32 %v210, 0.0
    %v265 = vmax.f32 %v215, 0.0
    %v266 = vmax.f32 %v220, 0.0
    %v267 = vmax.f32 %v225, 0.0
    %v268 = vmax.f32 %v230, 0.0
    %v269 = vmax.f32 %v235, 0.0
    %v270 = vmax.f32 %v240, 0.0
    %v271 = vmax.f32 %v245, 0.0
    %v272 = vmax.f32 %v250, 0.0
    %v273 = vmax.f32 %v255, 0.0
    %v274 = vld [vmem:[%s3] sm:$0xff]
    %v275 = vld [vmem:[%s3 + $0x8] sm:$0xff]
    %v276 = vld [vmem:[%s3 + $0x10] sm:$0xff]
    %v277 = vld [vmem:[%s3 + $0x18] sm:$0xff]
    %v278 = vld [vmem:[%s3 + $0x20] sm:$0xff]
    %v279 = vld [vmem:[%s3 + $0x28] sm:$0xff]
    %v280 = vld [vmem:[%s3 + $0x30] sm:$0xff]
    %v281 = vld [vmem:[%s3 + $0x38] sm:$0xff]
    %v282 = vld [vmem:[%s3 + $0x40] sm:$0xff]
    %v283 = vld [vmem:[%s3 + $0x48] sm:$0xff]
    %v284 = vld [vmem:[%s3 + $0x50] sm:$0xff]
    %v285 = vld [vmem:[%s3 + $0x58] sm:$0xff]
    %v286 = vld [vmem:[%s3 + $0x60] sm:$0xff]
    %v287 = vld [vmem:[%s3 + $0x68] sm:$0xff]
    %v288 = vld [vmem:[%s3 + $0x70] sm:$0xff]
    %v289 = vld [vmem:[%s3 + $0x78] sm:$0xff]
    %v290 = vld [vmem:[%s3 + $0x80] sm:$0xff]
    %v291 = vld [vmem:[%s3 + $0x88] sm:$0xff]
    %v292 = vld [vmem:[%s3 + $0x90] sm:$0xff]
    %v293 = vld [vmem:[%s3 + $0x98] sm:$0xff]
    %v294 = vld [vmem:[%s3 + $0xa0] sm:$0xff]
    %v295 = vld [vmem:[%s3 + $0xa8] sm:$0xff]
    %v296 = vld [vmem:[%s3 + $0xb0] sm:$0xff]
    %v297 = vld [vmem:[%s3 + $0xb8] sm:$0xff]
    %v298 = vld [vmem:[%s3 + $0xc0] sm:$0xff]
    %v299 = vld [vmem:[%s3 + $0xc8] sm:$0xff]
    %v300 = vld [vmem:[%s3 + $0xd0] sm:$0xff]
    %v301 = vld [vmem:[%s3 + $0xd8] sm:$0xff]
    %v302 = vld [vmem:[%s3 + $0xe0] sm:$0xff]
    %v303 = vld [vmem:[%s3 + $0xe8] sm:$0xff]
    %v304 = vld [vmem:[%s3 + $0xf0] sm:$0xff]
    %v305 = vld [vmem:[%s3 + $0xf8] sm:$0xff]
    %v306 = vld [vmem:[%s5] sm:$0xf]
    %v308 = vlaneseq
    %v309 = vshrl.u32 %v308, 7
    %v310 = vsub.s32 0, %v309
    %v311 = vrot.slane %v306, %v310
    %v312 = vlaneseq
    %v313 = vshrl.u32 %v312, 7
    %v314 = vsub.s32 1, %v313
    %v315 = vrot.slane %v306, %v314
    %v316 = vlaneseq
    %v317 = vshrl.u32 %v316, 7
    %v318 = vsub.s32 2, %v317
    %v319 = vrot.slane %v306, %v318
    %v320 = vlaneseq
    %v321 = vshrl.u32 %v320, 7
    %v322 = vsub.s32 3, %v321
    %v323 = vrot.slane %v306, %v322
    %vm328 = vcmask 523264
    %v330 = vsel %vm328, %v258, 0
    %v333 = vsel %vm328, %v259, 0
    %v336 = vsel %vm328, %v260, 0
    %v339 = vsel %vm328, %v261, 0
    %v342 = vsel %vm328, %v262, 0
    %v345 = vsel %vm328, %v263, 0
    %v348 = vsel %vm328, %v264, 0
    %v351 = vsel %vm328, %v265, 0
    %v354 = vsel %vm328, %v266, 0
    %v357 = vsel %vm328, %v267, 0
    %v360 = vsel %vm328, %v268, 0
    %v363 = vsel %vm328, %v269, 0
    %v366 = vsel %vm328, %v270, 0
    %v369 = vsel %vm328, %v271, 0
    %v372 = vsel %vm328, %v272, 0
    %v375 = vsel %vm328, %v273, 0
    %377 = vmatprep.subr.mxu0 0.0
    %378 = vmatpush1.msra.mxu0 0.0
    %379 = vmatprep.subr.mxu0 0.0
    %380 = vmatpush1.msra.mxu0 0.0
    %381 = vmatprep.subr.mxu0 0.0
    %382 = vmatpush1.msra.mxu0 0.0
    %383 = vmatprep.subr.mxu0 0.0
    %384 = vmatpush1.msra.mxu0 0.0
    %385 = vmatprep.subr.mxu0 0.0
    %386 = vmatpush1.msra.mxu0 0.0
    %387 = vmatprep.subr.mxu0 0.0
    %388 = vmatpush1.msra.mxu0 0.0
    %389 = vmatprep.subr.mxu0 0.0
    %390 = vmatpush1.msra.mxu0 0.0
    %391 = vmatprep.subr.mxu0 0.0
    %392 = vmatpush1.msra.mxu0 0.0
    %393 = vmatprep.subr.mxu0 %v303
    %394 = vmatpush1.msra.mxu0 %v302
    %395 = vmatprep.subr.mxu0 %v299
    %396 = vmatpush1.msra.mxu0 %v298
    %397 = vmatprep.subr.mxu0 %v295
    %398 = vmatpush1.msra.mxu0 %v294
    %399 = vmatprep.subr.mxu0 %v291
    %400 = vmatpush1.msra.mxu0 %v290
    %401 = vmatprep.subr.mxu0 %v287
    %402 = vmatpush1.msra.mxu0 %v286
    %403 = vmatprep.subr.mxu0 %v283
    %404 = vmatpush1.msra.mxu0 %v282
    %405 = vmatprep.subr.mxu0 %v279
    %406 = vmatpush1.msra.mxu0 %v278
    %407 = vmatprep.subr.mxu0 %v275
    %408 = vmatpush1.msra.mxu0 %v274
    %409 = vmatprep.subr.mxu0 0.0
    %410 = vmatpush2.msra.mxu0 0.0
    %411 = vmatprep.subr.mxu0 0.0
    %412 = vmatpush2.msra.mxu0 0.0
    %413 = vmatprep.subr.mxu0 0.0
    %414 = vmatpush2.msra.mxu0 0.0
    %415 = vmatprep.subr.mxu0 0.0
    %416 = vmatpush2.msra.mxu0 0.0
    %417 = vmatprep.subr.mxu0 0.0
    %418 = vmatpush2.msra.mxu0 0.0
    %419 = vmatprep.subr.mxu0 0.0
    %420 = vmatpush2.msra.mxu0 0.0
    %421 = vmatprep.subr.mxu0 0.0
    %422 = vmatpush2.msra.mxu0 0.0
    %423 = vmatprep.subr.mxu0 0.0
    %424 = vmatpush2.msra.mxu0 0.0
    %425 = vmatprep.subr.mxu0 0.0
    %426 = vmatpush2.msra.mxu0 0.0
    %427 = vmatprep.subr.mxu0 0.0
    %428 = vmatpush2.msra.mxu0 0.0
    %429 = vmatprep.subr.mxu0 0.0
    %430 = vmatpush2.msra.mxu0 0.0
    %431 = vmatprep.subr.mxu0 0.0
    %432 = vmatpush2.msra.mxu0 0.0
    %433 = vmatprep.subr.mxu0 0.0
    %434 = vmatpush2.msra.mxu0 0.0
    %435 = vmatprep.subr.mxu0 0.0
    %436 = vmatpush2.msra.mxu0 0.0
    %437 = vmatprep.subr.mxu0 0.0
    %438 = vmatpush2.msra.mxu0 0.0
    %439 = vmatprep.subr.mxu0 0.0
    %440 = vmatpush2.msra.mxu0 0.0
    %441 = vmatprep.mubr.f32.mxu0 0.0
    %442 = vmatmul.mubr.f32.gmra.mxu0 %v330
    %v443 = vpop.f32.mrf.mxu0
    %v444 = vadd.f32 %v311, %v443
    %v445 = vpop.f32.mrf.mxu0
    %v446 = vadd.f32 %v315, %v445
    %447 = vmatprep.mubr.f32.mxu0 0.0
    %448 = vmatmul.mubr.f32.gmra.mxu0 %v333
    %v449 = vpop.f32.mrf.mxu0
    %v450 = vadd.f32 %v311, %v449
    %v451 = vpop.f32.mrf.mxu0
    %v452 = vadd.f32 %v315, %v451
    %453 = vmatprep.mubr.f32.mxu0 0.0
    %454 = vmatmul.mubr.f32.gmra.mxu0 %v336
    %v455 = vpop.f32.mrf.mxu0
    %v456 = vadd.f32 %v311, %v455
    %v457 = vpop.f32.mrf.mxu0
    %v458 = vadd.f32 %v315, %v457
    %459 = vmatprep.mubr.f32.mxu0 0.0
    %460 = vmatmul.mubr.f32.gmra.mxu0 %v339
    %v461 = vpop.f32.mrf.mxu0
    %v462 = vadd.f32 %v311, %v461
    %v463 = vpop.f32.mrf.mxu0
    %v464 = vadd.f32 %v315, %v463
    %465 = vmatprep.mubr.f32.mxu0 0.0
    %466 = vmatmul.mubr.f32.gmra.mxu0 %v342
    %v467 = vpop.f32.mrf.mxu0
    %v468 = vadd.f32 %v311, %v467
    %v469 = vpop.f32.mrf.mxu0
    %v470 = vadd.f32 %v315, %v469
    %471 = vmatprep.mubr.f32.mxu0 0.0
    %472 = vmatmul.mubr.f32.gmra.mxu0 %v345
    %v473 = vpop.f32.mrf.mxu0
    %v474 = vadd.f32 %v311, %v473
    %v475 = vpop.f32.mrf.mxu0
    %v476 = vadd.f32 %v315, %v475
    %477 = vmatprep.mubr.f32.mxu0 0.0
    %478 = vmatmul.mubr.f32.gmra.mxu0 %v348
    %v479 = vpop.f32.mrf.mxu0
    %v480 = vadd.f32 %v311, %v479
    %v481 = vpop.f32.mrf.mxu0
    %v482 = vadd.f32 %v315, %v481
    %483 = vmatprep.mubr.f32.mxu0 0.0
    %484 = vmatmul.mubr.f32.gmra.mxu0 %v351
    %v485 = vpop.f32.mrf.mxu0
    %v486 = vadd.f32 %v311, %v485
    %v487 = vpop.f32.mrf.mxu0
    %v488 = vadd.f32 %v315, %v487
    %489 = vmatprep.mubr.f32.mxu0 0.0
    %490 = vmatmul.mubr.f32.gmra.mxu0 %v354
    %v491 = vpop.f32.mrf.mxu0
    %v492 = vadd.f32 %v311, %v491
    %v493 = vpop.f32.mrf.mxu0
    %v494 = vadd.f32 %v315, %v493
    %495 = vmatprep.mubr.f32.mxu0 0.0
    %496 = vmatmul.mubr.f32.gmra.mxu0 %v357
    %v497 = vpop.f32.mrf.mxu0
    %v498 = vadd.f32 %v311, %v497
    %v499 = vpop.f32.mrf.mxu0
    %v500 = vadd.f32 %v315, %v499
    %501 = vmatprep.mubr.f32.mxu0 0.0
    %502 = vmatmul.mubr.f32.gmra.mxu0 %v360
    %v503 = vpop.f32.mrf.mxu0
    %v504 = vadd.f32 %v311, %v503
    %v505 = vpop.f32.mrf.mxu0
    %v506 = vadd.f32 %v315, %v505
    %507 = vmatprep.mubr.f32.mxu0 0.0
    %508 = vmatmul.mubr.f32.gmra.mxu0 %v363
    %v509 = vpop.f32.mrf.mxu0
    %v510 = vadd.f32 %v311, %v509
    %v511 = vpop.f32.mrf.mxu0
    %v512 = vadd.f32 %v315, %v511
    %513 = vmatprep.mubr.f32.mxu0 0.0
    %514 = vmatmul.mubr.f32.gmra.mxu0 %v366
    %v515 = vpop.f32.mrf.mxu0
    %v516 = vadd.f32 %v311, %v515
    %v517 = vpop.f32.mrf.mxu0
    %v518 = vadd.f32 %v315, %v517
    %519 = vmatprep.mubr.f32.mxu0 0.0
    %520 = vmatmul.mubr.f32.gmra.mxu0 %v369
    %v521 = vpop.f32.mrf.mxu0
    %v522 = vadd.f32 %v311, %v521
    %v523 = vpop.f32.mrf.mxu0
    %v524 = vadd.f32 %v315, %v523
    %525 = vmatprep.mubr.f32.mxu0 0.0
    %526 = vmatmul.mubr.f32.gmra.mxu0 %v372
    %v527 = vpop.f32.mrf.mxu0
    %v528 = vadd.f32 %v311, %v527
    %v529 = vpop.f32.mrf.mxu0
    %v530 = vadd.f32 %v315, %v529
    %531 = vmatprep.mubr.f32.mxu0 0.0
    %532 = vmatmul.mubr.f32.gmra.mxu0 %v375
    %v533 = vpop.f32.mrf.mxu0
    %v534 = vadd.f32 %v311, %v533
    %v535 = vpop.f32.mrf.mxu0
    %v536 = vadd.f32 %v315, %v535
    %537 = vdwg.mxu0
    %538 = vmatprep.subr.mxu0 0.0
    %539 = vmatpush1.msra.mxu0 0.0
    %540 = vmatprep.subr.mxu0 0.0
    %541 = vmatpush1.msra.mxu0 0.0
    %542 = vmatprep.subr.mxu0 0.0
    %543 = vmatpush1.msra.mxu0 0.0
    %544 = vmatprep.subr.mxu0 0.0
    %545 = vmatpush1.msra.mxu0 0.0
    %546 = vmatprep.subr.mxu0 0.0
    %547 = vmatpush1.msra.mxu0 0.0
    %548 = vmatprep.subr.mxu0 0.0
    %549 = vmatpush1.msra.mxu0 0.0
    %550 = vmatprep.subr.mxu0 0.0
    %551 = vmatpush1.msra.mxu0 0.0
    %552 = vmatprep.subr.mxu0 0.0
    %553 = vmatpush1.msra.mxu0 0.0
    %554 = vmatprep.subr.mxu0 %v305
    %555 = vmatpush1.msra.mxu0 %v304
    %556 = vmatprep.subr.mxu0 %v301
    %557 = vmatpush1.msra.mxu0 %v300
    %558 = vmatprep.subr.mxu0 %v297
    %559 = vmatpush1.msra.mxu0 %v296
    %560 = vmatprep.subr.mxu0 %v293
    %561 = vmatpush1.msra.mxu0 %v292
    %562 = vmatprep.subr.mxu0 %v289
    %563 = vmatpush1.msra.mxu0 %v288
    %564 = vmatprep.subr.mxu0 %v285
    %565 = vmatpush1.msra.mxu0 %v284
    %566 = vmatprep.subr.mxu0 %v281
    %567 = vmatpush1.msra.mxu0 %v280
    %568 = vmatprep.subr.mxu0 %v277
    %569 = vmatpush1.msra.mxu0 %v276
    %570 = vmatprep.subr.mxu0 0.0
    %571 = vmatpush2.msra.mxu0 0.0
    %572 = vmatprep.subr.mxu0 0.0
    %573 = vmatpush2.msra.mxu0 0.0
    %574 = vmatprep.subr.mxu0 0.0
    %575 = vmatpush2.msra.mxu0 0.0
    %576 = vmatprep.subr.mxu0 0.0
    %577 = vmatpush2.msra.mxu0 0.0
    %578 = vmatprep.subr.mxu0 0.0
    %579 = vmatpush2.msra.mxu0 0.0
    %580 = vmatprep.subr.mxu0 0.0
    %581 = vmatpush2.msra.mxu0 0.0
    %582 = vmatprep.subr.mxu0 0.0
    %583 = vmatpush2.msra.mxu0 0.0
    %584 = vmatprep.subr.mxu0 0.0
    %585 = vmatpush2.msra.mxu0 0.0
    %586 = vmatprep.subr.mxu0 0.0
    %587 = vmatpush2.msra.mxu0 0.0
    %588 = vmatprep.subr.mxu0 0.0
    %589 = vmatpush2.msra.mxu0 0.0
    %590 = vmatprep.subr.mxu0 0.0
    %591 = vmatpush2.msra.mxu0 0.0
    %592 = vmatprep.subr.mxu0 0.0
    %593 = vmatpush2.msra.mxu0 0.0
    %594 = vmatprep.subr.mxu0 0.0
    %595 = vmatpush2.msra.mxu0 0.0
    %596 = vmatprep.subr.mxu0 0.0
    %597 = vmatpush2.msra.mxu0 0.0
    %598 = vmatprep.subr.mxu0 0.0
    %599 = vmatpush2.msra.mxu0 0.0
    %600 = vmatprep.subr.mxu0 0.0
    %601 = vmatpush2.msra.mxu0 0.0
    %602 = vmatprep.mubr.f32.mxu0 0.0
    %603 = vmatmul.mubr.f32.gmra.mxu0 %v330
    %v604 = vpop.f32.mrf.mxu0
    %v605 = vadd.f32 %v319, %v604
    %v606 = vpop.f32.mrf.mxu0
    %v607 = vadd.f32 %v323, %v606
    %608 = vmatprep.mubr.f32.mxu0 0.0
    %609 = vmatmul.mubr.f32.gmra.mxu0 %v333
    %v610 = vpop.f32.mrf.mxu0
    %v611 = vadd.f32 %v319, %v610
    %v612 = vpop.f32.mrf.mxu0
    %v613 = vadd.f32 %v323, %v612
    %614 = vmatprep.mubr.f32.mxu0 0.0
    %615 = vmatmul.mubr.f32.gmra.mxu0 %v336
    %v616 = vpop.f32.mrf.mxu0
    %v617 = vadd.f32 %v319, %v616
    %v618 = vpop.f32.mrf.mxu0
    %v619 = vadd.f32 %v323, %v618
    %620 = vmatprep.mubr.f32.mxu0 0.0
    %621 = vmatmul.mubr.f32.gmra.mxu0 %v339
    %v622 = vpop.f32.mrf.mxu0
    %v623 = vadd.f32 %v319, %v622
    %v624 = vpop.f32.mrf.mxu0
    %v625 = vadd.f32 %v323, %v624
    %626 = vmatprep.mubr.f32.mxu0 0.0
    %627 = vmatmul.mubr.f32.gmra.mxu0 %v342
    %v628 = vpop.f32.mrf.mxu0
    %v629 = vadd.f32 %v319, %v628
    %v630 = vpop.f32.mrf.mxu0
    %v631 = vadd.f32 %v323, %v630
    %632 = vmatprep.mubr.f32.mxu0 0.0
    %633 = vmatmul.mubr.f32.gmra.mxu0 %v345
    %v634 = vpop.f32.mrf.mxu0
    %v635 = vadd.f32 %v319, %v634
    %v636 = vpop.f32.mrf.mxu0
    %v637 = vadd.f32 %v323, %v636
    %638 = vmatprep.mubr.f32.mxu0 0.0
    %639 = vmatmul.mubr.f32.gmra.mxu0 %v348
    %v640 = vpop.f32.mrf.mxu0
    %v641 = vadd.f32 %v319, %v640
    %v642 = vpop.f32.mrf.mxu0
    %v643 = vadd.f32 %v323, %v642
    %644 = vmatprep.mubr.f32.mxu0 0.0
    %645 = vmatmul.mubr.f32.gmra.mxu0 %v351
    %v646 = vpop.f32.mrf.mxu0
    %v647 = vadd.f32 %v319, %v646
    %v648 = vpop.f32.mrf.mxu0
    %v649 = vadd.f32 %v323, %v648
    %650 = vmatprep.mubr.f32.mxu0 0.0
    %651 = vmatmul.mubr.f32.gmra.mxu0 %v354
    %v652 = vpop.f32.mrf.mxu0
    %v653 = vadd.f32 %v319, %v652
    %v654 = vpop.f32.mrf.mxu0
    %v655 = vadd.f32 %v323, %v654
    %656 = vmatprep.mubr.f32.mxu0 0.0
    %657 = vmatmul.mubr.f32.gmra.mxu0 %v357
    %v658 = vpop.f32.mrf.mxu0
    %v659 = vadd.f32 %v319, %v658
    %v660 = vpop.f32.mrf.mxu0
    %v661 = vadd.f32 %v323, %v660
    %662 = vmatprep.mubr.f32.mxu0 0.0
    %663 = vmatmul.mubr.f32.gmra.mxu0 %v360
    %v664 = vpop.f32.mrf.mxu0
    %v665 = vadd.f32 %v319, %v664
    %v666 = vpop.f32.mrf.mxu0
    %v667 = vadd.f32 %v323, %v666
    %668 = vmatprep.mubr.f32.mxu0 0.0
    %669 = vmatmul.mubr.f32.gmra.mxu0 %v363
    %v670 = vpop.f32.mrf.mxu0
    %v671 = vadd.f32 %v319, %v670
    %v672 = vpop.f32.mrf.mxu0
    %v673 = vadd.f32 %v323, %v672
    %674 = vmatprep.mubr.f32.mxu0 0.0
    %675 = vmatmul.mubr.f32.gmra.mxu0 %v366
    %v676 = vpop.f32.mrf.mxu0
    %v677 = vadd.f32 %v319, %v676
    %v678 = vpop.f32.mrf.mxu0
    %v679 = vadd.f32 %v323, %v678
    %680 = vmatprep.mubr.f32.mxu0 0.0
    %681 = vmatmul.mubr.f32.gmra.mxu0 %v369
    %v682 = vpop.f32.mrf.mxu0
    %v683 = vadd.f32 %v319, %v682
    %v684 = vpop.f32.mrf.mxu0
    %v685 = vadd.f32 %v323, %v684
    %686 = vmatprep.mubr.f32.mxu0 0.0
    %687 = vmatmul.mubr.f32.gmra.mxu0 %v372
    %v688 = vpop.f32.mrf.mxu0
    %v689 = vadd.f32 %v319, %v688
    %v690 = vpop.f32.mrf.mxu0
    %v691 = vadd.f32 %v323, %v690
    %692 = vmatprep.mubr.f32.mxu0 0.0
    %693 = vmatmul.mubr.f32.gmra.mxu0 %v375
    %v694 = vpop.f32.mrf.mxu0
    %v695 = vadd.f32 %v319, %v694
    %v696 = vpop.f32.mrf.mxu0
    %v697 = vadd.f32 %v323, %v696
    %698 = vdwg.mxu0
    %699 = vst [vmem:[#allocation2] sm:$0xff] %v444
    %700 = vst [vmem:[#allocation2 + $0x8] sm:$0xff] %v446
    %701 = vst [vmem:[#allocation2 + $0x10] sm:$0xff] %v605
    %702 = vst [vmem:[#allocation2 + $0x18] sm:$0xff] %v607
    %703 = vst [vmem:[#allocation2 + $0x20] sm:$0xff] %v450
    %704 = vst [vmem:[#allocation2 + $0x28] sm:$0xff] %v452
    %705 = vst [vmem:[#allocation2 + $0x30] sm:$0xff] %v611
    %706 = vst [vmem:[#allocation2 + $0x38] sm:$0xff] %v613
    %707 = vst [vmem:[#allocation2 + $0x40] sm:$0xff] %v456
    %708 = vst [vmem:[#allocation2 + $0x48] sm:$0xff] %v458
    %709 = vst [vmem:[#allocation2 + $0x50] sm:$0xff] %v617
    %710 = vst [vmem:[#allocation2 + $0x58] sm:$0xff] %v619
    %711 = vst [vmem:[#allocation2 + $0x60] sm:$0xff] %v462
    %712 = vst [vmem:[#allocation2 + $0x68] sm:$0xff] %v464
    %713 = vst [vmem:[#allocation2 + $0x70] sm:$0xff] %v623
    %714 = vst [vmem:[#allocation2 + $0x78] sm:$0xff] %v625
    %715 = vst [vmem:[#allocation2 + $0x80] sm:$0xff] %v468
    %716 = vst [vmem:[#allocation2 + $0x88] sm:$0xff] %v470
    %717 = vst [vmem:[#allocation2 + $0x90] sm:$0xff] %v629
    %718 = vst [vmem:[#allocation2 + $0x98] sm:$0xff] %v631
    %719 = vst [vmem:[#allocation2 + $0xa0] sm:$0xff] %v474
    %720 = vst [vmem:[#allocation2 + $0xa8] sm:$0xff] %v476
    %721 = vst [vmem:[#allocation2 + $0xb0] sm:$0xff] %v635
    %722 = vst [vmem:[#allocation2 + $0xb8] sm:$0xff] %v637
    %723 = vst [vmem:[#allocation2 + $0xc0] sm:$0xff] %v480
    %724 = vst [vmem:[#allocation2 + $0xc8] sm:$0xff] %v482
    %725 = vst [vmem:[#allocation2 + $0xd0] sm:$0xff] %v641
    %726 = vst [vmem:[#allocation2 + $0xd8] sm:$0xff] %v643
    %727 = vst [vmem:[#allocation2 + $0xe0] sm:$0xff] %v486
    %728 = vst [vmem:[#allocation2 + $0xe8] sm:$0xff] %v488
    %729 = vst [vmem:[#allocation2 + $0xf0] sm:$0xff] %v647
    %730 = vst [vmem:[#allocation2 + $0xf8] sm:$0xff] %v649
    %731 = vst [vmem:[#allocation2 + $0x100] sm:$0xff] %v492
    %732 = vst [vmem:[#allocation2 + $0x108] sm:$0xff] %v494
    %733 = vst [vmem:[#allocation2 + $0x110] sm:$0xff] %v653
    %734 = vst [vmem:[#allocation2 + $0x118] sm:$0xff] %v655
    %735 = vst [vmem:[#allocation2 + $0x120] sm:$0xff] %v498
    %736 = vst [vmem:[#allocation2 + $0x128] sm:$0xff] %v500
    %737 = vst [vmem:[#allocation2 + $0x130] sm:$0xff] %v659
    %738 = vst [vmem:[#allocation2 + $0x138] sm:$0xff] %v661
    %739 = vst [vmem:[#allocation2 + $0x140] sm:$0xff] %v504
    %740 = vst [vmem:[#allocation2 + $0x148] sm:$0xff] %v506
    %741 = vst [vmem:[#allocation2 + $0x150] sm:$0xff] %v665
    %742 = vst [vmem:[#allocation2 + $0x158] sm:$0xff] %v667
    %743 = vst [vmem:[#allocation2 + $0x160] sm:$0xff] %v510
    %744 = vst [vmem:[#allocation2 + $0x168] sm:$0xff] %v512
    %745 = vst [vmem:[#allocation2 + $0x170] sm:$0xff] %v671
    %746 = vst [vmem:[#allocation2 + $0x178] sm:$0xff] %v673
    %747 = vst [vmem:[#allocation2 + $0x180] sm:$0xff] %v516
    %748 = vst [vmem:[#allocation2 + $0x188] sm:$0xff] %v518
    %749 = vst [vmem:[#allocation2 + $0x190] sm:$0xff] %v677
    %750 = vst [vmem:[#allocation2 + $0x198] sm:$0xff] %v679
    %751 = vst [vmem:[#allocation2 + $0x1a0] sm:$0xff] %v522
    %752 = vst [vmem:[#allocation2 + $0x1a8] sm:$0xff] %v524
    %753 = vst [vmem:[#allocation2 + $0x1b0] sm:$0xff] %v683
    %754 = vst [vmem:[#allocation2 + $0x1b8] sm:$0xff] %v685
    %755 = vst [vmem:[#allocation2 + $0x1c0] sm:$0xff] %v528
    %756 = vst [vmem:[#allocation2 + $0x1c8] sm:$0xff] %v530
    %757 = vst [vmem:[#allocation2 + $0x1d0] sm:$0xff] %v689
    %758 = vst [vmem:[#allocation2 + $0x1d8] sm:$0xff] %v691
    %759 = vst [vmem:[#allocation2 + $0x1e0] sm:$0xff] %v534
    %760 = vst [vmem:[#allocation2 + $0x1e8] sm:$0xff] %v536
    %761 = vst [vmem:[#allocation2 + $0x1f0] sm:$0xff] %v695
    %762 = vst [vmem:[#allocation2 + $0x1f8] sm:$0xff] %v697
    %v763 = vlaneseq
    %v764 = vand.u32 %v763, 127
    %v765 = vadd.s32 %v764, 128
    %v766 = vadd.s32 %v764, 256
    %v767 = vadd.s32 %v764, 384
    %vm768 = vcmp.lt.s32.totalorder %v764, 0
    %v769 = vsub.s32 0, %v764
    %v770 = vsel %vm768, %v769, %v764
    %v771 = vshrl.u32 %v770, 7
    %v772 = vand.u32 %v770, 127
    %v773 = vsub.s32 0, %v772
    %v774 = vsel %vm768, %v773, %v772
    %vm775 = vcmp.lt.s32.totalorder %v765, 0
    %v776 = vsub.s32 0, %v765
    %v777 = vsel %vm775, %v776, %v765
    %v778 = vshrl.u32 %v777, 7
    %v779 = vand.u32 %v777, 127
    %v780 = vsub.s32 0, %v779
    %v781 = vsel %vm775, %v780, %v779
    %vm782 = vcmp.lt.s32.totalorder %v766, 0
    %v783 = vsub.s32 0, %v766
    %v784 = vsel %vm782, %v783, %v766
    %v785 = vshrl.u32 %v784, 7
    %v786 = vand.u32 %v784, 127
    %v787 = vsub.s32 0, %v786
    %v788 = vsel %vm782, %v787, %v786
    %vm789 = vcmp.lt.s32.totalorder %v767, 0
    %v790 = vsub.s32 0, %v767
    %v791 = vsel %vm789, %v790, %v767
    %v792 = vshrl.u32 %v791, 7
    %v793 = vand.u32 %v791, 127
    %v794 = vsub.s32 0, %v793
    %v795 = vsel %vm789, %v794, %v793
    %vm796 = vcmp.ne.s32.totalorder %v774, 0
    %vm797 = vcmp.ne.s32.totalorder %v781, 0
    %vm798 = vcmp.ne.s32.totalorder %v788, 0
    %vm799 = vcmp.ne.s32.totalorder %v795, 0
    %vm800 = vcmp.lt.s32.totalorder %v774, 0
    %vm801 = vcmp.lt.s32.totalorder %v781, 0
    %vm802 = vcmp.lt.s32.totalorder %v788, 0
    %vm803 = vcmp.lt.s32.totalorder %v795, 0
    %vm804 = vmand %vm800, %vm796
    %vm805 = vmand %vm801, %vm797
    %vm806 = vmand %vm802, %vm798
    %vm807 = vmand %vm803, %vm799
    %v808 = vadd.s32 %v774, 128
    %v809 = vadd.s32 %v781, 128
    %v810 = vadd.s32 %v788, 128
    %v811 = vadd.s32 %v795, 128
    %v812 = vsel %vm804, %v808, %v774
    %v813 = vsel %vm805, %v809, %v781
    %v814 = vsel %vm806, %v810, %v788
    %v815 = vsel %vm807, %v811, %v795
    %vm816 = vcmp.lt.s32.totalorder %v812, 64
    %vm817 = vcmp.lt.s32.totalorder %v813, 64
    %vm818 = vcmp.lt.s32.totalorder %v814, 64
    %vm819 = vcmp.lt.s32.totalorder %v815, 64
    %v820 = vld [vmem:[#allocation2] sm:$0xff]
    %v821 = vld [vmem:[#allocation2 + $0x8] sm:$0xff]
    %v822 = vld [vmem:[#allocation2 + $0x10] sm:$0xff]
    %v823 = vld [vmem:[#allocation2 + $0x18] sm:$0xff]
    %v824 = vld [vmem:[#allocation2 + $0x1e0] sm:$0xff]
    %v825 = vld [vmem:[#allocation2 + $0x1e8] sm:$0xff]
    %v826 = vld [vmem:[#allocation2 + $0x1f0] sm:$0xff]
    %v827 = vld [vmem:[#allocation2 + $0x1f8] sm:$0xff]
    %v828 = vsel %vm816, %v820, %v824
    %v829 = vsel %vm817, %v821, %v825
    %v830 = vsel %vm818, %v822, %v826
    %v831 = vsel %vm819, %v823, %v827
    %v832 = vld [vmem:[%s4] sm:$0xff]
    %v833 = vld [vmem:[%s4 + $0x8] sm:$0xff]
    %v834 = vld [vmem:[%s4 + $0x10] sm:$0xff]
    %v835 = vld [vmem:[%s4 + $0x18] sm:$0xff]
    %v836 = vld [vmem:[%s4 + $0x20] sm:$0xff]
    %v837 = vld [vmem:[%s4 + $0x28] sm:$0xff]
    %v838 = vld [vmem:[%s4 + $0x30] sm:$0xff]
    %v839 = vld [vmem:[%s4 + $0x38] sm:$0xff]
    %v840 = vld [vmem:[%s4 + $0x40] sm:$0xff]
    %v841 = vld [vmem:[%s4 + $0x48] sm:$0xff]
    %v842 = vld [vmem:[%s4 + $0x50] sm:$0xff]
    %v843 = vld [vmem:[%s4 + $0x58] sm:$0xff]
    %v844 = vld [vmem:[%s4 + $0x60] sm:$0xff]
    %v845 = vld [vmem:[%s4 + $0x68] sm:$0xff]
    %v846 = vld [vmem:[%s4 + $0x70] sm:$0xff]
    %v847 = vld [vmem:[%s4 + $0x78] sm:$0xff]
    %v848 = vld [vmem:[%s4 + $0x80] sm:$0xff]
    %v849 = vld [vmem:[%s4 + $0x88] sm:$0xff]
    %v850 = vld [vmem:[%s4 + $0x90] sm:$0xff]
    %v851 = vld [vmem:[%s4 + $0x98] sm:$0xff]
    %v852 = vld [vmem:[%s4 + $0xa0] sm:$0xff]
    %v853 = vld [vmem:[%s4 + $0xa8] sm:$0xff]
    %v854 = vld [vmem:[%s4 + $0xb0] sm:$0xff]
    %v855 = vld [vmem:[%s4 + $0xb8] sm:$0xff]
    %v856 = vld [vmem:[%s4 + $0xc0] sm:$0xff]
    %v857 = vld [vmem:[%s4 + $0xc8] sm:$0xff]
    %v858 = vld [vmem:[%s4 + $0xd0] sm:$0xff]
    %v859 = vld [vmem:[%s4 + $0xd8] sm:$0xff]
    %v860 = vld [vmem:[%s4 + $0xe0] sm:$0xff]
    %v861 = vld [vmem:[%s4 + $0xe8] sm:$0xff]
    %v862 = vld [vmem:[%s4 + $0xf0] sm:$0xff]
    %v863 = vld [vmem:[%s4 + $0xf8] sm:$0xff]
    %v864 = vld [vmem:[%s4 + $0x100] sm:$0xff]
    %v865 = vld [vmem:[%s4 + $0x108] sm:$0xff]
    %v866 = vld [vmem:[%s4 + $0x110] sm:$0xff]
    %v867 = vld [vmem:[%s4 + $0x118] sm:$0xff]
    %v868 = vld [vmem:[%s4 + $0x120] sm:$0xff]
    %v869 = vld [vmem:[%s4 + $0x128] sm:$0xff]
    %v870 = vld [vmem:[%s4 + $0x130] sm:$0xff]
    %v871 = vld [vmem:[%s4 + $0x138] sm:$0xff]
    %v872 = vld [vmem:[%s4 + $0x140] sm:$0xff]
    %v873 = vld [vmem:[%s4 + $0x148] sm:$0xff]
    %v874 = vld [vmem:[%s4 + $0x150] sm:$0xff]
    %v875 = vld [vmem:[%s4 + $0x158] sm:$0xff]
    %v876 = vld [vmem:[%s4 + $0x160] sm:$0xff]
    %v877 = vld [vmem:[%s4 + $0x168] sm:$0xff]
    %v878 = vld [vmem:[%s4 + $0x170] sm:$0xff]
    %v879 = vld [vmem:[%s4 + $0x178] sm:$0xff]
    %v880 = vld [vmem:[%s4 + $0x180] sm:$0xff]
    %v881 = vld [vmem:[%s4 + $0x188] sm:$0xff]
    %v882 = vld [vmem:[%s4 + $0x190] sm:$0xff]
    %v883 = vld [vmem:[%s4 + $0x198] sm:$0xff]
    %v884 = vld [vmem:[%s4 + $0x1a0] sm:$0xff]
    %v885 = vld [vmem:[%s4 + $0x1a8] sm:$0xff]
    %v886 = vld [vmem:[%s4 + $0x1b0] sm:$0xff]
    %v887 = vld [vmem:[%s4 + $0x1b8] sm:$0xff]
    %v888 = vld [vmem:[%s4 + $0x1c0] sm:$0xff]
    %v889 = vld [vmem:[%s4 + $0x1c8] sm:$0xff]
    %v890 = vld [vmem:[%s4 + $0x1d0] sm:$0xff]
    %v891 = vld [vmem:[%s4 + $0x1d8] sm:$0xff]
    %v892 = vld [vmem:[%s4 + $0x1e0] sm:$0xff]
    %v893 = vld [vmem:[%s4 + $0x1e8] sm:$0xff]
    %v894 = vld [vmem:[%s4 + $0x1f0] sm:$0xff]
    %v895 = vld [vmem:[%s4 + $0x1f8] sm:$0xff]
    %896 = vmatprep.subr.mxu0 %v893
    %897 = vmatpush1.msra.mxu0 %v892
    %898 = vmatprep.subr.mxu0 %v889
    %899 = vmatpush1.msra.mxu0 %v888
    %900 = vmatprep.subr.mxu0 %v885
    %901 = vmatpush1.msra.mxu0 %v884
    %902 = vmatprep.subr.mxu0 %v881
    %903 = vmatpush1.msra.mxu0 %v880
    %904 = vmatprep.subr.mxu0 %v877
    %905 = vmatpush1.msra.mxu0 %v876
    %906 = vmatprep.subr.mxu0 %v873
    %907 = vmatpush1.msra.mxu0 %v872
    %908 = vmatprep.subr.mxu0 %v869
    %909 = vmatpush1.msra.mxu0 %v868
    %910 = vmatprep.subr.mxu0 %v865
    %911 = vmatpush1.msra.mxu0 %v864
    %912 = vmatprep.subr.mxu0 %v861
    %913 = vmatpush1.msra.mxu0 %v860
    %914 = vmatprep.subr.mxu0 %v857
    %915 = vmatpush1.msra.mxu0 %v856
    %916 = vmatprep.subr.mxu0 %v853
    %917 = vmatpush1.msra.mxu0 %v852
    %918 = vmatprep.subr.mxu0 %v849
    %919 = vmatpush1.msra.mxu0 %v848
    %920 = vmatprep.subr.mxu0 %v845
    %921 = vmatpush1.msra.mxu0 %v844
    %922 = vmatprep.subr.mxu0 %v841
    %923 = vmatpush1.msra.mxu0 %v840
    %924 = vmatprep.subr.mxu0 %v837
    %925 = vmatpush1.msra.mxu0 %v836
    %926 = vmatprep.subr.mxu0 %v833
    %927 = vmatpush1.msra.mxu0 %v832
    %928 = vmatprep.subr.mxu0 0.0
    %929 = vmatpush2.msra.mxu0 0.0
    %930 = vmatprep.subr.mxu0 0.0
    %931 = vmatpush2.msra.mxu0 0.0
    %932 = vmatprep.subr.mxu0 0.0
    %933 = vmatpush2.msra.mxu0 0.0
    %934 = vmatprep.subr.mxu0 0.0
    %935 = vmatpush2.msra.mxu0 0.0
    %936 = vmatprep.subr.mxu0 0.0
    %937 = vmatpush2.msra.mxu0 0.0
    %938 = vmatprep.subr.mxu0 0.0
    %939 = vmatpush2.msra.mxu0 0.0
    %940 = vmatprep.subr.mxu0 0.0
    %941 = vmatpush2.msra.mxu0 0.0
    %942 = vmatprep.subr.mxu0 0.0
    %943 = vmatpush2.msra.mxu0 0.0
    %944 = vmatprep.subr.mxu0 0.0
    %945 = vmatpush2.msra.mxu0 0.0
    %946 = vmatprep.subr.mxu0 0.0
    %947 = vmatpush2.msra.mxu0 0.0
    %948 = vmatprep.subr.mxu0 0.0
    %949 = vmatpush2.msra.mxu0 0.0
    %950 = vmatprep.subr.mxu0 0.0
    %951 = vmatpush2.msra.mxu0 0.0
    %952 = vmatprep.subr.mxu0 0.0
    %953 = vmatpush2.msra.mxu0 0.0
    %954 = vmatprep.subr.mxu0 0.0
    %955 = vmatpush2.msra.mxu0 0.0
    %956 = vmatprep.subr.mxu0 0.0
    %957 = vmatpush2.msra.mxu0 0.0
    %958 = vmatprep.subr.mxu0 0.0
    %959 = vmatpush2.msra.mxu0 0.0
    %960 = vmatprep.mubr.f32.mxu0 0.0
    %961 = vmatmul.mubr.f32.gmra.mxu0 0.0
    %v962 = vpop.f32.mrf.mxu0
    %v963 = vadd.f32 0.0, %v962
    %v964 = vpop.f32.mrf.mxu0
    %v965 = vadd.f32 0.0, %v964
    %966 = vdwg.mxu0
    %967 = vmatprep.subr.mxu0 %v895
    %968 = vmatpush1.msra.mxu0 %v894
    %969 = vmatprep.subr.mxu0 %v891
    %970 = vmatpush1.msra.mxu0 %v890
    %971 = vmatprep.subr.mxu0 %v887
    %972 = vmatpush1.msra.mxu0 %v886
    %973 = vmatprep.subr.mxu0 %v883
    %974 = vmatpush1.msra.mxu0 %v882
    %975 = vmatprep.subr.mxu0 %v879
    %976 = vmatpush1.msra.mxu0 %v878
    %977 = vmatprep.subr.mxu0 %v875
    %978 = vmatpush1.msra.mxu0 %v874
    %979 = vmatprep.subr.mxu0 %v871
    %980 = vmatpush1.msra.mxu0 %v870
    %981 = vmatprep.subr.mxu0 %v867
    %982 = vmatpush1.msra.mxu0 %v866
    %983 = vmatprep.subr.mxu0 %v863
    %984 = vmatpush1.msra.mxu0 %v862
    %985 = vmatprep.subr.mxu0 %v859
    %986 = vmatpush1.msra.mxu0 %v858
    %987 = vmatprep.subr.mxu0 %v855
    %988 = vmatpush1.msra.mxu0 %v854
    %989 = vmatprep.subr.mxu0 %v851
    %990 = vmatpush1.msra.mxu0 %v850
    %991 = vmatprep.subr.mxu0 %v847
    %992 = vmatpush1.msra.mxu0 %v846
    %993 = vmatprep.subr.mxu0 %v843
    %994 = vmatpush1.msra.mxu0 %v842
    %995 = vmatprep.subr.mxu0 %v839
    %996 = vmatpush1.msra.mxu0 %v838
    %997 = vmatprep.subr.mxu0 %v835
    %998 = vmatpush1.msra.mxu0 %v834
    %999 = vmatprep.subr.mxu0 0.0
    %1000 = vmatpush2.msra.mxu0 0.0
    %1001 = vmatprep.subr.mxu0 0.0
    %1002 = vmatpush2.msra.mxu0 0.0
    %1003 = vmatprep.subr.mxu0 0.0
    %1004 = vmatpush2.msra.mxu0 0.0
    %1005 = vmatprep.subr.mxu0 0.0
    %1006 = vmatpush2.msra.mxu0 0.0
    %1007 = vmatprep.subr.mxu0 0.0
    %1008 = vmatpush2.msra.mxu0 0.0
    %1009 = vmatprep.subr.mxu0 0.0
    %1010 = vmatpush2.msra.mxu0 0.0
    %1011 = vmatprep.subr.mxu0 0.0
    %1012 = vmatpush2.msra.mxu0 0.0
    %1013 = vmatprep.subr.mxu0 0.0
    %1014 = vmatpush2.msra.mxu0 0.0
    %1015 = vmatprep.subr.mxu0 0.0
    %1016 = vmatpush2.msra.mxu0 0.0
    %1017 = vmatprep.subr.mxu0 0.0
    %1018 = vmatpush2.msra.mxu0 0.0
    %1019 = vmatprep.subr.mxu0 0.0
    %1020 = vmatpush2.msra.mxu0 0.0
    %1021 = vmatprep.subr.mxu0 0.0
    %1022 = vmatpush2.msra.mxu0 0.0
    %1023 = vmatprep.subr.mxu0 0.0
    %1024 = vmatpush2.msra.mxu0 0.0
    %1025 = vmatprep.subr.mxu0 0.0
    %1026 = vmatpush2.msra.mxu0 0.0
    %1027 = vmatprep.subr.mxu0 0.0
    %1028 = vmatpush2.msra.mxu0 0.0
    %1029 = vmatprep.subr.mxu0 0.0
    %1030 = vmatpush2.msra.mxu0 0.0
    %1031 = vmatprep.mubr.f32.mxu0 0.0
    %1032 = vmatmul.mubr.f32.gmra.mxu0 0.0
    %v1033 = vpop.f32.mrf.mxu0
    %v1034 = vadd.f32 0.0, %v1033
    %v1035 = vpop.f32.mrf.mxu0
    %v1036 = vadd.f32 0.0, %v1035
    %1037 = vdwg.mxu0
    %v1038 = vadd.f32 %v828, %v963
    %v1039 = vadd.f32 %v829, %v965
    %v1040 = vadd.f32 %v830, %v1034
    %v1041 = vadd.f32 %v831, %v1036
    %v1042 = vxor.u32 %v1038, 2147483648
    %v1043 = vmul.f32 %v1042, 1.442695
    %v1044 = vpow.pop %v1043
    %v1045 = vadd.f32 %v1044, 1.0
    %v1046 = vrcp.pop %v1045
    %v1047 = vmul.f32 1.0, %v1046
    %v1048 = vxor.u32 %v1039, 2147483648
    %v1049 = vmul.f32 %v1048, 1.442695
    %v1050 = vpow.pop %v1049
    %v1051 = vadd.f32 %v1050, 1.0
    %v1052 = vrcp.pop %v1051
    %v1053 = vmul.f32 1.0, %v1052
    %v1054 = vtanh.pop %v1040
    %v1055 = vxor.u32 %v1041, 2147483648
    %v1056 = vmul.f32 %v1055, 1.442695
    %v1057 = vpow.pop %v1056
    %v1058 = vadd.f32 %v1057, 1.0
    %v1059 = vrcp.pop %v1058
    %v1060 = vmul.f32 1.0, %v1059
    %v1061 = vmul.f32 %v1053, 0.0
    %v1062 = vmul.f32 %v1047, %v1054
    %v1063 = vadd.f32 %v1061, %v1062
    %v1064 = vtanh.pop %v1063
    %v1065 = vmul.f32 %v1060, %v1064
    %1066 = vst.msk [vmem:[#allocation3] sm:$0xff] %vm328, %v1065
    %vm1067 = vcmask 1048064
    %1068 = vst.msk [vmem:[#allocation3 + $0x78] sm:$0xff] %vm1067, %v1065
    %v1069 = vld [vmem:[#allocation2 + $0x20] sm:$0xff]
    %v1070 = vld [vmem:[#allocation2 + $0x28] sm:$0xff]
    %v1071 = vld [vmem:[#allocation2 + $0x30] sm:$0xff]
    %v1072 = vld [vmem:[#allocation2 + $0x38] sm:$0xff]
    %v1073 = vld [vmem:[#allocation2 + $0x1c0] sm:$0xff]
    %v1074 = vld [vmem:[#allocation2 + $0x1c8] sm:$0xff]
    %v1075 = vld [vmem:[#allocation2 + $0x1d0] sm:$0xff]
    %v1076 = vld [vmem:[#allocation2 + $0x1d8] sm:$0xff]
    %v1077 = vsel %vm816, %v1069, %v1073
    %v1078 = vsel %vm817, %v1070, %v1074
    %v1079 = vsel %vm818, %v1071, %v1075
    %v1080 = vsel %vm819, %v1072, %v1076
    %v1081 = vld [vmem:[%s4] sm:$0xff]
    %v1082 = vld [vmem:[%s4 + $0x8] sm:$0xff]
    %v1083 = vld [vmem:[%s4 + $0x10] sm:$0xff]
    %v1084 = vld [vmem:[%s4 + $0x18] sm:$0xff]
    %v1085 = vld [vmem:[%s4 + $0x20] sm:$0xff]
    %v1086 = vld [vmem:[%s4 + $0x28] sm:$0xff]
    %v1087 = vld [vmem:[%s4 + $0x30] sm:$0xff]
    %v1088 = vld [vmem:[%s4 + $0x38] sm:$0xff]
    %v1089 = vld [vmem:[%s4 + $0x40] sm:$0xff]
    %v1090 = vld [vmem:[%s4 + $0x48] sm:$0xff]
    %v1091 = vld [vmem:[%s4 + $0x50] sm:$0xff]
    %v1092 = vld [vmem:[%s4 + $0x58] sm:$0xff]
    %v1093 = vld [vmem:[%s4 + $0x60] sm:$0xff]
    %v1094 = vld [vmem:[%s4 + $0x68] sm:$0xff]
    %v1095 = vld [vmem:[%s4 + $0x70] sm:$0xff]
    %v1096 = vld [vmem:[%s4 + $0x78] sm:$0xff]
    %v1097 = vld [vmem:[%s4 + $0x80] sm:$0xff]
    %v1098 = vld [vmem:[%s4 + $0x88] sm:$0xff]
    %v1099 = vld [vmem:[%s4 + $0x90] sm:$0xff]
    %v1100 = vld [vmem:[%s4 + $0x98] sm:$0xff]
    %v1101 = vld [vmem:[%s4 + $0xa0] sm:$0xff]
    %v1102 = vld [vmem:[%s4 + $0xa8] sm:$0xff]
    %v1103 = vld [vmem:[%s4 + $0xb0] sm:$0xff]
    %v1104 = vld [vmem:[%s4 + $0xb8] sm:$0xff]
    %v1105 = vld [vmem:[%s4 + $0xc0] sm:$0xff]
    %v1106 = vld [vmem:[%s4 + $0xc8] sm:$0xff]
    %v1107 = vld [vmem:[%s4 + $0xd0] sm:$0xff]
    %v1108 = vld [vmem:[%s4 + $0xd8] sm:$0xff]
    %v1109 = vld [vmem:[%s4 + $0xe0] sm:$0xff]
    %v1110 = vld [vmem:[%s4 + $0xe8] sm:$0xff]
    %v1111 = vld [vmem:[%s4 + $0xf0] sm:$0xff]
    %v1112 = vld [vmem:[%s4 + $0xf8] sm:$0xff]
    %v1113 = vld [vmem:[%s4 + $0x100] sm:$0xff]
    %v1114 = vld [vmem:[%s4 + $0x108] sm:$0xff]
    %v1115 = vld [vmem:[%s4 + $0x110] sm:$0xff]
    %v1116 = vld [vmem:[%s4 + $0x118] sm:$0xff]
    %v1117 = vld [vmem:[%s4 + $0x120] sm:$0xff]
    %v1118 = vld [vmem:[%s4 + $0x128] sm:$0xff]
    %v1119 = vld [vmem:[%s4 + $0x130] sm:$0xff]
    %v1120 = vld [vmem:[%s4 + $0x138] sm:$0xff]
    %v1121 = vld [vmem:[%s4 + $0x140] sm:$0xff]
    %v1122 = vld [vmem:[%s4 + $0x148] sm:$0xff]
    %v1123 = vld [vmem:[%s4 + $0x150] sm:$0xff]
    %v1124 = vld [vmem:[%s4 + $0x158] sm:$0xff]
    %v1125 = vld [vmem:[%s4 + $0x160] sm:$0xff]
    %v1126 = vld [vmem:[%s4 + $0x168] sm:$0xff]
    %v1127 = vld [vmem:[%s4 + $0x170] sm:$0xff]
    %v1128 = vld [vmem:[%s4 + $0x178] sm:$0xff]
    %v1129 = vld [vmem:[%s4 + $0x180] sm:$0xff]
    %v1130 = vld [vmem:[%s4 + $0x188] sm:$0xff]
    %v1131 = vld [vmem:[%s4 + $0x190] sm:$0xff]
    %v1132 = vld [vmem:[%s4 + $0x198] sm:$0xff]
    %v1133 = vld [vmem:[%s4 + $0x1a0] sm:$0xff]
    %v1134 = vld [vmem:[%s4 + $0x1a8] sm:$0xff]
    %v1135 = vld [vmem:[%s4 + $0x1b0] sm:$0xff]
    %v1136 = vld [vmem:[%s4 + $0x1b8] sm:$0xff]
    %v1137 = vld [vmem:[%s4 + $0x1c0] sm:$0xff]
    %v1138 = vld [vmem:[%s4 + $0x1c8] sm:$0xff]
    %v1139 = vld [vmem:[%s4 + $0x1d0] sm:$0xff]
    %v1140 = vld [vmem:[%s4 + $0x1d8] sm:$0xff]
    %v1141 = vld [vmem:[%s4 + $0x1e0] sm:$0xff]
    %v1142 = vld [vmem:[%s4 + $0x1e8] sm:$0xff]
    %v1143 = vld [vmem:[%s4 + $0x1f0] sm:$0xff]
    %v1144 = vld [vmem:[%s4 + $0x1f8] sm:$0xff]
    %1145 = vmatprep.subr.mxu0 %v1142
    %1146 = vmatpush1.msra.mxu0 %v1141
    %1147 = vmatprep.subr.mxu0 %v1138
    %1148 = vmatpush1.msra.mxu0 %v1137
    %1149 = vmatprep.subr.mxu0 %v1134
    %1150 = vmatpush1.msra.mxu0 %v1133
    %1151 = vmatprep.subr.mxu0 %v1130
    %1152 = vmatpush1.msra.mxu0 %v1129
    %1153 = vmatprep.subr.mxu0 %v1126
    %1154 = vmatpush1.msra.mxu0 %v1125
    %1155 = vmatprep.subr.mxu0 %v1122
    %1156 = vmatpush1.msra.mxu0 %v1121
    %1157 = vmatprep.subr.mxu0 %v1118
    %1158 = vmatpush1.msra.mxu0 %v1117
    %1159 = vmatprep.subr.mxu0 %v1114
    %1160 = vmatpush1.msra.mxu0 %v1113
    %1161 = vmatprep.subr.mxu0 %v1110
    %1162 = vmatpush1.msra.mxu0 %v1109
    %1163 = vmatprep.subr.mxu0 %v1106
    %1164 = vmatpush1.msra.mxu0 %v1105
    %1165 = vmatprep.subr.mxu0 %v1102
    %1166 = vmatpush1.msra.mxu0 %v1101
    %1167 = vmatprep.subr.mxu0 %v1098
    %1168 = vmatpush1.msra.mxu0 %v1097
    %1169 = vmatprep.subr.mxu0 %v1094
    %1170 = vmatpush1.msra.mxu0 %v1093
    %1171 = vmatprep.subr.mxu0 %v1090
    %1172 = vmatpush1.msra.mxu0 %v1089
    %1173 = vmatprep.subr.mxu0 %v1086
    %1174 = vmatpush1.msra.mxu0 %v1085
    %1175 = vmatprep.subr.mxu0 %v1082
    %1176 = vmatpush1.msra.mxu0 %v1081
    %1177 = vmatprep.subr.mxu0 0.0
    %1178 = vmatpush2.msra.mxu0 0.0
    %1179 = vmatprep.subr.mxu0 0.0
    %1180 = vmatpush2.msra.mxu0 0.0
    %1181 = vmatprep.subr.mxu0 0.0
    %1182 = vmatpush2.msra.mxu0 0.0
    %1183 = vmatprep.subr.mxu0 0.0
    %1184 = vmatpush2.msra.mxu0 0.0
    %1185 = vmatprep.subr.mxu0 0.0
    %1186 = vmatpush2.msra.mxu0 0.0
    %1187 = vmatprep.subr.mxu0 0.0
    %1188 = vmatpush2.msra.mxu0 0.0
    %1189 = vmatprep.subr.mxu0 0.0
    %1190 = vmatpush2.msra.mxu0 0.0
    %1191 = vmatprep.subr.mxu0 0.0
    %1192 = vmatpush2.msra.mxu0 0.0
    %1193 = vmatprep.subr.mxu0 0.0
    %1194 = vmatpush2.msra.mxu0 0.0
    %1195 = vmatprep.subr.mxu0 0.0
    %1196 = vmatpush2.msra.mxu0 0.0
    %1197 = vmatprep.subr.mxu0 0.0
    %1198 = vmatpush2.msra.mxu0 0.0
    %1199 = vmatprep.subr.mxu0 0.0
    %1200 = vmatpush2.msra.mxu0 0.0
    %1201 = vmatprep.subr.mxu0 0.0
    %1202 = vmatpush2.msra.mxu0 0.0
    %1203 = vmatprep.subr.mxu0 0.0
    %1204 = vmatpush2.msra.mxu0 0.0
    %1205 = vmatprep.subr.mxu0 0.0
    %1206 = vmatpush2.msra.mxu0 0.0
    %1207 = vmatprep.subr.mxu0 0.0
    %1208 = vmatpush2.msra.mxu0 0.0
    %1209 = vmatprep.mubr.f32.mxu0 0.0
    %1210 = vmatmul.mubr.f32.gmra.mxu0 %v1065
    %v1211 = vpop.f32.mrf.mxu0
    %v1212 = vadd.f32 0.0, %v1211
    %v1213 = vpop.f32.mrf.mxu0
    %v1214 = vadd.f32 0.0, %v1213
    %1215 = vdwg.mxu0
    %1216 = vmatprep.subr.mxu0 %v1144
    %1217 = vmatpush1.msra.mxu0 %v1143
    %1218 = vmatprep.subr.mxu0 %v1140
    %1219 = vmatpush1.msra.mxu0 %v1139
    %1220 = vmatprep.subr.mxu0 %v1136
    %1221 = vmatpush1.msra.mxu0 %v1135
    %1222 = vmatprep.subr.mxu0 %v1132
    %1223 = vmatpush1.msra.mxu0 %v1131
    %1224 = vmatprep.subr.mxu0 %v1128
    %1225 = vmatpush1.msra.mxu0 %v1127
    %1226 = vmatprep.subr.mxu0 %v1124
    %1227 = vmatpush1.msra.mxu0 %v1123
    %1228 = vmatprep.subr.mxu0 %v1120
    %1229 = vmatpush1.msra.mxu0 %v1119
    %1230 = vmatprep.subr.mxu0 %v1116
    %1231 = vmatpush1.msra.mxu0 %v1115
    %1232 = vmatprep.subr.mxu0 %v1112
    %1233 = vmatpush1.msra.mxu0 %v1111
    %1234 = vmatprep.subr.mxu0 %v1108
    %1235 = vmatpush1.msra.mxu0 %v1107
    %1236 = vmatprep.subr.mxu0 %v1104
    %1237 = vmatpush1.msra.mxu0 %v1103
    %1238 = vmatprep.subr.mxu0 %v1100
    %1239 = vmatpush1.msra.mxu0 %v1099
    %1240 = vmatprep.subr.mxu0 %v1096
    %1241 = vmatpush1.msra.mxu0 %v1095
    %1242 = vmatprep.subr.mxu0 %v1092
    %1243 = vmatpush1.msra.mxu0 %v1091
    %1244 = vmatprep.subr.mxu0 %v1088
    %1245 = vmatpush1.msra.mxu0 %v1087
    %1246 = vmatprep.subr.mxu0 %v1084
    %1247 = vmatpush1.msra.mxu0 %v1083
    %1248 = vmatprep.subr.mxu0 0.0
    %1249 = vmatpush2.msra.mxu0 0.0
    %1250 = vmatprep.subr.mxu0 0.0
    %1251 = vmatpush2.msra.mxu0 0.0
    %1252 = vmatprep.subr.mxu0 0.0
    %1253 = vmatpush2.msra.mxu0 0.0
    %1254 = vmatprep.subr.mxu0 0.0
    %1255 = vmatpush2.msra.mxu0 0.0
    %1256 = vmatprep.subr.mxu0 0.0
    %1257 = vmatpush2.msra.mxu0 0.0
    %1258 = vmatprep.subr.mxu0 0.0
    %1259 = vmatpush2.msra.mxu0 0.0
    %1260 = vmatprep.subr.mxu0 0.0
    %1261 = vmatpush2.msra.mxu0 0.0
    %1262 = vmatprep.subr.mxu0 0.0
    %1263 = vmatpush2.msra.mxu0 0.0
    %1264 = vmatprep.subr.mxu0 0.0
    %1265 = vmatpush2.msra.mxu0 0.0
    %1266 = vmatprep.subr.mxu0 0.0
    %1267 = vmatpush2.msra.mxu0 0.0
    %1268 = vmatprep.subr.mxu0 0.0
    %1269 = vmatpush2.msra.mxu0 0.0
    %1270 = vmatprep.subr.mxu0 0.0
    %1271 = vmatpush2.msra.mxu0 0.0
    %1272 = vmatprep.subr.mxu0 0.0
    %1273 = vmatpush2.msra.mxu0 0.0
    %1274 = vmatprep.subr.mxu0 0.0
    %1275 = vmatpush2.msra.mxu0 0.0
    %1276 = vmatprep.subr.mxu0 0.0
    %1277 = vmatpush2.msra.mxu0 0.0
    %1278 = vmatprep.subr.mxu0 0.0
    %1279 = vmatpush2.msra.mxu0 0.0
    %1280 = vmatprep.mubr.f32.mxu0 0.0
    %1281 = vmatmul.mubr.f32.gmra.mxu0 %v1065
    %v1282 = vpop.f32.mrf.mxu0
    %v1283 = vadd.f32 0.0, %v1282
    %v1284 = vpop.f32.mrf.mxu0
    %v1285 = vadd.f32 0.0, %v1284
    %1286 = vdwg.mxu0
    %v1287 = vadd.f32 %v1077, %v1212
    %v1288 = vadd.f32 %v1078, %v1214
    %v1289 = vadd.f32 %v1079, %v1283
    %v1290 = vadd.f32 %v1080, %v1285
    %v1291 = vxor.u32 %v1287, 2147483648
    %v1292 = vmul.f32 %v1291, 1.442695
    %v1293 = vpow.pop %v1292
    %v1294 = vadd.f32 %v1293, 1.0
    %v1295 = vrcp.pop %v1294
    %v1296 = vmul.f32 1.0, %v1295
    %v1297 = vxor.u32 %v1288, 2147483648
    %v1298 = vmul.f32 %v1297, 1.442695
    %v1299 = vpow.pop %v1298
    %v1300 = vadd.f32 %v1299, 1.0
    %v1301 = vrcp.pop %v1300
    %v1302 = vmul.f32 1.0, %v1301
    %v1303 = vtanh.pop %v1289
    %v1304 = vxor.u32 %v1290, 2147483648
    %v1305 = vmul.f32 %v1304, 1.442695
    %v1306 = vpow.pop %v1305
    %v1307 = vadd.f32 %v1306, 1.0
    %v1308 = vrcp.pop %v1307
    %v1309 = vmul.f32 1.0, %v1308
    %v1310 = vmul.f32 %v1302, %v1063
    %v1311 = vmul.f32 %v1296, %v1303
    %v1312 = vadd.f32 %v1310, %v1311
    %v1313 = vtanh.pop %v1312
    %v1314 = vmul.f32 %v1309, %v1313
    %1315 = vst.msk [vmem:[#allocation3 + $0x8] sm:$0xff] %vm328, %v1314
    %1316 = vst.msk [vmem:[#allocation3 + $0x70] sm:$0xff] %vm1067, %v1314
    %v1317 = vld [vmem:[#allocation2 + $0x40] sm:$0xff]
    %v1318 = vld [vmem:[#allocation2 + $0x48] sm:$0xff]
    %v1319 = vld [vmem:[#allocation2 + $0x50] sm:$0xff]
    %v1320 = vld [vmem:[#allocation2 + $0x58] sm:$0xff]
    %v1321 = vld [vmem:[#allocation2 + $0x1a0] sm:$0xff]
    %v1322 = vld [vmem:[#allocation2 + $0x1a8] sm:$0xff]
    %v1323 = vld [vmem:[#allocation2 + $0x1b0] sm:$0xff]
    %v1324 = vld [vmem:[#allocation2 + $0x1b8] sm:$0xff]
    %v1325 = vsel %vm816, %v1317, %v1321
    %v1326 = vsel %vm817, %v1318, %v1322
    %v1327 = vsel %vm818, %v1319, %v1323
    %v1328 = vsel %vm819, %v1320, %v1324
    %v1329 = vld [vmem:[%s4] sm:$0xff]
    %v1330 = vld [vmem:[%s4 + $0x8] sm:$0xff]
    %v1331 = vld [vmem:[%s4 + $0x10] sm:$0xff]
    %v1332 = vld [vmem:[%s4 + $0x18] sm:$0xff]
    %v1333 = vld [vmem:[%s4 + $0x20] sm:$0xff]
    %v1334 = vld [vmem:[%s4 + $0x28] sm:$0xff]
    %v1335 = vld [vmem:[%s4 + $0x30] sm:$0xff]
    %v1336 = vld [vmem:[%s4 + $0x38] sm:$0xff]
    %v1337 = vld [vmem:[%s4 + $0x40] sm:$0xff]
    %v1338 = vld [vmem:[%s4 + $0x48] sm:$0xff]
    %v1339 = vld [vmem:[%s4 + $0x50] sm:$0xff]
    %v1340 = vld [vmem:[%s4 + $0x58] sm:$0xff]
    %v1341 = vld [vmem:[%s4 + $0x60] sm:$0xff]
    %v1342 = vld [vmem:[%s4 + $0x68] sm:$0xff]
    %v1343 = vld [vmem:[%s4 + $0x70] sm:$0xff]
    %v1344 = vld [vmem:[%s4 + $0x78] sm:$0xff]
    %v1345 = vld [vmem:[%s4 + $0x80] sm:$0xff]
    %v1346 = vld [vmem:[%s4 + $0x88] sm:$0xff]
    %v1347 = vld [vmem:[%s4 + $0x90] sm:$0xff]
    %v1348 = vld [vmem:[%s4 + $0x98] sm:$0xff]
    %v1349 = vld [vmem:[%s4 + $0xa0] sm:$0xff]
    %v1350 = vld [vmem:[%s4 + $0xa8] sm:$0xff]
    %v1351 = vld [vmem:[%s4 + $0xb0] sm:$0xff]
    %v1352 = vld [vmem:[%s4 + $0xb8] sm:$0xff]
    %v1353 = vld [vmem:[%s4 + $0xc0] sm:$0xff]
    %v1354 = vld [vmem:[%s4 + $0xc8] sm:$0xff]
    %v1355 = vld [vmem:[%s4 + $0xd0] sm:$0xff]
    %v1356 = vld [vmem:[%s4 + $0xd8] sm:$0xff]
    %v1357 = vld [vmem:[%s4 + $0xe0] sm:$0xff]
    %v1358 = vld [vmem:[%s4 + $0xe8] sm:$0xff]
    %v1359 = vld [vmem:[%s4 + $0xf0] sm:$0xff]
    %v1360 = vld [vmem:[%s4 + $0xf8] sm:$0xff]
    %v1361 = vld [vmem:[%s4 + $0x100] sm:$0xff]
    %v1362 = vld [vmem:[%s4 + $0x108] sm:$0xff]
    %v1363 = vld [vmem:[%s4 + $0x110] sm:$0xff]
    %v1364 = vld [vmem:[%s4 + $0x118] sm:$0xff]
    %v1365 = vld [vmem:[%s4 + $0x120] sm:$0xff]
    %v1366 = vld [vmem:[%s4 + $0x128] sm:$0xff]
    %v1367 = vld [vmem:[%s4 + $0x130] sm:$0xff]
    %v1368 = vld [vmem:[%s4 + $0x138] sm:$0xff]
    %v1369 = vld [vmem:[%s4 + $0x140] sm:$0xff]
    %v1370 = vld [vmem:[%s4 + $0x148] sm:$0xff]
    %v1371 = vld [vmem:[%s4 + $0x150] sm:$0xff]
    %v1372 = vld [vmem:[%s4 + $0x158] sm:$0xff]
    %v1373 = vld [vmem:[%s4 + $0x160] sm:$0xff]
    %v1374 = vld [vmem:[%s4 + $0x168] sm:$0xff]
    %v1375 = vld [vmem:[%s4 + $0x170] sm:$0xff]
    %v1376 = vld [vmem:[%s4 + $0x178] sm:$0xff]
    %v1377 = vld [vmem:[%s4 + $0x180] sm:$0xff]
    %v1378 = vld [vmem:[%s4 + $0x188] sm:$0xff]
    %v1379 = vld [vmem:[%s4 + $0x190] sm:$0xff]
    %v1380 = vld [vmem:[%s4 + $0x198] sm:$0xff]
    %v1381 = vld [vmem:[%s4 + $0x1a0] sm:$0xff]
    %v1382 = vld [vmem:[%s4 + $0x1a8] sm:$0xff]
    %v1383 = vld [vmem:[%s4 + $0x1b0] sm:$0xff]
    %v1384 = vld [vmem:[%s4 + $0x1b8] sm:$0xff]
    %v1385 = vld [vmem:[%s4 + $0x1c0] sm:$0xff]
    %v1386 = vld [vmem:[%s4 + $0x1c8] sm:$0xff]
    %v1387 = vld [vmem:[%s4 + $0x1d0] sm:$0xff]
    %v1388 = vld [vmem:[%s4 + $0x1d8] sm:$0xff]
    %v1389 = vld [vmem:[%s4 + $0x1e0] sm:$0xff]
    %v1390 = vld [vmem:[%s4 + $0x1e8] sm:$0xff]
    %v1391 = vld [vmem:[%s4 + $0x1f0] sm:$0xff]
    %v1392 = vld [vmem:[%s4 + $0x1f8] sm:$0xff]
    %1393 = vmatprep.subr.mxu0 %v1390
    %1394 = vmatpush1.msra.mxu0 %v1389
    %1395 = vmatprep.subr.mxu0 %v1386
    %1396 = vmatpush1.msra.mxu0 %v1385
    %1397 = vmatprep.subr.mxu0 %v1382
    %1398 = vmatpush1.msra.mxu0 %v1381
    %1399 = vmatprep.subr.mxu0 %v1378
    %1400 = vmatpush1.msra.mxu0 %v1377
    %1401 = vmatprep.subr.mxu0 %v1374
    %1402 = vmatpush1.msra.mxu0 %v1373
    %1403 = vmatprep.subr.mxu0 %v1370
    %1404 = vmatpush1.msra.mxu0 %v1369
    %1405 = vmatprep.subr.mxu0 %v1366
    %1406 = vmatpush1.msra.mxu0 %v1365
    %1407 = vmatprep.subr.mxu0 %v1362
    %1408 = vmatpush1.msra.mxu0 %v1361
    %1409 = vmatprep.subr.mxu0 %v1358
    %1410 = vmatpush1.msra.mxu0 %v1357
    %1411 = vmatprep.subr.mxu0 %v1354
    %1412 = vmatpush1.msra.mxu0 %v1353
    %1413 = vmatprep.subr.mxu0 %v1350
    %1414 = vmatpush1.msra.mxu0 %v1349
    %1415 = vmatprep.subr.mxu0 %v1346
    %1416 = vmatpush1.msra.mxu0 %v1345
    %1417 = vmatprep.subr.mxu0 %v1342
    %1418 = vmatpush1.msra.mxu0 %v1341
    %1419 = vmatprep.subr.mxu0 %v1338
    %1420 = vmatpush1.msra.mxu0 %v1337
    %1421 = vmatprep.subr.mxu0 %v1334
    %1422 = vmatpush1.msra.mxu0 %v1333
    %1423 = vmatprep.subr.mxu0 %v1330
    %1424 = vmatpush1.msra.mxu0 %v1329
    %1425 = vmatprep.subr.mxu0 0.0
    %1426 = vmatpush2.msra.mxu0 0.0
    %1427 = vmatprep.subr.mxu0 0.0
    %1428 = vmatpush2.msra.mxu0 0.0
    %1429 = vmatprep.subr.mxu0 0.0
    %1430 = vmatpush2.msra.mxu0 0.0
    %1431 = vmatprep.subr.mxu0 0.0
    %1432 = vmatpush2.msra.mxu0 0.0
    %1433 = vmatprep.subr.mxu0 0.0
    %1434 = vmatpush2.msra.mxu0 0.0
    %1435 = vmatprep.subr.mxu0 0.0
    %1436 = vmatpush2.msra.mxu0 0.0
    %1437 = vmatprep.subr.mxu0 0.0
    %1438 = vmatpush2.msra.mxu0 0.0
    %1439 = vmatprep.subr.mxu0 0.0
    %1440 = vmatpush2.msra.mxu0 0.0
    %1441 = vmatprep.subr.mxu0 0.0
    %1442 = vmatpush2.msra.mxu0 0.0
    %1443 = vmatprep.subr.mxu0 0.0
    %1444 = vmatpush2.msra.mxu0 0.0
    %1445 = vmatprep.subr.mxu0 0.0
    %1446 = vmatpush2.msra.mxu0 0.0
    %1447 = vmatprep.subr.mxu0 0.0
    %1448 = vmatpush2.msra.mxu0 0.0
    %1449 = vmatprep.subr.mxu0 0.0
    %1450 = vmatpush2.msra.mxu0 0.0
    %1451 = vmatprep.subr.mxu0 0.0
    %1452 = vmatpush2.msra.mxu0 0.0
    %1453 = vmatprep.subr.mxu0 0.0
    %1454 = vmatpush2.msra.mxu0 0.0
    %1455 = vmatprep.subr.mxu0 0.0
    %1456 = vmatpush2.msra.mxu0 0.0
    %1457 = vmatprep.mubr.f32.mxu0 0.0
    %1458 = vmatmul.mubr.f32.gmra.mxu0 %v1314
    %v1459 = vpop.f32.mrf.mxu0
    %v1460 = vadd.f32 0.0, %v1459
    %v1461 = vpop.f32.mrf.mxu0
    %v1462 = vadd.f32 0.0, %v1461
    %1463 = vdwg.mxu0
    %1464 = vmatprep.subr.mxu0 %v1392
    %1465 = vmatpush1.msra.mxu0 %v1391
    %1466 = vmatprep.subr.mxu0 %v1388
    %1467 = vmatpush1.msra.mxu0 %v1387
    %1468 = vmatprep.subr.mxu0 %v1384
    %1469 = vmatpush1.msra.mxu0 %v1383
    %1470 = vmatprep.subr.mxu0 %v1380
    %1471 = vmatpush1.msra.mxu0 %v1379
    %1472 = vmatprep.subr.mxu0 %v1376
    %1473 = vmatpush1.msra.mxu0 %v1375
    %1474 = vmatprep.subr.mxu0 %v1372
    %1475 = vmatpush1.msra.mxu0 %v1371
    %1476 = vmatprep.subr.mxu0 %v1368
    %1477 = vmatpush1.msra.mxu0 %v1367
    %1478 = vmatprep.subr.mxu0 %v1364
    %1479 = vmatpush1.msra.mxu0 %v1363
    %1480 = vmatprep.subr.mxu0 %v1360
    %1481 = vmatpush1.msra.mxu0 %v1359
    %1482 = vmatprep.subr.mxu0 %v1356
    %1483 = vmatpush1.msra.mxu0 %v1355
    %1484 = vmatprep.subr.mxu0 %v1352
    %1485 = vmatpush1.msra.mxu0 %v1351
    %1486 = vmatprep.subr.mxu0 %v1348
    %1487 = vmatpush1.msra.mxu0 %v1347
    %1488 = vmatprep.subr.mxu0 %v1344
    %1489 = vmatpush1.msra.mxu0 %v1343
    %1490 = vmatprep.subr.mxu0 %v1340
    %1491 = vmatpush1.msra.mxu0 %v1339
    %1492 = vmatprep.subr.mxu0 %v1336
    %1493 = vmatpush1.msra.mxu0 %v1335
    %1494 = vmatprep.subr.mxu0 %v1332
    %1495 = vmatpush1.msra.mxu0 %v1331
    %1496 = vmatprep.subr.mxu0 0.0
    %1497 = vmatpush2.msra.mxu0 0.0
    %1498 = vmatprep.subr.mxu0 0.0
    %1499 = vmatpush2.msra.mxu0 0.0
    %1500 = vmatprep.subr.mxu0 0.0
    %1501 = vmatpush2.msra.mxu0 0.0
    %1502 = vmatprep.subr.mxu0 0.0
    %1503 = vmatpush2.msra.mxu0 0.0
    %1504 = vmatprep.subr.mxu0 0.0
    %1505 = vmatpush2.msra.mxu0 0.0
    %1506 = vmatprep.subr.mxu0 0.0
    %1507 = vmatpush2.msra.mxu0 0.0
    %1508 = vmatprep.subr.mxu0 0.0
    %1509 = vmatpush2.msra.mxu0 0.0
    %1510 = vmatprep.subr.mxu0 0.0
    %1511 = vmatpush2.msra.mxu0 0.0
    %1512 = vmatprep.subr.mxu0 0.0
    %1513 = vmatpush2.msra.mxu0 0.0
    %1514 = vmatprep.subr.mxu0 0.0
    %1515 = vmatpush2.msra.mxu0 0.0
    %1516 = vmatprep.subr.mxu0 0.0
    %1517 = vmatpush2.msra.mxu0 0.0
    %1518 = vmatprep.subr.mxu0 0.0
    %1519 = vmatpush2.msra.mxu0 0.0
    %1520 = vmatprep.subr.mxu0 0.0
    %1521 = vmatpush2.msra.mxu0 0.0
    %1522 = vmatprep.subr.mxu0 0.0
    %1523 = vmatpush2.msra.mxu0 0.0
    %1524 = vmatprep.subr.mxu0 0.0
    %1525 = vmatpush2.msra.mxu0 0.0
    %1526 = vmatprep.subr.mxu0 0.0
    %1527 = vmatpush2.msra.mxu0 0.0
    %1528 = vmatprep.mubr.f32.mxu0 0.0
    %1529 = vmatmul.mubr.f32.gmra.mxu0 %v1314
    %v1530 = vpop.f32.mrf.mxu0
    %v1531 = vadd.f32 0.0, %v1530
    %v1532 = vpop.f32.mrf.mxu0
    %v1533 = vadd.f32 0.0, %v1532
    %1534 = vdwg.mxu0
    %v1535 = vadd.f32 %v1325, %v1460
    %v1536 = vadd.f32 %v1326, %v1462
    %v1537 = vadd.f32 %v1327, %v1531
    %v1538 = vadd.f32 %v1328, %v1533
    %v1539 = vxor.u32 %v1535, 2147483648
    %v1540 = vmul.f32 %v1539, 1.442695
    %v1541 = vpow.pop %v1540
    %v1542 = vadd.f32 %v1541, 1.0
    %v1543 = vrcp.pop %v1542
    %v1544 = vmul.f32 1.0, %v1543
    %v1545 = vxor.u32 %v1536, 2147483648
    %v1546 = vmul.f32 %v1545, 1.442695
    %v1547 = vpow.pop %v1546
    %v1548 = vadd.f32 %v1547, 1.0
    %v1549 = vrcp.pop %v1548
    %v1550 = vmul.f32 1.0, %v1549
    %v1551 = vtanh.pop %v1537
    %v1552 = vxor.u32 %v1538, 2147483648
    %v1553 = vmul.f32 %v1552, 1.442695
    %v1554 = vpow.pop %v1553
    %v1555 = vadd.f32 %v1554, 1.0
    %v1556 = vrcp.pop %v1555
    %v1557 = vmul.f32 1.0, %v1556
    %v1558 = vmul.f32 %v1550, %v1312
    %v1559 = vmul.f32 %v1544, %v1551
    %v1560 = vadd.f32 %v1558, %v1559
    %v1561 = vtanh.pop %v1560
    %v1562 = vmul.f32 %v1557, %v1561
    %1563 = vst.msk [vmem:[#allocation3 + $0x10] sm:$0xff] %vm328, %v1562
    %1564 = vst.msk [vmem:[#allocation3 + $0x68] sm:$0xff] %vm1067, %v1562
    %v1565 = vld [vmem:[#allocation2 + $0x60] sm:$0xff]
    %v1566 = vld [vmem:[#allocation2 + $0x68] sm:$0xff]
    %v1567 = vld [vmem:[#allocation2 + $0x70] sm:$0xff]
    %v1568 = vld [vmem:[#allocation2 + $0x78] sm:$0xff]
    %v1569 = vld [vmem:[#allocation2 + $0x180] sm:$0xff]
    %v1570 = vld [vmem:[#allocation2 + $0x188] sm:$0xff]
    %v1571 = vld [vmem:[#allocation2 + $0x190] sm:$0xff]
    %v1572 = vld [vmem:[#allocation2 + $0x198] sm:$0xff]
    %v1573 = vsel %vm816, %v1565, %v1569
    %v1574 = vsel %vm817, %v1566, %v1570
    %v1575 = vsel %vm818, %v1567, %v1571
    %v1576 = vsel %vm819, %v1568, %v1572
    %v1577 = vld [vmem:[%s4] sm:$0xff]
    %v1578 = vld [vmem:[%s4 + $0x8] sm:$0xff]
    %v1579 = vld [vmem:[%s4 + $0x10] sm:$0xff]
    %v1580 = vld [vmem:[%s4 + $0x18] sm:$0xff]
    %v1581 = vld [vmem:[%s4 + $0x20] sm:$0xff]
    %v1582 = vld [vmem:[%s4 + $0x28] sm:$0xff]
    %v1583 = vld [vmem:[%s4 + $0x30] sm:$0xff]
    %v1584 = vld [vmem:[%s4 + $0x38] sm:$0xff]
    %v1585 = vld [vmem:[%s4 + $0x40] sm:$0xff]
    %v1586 = vld [vmem:[%s4 + $0x48] sm:$0xff]
    %v1587 = vld [vmem:[%s4 + $0x50] sm:$0xff]
    %v1588 = vld [vmem:[%s4 + $0x58] sm:$0xff]
    %v1589 = vld [vmem:[%s4 + $0x60] sm:$0xff]
    %v1590 = vld [vmem:[%s4 + $0x68] sm:$0xff]
    %v1591 = vld [vmem:[%s4 + $0x70] sm:$0xff]
    %v1592 = vld [vmem:[%s4 + $0x78] sm:$0xff]
    %v1593 = vld [vmem:[%s4 + $0x80] sm:$0xff]
    %v1594 = vld [vmem:[%s4 + $0x88] sm:$0xff]
    %v1595 = vld [vmem:[%s4 + $0x90] sm:$0xff]
    %v1596 = vld [vmem:[%s4 + $0x98] sm:$0xff]
    %v1597 = vld [vmem:[%s4 + $0xa0] sm:$0xff]
    %v1598 = vld [vmem:[%s4 + $0xa8] sm:$0xff]
    %v1599 = vld [vmem:[%s4 + $0xb0] sm:$0xff]
    %v1600 = vld [vmem:[%s4 + $0xb8] sm:$0xff]
    %v1601 = vld [vmem:[%s4 + $0xc0] sm:$0xff]
    %v1602 = vld [vmem:[%s4 + $0xc8] sm:$0xff]
    %v1603 = vld [vmem:[%s4 + $0xd0] sm:$0xff]
    %v1604 = vld [vmem:[%s4 + $0xd8] sm:$0xff]
    %v1605 = vld [vmem:[%s4 + $0xe0] sm:$0xff]
    %v1606 = vld [vmem:[%s4 + $0xe8] sm:$0xff]
    %v1607 = vld [vmem:[%s4 + $0xf0] sm:$0xff]
    %v1608 = vld [vmem:[%s4 + $0xf8] sm:$0xff]
    %v1609 = vld [vmem:[%s4 + $0x100] sm:$0xff]
    %v1610 = vld [vmem:[%s4 + $0x108] sm:$0xff]
    %v1611 = vld [vmem:[%s4 + $0x110] sm:$0xff]
    %v1612 = vld [vmem:[%s4 + $0x118] sm:$0xff]
    %v1613 = vld [vmem:[%s4 + $0x120] sm:$0xff]
    %v1614 = vld [vmem:[%s4 + $0x128] sm:$0xff]
    %v1615 = vld [vmem:[%s4 + $0x130] sm:$0xff]
    %v1616 = vld [vmem:[%s4 + $0x138] sm:$0xff]
    %v1617 = vld [vmem:[%s4 + $0x140] sm:$0xff]
    %v1618 = vld [vmem:[%s4 + $0x148] sm:$0xff]
    %v1619 = vld [vmem:[%s4 + $0x150] sm:$0xff]
    %v1620 = vld [vmem:[%s4 + $0x158] sm:$0xff]
    %v1621 = vld [vmem:[%s4 + $0x160] sm:$0xff]
    %v1622 = vld [vmem:[%s4 + $0x168] sm:$0xff]
    %v1623 = vld [vmem:[%s4 + $0x170] sm:$0xff]
    %v1624 = vld [vmem:[%s4 + $0x178] sm:$0xff]
    %v1625 = vld [vmem:[%s4 + $0x180] sm:$0xff]
    %v1626 = vld [vmem:[%s4 + $0x188] sm:$0xff]
    %v1627 = vld [vmem:[%s4 + $0x190] sm:$0xff]
    %v1628 = vld [vmem:[%s4 + $0x198] sm:$0xff]
    %v1629 = vld [vmem:[%s4 + $0x1a0] sm:$0xff]
    %v1630 = vld [vmem:[%s4 + $0x1a8] sm:$0xff]
    %v1631 = vld [vmem:[%s4 + $0x1b0] sm:$0xff]
    %v1632 = vld [vmem:[%s4 + $0x1b8] sm:$0xff]
    %v1633 = vld [vmem:[%s4 + $0x1c0] sm:$0xff]
    %v1634 = vld [vmem:[%s4 + $0x1c8] sm:$0xff]
    %v1635 = vld [vmem:[%s4 + $0x1d0] sm:$0xff]
    %v1636 = vld [vmem:[%s4 + $0x1d8] sm:$0xff]
    %v1637 = vld [vmem:[%s4 + $0x1e0] sm:$0xff]
    %v1638 = vld [vmem:[%s4 + $0x1e8] sm:$0xff]
    %v1639 = vld [vmem:[%s4 + $0x1f0] sm:$0xff]
    %v1640 = vld [vmem:[%s4 + $0x1f8] sm:$0xff]
    %1641 = vmatprep.subr.mxu0 %v1638
    %1642 = vmatpush1.msra.mxu0 %v1637
    %1643 = vmatprep.subr.mxu0 %v1634
    %1644 = vmatpush1.msra.mxu0 %v1633
    %1645 = vmatprep.subr.mxu0 %v1630
    %1646 = vmatpush1.msra.mxu0 %v1629
    %1647 = vmatprep.subr.mxu0 %v1626
    %1648 = vmatpush1.msra.mxu0 %v1625
    %1649 = vmatprep.subr.mxu0 %v1622
    %1650 = vmatpush1.msra.mxu0 %v1621
    %1651 = vmatprep.subr.mxu0 %v1618
    %1652 = vmatpush1.msra.mxu0 %v1617
    %1653 = vmatprep.subr.mxu0 %v1614
    %1654 = vmatpush1.msra.mxu0 %v1613
    %1655 = vmatprep.subr.mxu0 %v1610
    %1656 = vmatpush1.msra.mxu0 %v1609
    %1657 = vmatprep.subr.mxu0 %v1606
    %1658 = vmatpush1.msra.mxu0 %v1605
    %1659 = vmatprep.subr.mxu0 %v1602
    %1660 = vmatpush1.msra.mxu0 %v1601
    %1661 = vmatprep.subr.mxu0 %v1598
    %1662 = vmatpush1.msra.mxu0 %v1597
    %1663 = vmatprep.subr.mxu0 %v1594
    %1664 = vmatpush1.msra.mxu0 %v1593
    %1665 = vmatprep.subr.mxu0 %v1590
    %1666 = vmatpush1.msra.mxu0 %v1589
    %1667 = vmatprep.subr.mxu0 %v1586
    %1668 = vmatpush1.msra.mxu0 %v1585
    %1669 = vmatprep.subr.mxu0 %v1582
    %1670 = vmatpush1.msra.mxu0 %v1581
    %1671 = vmatprep.subr.mxu0 %v1578
    %1672 = vmatpush1.msra.mxu0 %v1577
    %1673 = vmatprep.subr.mxu0 0.0
    %1674 = vmatpush2.msra.mxu0 0.0
    %1675 = vmatprep.subr.mxu0 0.0
    %1676 = vmatpush2.msra.mxu0 0.0
    %1677 = vmatprep.subr.mxu0 0.0
    %1678 = vmatpush2.msra.mxu0 0.0
    %1679 = vmatprep.subr.mxu0 0.0
    %1680 = vmatpush2.msra.mxu0 0.0
    %1681 = vmatprep.subr.mxu0 0.0
    %1682 = vmatpush2.msra.mxu0 0.0
    %1683 = vmatprep.subr.mxu0 0.0
    %1684 = vmatpush2.msra.mxu0 0.0
    %1685 = vmatprep.subr.mxu0 0.0
    %1686 = vmatpush2.msra.mxu0 0.0
    %1687 = vmatprep.subr.mxu0 0.0
    %1688 = vmatpush2.msra.mxu0 0.0
    %1689 = vmatprep.subr.mxu0 0.0
    %1690 = vmatpush2.msra.mxu0 0.0
    %1691 = vmatprep.subr.mxu0 0.0
    %1692 = vmatpush2.msra.mxu0 0.0
    %1693 = vmatprep.subr.mxu0 0.0
    %1694 = vmatpush2.msra.mxu0 0.0
    %1695 = vmatprep.subr.mxu0 0.0
    %1696 = vmatpush2.msra.mxu0 0.0
    %1697 = vmatprep.subr.mxu0 0.0
    %1698 = vmatpush2.msra.mxu0 0.0
    %1699 = vmatprep.subr.mxu0 0.0
    %1700 = vmatpush2.msra.mxu0 0.0
    %1701 = vmatprep.subr.mxu0 0.0
    %1702 = vmatpush2.msra.mxu0 0.0
    %1703 = vmatprep.subr.mxu0 0.0
    %1704 = vmatpush2.msra.mxu0 0.0
    %1705 = vmatprep.mubr.f32.mxu0 0.0
    %1706 = vmatmul.mubr.f32.gmra.mxu0 %v1562
    %v1707 = vpop.f32.mrf.mxu0
    %v1708 = vadd.f32 0.0, %v1707
    %v1709 = vpop.f32.mrf.mxu0
    %v1710 = vadd.f32 0.0, %v1709
    %1711 = vdwg.mxu0
    %1712 = vmatprep.subr.mxu0 %v1640
    %1713 = vmatpush1.msra.mxu0 %v1639
    %1714 = vmatprep.subr.mxu0 %v1636
    %1715 = vmatpush1.msra.mxu0 %v1635
    %1716 = vmatprep.subr.mxu0 %v1632
    %1717 = vmatpush1.msra.mxu0 %v1631
    %1718 = vmatprep.subr.mxu0 %v1628
    %1719 = vmatpush1.msra.mxu0 %v1627
    %1720 = vmatprep.subr.mxu0 %v1624
    %1721 = vmatpush1.msra.mxu0 %v1623
    %1722 = vmatprep.subr.mxu0 %v1620
    %1723 = vmatpush1.msra.mxu0 %v1619
    %1724 = vmatprep.subr.mxu0 %v1616
    %1725 = vmatpush1.msra.mxu0 %v1615
    %1726 = vmatprep.subr.mxu0 %v1612
    %1727 = vmatpush1.msra.mxu0 %v1611
    %1728 = vmatprep.subr.mxu0 %v1608
    %1729 = vmatpush1.msra.mxu0 %v1607
    %1730 = vmatprep.subr.mxu0 %v1604
    %1731 = vmatpush1.msra.mxu0 %v1603
    %1732 = vmatprep.subr.mxu0 %v1600
    %1733 = vmatpush1.msra.mxu0 %v1599
    %1734 = vmatprep.subr.mxu0 %v1596
    %1735 = vmatpush1.msra.mxu0 %v1595
    %1736 = vmatprep.subr.mxu0 %v1592
    %1737 = vmatpush1.msra.mxu0 %v1591
    %1738 = vmatprep.subr.mxu0 %v1588
    %1739 = vmatpush1.msra.mxu0 %v1587
    %1740 = vmatprep.subr.mxu0 %v1584
    %1741 = vmatpush1.msra.mxu0 %v1583
    %1742 = vmatprep.subr.mxu0 %v1580
    %1743 = vmatpush1.msra.mxu0 %v1579
    %1744 = vmatprep.subr.mxu0 0.0
    %1745 = vmatpush2.msra.mxu0 0.0
    %1746 = vmatprep.subr.mxu0 0.0
    %1747 = vmatpush2.msra.mxu0 0.0
    %1748 = vmatprep.subr.mxu0 0.0
    %1749 = vmatpush2.msra.mxu0 0.0
    %1750 = vmatprep.subr.mxu0 0.0
    %1751 = vmatpush2.msra.mxu0 0.0
    %1752 = vmatprep.subr.mxu0 0.0
    %1753 = vmatpush2.msra.mxu0 0.0
    %1754 = vmatprep.subr.mxu0 0.0
    %1755 = vmatpush2.msra.mxu0 0.0
    %1756 = vmatprep.subr.mxu0 0.0
    %1757 = vmatpush2.msra.mxu0 0.0
    %1758 = vmatprep.subr.mxu0 0.0
    %1759 = vmatpush2.msra.mxu0 0.0
    %1760 = vmatprep.subr.mxu0 0.0
    %1761 = vmatpush2.msra.mxu0 0.0
    %1762 = vmatprep.subr.mxu0 0.0
    %1763 = vmatpush2.msra.mxu0 0.0
    %1764 = vmatprep.subr.mxu0 0.0
    %1765 = vmatpush2.msra.mxu0 0.0
    %1766 = vmatprep.subr.mxu0 0.0
    %1767 = vmatpush2.msra.mxu0 0.0
    %1768 = vmatprep.subr.mxu0 0.0
    %1769 = vmatpush2.msra.mxu0 0.0
    %1770 = vmatprep.subr.mxu0 0.0
    %1771 = vmatpush2.msra.mxu0 0.0
    %1772 = vmatprep.subr.mxu0 0.0
    %1773 = vmatpush2.msra.mxu0 0.0
    %1774 = vmatprep.subr.mxu0 0.0
    %1775 = vmatpush2.msra.mxu0 0.0
    %1776 = vmatprep.mubr.f32.mxu0 0.0
    %1777 = vmatmul.mubr.f32.gmra.mxu0 %v1562
    %v1778 = vpop.f32.mrf.mxu0
    %v1779 = vadd.f32 0.0, %v1778
    %v1780 = vpop.f32.mrf.mxu0
    %v1781 = vadd.f32 0.0, %v1780
    %1782 = vdwg.mxu0
    %v1783 = vadd.f32 %v1573, %v1708
    %v1784 = vadd.f32 %v1574, %v1710
    %v1785 = vadd.f32 %v1575, %v1779
    %v1786 = vadd.f32 %v1576, %v1781
    %v1787 = vxor.u32 %v1783, 2147483648
    %v1788 = vmul.f32 %v1787, 1.442695
    %v1789 = vpow.pop %v1788
    %v1790 = vadd.f32 %v1789, 1.0
    %v1791 = vrcp.pop %v1790
    %v1792 = vmul.f32 1.0, %v1791
    %v1793 = vxor.u32 %v1784, 2147483648
    %v1794 = vmul.f32 %v1793, 1.442695
    %v1795 = vpow.pop %v1794
    %v1796 = vadd.f32 %v1795, 1.0
    %v1797 = vrcp.pop %v1796
    %v1798 = vmul.f32 1.0, %v1797
    %v1799 = vtanh.pop %v1785
    %v1800 = vxor.u32 %v1786, 2147483648
    %v1801 = vmul.f32 %v1800, 1.442695
    %v1802 = vpow.pop %v1801
    %v1803 = vadd.f32 %v1802, 1.0
    %v1804 = vrcp.pop %v1803
    %v1805 = vmul.f32 1.0, %v1804
    %v1806 = vmul.f32 %v1798, %v1560
    %v1807 = vmul.f32 %v1792, %v1799
    %v1808 = vadd.f32 %v1806, %v1807
    %v1809 = vtanh.pop %v1808
    %v1810 = vmul.f32 %v1805, %v1809
    %1811 = vst.msk [vmem:[#allocation3 + $0x18] sm:$0xff] %vm328, %v1810
    %1812 = vst.msk [vmem:[#allocation3 + $0x60] sm:$0xff] %vm1067, %v1810
    %v1813 = vld [vmem:[#allocation2 + $0x80] sm:$0xff]
    %v1814 = vld [vmem:[#allocation2 + $0x88] sm:$0xff]
    %v1815 = vld [vmem:[#allocation2 + $0x90] sm:$0xff]
    %v1816 = vld [vmem:[#allocation2 + $0x98] sm:$0xff]
    %v1817 = vld [vmem:[#allocation2 + $0x160] sm:$0xff]
    %v1818 = vld [vmem:[#allocation2 + $0x168] sm:$0xff]
    %v1819 = vld [vmem:[#allocation2 + $0x170] sm:$0xff]
    %v1820 = vld [vmem:[#allocation2 + $0x178] sm:$0xff]
    %v1821 = vsel %vm816, %v1813, %v1817
    %v1822 = vsel %vm817, %v1814, %v1818
    %v1823 = vsel %vm818, %v1815, %v1819
    %v1824 = vsel %vm819, %v1816, %v1820
    %v1825 = vld [vmem:[%s4] sm:$0xff]
    %v1826 = vld [vmem:[%s4 + $0x8] sm:$0xff]
    %v1827 = vld [vmem:[%s4 + $0x10] sm:$0xff]
    %v1828 = vld [vmem:[%s4 + $0x18] sm:$0xff]
    %v1829 = vld [vmem:[%s4 + $0x20] sm:$0xff]
    %v1830 = vld [vmem:[%s4 + $0x28] sm:$0xff]
    %v1831 = vld [vmem:[%s4 + $0x30] sm:$0xff]
    %v1832 = vld [vmem:[%s4 + $0x38] sm:$0xff]
    %v1833 = vld [vmem:[%s4 + $0x40] sm:$0xff]
    %v1834 = vld [vmem:[%s4 + $0x48] sm:$0xff]
    %v1835 = vld [vmem:[%s4 + $0x50] sm:$0xff]
    %v1836 = vld [vmem:[%s4 + $0x58] sm:$0xff]
    %v1837 = vld [vmem:[%s4 + $0x60] sm:$0xff]
    %v1838 = vld [vmem:[%s4 + $0x68] sm:$0xff]
    %v1839 = vld [vmem:[%s4 + $0x70] sm:$0xff]
    %v1840 = vld [vmem:[%s4 + $0x78] sm:$0xff]
    %v1841 = vld [vmem:[%s4 + $0x80] sm:$0xff]
    %v1842 = vld [vmem:[%s4 + $0x88] sm:$0xff]
    %v1843 = vld [vmem:[%s4 + $0x90] sm:$0xff]
    %v1844 = vld [vmem:[%s4 + $0x98] sm:$0xff]
    %v1845 = vld [vmem:[%s4 + $0xa0] sm:$0xff]
    %v1846 = vld [vmem:[%s4 + $0xa8] sm:$0xff]
    %v1847 = vld [vmem:[%s4 + $0xb0] sm:$0xff]
    %v1848 = vld [vmem:[%s4 + $0xb8] sm:$0xff]
    %v1849 = vld [vmem:[%s4 + $0xc0] sm:$0xff]
    %v1850 = vld [vmem:[%s4 + $0xc8] sm:$0xff]
    %v1851 = vld [vmem:[%s4 + $0xd0] sm:$0xff]
    %v1852 = vld [vmem:[%s4 + $0xd8] sm:$0xff]
    %v1853 = vld [vmem:[%s4 + $0xe0] sm:$0xff]
    %v1854 = vld [vmem:[%s4 + $0xe8] sm:$0xff]
    %v1855 = vld [vmem:[%s4 + $0xf0] sm:$0xff]
    %v1856 = vld [vmem:[%s4 + $0xf8] sm:$0xff]
    %v1857 = vld [vmem:[%s4 + $0x100] sm:$0xff]
    %v1858 = vld [vmem:[%s4 + $0x108] sm:$0xff]
    %v1859 = vld [vmem:[%s4 + $0x110] sm:$0xff]
    %v1860 = vld [vmem:[%s4 + $0x118] sm:$0xff]
    %v1861 = vld [vmem:[%s4 + $0x120] sm:$0xff]
    %v1862 = vld [vmem:[%s4 + $0x128] sm:$0xff]
    %v1863 = vld [vmem:[%s4 + $0x130] sm:$0xff]
    %v1864 = vld [vmem:[%s4 + $0x138] sm:$0xff]
    %v1865 = vld [vmem:[%s4 + $0x140] sm:$0xff]
    %v1866 = vld [vmem:[%s4 + $0x148] sm:$0xff]
    %v1867 = vld [vmem:[%s4 + $0x150] sm:$0xff]
    %v1868 = vld [vmem:[%s4 + $0x158] sm:$0xff]
    %v1869 = vld [vmem:[%s4 + $0x160] sm:$0xff]
    %v1870 = vld [vmem:[%s4 + $0x168] sm:$0xff]
    %v1871 = vld [vmem:[%s4 + $0x170] sm:$0xff]
    %v1872 = vld [vmem:[%s4 + $0x178] sm:$0xff]
    %v1873 = vld [vmem:[%s4 + $0x180] sm:$0xff]
    %v1874 = vld [vmem:[%s4 + $0x188] sm:$0xff]
    %v1875 = vld [vmem:[%s4 + $0x190] sm:$0xff]
    %v1876 = vld [vmem:[%s4 + $0x198] sm:$0xff]
    %v1877 = vld [vmem:[%s4 + $0x1a0] sm:$0xff]
    %v1878 = vld [vmem:[%s4 + $0x1a8] sm:$0xff]
    %v1879 = vld [vmem:[%s4 + $0x1b0] sm:$0xff]
    %v1880 = vld [vmem:[%s4 + $0x1b8] sm:$0xff]
    %v1881 = vld [vmem:[%s4 + $0x1c0] sm:$0xff]
    %v1882 = vld [vmem:[%s4 + $0x1c8] sm:$0xff]
    %v1883 = vld [vmem:[%s4 + $0x1d0] sm:$0xff]
    %v1884 = vld [vmem:[%s4 + $0x1d8] sm:$0xff]
    %v1885 = vld [vmem:[%s4 + $0x1e0] sm:$0xff]
    %v1886 = vld [vmem:[%s4 + $0x1e8] sm:$0xff]
    %v1887 = vld [vmem:[%s4 + $0x1f0] sm:$0xff]
    %v1888 = vld [vmem:[%s4 + $0x1f8] sm:$0xff]
    %1889 = vmatprep.subr.mxu0 %v1886
    %1890 = vmatpush1.msra.mxu0 %v1885
    %1891 = vmatprep.subr.mxu0 %v1882
    %1892 = vmatpush1.msra.mxu0 %v1881
    %1893 = vmatprep.subr.mxu0 %v1878
    %1894 = vmatpush1.msra.mxu0 %v1877
    %1895 = vmatprep.subr.mxu0 %v1874
    %1896 = vmatpush1.msra.mxu0 %v1873
    %1897 = vmatprep.subr.mxu0 %v1870
    %1898 = vmatpush1.msra.mxu0 %v1869
    %1899 = vmatprep.subr.mxu0 %v1866
    %1900 = vmatpush1.msra.mxu0 %v1865
    %1901 = vmatprep.subr.mxu0 %v1862
    %1902 = vmatpush1.msra.mxu0 %v1861
    %1903 = vmatprep.subr.mxu0 %v1858
    %1904 = vmatpush1.msra.mxu0 %v1857
    %1905 = vmatprep.subr.mxu0 %v1854
    %1906 = vmatpush1.msra.mxu0 %v1853
    %1907 = vmatprep.subr.mxu0 %v1850
    %1908 = vmatpush1.msra.mxu0 %v1849
    %1909 = vmatprep.subr.mxu0 %v1846
    %1910 = vmatpush1.msra.mxu0 %v1845
    %1911 = vmatprep.subr.mxu0 %v1842
    %1912 = vmatpush1.msra.mxu0 %v1841
    %1913 = vmatprep.subr.mxu0 %v1838
    %1914 = vmatpush1.msra.mxu0 %v1837
    %1915 = vmatprep.subr.mxu0 %v1834
    %1916 = vmatpush1.msra.mxu0 %v1833
    %1917 = vmatprep.subr.mxu0 %v1830
    %1918 = vmatpush1.msra.mxu0 %v1829
    %1919 = vmatprep.subr.mxu0 %v1826
    %1920 = vmatpush1.msra.mxu0 %v1825
    %1921 = vmatprep.subr.mxu0 0.0
    %1922 = vmatpush2.msra.mxu0 0.0
    %1923 = vmatprep.subr.mxu0 0.0
    %1924 = vmatpush2.msra.mxu0 0.0
    %1925 = vmatprep.subr.mxu0 0.0
    %1926 = vmatpush2.msra.mxu0 0.0
    %1927 = vmatprep.subr.mxu0 0.0
    %1928 = vmatpush2.msra.mxu0 0.0
    %1929 = vmatprep.subr.mxu0 0.0
    %1930 = vmatpush2.msra.mxu0 0.0
    %1931 = vmatprep.subr.mxu0 0.0
    %1932 = vmatpush2.msra.mxu0 0.0
    %1933 = vmatprep.subr.mxu0 0.0
    %1934 = vmatpush2.msra.mxu0 0.0
    %1935 = vmatprep.subr.mxu0 0.0
    %1936 = vmatpush2.msra.mxu0 0.0
    %1937 = vmatprep.subr.mxu0 0.0
    %1938 = vmatpush2.msra.mxu0 0.0
    %1939 = vmatprep.subr.mxu0 0.0
    %1940 = vmatpush2.msra.mxu0 0.0
    %1941 = vmatprep.subr.mxu0 0.0
    %1942 = vmatpush2.msra.mxu0 0.0
    %1943 = vmatprep.subr.mxu0 0.0
    %1944 = vmatpush2.msra.mxu0 0.0
    %1945 = vmatprep.subr.mxu0 0.0
    %1946 = vmatpush2.msra.mxu0 0.0
    %1947 = vmatprep.subr.mxu0 0.0
    %1948 = vmatpush2.msra.mxu0 0.0
    %1949 = vmatprep.subr.mxu0 0.0
    %1950 = vmatpush2.msra.mxu0 0.0
    %1951 = vmatprep.subr.mxu0 0.0
    %1952 = vmatpush2.msra.mxu0 0.0
    %1953 = vmatprep.mubr.f32.mxu0 0.0
    %1954 = vmatmul.mubr.f32.gmra.mxu0 %v1810
    %v1955 = vpop.f32.mrf.mxu0
    %v1956 = vadd.f32 0.0, %v1955
    %v1957 = vpop.f32.mrf.mxu0
    %v1958 = vadd.f32 0.0, %v1957
    %1959 = vdwg.mxu0
    %1960 = vmatprep.subr.mxu0 %v1888
    %1961 = vmatpush1.msra.mxu0 %v1887
    %1962 = vmatprep.subr.mxu0 %v1884
    %1963 = vmatpush1.msra.mxu0 %v1883
    %1964 = vmatprep.subr.mxu0 %v1880
    %1965 = vmatpush1.msra.mxu0 %v1879
    %1966 = vmatprep.subr.mxu0 %v1876
    %1967 = vmatpush1.msra.mxu0 %v1875
    %1968 = vmatprep.subr.mxu0 %v1872
    %1969 = vmatpush1.msra.mxu0 %v1871
    %1970 = vmatprep.subr.mxu0 %v1868
    %1971 = vmatpush1.msra.mxu0 %v1867
    %1972 = vmatprep.subr.mxu0 %v1864
    %1973 = vmatpush1.msra.mxu0 %v1863
    %1974 = vmatprep.subr.mxu0 %v1860
    %1975 = vmatpush1.msra.mxu0 %v1859
    %1976 = vmatprep.subr.mxu0 %v1856
    %1977 = vmatpush1.msra.mxu0 %v1855
    %1978 = vmatprep.subr.mxu0 %v1852
    %1979 = vmatpush1.msra.mxu0 %v1851
    %1980 = vmatprep.subr.mxu0 %v1848
    %1981 = vmatpush1.msra.mxu0 %v1847
    %1982 = vmatprep.subr.mxu0 %v1844
    %1983 = vmatpush1.msra.mxu0 %v1843
    %1984 = vmatprep.subr.mxu0 %v1840
    %1985 = vmatpush1.msra.mxu0 %v1839
    %1986 = vmatprep.subr.mxu0 %v1836
    %1987 = vmatpush1.msra.mxu0 %v1835
    %1988 = vmatprep.subr.mxu0 %v1832
    %1989 = vmatpush1.msra.mxu0 %v1831
    %1990 = vmatprep.subr.mxu0 %v1828
    %1991 = vmatpush1.msra.mxu0 %v1827
    %1992 = vmatprep.subr.mxu0 0.0
    %1993 = vmatpush2.msra.mxu0 0.0
    %1994 = vmatprep.subr.mxu0 0.0
    %1995 = vmatpush2.msra.mxu0 0.0
    %1996 = vmatprep.subr.mxu0 0.0
    %1997 = vmatpush2.msra.mxu0 0.0
    %1998 = vmatprep.subr.mxu0 0.0
    %1999 = vmatpush2.msra.mxu0 0.0
    %2000 = vmatprep.subr.mxu0 0.0
    %2001 = vmatpush2.msra.mxu0 0.0
    %2002 = vmatprep.subr.mxu0 0.0
    %2003 = vmatpush2.msra.mxu0 0.0
    %2004 = vmatprep.subr.mxu0 0.0
    %2005 = vmatpush2.msra.mxu0 0.0
    %2006 = vmatprep.subr.mxu0 0.0
    %2007 = vmatpush2.msra.mxu0 0.0
    %2008 = vmatprep.subr.mxu0 0.0
    %2009 = vmatpush2.msra.mxu0 0.0
    %2010 = vmatprep.subr.mxu0 0.0
    %2011 = vmatpush2.msra.mxu0 0.0
    %2012 = vmatprep.subr.mxu0 0.0
    %2013 = vmatpush2.msra.mxu0 0.0
    %2014 = vmatprep.subr.mxu0 0.0
    %2015 = vmatpush2.msra.mxu0 0.0
    %2016 = vmatprep.subr.mxu0 0.0
    %2017 = vmatpush2.msra.mxu0 0.0
    %2018 = vmatprep.subr.mxu0 0.0
    %2019 = vmatpush2.msra.mxu0 0.0
    %2020 = vmatprep.subr.mxu0 0.0
    %2021 = vmatpush2.msra.mxu0 0.0
    %2022 = vmatprep.subr.mxu0 0.0
    %2023 = vmatpush2.msra.mxu0 0.0
    %2024 = vmatprep.mubr.f32.mxu0 0.0
    %2025 = vmatmul.mubr.f32.gmra.mxu0 %v1810
    %v2026 = vpop.f32.mrf.mxu0
    %v2027 = vadd.f32 0.0, %v2026
    %v2028 = vpop.f32.mrf.mxu0
    %v2029 = vadd.f32 0.0, %v2028
    %2030 = vdwg.mxu0
    %v2031 = vadd.f32 %v1821, %v1956
    %v2032 = vadd.f32 %v1822, %v1958
    %v2033 = vadd.f32 %v1823, %v2027
    %v2034 = vadd.f32 %v1824, %v2029
    %v2035 = vxor.u32 %v2031, 2147483648
    %v2036 = vmul.f32 %v2035, 1.442695
    %v2037 = vpow.pop %v2036
    %v2038 = vadd.f32 %v2037, 1.0
    %v2039 = vrcp.pop %v2038
    %v2040 = vmul.f32 1.0, %v2039
    %v2041 = vxor.u32 %v2032, 2147483648
    %v2042 = vmul.f32 %v2041, 1.442695
    %v2043 = vpow.pop %v2042
    %v2044 = vadd.f32 %v2043, 1.0
    %v2045 = vrcp.pop %v2044
    %v2046 = vmul.f32 1.0, %v2045
    %v2047 = vtanh.pop %v2033
    %v2048 = vxor.u32 %v2034, 2147483648
    %v2049 = vmul.f32 %v2048, 1.442695
    %v2050 = vpow.pop %v2049
    %v2051 = vadd.f32 %v2050, 1.0
    %v2052 = vrcp.pop %v2051
    %v2053 = vmul.f32 1.0, %v2052
    %v2054 = vmul.f32 %v2046, %v1808
    %v2055 = vmul.f32 %v2040, %v2047
    %v2056 = vadd.f32 %v2054, %v2055
    %v2057 = vtanh.pop %v2056
    %v2058 = vmul.f32 %v2053, %v2057
    %2059 = vst.msk [vmem:[#allocation3 + $0x20] sm:$0xff] %vm328, %v2058
    %2060 = vst.msk [vmem:[#allocation3 + $0x58] sm:$0xff] %vm1067, %v2058
    %v2061 = vld [vmem:[#allocation2 + $0xa0] sm:$0xff]
    %v2062 = vld [vmem:[#allocation2 + $0xa8] sm:$0xff]
    %v2063 = vld [vmem:[#allocation2 + $0xb0] sm:$0xff]
    %v2064 = vld [vmem:[#allocation2 + $0xb8] sm:$0xff]
    %v2065 = vld [vmem:[#allocation2 + $0x140] sm:$0xff]
    %v2066 = vld [vmem:[#allocation2 + $0x148] sm:$0xff]
    %v2067 = vld [vmem:[#allocation2 + $0x150] sm:$0xff]
    %v2068 = vld [vmem:[#allocation2 + $0x158] sm:$0xff]
    %v2069 = vsel %vm816, %v2061, %v2065
    %v2070 = vsel %vm817, %v2062, %v2066
    %v2071 = vsel %vm818, %v2063, %v2067
    %v2072 = vsel %vm819, %v2064, %v2068
    %v2073 = vld [vmem:[%s4] sm:$0xff]
    %v2074 = vld [vmem:[%s4 + $0x8] sm:$0xff]
    %v2075 = vld [vmem:[%s4 + $0x10] sm:$0xff]
    %v2076 = vld [vmem:[%s4 + $0x18] sm:$0xff]
    %v2077 = vld [vmem:[%s4 + $0x20] sm:$0xff]
    %v2078 = vld [vmem:[%s4 + $0x28] sm:$0xff]
    %v2079 = vld [vmem:[%s4 + $0x30] sm:$0xff]
    %v2080 = vld [vmem:[%s4 + $0x38] sm:$0xff]
    %v2081 = vld [vmem:[%s4 + $0x40] sm:$0xff]
    %v2082 = vld [vmem:[%s4 + $0x48] sm:$0xff]
    %v2083 = vld [vmem:[%s4 + $0x50] sm:$0xff]
    %v2084 = vld [vmem:[%s4 + $0x58] sm:$0xff]
    %v2085 = vld [vmem:[%s4 + $0x60] sm:$0xff]
    %v2086 = vld [vmem:[%s4 + $0x68] sm:$0xff]
    %v2087 = vld [vmem:[%s4 + $0x70] sm:$0xff]
    %v2088 = vld [vmem:[%s4 + $0x78] sm:$0xff]
    %v2089 = vld [vmem:[%s4 + $0x80] sm:$0xff]
    %v2090 = vld [vmem:[%s4 + $0x88] sm:$0xff]
    %v2091 = vld [vmem:[%s4 + $0x90] sm:$0xff]
    %v2092 = vld [vmem:[%s4 + $0x98] sm:$0xff]
    %v2093 = vld [vmem:[%s4 + $0xa0] sm:$0xff]
    %v2094 = vld [vmem:[%s4 + $0xa8] sm:$0xff]
    %v2095 = vld [vmem:[%s4 + $0xb0] sm:$0xff]
    %v2096 = vld [vmem:[%s4 + $0xb8] sm:$0xff]
    %v2097 = vld [vmem:[%s4 + $0xc0] sm:$0xff]
    %v2098 = vld [vmem:[%s4 + $0xc8] sm:$0xff]
    %v2099 = vld [vmem:[%s4 + $0xd0] sm:$0xff]
    %v2100 = vld [vmem:[%s4 + $0xd8] sm:$0xff]
    %v2101 = vld [vmem:[%s4 + $0xe0] sm:$0xff]
    %v2102 = vld [vmem:[%s4 + $0xe8] sm:$0xff]
    %v2103 = vld [vmem:[%s4 + $0xf0] sm:$0xff]
    %v2104 = vld [vmem:[%s4 + $0xf8] sm:$0xff]
    %v2105 = vld [vmem:[%s4 + $0x100] sm:$0xff]
    %v2106 = vld [vmem:[%s4 + $0x108] sm:$0xff]
    %v2107 = vld [vmem:[%s4 + $0x110] sm:$0xff]
    %v2108 = vld [vmem:[%s4 + $0x118] sm:$0xff]
    %v2109 = vld [vmem:[%s4 + $0x120] sm:$0xff]
    %v2110 = vld [vmem:[%s4 + $0x128] sm:$0xff]
    %v2111 = vld [vmem:[%s4 + $0x130] sm:$0xff]
    %v2112 = vld [vmem:[%s4 + $0x138] sm:$0xff]
    %v2113 = vld [vmem:[%s4 + $0x140] sm:$0xff]
    %v2114 = vld [vmem:[%s4 + $0x148] sm:$0xff]
    %v2115 = vld [vmem:[%s4 + $0x150] sm:$0xff]
    %v2116 = vld [vmem:[%s4 + $0x158] sm:$0xff]
    %v2117 = vld [vmem:[%s4 + $0x160] sm:$0xff]
    %v2118 = vld [vmem:[%s4 + $0x168] sm:$0xff]
    %v2119 = vld [vmem:[%s4 + $0x170] sm:$0xff]
    %v2120 = vld [vmem:[%s4 + $0x178] sm:$0xff]
    %v2121 = vld [vmem:[%s4 + $0x180] sm:$0xff]
    %v2122 = vld [vmem:[%s4 + $0x188] sm:$0xff]
    %v2123 = vld [vmem:[%s4 + $0x190] sm:$0xff]
    %v2124 = vld [vmem:[%s4 + $0x198] sm:$0xff]
    %v2125 = vld [vmem:[%s4 + $0x1a0] sm:$0xff]
    %v2126 = vld [vmem:[%s4 + $0x1a8] sm:$0xff]
    %v2127 = vld [vmem:[%s4 + $0x1b0] sm:$0xff]
    %v2128 = vld [vmem:[%s4 + $0x1b8] sm:$0xff]
    %v2129 = vld [vmem:[%s4 + $0x1c0] sm:$0xff]
    %v2130 = vld [vmem:[%s4 + $0x1c8] sm:$0xff]
    %v2131 = vld [vmem:[%s4 + $0x1d0] sm:$0xff]
    %v2132 = vld [vmem:[%s4 + $0x1d8] sm:$0xff]
    %v2133 = vld [vmem:[%s4 + $0x1e0] sm:$0xff]
    %v2134 = vld [vmem:[%s4 + $0x1e8] sm:$0xff]
    %v2135 = vld [vmem:[%s4 + $0x1f0] sm:$0xff]
    %v2136 = vld [vmem:[%s4 + $0x1f8] sm:$0xff]
    %2137 = vmatprep.subr.mxu0 %v2134
    %2138 = vmatpush1.msra.mxu0 %v2133
    %2139 = vmatprep.subr.mxu0 %v2130
    %2140 = vmatpush1.msra.mxu0 %v2129
    %2141 = vmatprep.subr.mxu0 %v2126
    %2142 = vmatpush1.msra.mxu0 %v2125
    %2143 = vmatprep.subr.mxu0 %v2122
    %2144 = vmatpush1.msra.mxu0 %v2121
    %2145 = vmatprep.subr.mxu0 %v2118
    %2146 = vmatpush1.msra.mxu0 %v2117
    %2147 = vmatprep.subr.mxu0 %v2114
    %2148 = vmatpush1.msra.mxu0 %v2113
    %2149 = vmatprep.subr.mxu0 %v2110
    %2150 = vmatpush1.msra.mxu0 %v2109
    %2151 = vmatprep.subr.mxu0 %v2106
    %2152 = vmatpush1.msra.mxu0 %v2105
    %2153 = vmatprep.subr.mxu0 %v2102
    %2154 = vmatpush1.msra.mxu0 %v2101
    %2155 = vmatprep.subr.mxu0 %v2098
    %2156 = vmatpush1.msra.mxu0 %v2097
    %2157 = vmatprep.subr.mxu0 %v2094
    %2158 = vmatpush1.msra.mxu0 %v2093
    %2159 = vmatprep.subr.mxu0 %v2090
    %2160 = vmatpush1.msra.mxu0 %v2089
    %2161 = vmatprep.subr.mxu0 %v2086
    %2162 = vmatpush1.msra.mxu0 %v2085
    %2163 = vmatprep.subr.mxu0 %v2082
    %2164 = vmatpush1.msra.mxu0 %v2081
    %2165 = vmatprep.subr.mxu0 %v2078
    %2166 = vmatpush1.msra.mxu0 %v2077
    %2167 = vmatprep.subr.mxu0 %v2074
    %2168 = vmatpush1.msra.mxu0 %v2073
    %2169 = vmatprep.subr.mxu0 0.0
    %2170 = vmatpush2.msra.mxu0 0.0
    %2171 = vmatprep.subr.mxu0 0.0
    %2172 = vmatpush2.msra.mxu0 0.0
    %2173 = vmatprep.subr.mxu0 0.0
    %2174 = vmatpush2.msra.mxu0 0.0
    %2175 = vmatprep.subr.mxu0 0.0
    %2176 = vmatpush2.msra.mxu0 0.0
    %2177 = vmatprep.subr.mxu0 0.0
    %2178 = vmatpush2.msra.mxu0 0.0
    %2179 = vmatprep.subr.mxu0 0.0
    %2180 = vmatpush2.msra.mxu0 0.0
    %2181 = vmatprep.subr.mxu0 0.0
    %2182 = vmatpush2.msra.mxu0 0.0
    %2183 = vmatprep.subr.mxu0 0.0
    %2184 = vmatpush2.msra.mxu0 0.0
    %2185 = vmatprep.subr.mxu0 0.0
    %2186 = vmatpush2.msra.mxu0 0.0
    %2187 = vmatprep.subr.mxu0 0.0
    %2188 = vmatpush2.msra.mxu0 0.0
    %2189 = vmatprep.subr.mxu0 0.0
    %2190 = vmatpush2.msra.mxu0 0.0
    %2191 = vmatprep.subr.mxu0 0.0
    %2192 = vmatpush2.msra.mxu0 0.0
    %2193 = vmatprep.subr.mxu0 0.0
    %2194 = vmatpush2.msra.mxu0 0.0
    %2195 = vmatprep.subr.mxu0 0.0
    %2196 = vmatpush2.msra.mxu0 0.0
    %2197 = vmatprep.subr.mxu0 0.0
    %2198 = vmatpush2.msra.mxu0 0.0
    %2199 = vmatprep.subr.mxu0 0.0
    %2200 = vmatpush2.msra.mxu0 0.0
    %2201 = vmatprep.mubr.f32.mxu0 0.0
    %2202 = vmatmul.mubr.f32.gmra.mxu0 %v2058
    %v2203 = vpop.f32.mrf.mxu0
    %v2204 = vadd.f32 0.0, %v2203
    %v2205 = vpop.f32.mrf.mxu0
    %v2206 = vadd.f32 0.0, %v2205
    %2207 = vdwg.mxu0
    %2208 = vmatprep.subr.mxu0 %v2136
    %2209 = vmatpush1.msra.mxu0 %v2135
    %2210 = vmatprep.subr.mxu0 %v2132
    %2211 = vmatpush1.msra.mxu0 %v2131
    %2212 = vmatprep.subr.mxu0 %v2128
    %2213 = vmatpush1.msra.mxu0 %v2127
    %2214 = vmatprep.subr.mxu0 %v2124
    %2215 = vmatpush1.msra.mxu0 %v2123
    %2216 = vmatprep.subr.mxu0 %v2120
    %2217 = vmatpush1.msra.mxu0 %v2119
    %2218 = vmatprep.subr.mxu0 %v2116
    %2219 = vmatpush1.msra.mxu0 %v2115
    %2220 = vmatprep.subr.mxu0 %v2112
    %2221 = vmatpush1.msra.mxu0 %v2111
    %2222 = vmatprep.subr.mxu0 %v2108
    %2223 = vmatpush1.msra.mxu0 %v2107
    %2224 = vmatprep.subr.mxu0 %v2104
    %2225 = vmatpush1.msra.mxu0 %v2103
    %2226 = vmatprep.subr.mxu0 %v2100
    %2227 = vmatpush1.msra.mxu0 %v2099
    %2228 = vmatprep.subr.mxu0 %v2096
    %2229 = vmatpush1.msra.mxu0 %v2095
    %2230 = vmatprep.subr.mxu0 %v2092
    %2231 = vmatpush1.msra.mxu0 %v2091
    %2232 = vmatprep.subr.mxu0 %v2088
    %2233 = vmatpush1.msra.mxu0 %v2087
    %2234 = vmatprep.subr.mxu0 %v2084
    %2235 = vmatpush1.msra.mxu0 %v2083
    %2236 = vmatprep.subr.mxu0 %v2080
    %2237 = vmatpush1.msra.mxu0 %v2079
    %2238 = vmatprep.subr.mxu0 %v2076
    %2239 = vmatpush1.msra.mxu0 %v2075
    %2240 = vmatprep.subr.mxu0 0.0
    %2241 = vmatpush2.msra.mxu0 0.0
    %2242 = vmatprep.subr.mxu0 0.0
    %2243 = vmatpush2.msra.mxu0 0.0
    %2244 = vmatprep.subr.mxu0 0.0
    %2245 = vmatpush2.msra.mxu0 0.0
    %2246 = vmatprep.subr.mxu0 0.0
    %2247 = vmatpush2.msra.mxu0 0.0
    %2248 = vmatprep.subr.mxu0 0.0
    %2249 = vmatpush2.msra.mxu0 0.0
    %2250 = vmatprep.subr.mxu0 0.0
    %2251 = vmatpush2.msra.mxu0 0.0
    %2252 = vmatprep.subr.mxu0 0.0
    %2253 = vmatpush2.msra.mxu0 0.0
    %2254 = vmatprep.subr.mxu0 0.0
    %2255 = vmatpush2.msra.mxu0 0.0
    %2256 = vmatprep.subr.mxu0 0.0
    %2257 = vmatpush2.msra.mxu0 0.0
    %2258 = vmatprep.subr.mxu0 0.0
    %2259 = vmatpush2.msra.mxu0 0.0
    %2260 = vmatprep.subr.mxu0 0.0
    %2261 = vmatpush2.msra.mxu0 0.0
    %2262 = vmatprep.subr.mxu0 0.0
    %2263 = vmatpush2.msra.mxu0 0.0
    %2264 = vmatprep.subr.mxu0 0.0
    %2265 = vmatpush2.msra.mxu0 0.0
    %2266 = vmatprep.subr.mxu0 0.0
    %2267 = vmatpush2.msra.mxu0 0.0
    %2268 = vmatprep.subr.mxu0 0.0
    %2269 = vmatpush2.msra.mxu0 0.0
    %2270 = vmatprep.subr.mxu0 0.0
    %2271 = vmatpush2.msra.mxu0 0.0
    %2272 = vmatprep.mubr.f32.mxu0 0.0
    %2273 = vmatmul.mubr.f32.gmra.mxu0 %v2058
    %v2274 = vpop.f32.mrf.mxu0
    %v2275 = vadd.f32 0.0, %v2274
    %v2276 = vpop.f32.mrf.mxu0
    %v2277 = vadd.f32 0.0, %v2276
    %2278 = vdwg.mxu0
    %v2279 = vadd.f32 %v2069, %v2204
    %v2280 = vadd.f32 %v2070, %v2206
    %v2281 = vadd.f32 %v2071, %v2275
    %v2282 = vadd.f32 %v2072, %v2277
    %v2283 = vxor.u32 %v2279, 2147483648
    %v2284 = vmul.f32 %v2283, 1.442695
    %v2285 = vpow.pop %v2284
    %v2286 = vadd.f32 %v2285, 1.0
    %v2287 = vrcp.pop %v2286
    %v2288 = vmul.f32 1.0, %v2287
    %v2289 = vxor.u32 %v2280, 2147483648
    %v2290 = vmul.f32 %v2289, 1.442695
    %v2291 = vpow.pop %v2290
    %v2292 = vadd.f32 %v2291, 1.0
    %v2293 = vrcp.pop %v2292
    %v2294 = vmul.f32 1.0, %v2293
    %v2295 = vtanh.pop %v2281
    %v2296 = vxor.u32 %v2282, 2147483648
    %v2297 = vmul.f32 %v2296, 1.442695
    %v2298 = vpow.pop %v2297
    %v2299 = vadd.f32 %v2298, 1.0
    %v2300 = vrcp.pop %v2299
    %v2301 = vmul.f32 1.0, %v2300
    %v2302 = vmul.f32 %v2294, %v2056
    %v2303 = vmul.f32 %v2288, %v2295
    %v2304 = vadd.f32 %v2302, %v2303
    %v2305 = vtanh.pop %v2304
    %v2306 = vmul.f32 %v2301, %v2305
    %2307 = vst.msk [vmem:[#allocation3 + $0x28] sm:$0xff] %vm328, %v2306
    %2308 = vst.msk [vmem:[#allocation3 + $0x50] sm:$0xff] %vm1067, %v2306
    %v2309 = vld [vmem:[#allocation2 + $0xc0] sm:$0xff]
    %v2310 = vld [vmem:[#allocation2 + $0xc8] sm:$0xff]
    %v2311 = vld [vmem:[#allocation2 + $0xd0] sm:$0xff]
    %v2312 = vld [vmem:[#allocation2 + $0xd8] sm:$0xff]
    %v2313 = vld [vmem:[#allocation2 + $0x120] sm:$0xff]
    %v2314 = vld [vmem:[#allocation2 + $0x128] sm:$0xff]
    %v2315 = vld [vmem:[#allocation2 + $0x130] sm:$0xff]
    %v2316 = vld [vmem:[#allocation2 + $0x138] sm:$0xff]
    %v2317 = vsel %vm816, %v2309, %v2313
    %v2318 = vsel %vm817, %v2310, %v2314
    %v2319 = vsel %vm818, %v2311, %v2315
    %v2320 = vsel %vm819, %v2312, %v2316
    %v2321 = vld [vmem:[%s4] sm:$0xff]
    %v2322 = vld [vmem:[%s4 + $0x8] sm:$0xff]
    %v2323 = vld [vmem:[%s4 + $0x10] sm:$0xff]
    %v2324 = vld [vmem:[%s4 + $0x18] sm:$0xff]
    %v2325 = vld [vmem:[%s4 + $0x20] sm:$0xff]
    %v2326 = vld [vmem:[%s4 + $0x28] sm:$0xff]
    %v2327 = vld [vmem:[%s4 + $0x30] sm:$0xff]
    %v2328 = vld [vmem:[%s4 + $0x38] sm:$0xff]
    %v2329 = vld [vmem:[%s4 + $0x40] sm:$0xff]
    %v2330 = vld [vmem:[%s4 + $0x48] sm:$0xff]
    %v2331 = vld [vmem:[%s4 + $0x50] sm:$0xff]
    %v2332 = vld [vmem:[%s4 + $0x58] sm:$0xff]
    %v2333 = vld [vmem:[%s4 + $0x60] sm:$0xff]
    %v2334 = vld [vmem:[%s4 + $0x68] sm:$0xff]
    %v2335 = vld [vmem:[%s4 + $0x70] sm:$0xff]
    %v2336 = vld [vmem:[%s4 + $0x78] sm:$0xff]
    %v2337 = vld [vmem:[%s4 + $0x80] sm:$0xff]
    %v2338 = vld [vmem:[%s4 + $0x88] sm:$0xff]
    %v2339 = vld [vmem:[%s4 + $0x90] sm:$0xff]
    %v2340 = vld [vmem:[%s4 + $0x98] sm:$0xff]
    %v2341 = vld [vmem:[%s4 + $0xa0] sm:$0xff]
    %v2342 = vld [vmem:[%s4 + $0xa8] sm:$0xff]
    %v2343 = vld [vmem:[%s4 + $0xb0] sm:$0xff]
    %v2344 = vld [vmem:[%s4 + $0xb8] sm:$0xff]
    %v2345 = vld [vmem:[%s4 + $0xc0] sm:$0xff]
    %v2346 = vld [vmem:[%s4 + $0xc8] sm:$0xff]
    %v2347 = vld [vmem:[%s4 + $0xd0] sm:$0xff]
    %v2348 = vld [vmem:[%s4 + $0xd8] sm:$0xff]
    %v2349 = vld [vmem:[%s4 + $0xe0] sm:$0xff]
    %v2350 = vld [vmem:[%s4 + $0xe8] sm:$0xff]
    %v2351 = vld [vmem:[%s4 + $0xf0] sm:$0xff]
    %v2352 = vld [vmem:[%s4 + $0xf8] sm:$0xff]
    %v2353 = vld [vmem:[%s4 + $0x100] sm:$0xff]
    %v2354 = vld [vmem:[%s4 + $0x108] sm:$0xff]
    %v2355 = vld [vmem:[%s4 + $0x110] sm:$0xff]
    %v2356 = vld [vmem:[%s4 + $0x118] sm:$0xff]
    %v2357 = vld [vmem:[%s4 + $0x120] sm:$0xff]
    %v2358 = vld [vmem:[%s4 + $0x128] sm:$0xff]
    %v2359 = vld [vmem:[%s4 + $0x130] sm:$0xff]
    %v2360 = vld [vmem:[%s4 + $0x138] sm:$0xff]
    %v2361 = vld [vmem:[%s4 + $0x140] sm:$0xff]
    %v2362 = vld [vmem:[%s4 + $0x148] sm:$0xff]
    %v2363 = vld [vmem:[%s4 + $0x150] sm:$0xff]
    %v2364 = vld [vmem:[%s4 + $0x158] sm:$0xff]
    %v2365 = vld [vmem:[%s4 + $0x160] sm:$0xff]
    %v2366 = vld [vmem:[%s4 + $0x168] sm:$0xff]
    %v2367 = vld [vmem:[%s4 + $0x170] sm:$0xff]
    %v2368 = vld [vmem:[%s4 + $0x178] sm:$0xff]
    %v2369 = vld [vmem:[%s4 + $0x180] sm:$0xff]
    %v2370 = vld [vmem:[%s4 + $0x188] sm:$0xff]
    %v2371 = vld [vmem:[%s4 + $0x190] sm:$0xff]
    %v2372 = vld [vmem:[%s4 + $0x198] sm:$0xff]
    %v2373 = vld [vmem:[%s4 + $0x1a0] sm:$0xff]
    %v2374 = vld [vmem:[%s4 + $0x1a8] sm:$0xff]
    %v2375 = vld [vmem:[%s4 + $0x1b0] sm:$0xff]
    %v2376 = vld [vmem:[%s4 + $0x1b8] sm:$0xff]
    %v2377 = vld [vmem:[%s4 + $0x1c0] sm:$0xff]
    %v2378 = vld [vmem:[%s4 + $0x1c8] sm:$0xff]
    %v2379 = vld [vmem:[%s4 + $0x1d0] sm:$0xff]
    %v2380 = vld [vmem:[%s4 + $0x1d8] sm:$0xff]
    %v2381 = vld [vmem:[%s4 + $0x1e0] sm:$0xff]
    %v2382 = vld [vmem:[%s4 + $0x1e8] sm:$0xff]
    %v2383 = vld [vmem:[%s4 + $0x1f0] sm:$0xff]
    %v2384 = vld [vmem:[%s4 + $0x1f8] sm:$0xff]
    %2385 = vmatprep.subr.mxu0 %v2382
    %2386 = vmatpush1.msra.mxu0 %v2381
    %2387 = vmatprep.subr.mxu0 %v2378
    %2388 = vmatpush1.msra.mxu0 %v2377
    %2389 = vmatprep.subr.mxu0 %v2374
    %2390 = vmatpush1.msra.mxu0 %v2373
    %2391 = vmatprep.subr.mxu0 %v2370
    %2392 = vmatpush1.msra.mxu0 %v2369
    %2393 = vmatprep.subr.mxu0 %v2366
    %2394 = vmatpush1.msra.mxu0 %v2365
    %2395 = vmatprep.subr.mxu0 %v2362
    %2396 = vmatpush1.msra.mxu0 %v2361
    %2397 = vmatprep.subr.mxu0 %v2358
    %2398 = vmatpush1.msra.mxu0 %v2357
    %2399 = vmatprep.subr.mxu0 %v2354
    %2400 = vmatpush1.msra.mxu0 %v2353
    %2401 = vmatprep.subr.mxu0 %v2350
    %2402 = vmatpush1.msra.mxu0 %v2349
    %2403 = vmatprep.subr.mxu0 %v2346
    %2404 = vmatpush1.msra.mxu0 %v2345
    %2405 = vmatprep.subr.mxu0 %v2342
    %2406 = vmatpush1.msra.mxu0 %v2341
    %2407 = vmatprep.subr.mxu0 %v2338
    %2408 = vmatpush1.msra.mxu0 %v2337
    %2409 = vmatprep.subr.mxu0 %v2334
    %2410 = vmatpush1.msra.mxu0 %v2333
    %2411 = vmatprep.subr.mxu0 %v2330
    %2412 = vmatpush1.msra.mxu0 %v2329
    %2413 = vmatprep.subr.mxu0 %v2326
    %2414 = vmatpush1.msra.mxu0 %v2325
    %2415 = vmatprep.subr.mxu0 %v2322
    %2416 = vmatpush1.msra.mxu0 %v2321
    %2417 = vmatprep.subr.mxu0 0.0
    %2418 = vmatpush2.msra.mxu0 0.0
    %2419 = vmatprep.subr.mxu0 0.0
    %2420 = vmatpush2.msra.mxu0 0.0
    %2421 = vmatprep.subr.mxu0 0.0
    %2422 = vmatpush2.msra.mxu0 0.0
    %2423 = vmatprep.subr.mxu0 0.0
    %2424 = vmatpush2.msra.mxu0 0.0
    %2425 = vmatprep.subr.mxu0 0.0
    %2426 = vmatpush2.msra.mxu0 0.0
    %2427 = vmatprep.subr.mxu0 0.0
    %2428 = vmatpush2.msra.mxu0 0.0
    %2429 = vmatprep.subr.mxu0 0.0
    %2430 = vmatpush2.msra.mxu0 0.0
    %2431 = vmatprep.subr.mxu0 0.0
    %2432 = vmatpush2.msra.mxu0 0.0
    %2433 = vmatprep.subr.mxu0 0.0
    %2434 = vmatpush2.msra.mxu0 0.0
    %2435 = vmatprep.subr.mxu0 0.0
    %2436 = vmatpush2.msra.mxu0 0.0
    %2437 = vmatprep.subr.mxu0 0.0
    %2438 = vmatpush2.msra.mxu0 0.0
    %2439 = vmatprep.subr.mxu0 0.0
    %2440 = vmatpush2.msra.mxu0 0.0
    %2441 = vmatprep.subr.mxu0 0.0
    %2442 = vmatpush2.msra.mxu0 0.0
    %2443 = vmatprep.subr.mxu0 0.0
    %2444 = vmatpush2.msra.mxu0 0.0
    %2445 = vmatprep.subr.mxu0 0.0
    %2446 = vmatpush2.msra.mxu0 0.0
    %2447 = vmatprep.subr.mxu0 0.0
    %2448 = vmatpush2.msra.mxu0 0.0
    %2449 = vmatprep.mubr.f32.mxu0 0.0
    %2450 = vmatmul.mubr.f32.gmra.mxu0 %v2306
    %v2451 = vpop.f32.mrf.mxu0
    %v2452 = vadd.f32 0.0, %v2451
    %v2453 = vpop.f32.mrf.mxu0
    %v2454 = vadd.f32 0.0, %v2453
    %2455 = vdwg.mxu0
    %2456 = vmatprep.subr.mxu0 %v2384
    %2457 = vmatpush1.msra.mxu0 %v2383
    %2458 = vmatprep.subr.mxu0 %v2380
    %2459 = vmatpush1.msra.mxu0 %v2379
    %2460 = vmatprep.subr.mxu0 %v2376
    %2461 = vmatpush1.msra.mxu0 %v2375
    %2462 = vmatprep.subr.mxu0 %v2372
    %2463 = vmatpush1.msra.mxu0 %v2371
    %2464 = vmatprep.subr.mxu0 %v2368
    %2465 = vmatpush1.msra.mxu0 %v2367
    %2466 = vmatprep.subr.mxu0 %v2364
    %2467 = vmatpush1.msra.mxu0 %v2363
    %2468 = vmatprep.subr.mxu0 %v2360
    %2469 = vmatpush1.msra.mxu0 %v2359
    %2470 = vmatprep.subr.mxu0 %v2356
    %2471 = vmatpush1.msra.mxu0 %v2355
    %2472 = vmatprep.subr.mxu0 %v2352
    %2473 = vmatpush1.msra.mxu0 %v2351
    %2474 = vmatprep.subr.mxu0 %v2348
    %2475 = vmatpush1.msra.mxu0 %v2347
    %2476 = vmatprep.subr.mxu0 %v2344
    %2477 = vmatpush1.msra.mxu0 %v2343
    %2478 = vmatprep.subr.mxu0 %v2340
    %2479 = vmatpush1.msra.mxu0 %v2339
    %2480 = vmatprep.subr.mxu0 %v2336
    %2481 = vmatpush1.msra.mxu0 %v2335
    %2482 = vmatprep.subr.mxu0 %v2332
    %2483 = vmatpush1.msra.mxu0 %v2331
    %2484 = vmatprep.subr.mxu0 %v2328
    %2485 = vmatpush1.msra.mxu0 %v2327
    %2486 = vmatprep.subr.mxu0 %v2324
    %2487 = vmatpush1.msra.mxu0 %v2323
    %2488 = vmatprep.subr.mxu0 0.0
    %2489 = vmatpush2.msra.mxu0 0.0
    %2490 = vmatprep.subr.mxu0 0.0
    %2491 = vmatpush2.msra.mxu0 0.0
    %2492 = vmatprep.subr.mxu0 0.0
    %2493 = vmatpush2.msra.mxu0 0.0
    %2494 = vmatprep.subr.mxu0 0.0
    %2495 = vmatpush2.msra.mxu0 0.0
    %2496 = vmatprep.subr.mxu0 0.0
    %2497 = vmatpush2.msra.mxu0 0.0
    %2498 = vmatprep.subr.mxu0 0.0
    %2499 = vmatpush2.msra.mxu0 0.0
    %2500 = vmatprep.subr.mxu0 0.0
    %2501 = vmatpush2.msra.mxu0 0.0
    %2502 = vmatprep.subr.mxu0 0.0
    %2503 = vmatpush2.msra.mxu0 0.0
    %2504 = vmatprep.subr.mxu0 0.0
    %2505 = vmatpush2.msra.mxu0 0.0
    %2506 = vmatprep.subr.mxu0 0.0
    %2507 = vmatpush2.msra.mxu0 0.0
    %2508 = vmatprep.subr.mxu0 0.0
    %2509 = vmatpush2.msra.mxu0 0.0
    %2510 = vmatprep.subr.mxu0 0.0
    %2511 = vmatpush2.msra.mxu0 0.0
    %2512 = vmatprep.subr.mxu0 0.0
    %2513 = vmatpush2.msra.mxu0 0.0
    %2514 = vmatprep.subr.mxu0 0.0
    %2515 = vmatpush2.msra.mxu0 0.0
    %2516 = vmatprep.subr.mxu0 0.0
    %2517 = vmatpush2.msra.mxu0 0.0
    %2518 = vmatprep.subr.mxu0 0.0
    %2519 = vmatpush2.msra.mxu0 0.0
    %2520 = vmatprep.mubr.f32.mxu0 0.0
    %2521 = vmatmul.mubr.f32.gmra.mxu0 %v2306
    %v2522 = vpop.f32.mrf.mxu0
    %v2523 = vadd.f32 0.0, %v2522
    %v2524 = vpop.f32.mrf.mxu0
    %v2525 = vadd.f32 0.0, %v2524
    %2526 = vdwg.mxu0
    %v2527 = vadd.f32 %v2317, %v2452
    %v2528 = vadd.f32 %v2318, %v2454
    %v2529 = vadd.f32 %v2319, %v2523
    %v2530 = vadd.f32 %v2320, %v2525
    %v2531 = vxor.u32 %v2527, 2147483648
    %v2532 = vmul.f32 %v2531, 1.442695
    %v2533 = vpow.pop %v2532
    %v2534 = vadd.f32 %v2533, 1.0
    %v2535 = vrcp.pop %v2534
    %v2536 = vmul.f32 1.0, %v2535
    %v2537 = vxor.u32 %v2528, 2147483648
    %v2538 = vmul.f32 %v2537, 1.442695
    %v2539 = vpow.pop %v2538
    %v2540 = vadd.f32 %v2539, 1.0
    %v2541 = vrcp.pop %v2540
    %v2542 = vmul.f32 1.0, %v2541
    %v2543 = vtanh.pop %v2529
    %v2544 = vxor.u32 %v2530, 2147483648
    %v2545 = vmul.f32 %v2544, 1.442695
    %v2546 = vpow.pop %v2545
    %v2547 = vadd.f32 %v2546, 1.0
    %v2548 = vrcp.pop %v2547
    %v2549 = vmul.f32 1.0, %v2548
    %v2550 = vmul.f32 %v2542, %v2304
    %v2551 = vmul.f32 %v2536, %v2543
    %v2552 = vadd.f32 %v2550, %v2551
    %v2553 = vtanh.pop %v2552
    %v2554 = vmul.f32 %v2549, %v2553
    %2555 = vst.msk [vmem:[#allocation3 + $0x30] sm:$0xff] %vm328, %v2554
    %2556 = vst.msk [vmem:[#allocation3 + $0x48] sm:$0xff] %vm1067, %v2554
    %v2557 = vld [vmem:[#allocation2 + $0xe0] sm:$0xff]
    %v2558 = vld [vmem:[#allocation2 + $0xe8] sm:$0xff]
    %v2559 = vld [vmem:[#allocation2 + $0xf0] sm:$0xff]
    %v2560 = vld [vmem:[#allocation2 + $0xf8] sm:$0xff]
    %v2561 = vld [vmem:[#allocation2 + $0x100] sm:$0xff]
    %v2562 = vld [vmem:[#allocation2 + $0x108] sm:$0xff]
    %v2563 = vld [vmem:[#allocation2 + $0x110] sm:$0xff]
    %v2564 = vld [vmem:[#allocation2 + $0x118] sm:$0xff]
    %v2565 = vsel %vm816, %v2557, %v2561
    %v2566 = vsel %vm817, %v2558, %v2562
    %v2567 = vsel %vm818, %v2559, %v2563
    %v2568 = vsel %vm819, %v2560, %v2564
    %v2569 = vld [vmem:[%s4] sm:$0xff]
    %v2570 = vld [vmem:[%s4 + $0x8] sm:$0xff]
    %v2571 = vld [vmem:[%s4 + $0x10] sm:$0xff]
    %v2572 = vld [vmem:[%s4 + $0x18] sm:$0xff]
    %v2573 = vld [vmem:[%s4 + $0x20] sm:$0xff]
    %v2574 = vld [vmem:[%s4 + $0x28] sm:$0xff]
    %v2575 = vld [vmem:[%s4 + $0x30] sm:$0xff]
    %v2576 = vld [vmem:[%s4 + $0x38] sm:$0xff]
    %v2577 = vld [vmem:[%s4 + $0x40] sm:$0xff]
    %v2578 = vld [vmem:[%s4 + $0x48] sm:$0xff]
    %v2579 = vld [vmem:[%s4 + $0x50] sm:$0xff]
    %v2580 = vld [vmem:[%s4 + $0x58] sm:$0xff]
    %v2581 = vld [vmem:[%s4 + $0x60] sm:$0xff]
    %v2582 = vld [vmem:[%s4 + $0x68] sm:$0xff]
    %v2583 = vld [vmem:[%s4 + $0x70] sm:$0xff]
    %v2584 = vld [vmem:[%s4 + $0x78] sm:$0xff]
    %v2585 = vld [vmem:[%s4 + $0x80] sm:$0xff]
    %v2586 = vld [vmem:[%s4 + $0x88] sm:$0xff]
    %v2587 = vld [vmem:[%s4 + $0x90] sm:$0xff]
    %v2588 = vld [vmem:[%s4 + $0x98] sm:$0xff]
    %v2589 = vld [vmem:[%s4 + $0xa0] sm:$0xff]
    %v2590 = vld [vmem:[%s4 + $0xa8] sm:$0xff]
    %v2591 = vld [vmem:[%s4 + $0xb0] sm:$0xff]
    %v2592 = vld [vmem:[%s4 + $0xb8] sm:$0xff]
    %v2593 = vld [vmem:[%s4 + $0xc0] sm:$0xff]
    %v2594 = vld [vmem:[%s4 + $0xc8] sm:$0xff]
    %v2595 = vld [vmem:[%s4 + $0xd0] sm:$0xff]
    %v2596 = vld [vmem:[%s4 + $0xd8] sm:$0xff]
    %v2597 = vld [vmem:[%s4 + $0xe0] sm:$0xff]
    %v2598 = vld [vmem:[%s4 + $0xe8] sm:$0xff]
    %v2599 = vld [vmem:[%s4 + $0xf0] sm:$0xff]
    %v2600 = vld [vmem:[%s4 + $0xf8] sm:$0xff]
    %v2601 = vld [vmem:[%s4 + $0x100] sm:$0xff]
    %v2602 = vld [vmem:[%s4 + $0x108] sm:$0xff]
    %v2603 = vld [vmem:[%s4 + $0x110] sm:$0xff]
    %v2604 = vld [vmem:[%s4 + $0x118] sm:$0xff]
    %v2605 = vld [vmem:[%s4 + $0x120] sm:$0xff]
    %v2606 = vld [vmem:[%s4 + $0x128] sm:$0xff]
    %v2607 = vld [vmem:[%s4 + $0x130] sm:$0xff]
    %v2608 = vld [vmem:[%s4 + $0x138] sm:$0xff]
    %v2609 = vld [vmem:[%s4 + $0x140] sm:$0xff]
    %v2610 = vld [vmem:[%s4 + $0x148] sm:$0xff]
    %v2611 = vld [vmem:[%s4 + $0x150] sm:$0xff]
    %v2612 = vld [vmem:[%s4 + $0x158] sm:$0xff]
    %v2613 = vld [vmem:[%s4 + $0x160] sm:$0xff]
    %v2614 = vld [vmem:[%s4 + $0x168] sm:$0xff]
    %v2615 = vld [vmem:[%s4 + $0x170] sm:$0xff]
    %v2616 = vld [vmem:[%s4 + $0x178] sm:$0xff]
    %v2617 = vld [vmem:[%s4 + $0x180] sm:$0xff]
    %v2618 = vld [vmem:[%s4 + $0x188] sm:$0xff]
    %v2619 = vld [vmem:[%s4 + $0x190] sm:$0xff]
    %v2620 = vld [vmem:[%s4 + $0x198] sm:$0xff]
    %v2621 = vld [vmem:[%s4 + $0x1a0] sm:$0xff]
    %v2622 = vld [vmem:[%s4 + $0x1a8] sm:$0xff]
    %v2623 = vld [vmem:[%s4 + $0x1b0] sm:$0xff]
    %v2624 = vld [vmem:[%s4 + $0x1b8] sm:$0xff]
    %v2625 = vld [vmem:[%s4 + $0x1c0] sm:$0xff]
    %v2626 = vld [vmem:[%s4 + $0x1c8] sm:$0xff]
    %v2627 = vld [vmem:[%s4 + $0x1d0] sm:$0xff]
    %v2628 = vld [vmem:[%s4 + $0x1d8] sm:$0xff]
    %v2629 = vld [vmem:[%s4 + $0x1e0] sm:$0xff]
    %v2630 = vld [vmem:[%s4 + $0x1e8] sm:$0xff]
    %v2631 = vld [vmem:[%s4 + $0x1f0] sm:$0xff]
    %v2632 = vld [vmem:[%s4 + $0x1f8] sm:$0xff]
    %2633 = vmatprep.subr.mxu0 %v2630
    %2634 = vmatpush1.msra.mxu0 %v2629
    %2635 = vmatprep.subr.mxu0 %v2626
    %2636 = vmatpush1.msra.mxu0 %v2625
    %2637 = vmatprep.subr.mxu0 %v2622
    %2638 = vmatpush1.msra.mxu0 %v2621
    %2639 = vmatprep.subr.mxu0 %v2618
    %2640 = vmatpush1.msra.mxu0 %v2617
    %2641 = vmatprep.subr.mxu0 %v2614
    %2642 = vmatpush1.msra.mxu0 %v2613
    %2643 = vmatprep.subr.mxu0 %v2610
    %2644 = vmatpush1.msra.mxu0 %v2609
    %2645 = vmatprep.subr.mxu0 %v2606
    %2646 = vmatpush1.msra.mxu0 %v2605
    %2647 = vmatprep.subr.mxu0 %v2602
    %2648 = vmatpush1.msra.mxu0 %v2601
    %2649 = vmatprep.subr.mxu0 %v2598
    %2650 = vmatpush1.msra.mxu0 %v2597
    %2651 = vmatprep.subr.mxu0 %v2594
    %2652 = vmatpush1.msra.mxu0 %v2593
    %2653 = vmatprep.subr.mxu0 %v2590
    %2654 = vmatpush1.msra.mxu0 %v2589
    %2655 = vmatprep.subr.mxu0 %v2586
    %2656 = vmatpush1.msra.mxu0 %v2585
    %2657 = vmatprep.subr.mxu0 %v2582
    %2658 = vmatpush1.msra.mxu0 %v2581
    %2659 = vmatprep.subr.mxu0 %v2578
    %2660 = vmatpush1.msra.mxu0 %v2577
    %2661 = vmatprep.subr.mxu0 %v2574
    %2662 = vmatpush1.msra.mxu0 %v2573
    %2663 = vmatprep.subr.mxu0 %v2570
    %2664 = vmatpush1.msra.mxu0 %v2569
    %2665 = vmatprep.subr.mxu0 0.0
    %2666 = vmatpush2.msra.mxu0 0.0
    %2667 = vmatprep.subr.mxu0 0.0
    %2668 = vmatpush2.msra.mxu0 0.0
    %2669 = vmatprep.subr.mxu0 0.0
    %2670 = vmatpush2.msra.mxu0 0.0
    %2671 = vmatprep.subr.mxu0 0.0
    %2672 = vmatpush2.msra.mxu0 0.0
    %2673 = vmatprep.subr.mxu0 0.0
    %2674 = vmatpush2.msra.mxu0 0.0
    %2675 = vmatprep.subr.mxu0 0.0
    %2676 = vmatpush2.msra.mxu0 0.0
    %2677 = vmatprep.subr.mxu0 0.0
    %2678 = vmatpush2.msra.mxu0 0.0
    %2679 = vmatprep.subr.mxu0 0.0
    %2680 = vmatpush2.msra.mxu0 0.0
    %2681 = vmatprep.subr.mxu0 0.0
    %2682 = vmatpush2.msra.mxu0 0.0
    %2683 = vmatprep.subr.mxu0 0.0
    %2684 = vmatpush2.msra.mxu0 0.0
    %2685 = vmatprep.subr.mxu0 0.0
    %2686 = vmatpush2.msra.mxu0 0.0
    %2687 = vmatprep.subr.mxu0 0.0
    %2688 = vmatpush2.msra.mxu0 0.0
    %2689 = vmatprep.subr.mxu0 0.0
    %2690 = vmatpush2.msra.mxu0 0.0
    %2691 = vmatprep.subr.mxu0 0.0
    %2692 = vmatpush2.msra.mxu0 0.0
    %2693 = vmatprep.subr.mxu0 0.0
    %2694 = vmatpush2.msra.mxu0 0.0
    %2695 = vmatprep.subr.mxu0 0.0
    %2696 = vmatpush2.msra.mxu0 0.0
    %2697 = vmatprep.mubr.f32.mxu0 0.0
    %2698 = vmatmul.mubr.f32.gmra.mxu0 %v2554
    %v2699 = vpop.f32.mrf.mxu0
    %v2700 = vadd.f32 0.0, %v2699
    %v2701 = vpop.f32.mrf.mxu0
    %v2702 = vadd.f32 0.0, %v2701
    %2703 = vdwg.mxu0
    %2704 = vmatprep.subr.mxu0 %v2632
    %2705 = vmatpush1.msra.mxu0 %v2631
    %2706 = vmatprep.subr.mxu0 %v2628
    %2707 = vmatpush1.msra.mxu0 %v2627
    %2708 = vmatprep.subr.mxu0 %v2624
    %2709 = vmatpush1.msra.mxu0 %v2623
    %2710 = vmatprep.subr.mxu0 %v2620
    %2711 = vmatpush1.msra.mxu0 %v2619
    %2712 = vmatprep.subr.mxu0 %v2616
    %2713 = vmatpush1.msra.mxu0 %v2615
    %2714 = vmatprep.subr.mxu0 %v2612
    %2715 = vmatpush1.msra.mxu0 %v2611
    %2716 = vmatprep.subr.mxu0 %v2608
    %2717 = vmatpush1.msra.mxu0 %v2607
    %2718 = vmatprep.subr.mxu0 %v2604
    %2719 = vmatpush1.msra.mxu0 %v2603
    %2720 = vmatprep.subr.mxu0 %v2600
    %2721 = vmatpush1.msra.mxu0 %v2599
    %2722 = vmatprep.subr.mxu0 %v2596
    %2723 = vmatpush1.msra.mxu0 %v2595
    %2724 = vmatprep.subr.mxu0 %v2592
    %2725 = vmatpush1.msra.mxu0 %v2591
    %2726 = vmatprep.subr.mxu0 %v2588
    %2727 = vmatpush1.msra.mxu0 %v2587
    %2728 = vmatprep.subr.mxu0 %v2584
    %2729 = vmatpush1.msra.mxu0 %v2583
    %2730 = vmatprep.subr.mxu0 %v2580
    %2731 = vmatpush1.msra.mxu0 %v2579
    %2732 = vmatprep.subr.mxu0 %v2576
    %2733 = vmatpush1.msra.mxu0 %v2575
    %2734 = vmatprep.subr.mxu0 %v2572
    %2735 = vmatpush1.msra.mxu0 %v2571
    %2736 = vmatprep.subr.mxu0 0.0
    %2737 = vmatpush2.msra.mxu0 0.0
    %2738 = vmatprep.subr.mxu0 0.0
    %2739 = vmatpush2.msra.mxu0 0.0
    %2740 = vmatprep.subr.mxu0 0.0
    %2741 = vmatpush2.msra.mxu0 0.0
    %2742 = vmatprep.subr.mxu0 0.0
    %2743 = vmatpush2.msra.mxu0 0.0
    %2744 = vmatprep.subr.mxu0 0.0
    %2745 = vmatpush2.msra.mxu0 0.0
    %2746 = vmatprep.subr.mxu0 0.0
    %2747 = vmatpush2.msra.mxu0 0.0
    %2748 = vmatprep.subr.mxu0 0.0
    %2749 = vmatpush2.msra.mxu0 0.0
    %2750 = vmatprep.subr.mxu0 0.0
    %2751 = vmatpush2.msra.mxu0 0.0
    %2752 = vmatprep.subr.mxu0 0.0
    %2753 = vmatpush2.msra.mxu0 0.0
    %2754 = vmatprep.subr.mxu0 0.0
    %2755 = vmatpush2.msra.mxu0 0.0
    %2756 = vmatprep.subr.mxu0 0.0
    %2757 = vmatpush2.msra.mxu0 0.0
    %2758 = vmatprep.subr.mxu0 0.0
    %2759 = vmatpush2.msra.mxu0 0.0
    %2760 = vmatprep.subr.mxu0 0.0
    %2761 = vmatpush2.msra.mxu0 0.0
    %2762 = vmatprep.subr.mxu0 0.0
    %2763 = vmatpush2.msra.mxu0 0.0
    %2764 = vmatprep.subr.mxu0 0.0
    %2765 = vmatpush2.msra.mxu0 0.0
    %2766 = vmatprep.subr.mxu0 0.0
    %2767 = vmatpush2.msra.mxu0 0.0
    %2768 = vmatprep.mubr.f32.mxu0 0.0
    %2769 = vmatmul.mubr.f32.gmra.mxu0 %v2554
    %v2770 = vpop.f32.mrf.mxu0
    %v2771 = vadd.f32 0.0, %v2770
    %v2772 = vpop.f32.mrf.mxu0
    %v2773 = vadd.f32 0.0, %v2772
    %2774 = vdwg.mxu0
    %v2775 = vadd.f32 %v2565, %v2700
    %v2776 = vadd.f32 %v2566, %v2702
    %v2777 = vadd.f32 %v2567, %v2771
    %v2778 = vadd.f32 %v2568, %v2773
    %v2779 = vxor.u32 %v2775, 2147483648
    %v2780 = vmul.f32 %v2779, 1.442695
    %v2781 = vpow.pop %v2780
    %v2782 = vadd.f32 %v2781, 1.0
    %v2783 = vrcp.pop %v2782
    %v2784 = vmul.f32 1.0, %v2783
    %v2785 = vxor.u32 %v2776, 2147483648
    %v2786 = vmul.f32 %v2785, 1.442695
    %v2787 = vpow.pop %v2786
    %v2788 = vadd.f32 %v2787, 1.0
    %v2789 = vrcp.pop %v2788
    %v2790 = vmul.f32 1.0, %v2789
    %v2791 = vtanh.pop %v2777
    %v2792 = vxor.u32 %v2778, 2147483648
    %v2793 = vmul.f32 %v2792, 1.442695
    %v2794 = vpow.pop %v2793
    %v2795 = vadd.f32 %v2794, 1.0
    %v2796 = vrcp.pop %v2795
    %v2797 = vmul.f32 1.0, %v2796
    %v2798 = vmul.f32 %v2790, %v2552
    %v2799 = vmul.f32 %v2784, %v2791
    %v2800 = vadd.f32 %v2798, %v2799
    %v2801 = vtanh.pop %v2800
    %v2802 = vmul.f32 %v2797, %v2801
    %2803 = vst.msk [vmem:[#allocation3 + $0x38] sm:$0xff] %vm328, %v2802
    %2804 = vst.msk [vmem:[#allocation3 + $0x40] sm:$0xff] %vm1067, %v2802
    %v2805 = vld [vmem:[#allocation2 + $0x100] sm:$0xff]
    %v2806 = vld [vmem:[#allocation2 + $0x108] sm:$0xff]
    %v2807 = vld [vmem:[#allocation2 + $0x110] sm:$0xff]
    %v2808 = vld [vmem:[#allocation2 + $0x118] sm:$0xff]
    %v2809 = vld [vmem:[#allocation2 + $0xe0] sm:$0xff]
    %v2810 = vld [vmem:[#allocation2 + $0xe8] sm:$0xff]
    %v2811 = vld [vmem:[#allocation2 + $0xf0] sm:$0xff]
    %v2812 = vld [vmem:[#allocation2 + $0xf8] sm:$0xff]
    %v2813 = vsel %vm816, %v2805, %v2809
    %v2814 = vsel %vm817, %v2806, %v2810
    %v2815 = vsel %vm818, %v2807, %v2811
    %v2816 = vsel %vm819, %v2808, %v2812
    %v2817 = vld [vmem:[%s4] sm:$0xff]
    %v2818 = vld [vmem:[%s4 + $0x8] sm:$0xff]
    %v2819 = vld [vmem:[%s4 + $0x10] sm:$0xff]
    %v2820 = vld [vmem:[%s4 + $0x18] sm:$0xff]
    %v2821 = vld [vmem:[%s4 + $0x20] sm:$0xff]
    %v2822 = vld [vmem:[%s4 + $0x28] sm:$0xff]
    %v2823 = vld [vmem:[%s4 + $0x30] sm:$0xff]
    %v2824 = vld [vmem:[%s4 + $0x38] sm:$0xff]
    %v2825 = vld [vmem:[%s4 + $0x40] sm:$0xff]
    %v2826 = vld [vmem:[%s4 + $0x48] sm:$0xff]
    %v2827 = vld [vmem:[%s4 + $0x50] sm:$0xff]
    %v2828 = vld [vmem:[%s4 + $0x58] sm:$0xff]
    %v2829 = vld [vmem:[%s4 + $0x60] sm:$0xff]
    %v2830 = vld [vmem:[%s4 + $0x68] sm:$0xff]
    %v2831 = vld [vmem:[%s4 + $0x70] sm:$0xff]
    %v2832 = vld [vmem:[%s4 + $0x78] sm:$0xff]
    %v2833 = vld [vmem:[%s4 + $0x80] sm:$0xff]
    %v2834 = vld [vmem:[%s4 + $0x88] sm:$0xff]
    %v2835 = vld [vmem:[%s4 + $0x90] sm:$0xff]
    %v2836 = vld [vmem:[%s4 + $0x98] sm:$0xff]
    %v2837 = vld [vmem:[%s4 + $0xa0] sm:$0xff]
    %v2838 = vld [vmem:[%s4 + $0xa8] sm:$0xff]
    %v2839 = vld [vmem:[%s4 + $0xb0] sm:$0xff]
    %v2840 = vld [vmem:[%s4 + $0xb8] sm:$0xff]
    %v2841 = vld [vmem:[%s4 + $0xc0] sm:$0xff]
    %v2842 = vld [vmem:[%s4 + $0xc8] sm:$0xff]
    %v2843 = vld [vmem:[%s4 + $0xd0] sm:$0xff]
    %v2844 = vld [vmem:[%s4 + $0xd8] sm:$0xff]
    %v2845 = vld [vmem:[%s4 + $0xe0] sm:$0xff]
    %v2846 = vld [vmem:[%s4 + $0xe8] sm:$0xff]
    %v2847 = vld [vmem:[%s4 + $0xf0] sm:$0xff]
    %v2848 = vld [vmem:[%s4 + $0xf8] sm:$0xff]
    %v2849 = vld [vmem:[%s4 + $0x100] sm:$0xff]
    %v2850 = vld [vmem:[%s4 + $0x108] sm:$0xff]
    %v2851 = vld [vmem:[%s4 + $0x110] sm:$0xff]
    %v2852 = vld [vmem:[%s4 + $0x118] sm:$0xff]
    %v2853 = vld [vmem:[%s4 + $0x120] sm:$0xff]
    %v2854 = vld [vmem:[%s4 + $0x128] sm:$0xff]
    %v2855 = vld [vmem:[%s4 + $0x130] sm:$0xff]
    %v2856 = vld [vmem:[%s4 + $0x138] sm:$0xff]
    %v2857 = vld [vmem:[%s4 + $0x140] sm:$0xff]
    %v2858 = vld [vmem:[%s4 + $0x148] sm:$0xff]
    %v2859 = vld [vmem:[%s4 + $0x150] sm:$0xff]
    %v2860 = vld [vmem:[%s4 + $0x158] sm:$0xff]
    %v2861 = vld [vmem:[%s4 + $0x160] sm:$0xff]
    %v2862 = vld [vmem:[%s4 + $0x168] sm:$0xff]
    %v2863 = vld [vmem:[%s4 + $0x170] sm:$0xff]
    %v2864 = vld [vmem:[%s4 + $0x178] sm:$0xff]
    %v2865 = vld [vmem:[%s4 + $0x180] sm:$0xff]
    %v2866 = vld [vmem:[%s4 + $0x188] sm:$0xff]
    %v2867 = vld [vmem:[%s4 + $0x190] sm:$0xff]
    %v2868 = vld [vmem:[%s4 + $0x198] sm:$0xff]
    %v2869 = vld [vmem:[%s4 + $0x1a0] sm:$0xff]
    %v2870 = vld [vmem:[%s4 + $0x1a8] sm:$0xff]
    %v2871 = vld [vmem:[%s4 + $0x1b0] sm:$0xff]
    %v2872 = vld [vmem:[%s4 + $0x1b8] sm:$0xff]
    %v2873 = vld [vmem:[%s4 + $0x1c0] sm:$0xff]
    %v2874 = vld [vmem:[%s4 + $0x1c8] sm:$0xff]
    %v2875 = vld [vmem:[%s4 + $0x1d0] sm:$0xff]
    %v2876 = vld [vmem:[%s4 + $0x1d8] sm:$0xff]
    %v2877 = vld [vmem:[%s4 + $0x1e0] sm:$0xff]
    %v2878 = vld [vmem:[%s4 + $0x1e8] sm:$0xff]
    %v2879 = vld [vmem:[%s4 + $0x1f0] sm:$0xff]
    %v2880 = vld [vmem:[%s4 + $0x1f8] sm:$0xff]
    %2881 = vmatprep.subr.mxu0 %v2878
    %2882 = vmatpush1.msra.mxu0 %v2877
    %2883 = vmatprep.subr.mxu0 %v2874
    %2884 = vmatpush1.msra.mxu0 %v2873
    %2885 = vmatprep.subr.mxu0 %v2870
    %2886 = vmatpush1.msra.mxu0 %v2869
    %2887 = vmatprep.subr.mxu0 %v2866
    %2888 = vmatpush1.msra.mxu0 %v2865
    %2889 = vmatprep.subr.mxu0 %v2862
    %2890 = vmatpush1.msra.mxu0 %v2861
    %2891 = vmatprep.subr.mxu0 %v2858
    %2892 = vmatpush1.msra.mxu0 %v2857
    %2893 = vmatprep.subr.mxu0 %v2854
    %2894 = vmatpush1.msra.mxu0 %v2853
    %2895 = vmatprep.subr.mxu0 %v2850
    %2896 = vmatpush1.msra.mxu0 %v2849
    %2897 = vmatprep.subr.mxu0 %v2846
    %2898 = vmatpush1.msra.mxu0 %v2845
    %2899 = vmatprep.subr.mxu0 %v2842
    %2900 = vmatpush1.msra.mxu0 %v2841
    %2901 = vmatprep.subr.mxu0 %v2838
    %2902 = vmatpush1.msra.mxu0 %v2837
    %2903 = vmatprep.subr.mxu0 %v2834
    %2904 = vmatpush1.msra.mxu0 %v2833
    %2905 = vmatprep.subr.mxu0 %v2830
    %2906 = vmatpush1.msra.mxu0 %v2829
    %2907 = vmatprep.subr.mxu0 %v2826
    %2908 = vmatpush1.msra.mxu0 %v2825
    %2909 = vmatprep.subr.mxu0 %v2822
    %2910 = vmatpush1.msra.mxu0 %v2821
    %2911 = vmatprep.subr.mxu0 %v2818
    %2912 = vmatpush1.msra.mxu0 %v2817
    %2913 = vmatprep.subr.mxu0 0.0
    %2914 = vmatpush2.msra.mxu0 0.0
    %2915 = vmatprep.subr.mxu0 0.0
    %2916 = vmatpush2.msra.mxu0 0.0
    %2917 = vmatprep.subr.mxu0 0.0
    %2918 = vmatpush2.msra.mxu0 0.0
    %2919 = vmatprep.subr.mxu0 0.0
    %2920 = vmatpush2.msra.mxu0 0.0
    %2921 = vmatprep.subr.mxu0 0.0
    %2922 = vmatpush2.msra.mxu0 0.0
    %2923 = vmatprep.subr.mxu0 0.0
    %2924 = vmatpush2.msra.mxu0 0.0
    %2925 = vmatprep.subr.mxu0 0.0
    %2926 = vmatpush2.msra.mxu0 0.0
    %2927 = vmatprep.subr.mxu0 0.0
    %2928 = vmatpush2.msra.mxu0 0.0
    %2929 = vmatprep.subr.mxu0 0.0
    %2930 = vmatpush2.msra.mxu0 0.0
    %2931 = vmatprep.subr.mxu0 0.0
    %2932 = vmatpush2.msra.mxu0 0.0
    %2933 = vmatprep.subr.mxu0 0.0
    %2934 = vmatpush2.msra.mxu0 0.0
    %2935 = vmatprep.subr.mxu0 0.0
    %2936 = vmatpush2.msra.mxu0 0.0
    %2937 = vmatprep.subr.mxu0 0.0
    %2938 = vmatpush2.msra.mxu0 0.0
    %2939 = vmatprep.subr.mxu0 0.0
    %2940 = vmatpush2.msra.mxu0 0.0
    %2941 = vmatprep.subr.mxu0 0.0
    %2942 = vmatpush2.msra.mxu0 0.0
    %2943 = vmatprep.subr.mxu0 0.0
    %2944 = vmatpush2.msra.mxu0 0.0
    %2945 = vmatprep.mubr.f32.mxu0 0.0
    %2946 = vmatmul.mubr.f32.gmra.mxu0 %v2802
    %v2947 = vpop.f32.mrf.mxu0
    %v2948 = vadd.f32 0.0, %v2947
    %v2949 = vpop.f32.mrf.mxu0
    %v2950 = vadd.f32 0.0, %v2949
    %2951 = vdwg.mxu0
    %2952 = vmatprep.subr.mxu0 %v2880
    %2953 = vmatpush1.msra.mxu0 %v2879
    %2954 = vmatprep.subr.mxu0 %v2876
    %2955 = vmatpush1.msra.mxu0 %v2875
    %2956 = vmatprep.subr.mxu0 %v2872
    %2957 = vmatpush1.msra.mxu0 %v2871
    %2958 = vmatprep.subr.mxu0 %v2868
    %2959 = vmatpush1.msra.mxu0 %v2867
    %2960 = vmatprep.subr.mxu0 %v2864
    %2961 = vmatpush1.msra.mxu0 %v2863
    %2962 = vmatprep.subr.mxu0 %v2860
    %2963 = vmatpush1.msra.mxu0 %v2859
    %2964 = vmatprep.subr.mxu0 %v2856
    %2965 = vmatpush1.msra.mxu0 %v2855
    %2966 = vmatprep.subr.mxu0 %v2852
    %2967 = vmatpush1.msra.mxu0 %v2851
    %2968 = vmatprep.subr.mxu0 %v2848
    %2969 = vmatpush1.msra.mxu0 %v2847
    %2970 = vmatprep.subr.mxu0 %v2844
    %2971 = vmatpush1.msra.mxu0 %v2843
    %2972 = vmatprep.subr.mxu0 %v2840
    %2973 = vmatpush1.msra.mxu0 %v2839
    %2974 = vmatprep.subr.mxu0 %v2836
    %2975 = vmatpush1.msra.mxu0 %v2835
    %2976 = vmatprep.subr.mxu0 %v2832
    %2977 = vmatpush1.msra.mxu0 %v2831
    %2978 = vmatprep.subr.mxu0 %v2828
    %2979 = vmatpush1.msra.mxu0 %v2827
    %2980 = vmatprep.subr.mxu0 %v2824
    %2981 = vmatpush1.msra.mxu0 %v2823
    %2982 = vmatprep.subr.mxu0 %v2820
    %2983 = vmatpush1.msra.mxu0 %v2819
    %2984 = vmatprep.subr.mxu0 0.0
    %2985 = vmatpush2.msra.mxu0 0.0
    %2986 = vmatprep.subr.mxu0 0.0
    %2987 = vmatpush2.msra.mxu0 0.0
    %2988 = vmatprep.subr.mxu0 0.0
    %2989 = vmatpush2.msra.mxu0 0.0
    %2990 = vmatprep.subr.mxu0 0.0
    %2991 = vmatpush2.msra.mxu0 0.0
    %2992 = vmatprep.subr.mxu0 0.0
    %2993 = vmatpush2.msra.mxu0 0.0
    %2994 = vmatprep.subr.mxu0 0.0
    %2995 = vmatpush2.msra.mxu0 0.0
    %2996 = vmatprep.subr.mxu0 0.0
    %2997 = vmatpush2.msra.mxu0 0.0
    %2998 = vmatprep.subr.mxu0 0.0
    %2999 = vmatpush2.msra.mxu0 0.0
    %3000 = vmatprep.subr.mxu0 0.0
    %3001 = vmatpush2.msra.mxu0 0.0
    %3002 = vmatprep.subr.mxu0 0.0
    %3003 = vmatpush2.msra.mxu0 0.0
    %3004 = vmatprep.subr.mxu0 0.0
    %3005 = vmatpush2.msra.mxu0 0.0
    %3006 = vmatprep.subr.mxu0 0.0
    %3007 = vmatpush2.msra.mxu0 0.0
    %3008 = vmatprep.subr.mxu0 0.0
    %3009 = vmatpush2.msra.mxu0 0.0
    %3010 = vmatprep.subr.mxu0 0.0
    %3011 = vmatpush2.msra.mxu0 0.0
    %3012 = vmatprep.subr.mxu0 0.0
    %3013 = vmatpush2.msra.mxu0 0.0
    %3014 = vmatprep.subr.mxu0 0.0
    %3015 = vmatpush2.msra.mxu0 0.0
    %3016 = vmatprep.mubr.f32.mxu0 0.0
    %3017 = vmatmul.mubr.f32.gmra.mxu0 %v2802
    %v3018 = vpop.f32.mrf.mxu0
    %v3019 = vadd.f32 0.0, %v3018
    %v3020 = vpop.f32.mrf.mxu0
    %v3021 = vadd.f32 0.0, %v3020
    %3022 = vdwg.mxu0
    %v3023 = vadd.f32 %v2813, %v2948
    %v3024 = vadd.f32 %v2814, %v2950
    %v3025 = vadd.f32 %v2815, %v3019
    %v3026 = vadd.f32 %v2816, %v3021
    %v3027 = vxor.u32 %v3023, 2147483648
    %v3028 = vmul.f32 %v3027, 1.442695
    %v3029 = vpow.pop %v3028
    %v3030 = vadd.f32 %v3029, 1.0
    %v3031 = vrcp.pop %v3030
    %v3032 = vmul.f32 1.0, %v3031
    %v3033 = vxor.u32 %v3024, 2147483648
    %v3034 = vmul.f32 %v3033, 1.442695
    %v3035 = vpow.pop %v3034
    %v3036 = vadd.f32 %v3035, 1.0
    %v3037 = vrcp.pop %v3036
    %v3038 = vmul.f32 1.0, %v3037
    %v3039 = vtanh.pop %v3025
    %v3040 = vxor.u32 %v3026, 2147483648
    %v3041 = vmul.f32 %v3040, 1.442695
    %v3042 = vpow.pop %v3041
    %v3043 = vadd.f32 %v3042, 1.0
    %v3044 = vrcp.pop %v3043
    %v3045 = vmul.f32 1.0, %v3044
    %v3046 = vmul.f32 %v3038, %v2800
    %v3047 = vmul.f32 %v3032, %v3039
    %v3048 = vadd.f32 %v3046, %v3047
    %v3049 = vtanh.pop %v3048
    %v3050 = vmul.f32 %v3045, %v3049
    %3051 = vst.msk [vmem:[#allocation3 + $0x40] sm:$0xff] %vm328, %v3050
    %3052 = vst.msk [vmem:[#allocation3 + $0x38] sm:$0xff] %vm1067, %v3050
    %v3053 = vld [vmem:[#allocation2 + $0x120] sm:$0xff]
    %v3054 = vld [vmem:[#allocation2 + $0x128] sm:$0xff]
    %v3055 = vld [vmem:[#allocation2 + $0x130] sm:$0xff]
    %v3056 = vld [vmem:[#allocation2 + $0x138] sm:$0xff]
    %v3057 = vld [vmem:[#allocation2 + $0xc0] sm:$0xff]
    %v3058 = vld [vmem:[#allocation2 + $0xc8] sm:$0xff]
    %v3059 = vld [vmem:[#allocation2 + $0xd0] sm:$0xff]
    %v3060 = vld [vmem:[#allocation2 + $0xd8] sm:$0xff]
    %v3061 = vsel %vm816, %v3053, %v3057
    %v3062 = vsel %vm817, %v3054, %v3058
    %v3063 = vsel %vm818, %v3055, %v3059
    %v3064 = vsel %vm819, %v3056, %v3060
    %v3065 = vld [vmem:[%s4] sm:$0xff]
    %v3066 = vld [vmem:[%s4 + $0x8] sm:$0xff]
    %v3067 = vld [vmem:[%s4 + $0x10] sm:$0xff]
    %v3068 = vld [vmem:[%s4 + $0x18] sm:$0xff]
    %v3069 = vld [vmem:[%s4 + $0x20] sm:$0xff]
    %v3070 = vld [vmem:[%s4 + $0x28] sm:$0xff]
    %v3071 = vld [vmem:[%s4 + $0x30] sm:$0xff]
    %v3072 = vld [vmem:[%s4 + $0x38] sm:$0xff]
    %v3073 = vld [vmem:[%s4 + $0x40] sm:$0xff]
    %v3074 = vld [vmem:[%s4 + $0x48] sm:$0xff]
    %v3075 = vld [vmem:[%s4 + $0x50] sm:$0xff]
    %v3076 = vld [vmem:[%s4 + $0x58] sm:$0xff]
    %v3077 = vld [vmem:[%s4 + $0x60] sm:$0xff]
    %v3078 = vld [vmem:[%s4 + $0x68] sm:$0xff]
    %v3079 = vld [vmem:[%s4 + $0x70] sm:$0xff]
    %v3080 = vld [vmem:[%s4 + $0x78] sm:$0xff]
    %v3081 = vld [vmem:[%s4 + $0x80] sm:$0xff]
    %v3082 = vld [vmem:[%s4 + $0x88] sm:$0xff]
    %v3083 = vld [vmem:[%s4 + $0x90] sm:$0xff]
    %v3084 = vld [vmem:[%s4 + $0x98] sm:$0xff]
    %v3085 = vld [vmem:[%s4 + $0xa0] sm:$0xff]
    %v3086 = vld [vmem:[%s4 + $0xa8] sm:$0xff]
    %v3087 = vld [vmem:[%s4 + $0xb0] sm:$0xff]
    %v3088 = vld [vmem:[%s4 + $0xb8] sm:$0xff]
    %v3089 = vld [vmem:[%s4 + $0xc0] sm:$0xff]
    %v3090 = vld [vmem:[%s4 + $0xc8] sm:$0xff]
    %v3091 = vld [vmem:[%s4 + $0xd0] sm:$0xff]
    %v3092 = vld [vmem:[%s4 + $0xd8] sm:$0xff]
    %v3093 = vld [vmem:[%s4 + $0xe0] sm:$0xff]
    %v3094 = vld [vmem:[%s4 + $0xe8] sm:$0xff]
    %v3095 = vld [vmem:[%s4 + $0xf0] sm:$0xff]
    %v3096 = vld [vmem:[%s4 + $0xf8] sm:$0xff]
    %v3097 = vld [vmem:[%s4 + $0x100] sm:$0xff]
    %v3098 = vld [vmem:[%s4 + $0x108] sm:$0xff]
    %v3099 = vld [vmem:[%s4 + $0x110] sm:$0xff]
    %v3100 = vld [vmem:[%s4 + $0x118] sm:$0xff]
    %v3101 = vld [vmem:[%s4 + $0x120] sm:$0xff]
    %v3102 = vld [vmem:[%s4 + $0x128] sm:$0xff]
    %v3103 = vld [vmem:[%s4 + $0x130] sm:$0xff]
    %v3104 = vld [vmem:[%s4 + $0x138] sm:$0xff]
    %v3105 = vld [vmem:[%s4 + $0x140] sm:$0xff]
    %v3106 = vld [vmem:[%s4 + $0x148] sm:$0xff]
    %v3107 = vld [vmem:[%s4 + $0x150] sm:$0xff]
    %v3108 = vld [vmem:[%s4 + $0x158] sm:$0xff]
    %v3109 = vld [vmem:[%s4 + $0x160] sm:$0xff]
    %v3110 = vld [vmem:[%s4 + $0x168] sm:$0xff]
    %v3111 = vld [vmem:[%s4 + $0x170] sm:$0xff]
    %v3112 = vld [vmem:[%s4 + $0x178] sm:$0xff]
    %v3113 = vld [vmem:[%s4 + $0x180] sm:$0xff]
    %v3114 = vld [vmem:[%s4 + $0x188] sm:$0xff]
    %v3115 = vld [vmem:[%s4 + $0x190] sm:$0xff]
    %v3116 = vld [vmem:[%s4 + $0x198] sm:$0xff]
    %v3117 = vld [vmem:[%s4 + $0x1a0] sm:$0xff]
    %v3118 = vld [vmem:[%s4 + $0x1a8] sm:$0xff]
    %v3119 = vld [vmem:[%s4 + $0x1b0] sm:$0xff]
    %v3120 = vld [vmem:[%s4 + $0x1b8] sm:$0xff]
    %v3121 = vld [vmem:[%s4 + $0x1c0] sm:$0xff]
    %v3122 = vld [vmem:[%s4 + $0x1c8] sm:$0xff]
    %v3123 = vld [vmem:[%s4 + $0x1d0] sm:$0xff]
    %v3124 = vld [vmem:[%s4 + $0x1d8] sm:$0xff]
    %v3125 = vld [vmem:[%s4 + $0x1e0] sm:$0xff]
    %v3126 = vld [vmem:[%s4 + $0x1e8] sm:$0xff]
    %v3127 = vld [vmem:[%s4 + $0x1f0] sm:$0xff]
    %v3128 = vld [vmem:[%s4 + $0x1f8] sm:$0xff]
    %3129 = vmatprep.subr.mxu0 %v3126
    %3130 = vmatpush1.msra.mxu0 %v3125
    %3131 = vmatprep.subr.mxu0 %v3122
    %3132 = vmatpush1.msra.mxu0 %v3121
    %3133 = vmatprep.subr.mxu0 %v3118
    %3134 = vmatpush1.msra.mxu0 %v3117
    %3135 = vmatprep.subr.mxu0 %v3114
    %3136 = vmatpush1.msra.mxu0 %v3113
    %3137 = vmatprep.subr.mxu0 %v3110
    %3138 = vmatpush1.msra.mxu0 %v3109
    %3139 = vmatprep.subr.mxu0 %v3106
    %3140 = vmatpush1.msra.mxu0 %v3105
    %3141 = vmatprep.subr.mxu0 %v3102
    %3142 = vmatpush1.msra.mxu0 %v3101
    %3143 = vmatprep.subr.mxu0 %v3098
    %3144 = vmatpush1.msra.mxu0 %v3097
    %3145 = vmatprep.subr.mxu0 %v3094
    %3146 = vmatpush1.msra.mxu0 %v3093
    %3147 = vmatprep.subr.mxu0 %v3090
    %3148 = vmatpush1.msra.mxu0 %v3089
    %3149 = vmatprep.subr.mxu0 %v3086
    %3150 = vmatpush1.msra.mxu0 %v3085
    %3151 = vmatprep.subr.mxu0 %v3082
    %3152 = vmatpush1.msra.mxu0 %v3081
    %3153 = vmatprep.subr.mxu0 %v3078
    %3154 = vmatpush1.msra.mxu0 %v3077
    %3155 = vmatprep.subr.mxu0 %v3074
    %3156 = vmatpush1.msra.mxu0 %v3073
    %3157 = vmatprep.subr.mxu0 %v3070
    %3158 = vmatpush1.msra.mxu0 %v3069
    %3159 = vmatprep.subr.mxu0 %v3066
    %3160 = vmatpush1.msra.mxu0 %v3065
    %3161 = vmatprep.subr.mxu0 0.0
    %3162 = vmatpush2.msra.mxu0 0.0
    %3163 = vmatprep.subr.mxu0 0.0
    %3164 = vmatpush2.msra.mxu0 0.0
    %3165 = vmatprep.subr.mxu0 0.0
    %3166 = vmatpush2.msra.mxu0 0.0
    %3167 = vmatprep.subr.mxu0 0.0
    %3168 = vmatpush2.msra.mxu0 0.0
    %3169 = vmatprep.subr.mxu0 0.0
    %3170 = vmatpush2.msra.mxu0 0.0
    %3171 = vmatprep.subr.mxu0 0.0
    %3172 = vmatpush2.msra.mxu0 0.0
    %3173 = vmatprep.subr.mxu0 0.0
    %3174 = vmatpush2.msra.mxu0 0.0
    %3175 = vmatprep.subr.mxu0 0.0
    %3176 = vmatpush2.msra.mxu0 0.0
    %3177 = vmatprep.subr.mxu0 0.0
    %3178 = vmatpush2.msra.mxu0 0.0
    %3179 = vmatprep.subr.mxu0 0.0
    %3180 = vmatpush2.msra.mxu0 0.0
    %3181 = vmatprep.subr.mxu0 0.0
    %3182 = vmatpush2.msra.mxu0 0.0
    %3183 = vmatprep.subr.mxu0 0.0
    %3184 = vmatpush2.msra.mxu0 0.0
    %3185 = vmatprep.subr.mxu0 0.0
    %3186 = vmatpush2.msra.mxu0 0.0
    %3187 = vmatprep.subr.mxu0 0.0
    %3188 = vmatpush2.msra.mxu0 0.0
    %3189 = vmatprep.subr.mxu0 0.0
    %3190 = vmatpush2.msra.mxu0 0.0
    %3191 = vmatprep.subr.mxu0 0.0
    %3192 = vmatpush2.msra.mxu0 0.0
    %3193 = vmatprep.mubr.f32.mxu0 0.0
    %3194 = vmatmul.mubr.f32.gmra.mxu0 %v3050
    %v3195 = vpop.f32.mrf.mxu0
    %v3196 = vadd.f32 0.0, %v3195
    %v3197 = vpop.f32.mrf.mxu0
    %v3198 = vadd.f32 0.0, %v3197
    %3199 = vdwg.mxu0
    %3200 = vmatprep.subr.mxu0 %v3128
    %3201 = vmatpush1.msra.mxu0 %v3127
    %3202 = vmatprep.subr.mxu0 %v3124
    %3203 = vmatpush1.msra.mxu0 %v3123
    %3204 = vmatprep.subr.mxu0 %v3120
    %3205 = vmatpush1.msra.mxu0 %v3119
    %3206 = vmatprep.subr.mxu0 %v3116
    %3207 = vmatpush1.msra.mxu0 %v3115
    %3208 = vmatprep.subr.mxu0 %v3112
    %3209 = vmatpush1.msra.mxu0 %v3111
    %3210 = vmatprep.subr.mxu0 %v3108
    %3211 = vmatpush1.msra.mxu0 %v3107
    %3212 = vmatprep.subr.mxu0 %v3104
    %3213 = vmatpush1.msra.mxu0 %v3103
    %3214 = vmatprep.subr.mxu0 %v3100
    %3215 = vmatpush1.msra.mxu0 %v3099
    %3216 = vmatprep.subr.mxu0 %v3096
    %3217 = vmatpush1.msra.mxu0 %v3095
    %3218 = vmatprep.subr.mxu0 %v3092
    %3219 = vmatpush1.msra.mxu0 %v3091
    %3220 = vmatprep.subr.mxu0 %v3088
    %3221 = vmatpush1.msra.mxu0 %v3087
    %3222 = vmatprep.subr.mxu0 %v3084
    %3223 = vmatpush1.msra.mxu0 %v3083
    %3224 = vmatprep.subr.mxu0 %v3080
    %3225 = vmatpush1.msra.mxu0 %v3079
    %3226 = vmatprep.subr.mxu0 %v3076
    %3227 = vmatpush1.msra.mxu0 %v3075
    %3228 = vmatprep.subr.mxu0 %v3072
    %3229 = vmatpush1.msra.mxu0 %v3071
    %3230 = vmatprep.subr.mxu0 %v3068
    %3231 = vmatpush1.msra.mxu0 %v3067
    %3232 = vmatprep.subr.mxu0 0.0
    %3233 = vmatpush2.msra.mxu0 0.0
    %3234 = vmatprep.subr.mxu0 0.0
    %3235 = vmatpush2.msra.mxu0 0.0
    %3236 = vmatprep.subr.mxu0 0.0
    %3237 = vmatpush2.msra.mxu0 0.0
    %3238 = vmatprep.subr.mxu0 0.0
    %3239 = vmatpush2.msra.mxu0 0.0
    %3240 = vmatprep.subr.mxu0 0.0
    %3241 = vmatpush2.msra.mxu0 0.0
    %3242 = vmatprep.subr.mxu0 0.0
    %3243 = vmatpush2.msra.mxu0 0.0
    %3244 = vmatprep.subr.mxu0 0.0
    %3245 = vmatpush2.msra.mxu0 0.0
    %3246 = vmatprep.subr.mxu0 0.0
    %3247 = vmatpush2.msra.mxu0 0.0
    %3248 = vmatprep.subr.mxu0 0.0
    %3249 = vmatpush2.msra.mxu0 0.0
    %3250 = vmatprep.subr.mxu0 0.0
    %3251 = vmatpush2.msra.mxu0 0.0
    %3252 = vmatprep.subr.mxu0 0.0
    %3253 = vmatpush2.msra.mxu0 0.0
    %3254 = vmatprep.subr.mxu0 0.0
    %3255 = vmatpush2.msra.mxu0 0.0
    %3256 = vmatprep.subr.mxu0 0.0
    %3257 = vmatpush2.msra.mxu0 0.0
    %3258 = vmatprep.subr.mxu0 0.0
    %3259 = vmatpush2.msra.mxu0 0.0
    %3260 = vmatprep.subr.mxu0 0.0
    %3261 = vmatpush2.msra.mxu0 0.0
    %3262 = vmatprep.subr.mxu0 0.0
    %3263 = vmatpush2.msra.mxu0 0.0
    %3264 = vmatprep.mubr.f32.mxu0 0.0
    %3265 = vmatmul.mubr.f32.gmra.mxu0 %v3050
    %v3266 = vpop.f32.mrf.mxu0
    %v3267 = vadd.f32 0.0, %v3266
    %v3268 = vpop.f32.mrf.mxu0
    %v3269 = vadd.f32 0.0, %v3268
    %3270 = vdwg.mxu0
    %v3271 = vadd.f32 %v3061, %v3196
    %v3272 = vadd.f32 %v3062, %v3198
    %v3273 = vadd.f32 %v3063, %v3267
    %v3274 = vadd.f32 %v3064, %v3269
    %v3275 = vxor.u32 %v3271, 2147483648
    %v3276 = vmul.f32 %v3275, 1.442695
    %v3277 = vpow.pop %v3276
    %v3278 = vadd.f32 %v3277, 1.0
    %v3279 = vrcp.pop %v3278
    %v3280 = vmul.f32 1.0, %v3279
    %v3281 = vxor.u32 %v3272, 2147483648
    %v3282 = vmul.f32 %v3281, 1.442695
    %v3283 = vpow.pop %v3282
    %v3284 = vadd.f32 %v3283, 1.0
    %v3285 = vrcp.pop %v3284
    %v3286 = vmul.f32 1.0, %v3285
    %v3287 = vtanh.pop %v3273
    %v3288 = vxor.u32 %v3274, 2147483648
    %v3289 = vmul.f32 %v3288, 1.442695
    %v3290 = vpow.pop %v3289
    %v3291 = vadd.f32 %v3290, 1.0
    %v3292 = vrcp.pop %v3291
    %v3293 = vmul.f32 1.0, %v3292
    %v3294 = vmul.f32 %v3286, %v3048
    %v3295 = vmul.f32 %v3280, %v3287
    %v3296 = vadd.f32 %v3294, %v3295
    %v3297 = vtanh.pop %v3296
    %v3298 = vmul.f32 %v3293, %v3297
    %3299 = vst.msk [vmem:[#allocation3 + $0x48] sm:$0xff] %vm328, %v3298
    %3300 = vst.msk [vmem:[#allocation3 + $0x30] sm:$0xff] %vm1067, %v3298
    %v3301 = vld [vmem:[#allocation2 + $0x140] sm:$0xff]
    %v3302 = vld [vmem:[#allocation2 + $0x148] sm:$0xff]
    %v3303 = vld [vmem:[#allocation2 + $0x150] sm:$0xff]
    %v3304 = vld [vmem:[#allocation2 + $0x158] sm:$0xff]
    %v3305 = vld [vmem:[#allocation2 + $0xa0] sm:$0xff]
    %v3306 = vld [vmem:[#allocation2 + $0xa8] sm:$0xff]
    %v3307 = vld [vmem:[#allocation2 + $0xb0] sm:$0xff]
    %v3308 = vld [vmem:[#allocation2 + $0xb8] sm:$0xff]
    %v3309 = vsel %vm816, %v3301, %v3305
    %v3310 = vsel %vm817, %v3302, %v3306
    %v3311 = vsel %vm818, %v3303, %v3307
    %v3312 = vsel %vm819, %v3304, %v3308
    %v3313 = vld [vmem:[%s4] sm:$0xff]
    %v3314 = vld [vmem:[%s4 + $0x8] sm:$0xff]
    %v3315 = vld [vmem:[%s4 + $0x10] sm:$0xff]
    %v3316 = vld [vmem:[%s4 + $0x18] sm:$0xff]
    %v3317 = vld [vmem:[%s4 + $0x20] sm:$0xff]
    %v3318 = vld [vmem:[%s4 + $0x28] sm:$0xff]
    %v3319 = vld [vmem:[%s4 + $0x30] sm:$0xff]
    %v3320 = vld [vmem:[%s4 + $0x38] sm:$0xff]
    %v3321 = vld [vmem:[%s4 + $0x40] sm:$0xff]
    %v3322 = vld [vmem:[%s4 + $0x48] sm:$0xff]
    %v3323 = vld [vmem:[%s4 + $0x50] sm:$0xff]
    %v3324 = vld [vmem:[%s4 + $0x58] sm:$0xff]
    %v3325 = vld [vmem:[%s4 + $0x60] sm:$0xff]
    %v3326 = vld [vmem:[%s4 + $0x68] sm:$0xff]
    %v3327 = vld [vmem:[%s4 + $0x70] sm:$0xff]
    %v3328 = vld [vmem:[%s4 + $0x78] sm:$0xff]
    %v3329 = vld [vmem:[%s4 + $0x80] sm:$0xff]
    %v3330 = vld [vmem:[%s4 + $0x88] sm:$0xff]
    %v3331 = vld [vmem:[%s4 + $0x90] sm:$0xff]
    %v3332 = vld [vmem:[%s4 + $0x98] sm:$0xff]
    %v3333 = vld [vmem:[%s4 + $0xa0] sm:$0xff]
    %v3334 = vld [vmem:[%s4 + $0xa8] sm:$0xff]
    %v3335 = vld [vmem:[%s4 + $0xb0] sm:$0xff]
    %v3336 = vld [vmem:[%s4 + $0xb8] sm:$0xff]
    %v3337 = vld [vmem:[%s4 + $0xc0] sm:$0xff]
    %v3338 = vld [vmem:[%s4 + $0xc8] sm:$0xff]
    %v3339 = vld [vmem:[%s4 + $0xd0] sm:$0xff]
    %v3340 = vld [vmem:[%s4 + $0xd8] sm:$0xff]
    %v3341 = vld [vmem:[%s4 + $0xe0] sm:$0xff]
    %v3342 = vld [vmem:[%s4 + $0xe8] sm:$0xff]
    %v3343 = vld [vmem:[%s4 + $0xf0] sm:$0xff]
    %v3344 = vld [vmem:[%s4 + $0xf8] sm:$0xff]
    %v3345 = vld [vmem:[%s4 + $0x100] sm:$0xff]
    %v3346 = vld [vmem:[%s4 + $0x108] sm:$0xff]
    %v3347 = vld [vmem:[%s4 + $0x110] sm:$0xff]
    %v3348 = vld [vmem:[%s4 + $0x118] sm:$0xff]
    %v3349 = vld [vmem:[%s4 + $0x120] sm:$0xff]
    %v3350 = vld [vmem:[%s4 + $0x128] sm:$0xff]
    %v3351 = vld [vmem:[%s4 + $0x130] sm:$0xff]
    %v3352 = vld [vmem:[%s4 + $0x138] sm:$0xff]
    %v3353 = vld [vmem:[%s4 + $0x140] sm:$0xff]
    %v3354 = vld [vmem:[%s4 + $0x148] sm:$0xff]
    %v3355 = vld [vmem:[%s4 + $0x150] sm:$0xff]
    %v3356 = vld [vmem:[%s4 + $0x158] sm:$0xff]
    %v3357 = vld [vmem:[%s4 + $0x160] sm:$0xff]
    %v3358 = vld [vmem:[%s4 + $0x168] sm:$0xff]
    %v3359 = vld [vmem:[%s4 + $0x170] sm:$0xff]
    %v3360 = vld [vmem:[%s4 + $0x178] sm:$0xff]
    %v3361 = vld [vmem:[%s4 + $0x180] sm:$0xff]
    %v3362 = vld [vmem:[%s4 + $0x188] sm:$0xff]
    %v3363 = vld [vmem:[%s4 + $0x190] sm:$0xff]
    %v3364 = vld [vmem:[%s4 + $0x198] sm:$0xff]
    %v3365 = vld [vmem:[%s4 + $0x1a0] sm:$0xff]
    %v3366 = vld [vmem:[%s4 + $0x1a8] sm:$0xff]
    %v3367 = vld [vmem:[%s4 + $0x1b0] sm:$0xff]
    %v3368 = vld [vmem:[%s4 + $0x1b8] sm:$0xff]
    %v3369 = vld [vmem:[%s4 + $0x1c0] sm:$0xff]
    %v3370 = vld [vmem:[%s4 + $0x1c8] sm:$0xff]
    %v3371 = vld [vmem:[%s4 + $0x1d0] sm:$0xff]
    %v3372 = vld [vmem:[%s4 + $0x1d8] sm:$0xff]
    %v3373 = vld [vmem:[%s4 + $0x1e0] sm:$0xff]
    %v3374 = vld [vmem:[%s4 + $0x1e8] sm:$0xff]
    %v3375 = vld [vmem:[%s4 + $0x1f0] sm:$0xff]
    %v3376 = vld [vmem:[%s4 + $0x1f8] sm:$0xff]
    %3377 = vmatprep.subr.mxu0 %v3374
    %3378 = vmatpush1.msra.mxu0 %v3373
    %3379 = vmatprep.subr.mxu0 %v3370
    %3380 = vmatpush1.msra.mxu0 %v3369
    %3381 = vmatprep.subr.mxu0 %v3366
    %3382 = vmatpush1.msra.mxu0 %v3365
    %3383 = vmatprep.subr.mxu0 %v3362
    %3384 = vmatpush1.msra.mxu0 %v3361
    %3385 = vmatprep.subr.mxu0 %v3358
    %3386 = vmatpush1.msra.mxu0 %v3357
    %3387 = vmatprep.subr.mxu0 %v3354
    %3388 = vmatpush1.msra.mxu0 %v3353
    %3389 = vmatprep.subr.mxu0 %v3350
    %3390 = vmatpush1.msra.mxu0 %v3349
    %3391 = vmatprep.subr.mxu0 %v3346
    %3392 = vmatpush1.msra.mxu0 %v3345
    %3393 = vmatprep.subr.mxu0 %v3342
    %3394 = vmatpush1.msra.mxu0 %v3341
    %3395 = vmatprep.subr.mxu0 %v3338
    %3396 = vmatpush1.msra.mxu0 %v3337
    %3397 = vmatprep.subr.mxu0 %v3334
    %3398 = vmatpush1.msra.mxu0 %v3333
    %3399 = vmatprep.subr.mxu0 %v3330
    %3400 = vmatpush1.msra.mxu0 %v3329
    %3401 = vmatprep.subr.mxu0 %v3326
    %3402 = vmatpush1.msra.mxu0 %v3325
    %3403 = vmatprep.subr.mxu0 %v3322
    %3404 = vmatpush1.msra.mxu0 %v3321
    %3405 = vmatprep.subr.mxu0 %v3318
    %3406 = vmatpush1.msra.mxu0 %v3317
    %3407 = vmatprep.subr.mxu0 %v3314
    %3408 = vmatpush1.msra.mxu0 %v3313
    %3409 = vmatprep.subr.mxu0 0.0
    %3410 = vmatpush2.msra.mxu0 0.0
    %3411 = vmatprep.subr.mxu0 0.0
    %3412 = vmatpush2.msra.mxu0 0.0
    %3413 = vmatprep.subr.mxu0 0.0
    %3414 = vmatpush2.msra.mxu0 0.0
    %3415 = vmatprep.subr.mxu0 0.0
    %3416 = vmatpush2.msra.mxu0 0.0
    %3417 = vmatprep.subr.mxu0 0.0
    %3418 = vmatpush2.msra.mxu0 0.0
    %3419 = vmatprep.subr.mxu0 0.0
    %3420 = vmatpush2.msra.mxu0 0.0
    %3421 = vmatprep.subr.mxu0 0.0
    %3422 = vmatpush2.msra.mxu0 0.0
    %3423 = vmatprep.subr.mxu0 0.0
    %3424 = vmatpush2.msra.mxu0 0.0
    %3425 = vmatprep.subr.mxu0 0.0
    %3426 = vmatpush2.msra.mxu0 0.0
    %3427 = vmatprep.subr.mxu0 0.0
    %3428 = vmatpush2.msra.mxu0 0.0
    %3429 = vmatprep.subr.mxu0 0.0
    %3430 = vmatpush2.msra.mxu0 0.0
    %3431 = vmatprep.subr.mxu0 0.0
    %3432 = vmatpush2.msra.mxu0 0.0
    %3433 = vmatprep.subr.mxu0 0.0
    %3434 = vmatpush2.msra.mxu0 0.0
    %3435 = vmatprep.subr.mxu0 0.0
    %3436 = vmatpush2.msra.mxu0 0.0
    %3437 = vmatprep.subr.mxu0 0.0
    %3438 = vmatpush2.msra.mxu0 0.0
    %3439 = vmatprep.subr.mxu0 0.0
    %3440 = vmatpush2.msra.mxu0 0.0
    %3441 = vmatprep.mubr.f32.mxu0 0.0
    %3442 = vmatmul.mubr.f32.gmra.mxu0 %v3298
    %v3443 = vpop.f32.mrf.mxu0
    %v3444 = vadd.f32 0.0, %v3443
    %v3445 = vpop.f32.mrf.mxu0
    %v3446 = vadd.f32 0.0, %v3445
    %3447 = vdwg.mxu0
    %3448 = vmatprep.subr.mxu0 %v3376
    %3449 = vmatpush1.msra.mxu0 %v3375
    %3450 = vmatprep.subr.mxu0 %v3372
    %3451 = vmatpush1.msra.mxu0 %v3371
    %3452 = vmatprep.subr.mxu0 %v3368
    %3453 = vmatpush1.msra.mxu0 %v3367
    %3454 = vmatprep.subr.mxu0 %v3364
    %3455 = vmatpush1.msra.mxu0 %v3363
    %3456 = vmatprep.subr.mxu0 %v3360
    %3457 = vmatpush1.msra.mxu0 %v3359
    %3458 = vmatprep.subr.mxu0 %v3356
    %3459 = vmatpush1.msra.mxu0 %v3355
    %3460 = vmatprep.subr.mxu0 %v3352
    %3461 = vmatpush1.msra.mxu0 %v3351
    %3462 = vmatprep.subr.mxu0 %v3348
    %3463 = vmatpush1.msra.mxu0 %v3347
    %3464 = vmatprep.subr.mxu0 %v3344
    %3465 = vmatpush1.msra.mxu0 %v3343
    %3466 = vmatprep.subr.mxu0 %v3340
    %3467 = vmatpush1.msra.mxu0 %v3339
    %3468 = vmatprep.subr.mxu0 %v3336
    %3469 = vmatpush1.msra.mxu0 %v3335
    %3470 = vmatprep.subr.mxu0 %v3332
    %3471 = vmatpush1.msra.mxu0 %v3331
    %3472 = vmatprep.subr.mxu0 %v3328
    %3473 = vmatpush1.msra.mxu0 %v3327
    %3474 = vmatprep.subr.mxu0 %v3324
    %3475 = vmatpush1.msra.mxu0 %v3323
    %3476 = vmatprep.subr.mxu0 %v3320
    %3477 = vmatpush1.msra.mxu0 %v3319
    %3478 = vmatprep.subr.mxu0 %v3316
    %3479 = vmatpush1.msra.mxu0 %v3315
    %3480 = vmatprep.subr.mxu0 0.0
    %3481 = vmatpush2.msra.mxu0 0.0
    %3482 = vmatprep.subr.mxu0 0.0
    %3483 = vmatpush2.msra.mxu0 0.0
    %3484 = vmatprep.subr.mxu0 0.0
    %3485 = vmatpush2.msra.mxu0 0.0
    %3486 = vmatprep.subr.mxu0 0.0
    %3487 = vmatpush2.msra.mxu0 0.0
    %3488 = vmatprep.subr.mxu0 0.0
    %3489 = vmatpush2.msra.mxu0 0.0
    %3490 = vmatprep.subr.mxu0 0.0
    %3491 = vmatpush2.msra.mxu0 0.0
    %3492 = vmatprep.subr.mxu0 0.0
    %3493 = vmatpush2.msra.mxu0 0.0
    %3494 = vmatprep.subr.mxu0 0.0
    %3495 = vmatpush2.msra.mxu0 0.0
    %3496 = vmatprep.subr.mxu0 0.0
    %3497 = vmatpush2.msra.mxu0 0.0
    %3498 = vmatprep.subr.mxu0 0.0
    %3499 = vmatpush2.msra.mxu0 0.0
    %3500 = vmatprep.subr.mxu0 0.0
    %3501 = vmatpush2.msra.mxu0 0.0
    %3502 = vmatprep.subr.mxu0 0.0
    %3503 = vmatpush2.msra.mxu0 0.0
    %3504 = vmatprep.subr.mxu0 0.0
    %3505 = vmatpush2.msra.mxu0 0.0
    %3506 = vmatprep.subr.mxu0 0.0
    %3507 = vmatpush2.msra.mxu0 0.0
    %3508 = vmatprep.subr.mxu0 0.0
    %3509 = vmatpush2.msra.mxu0 0.0
    %3510 = vmatprep.subr.mxu0 0.0
    %3511 = vmatpush2.msra.mxu0 0.0
    %3512 = vmatprep.mubr.f32.mxu0 0.0
    %3513 = vmatmul.mubr.f32.gmra.mxu0 %v3298
    %v3514 = vpop.f32.mrf.mxu0
    %v3515 = vadd.f32 0.0, %v3514
    %v3516 = vpop.f32.mrf.mxu0
    %v3517 = vadd.f32 0.0, %v3516
    %3518 = vdwg.mxu0
    %v3519 = vadd.f32 %v3309, %v3444
    %v3520 = vadd.f32 %v3310, %v3446
    %v3521 = vadd.f32 %v3311, %v3515
    %v3522 = vadd.f32 %v3312, %v3517
    %v3523 = vxor.u32 %v3519, 2147483648
    %v3524 = vmul.f32 %v3523, 1.442695
    %v3525 = vpow.pop %v3524
    %v3526 = vadd.f32 %v3525, 1.0
    %v3527 = vrcp.pop %v3526
    %v3528 = vmul.f32 1.0, %v3527
    %v3529 = vxor.u32 %v3520, 2147483648
    %v3530 = vmul.f32 %v3529, 1.442695
    %v3531 = vpow.pop %v3530
    %v3532 = vadd.f32 %v3531, 1.0
    %v3533 = vrcp.pop %v3532
    %v3534 = vmul.f32 1.0, %v3533
    %v3535 = vtanh.pop %v3521
    %v3536 = vxor.u32 %v3522, 2147483648
    %v3537 = vmul.f32 %v3536, 1.442695
    %v3538 = vpow.pop %v3537
    %v3539 = vadd.f32 %v3538, 1.0
    %v3540 = vrcp.pop %v3539
    %v3541 = vmul.f32 1.0, %v3540
    %v3542 = vmul.f32 %v3534, %v3296
    %v3543 = vmul.f32 %v3528, %v3535
    %v3544 = vadd.f32 %v3542, %v3543
    %v3545 = vtanh.pop %v3544
    %v3546 = vmul.f32 %v3541, %v3545
    %3547 = vst.msk [vmem:[#allocation3 + $0x50] sm:$0xff] %vm328, %v3546
    %3548 = vst.msk [vmem:[#allocation3 + $0x28] sm:$0xff] %vm1067, %v3546
    %v3549 = vld [vmem:[#allocation2 + $0x160] sm:$0xff]
    %v3550 = vld [vmem:[#allocation2 + $0x168] sm:$0xff]
    %v3551 = vld [vmem:[#allocation2 + $0x170] sm:$0xff]
    %v3552 = vld [vmem:[#allocation2 + $0x178] sm:$0xff]
    %v3553 = vld [vmem:[#allocation2 + $0x80] sm:$0xff]
    %v3554 = vld [vmem:[#allocation2 + $0x88] sm:$0xff]
    %v3555 = vld [vmem:[#allocation2 + $0x90] sm:$0xff]
    %v3556 = vld [vmem:[#allocation2 + $0x98] sm:$0xff]
    %v3557 = vsel %vm816, %v3549, %v3553
    %v3558 = vsel %vm817, %v3550, %v3554
    %v3559 = vsel %vm818, %v3551, %v3555
    %v3560 = vsel %vm819, %v3552, %v3556
    %v3561 = vld [vmem:[%s4] sm:$0xff]
    %v3562 = vld [vmem:[%s4 + $0x8] sm:$0xff]
    %v3563 = vld [vmem:[%s4 + $0x10] sm:$0xff]
    %v3564 = vld [vmem:[%s4 + $0x18] sm:$0xff]
    %v3565 = vld [vmem:[%s4 + $0x20] sm:$0xff]
    %v3566 = vld [vmem:[%s4 + $0x28] sm:$0xff]
    %v3567 = vld [vmem:[%s4 + $0x30] sm:$0xff]
    %v3568 = vld [vmem:[%s4 + $0x38] sm:$0xff]
    %v3569 = vld [vmem:[%s4 + $0x40] sm:$0xff]
    %v3570 = vld [vmem:[%s4 + $0x48] sm:$0xff]
    %v3571 = vld [vmem:[%s4 + $0x50] sm:$0xff]
    %v3572 = vld [vmem:[%s4 + $0x58] sm:$0xff]
    %v3573 = vld [vmem:[%s4 + $0x60] sm:$0xff]
    %v3574 = vld [vmem:[%s4 + $0x68] sm:$0xff]
    %v3575 = vld [vmem:[%s4 + $0x70] sm:$0xff]
    %v3576 = vld [vmem:[%s4 + $0x78] sm:$0xff]
    %v3577 = vld [vmem:[%s4 + $0x80] sm:$0xff]
    %v3578 = vld [vmem:[%s4 + $0x88] sm:$0xff]
    %v3579 = vld [vmem:[%s4 + $0x90] sm:$0xff]
    %v3580 = vld [vmem:[%s4 + $0x98] sm:$0xff]
    %v3581 = vld [vmem:[%s4 + $0xa0] sm:$0xff]
    %v3582 = vld [vmem:[%s4 + $0xa8] sm:$0xff]
    %v3583 = vld [vmem:[%s4 + $0xb0] sm:$0xff]
    %v3584 = vld [vmem:[%s4 + $0xb8] sm:$0xff]
    %v3585 = vld [vmem:[%s4 + $0xc0] sm:$0xff]
    %v3586 = vld [vmem:[%s4 + $0xc8] sm:$0xff]
    %v3587 = vld [vmem:[%s4 + $0xd0] sm:$0xff]
    %v3588 = vld [vmem:[%s4 + $0xd8] sm:$0xff]
    %v3589 = vld [vmem:[%s4 + $0xe0] sm:$0xff]
    %v3590 = vld [vmem:[%s4 + $0xe8] sm:$0xff]
    %v3591 = vld [vmem:[%s4 + $0xf0] sm:$0xff]
    %v3592 = vld [vmem:[%s4 + $0xf8] sm:$0xff]
    %v3593 = vld [vmem:[%s4 + $0x100] sm:$0xff]
    %v3594 = vld [vmem:[%s4 + $0x108] sm:$0xff]
    %v3595 = vld [vmem:[%s4 + $0x110] sm:$0xff]
    %v3596 = vld [vmem:[%s4 + $0x118] sm:$0xff]
    %v3597 = vld [vmem:[%s4 + $0x120] sm:$0xff]
    %v3598 = vld [vmem:[%s4 + $0x128] sm:$0xff]
    %v3599 = vld [vmem:[%s4 + $0x130] sm:$0xff]
    %v3600 = vld [vmem:[%s4 + $0x138] sm:$0xff]
    %v3601 = vld [vmem:[%s4 + $0x140] sm:$0xff]
    %v3602 = vld [vmem:[%s4 + $0x148] sm:$0xff]
    %v3603 = vld [vmem:[%s4 + $0x150] sm:$0xff]
    %v3604 = vld [vmem:[%s4 + $0x158] sm:$0xff]
    %v3605 = vld [vmem:[%s4 + $0x160] sm:$0xff]
    %v3606 = vld [vmem:[%s4 + $0x168] sm:$0xff]
    %v3607 = vld [vmem:[%s4 + $0x170] sm:$0xff]
    %v3608 = vld [vmem:[%s4 + $0x178] sm:$0xff]
    %v3609 = vld [vmem:[%s4 + $0x180] sm:$0xff]
    %v3610 = vld [vmem:[%s4 + $0x188] sm:$0xff]
    %v3611 = vld [vmem:[%s4 + $0x190] sm:$0xff]
    %v3612 = vld [vmem:[%s4 + $0x198] sm:$0xff]
    %v3613 = vld [vmem:[%s4 + $0x1a0] sm:$0xff]
    %v3614 = vld [vmem:[%s4 + $0x1a8] sm:$0xff]
    %v3615 = vld [vmem:[%s4 + $0x1b0] sm:$0xff]
    %v3616 = vld [vmem:[%s4 + $0x1b8] sm:$0xff]
    %v3617 = vld [vmem:[%s4 + $0x1c0] sm:$0xff]
    %v3618 = vld [vmem:[%s4 + $0x1c8] sm:$0xff]
    %v3619 = vld [vmem:[%s4 + $0x1d0] sm:$0xff]
    %v3620 = vld [vmem:[%s4 + $0x1d8] sm:$0xff]
    %v3621 = vld [vmem:[%s4 + $0x1e0] sm:$0xff]
    %v3622 = vld [vmem:[%s4 + $0x1e8] sm:$0xff]
    %v3623 = vld [vmem:[%s4 + $0x1f0] sm:$0xff]
    %v3624 = vld [vmem:[%s4 + $0x1f8] sm:$0xff]
    %3625 = vmatprep.subr.mxu0 %v3622
    %3626 = vmatpush1.msra.mxu0 %v3621
    %3627 = vmatprep.subr.mxu0 %v3618
    %3628 = vmatpush1.msra.mxu0 %v3617
    %3629 = vmatprep.subr.mxu0 %v3614
    %3630 = vmatpush1.msra.mxu0 %v3613
    %3631 = vmatprep.subr.mxu0 %v3610
    %3632 = vmatpush1.msra.mxu0 %v3609
    %3633 = vmatprep.subr.mxu0 %v3606
    %3634 = vmatpush1.msra.mxu0 %v3605
    %3635 = vmatprep.subr.mxu0 %v3602
    %3636 = vmatpush1.msra.mxu0 %v3601
    %3637 = vmatprep.subr.mxu0 %v3598
    %3638 = vmatpush1.msra.mxu0 %v3597
    %3639 = vmatprep.subr.mxu0 %v3594
    %3640 = vmatpush1.msra.mxu0 %v3593
    %3641 = vmatprep.subr.mxu0 %v3590
    %3642 = vmatpush1.msra.mxu0 %v3589
    %3643 = vmatprep.subr.mxu0 %v3586
    %3644 = vmatpush1.msra.mxu0 %v3585
    %3645 = vmatprep.subr.mxu0 %v3582
    %3646 = vmatpush1.msra.mxu0 %v3581
    %3647 = vmatprep.subr.mxu0 %v3578
    %3648 = vmatpush1.msra.mxu0 %v3577
    %3649 = vmatprep.subr.mxu0 %v3574
    %3650 = vmatpush1.msra.mxu0 %v3573
    %3651 = vmatprep.subr.mxu0 %v3570
    %3652 = vmatpush1.msra.mxu0 %v3569
    %3653 = vmatprep.subr.mxu0 %v3566
    %3654 = vmatpush1.msra.mxu0 %v3565
    %3655 = vmatprep.subr.mxu0 %v3562
    %3656 = vmatpush1.msra.mxu0 %v3561
    %3657 = vmatprep.subr.mxu0 0.0
    %3658 = vmatpush2.msra.mxu0 0.0
    %3659 = vmatprep.subr.mxu0 0.0
    %3660 = vmatpush2.msra.mxu0 0.0
    %3661 = vmatprep.subr.mxu0 0.0
    %3662 = vmatpush2.msra.mxu0 0.0
    %3663 = vmatprep.subr.mxu0 0.0
    %3664 = vmatpush2.msra.mxu0 0.0
    %3665 = vmatprep.subr.mxu0 0.0
    %3666 = vmatpush2.msra.mxu0 0.0
    %3667 = vmatprep.subr.mxu0 0.0
    %3668 = vmatpush2.msra.mxu0 0.0
    %3669 = vmatprep.subr.mxu0 0.0
    %3670 = vmatpush2.msra.mxu0 0.0
    %3671 = vmatprep.subr.mxu0 0.0
    %3672 = vmatpush2.msra.mxu0 0.0
    %3673 = vmatprep.subr.mxu0 0.0
    %3674 = vmatpush2.msra.mxu0 0.0
    %3675 = vmatprep.subr.mxu0 0.0
    %3676 = vmatpush2.msra.mxu0 0.0
    %3677 = vmatprep.subr.mxu0 0.0
    %3678 = vmatpush2.msra.mxu0 0.0
    %3679 = vmatprep.subr.mxu0 0.0
    %3680 = vmatpush2.msra.mxu0 0.0
    %3681 = vmatprep.subr.mxu0 0.0
    %3682 = vmatpush2.msra.mxu0 0.0
    %3683 = vmatprep.subr.mxu0 0.0
    %3684 = vmatpush2.msra.mxu0 0.0
    %3685 = vmatprep.subr.mxu0 0.0
    %3686 = vmatpush2.msra.mxu0 0.0
    %3687 = vmatprep.subr.mxu0 0.0
    %3688 = vmatpush2.msra.mxu0 0.0
    %3689 = vmatprep.mubr.f32.mxu0 0.0
    %3690 = vmatmul.mubr.f32.gmra.mxu0 %v3546
    %v3691 = vpop.f32.mrf.mxu0
    %v3692 = vadd.f32 0.0, %v3691
    %v3693 = vpop.f32.mrf.mxu0
    %v3694 = vadd.f32 0.0, %v3693
    %3695 = vdwg.mxu0
    %3696 = vmatprep.subr.mxu0 %v3624
    %3697 = vmatpush1.msra.mxu0 %v3623
    %3698 = vmatprep.subr.mxu0 %v3620
    %3699 = vmatpush1.msra.mxu0 %v3619
    %3700 = vmatprep.subr.mxu0 %v3616
    %3701 = vmatpush1.msra.mxu0 %v3615
    %3702 = vmatprep.subr.mxu0 %v3612
    %3703 = vmatpush1.msra.mxu0 %v3611
    %3704 = vmatprep.subr.mxu0 %v3608
    %3705 = vmatpush1.msra.mxu0 %v3607
    %3706 = vmatprep.subr.mxu0 %v3604
    %3707 = vmatpush1.msra.mxu0 %v3603
    %3708 = vmatprep.subr.mxu0 %v3600
    %3709 = vmatpush1.msra.mxu0 %v3599
    %3710 = vmatprep.subr.mxu0 %v3596
    %3711 = vmatpush1.msra.mxu0 %v3595
    %3712 = vmatprep.subr.mxu0 %v3592
    %3713 = vmatpush1.msra.mxu0 %v3591
    %3714 = vmatprep.subr.mxu0 %v3588
    %3715 = vmatpush1.msra.mxu0 %v3587
    %3716 = vmatprep.subr.mxu0 %v3584
    %3717 = vmatpush1.msra.mxu0 %v3583
    %3718 = vmatprep.subr.mxu0 %v3580
    %3719 = vmatpush1.msra.mxu0 %v3579
    %3720 = vmatprep.subr.mxu0 %v3576
    %3721 = vmatpush1.msra.mxu0 %v3575
    %3722 = vmatprep.subr.mxu0 %v3572
    %3723 = vmatpush1.msra.mxu0 %v3571
    %3724 = vmatprep.subr.mxu0 %v3568
    %3725 = vmatpush1.msra.mxu0 %v3567
    %3726 = vmatprep.subr.mxu0 %v3564
    %3727 = vmatpush1.msra.mxu0 %v3563
    %3728 = vmatprep.subr.mxu0 0.0
    %3729 = vmatpush2.msra.mxu0 0.0
    %3730 = vmatprep.subr.mxu0 0.0
    %3731 = vmatpush2.msra.mxu0 0.0
    %3732 = vmatprep.subr.mxu0 0.0
    %3733 = vmatpush2.msra.mxu0 0.0
    %3734 = vmatprep.subr.mxu0 0.0
    %3735 = vmatpush2.msra.mxu0 0.0
    %3736 = vmatprep.subr.mxu0 0.0
    %3737 = vmatpush2.msra.mxu0 0.0
    %3738 = vmatprep.subr.mxu0 0.0
    %3739 = vmatpush2.msra.mxu0 0.0
    %3740 = vmatprep.subr.mxu0 0.0
    %3741 = vmatpush2.msra.mxu0 0.0
    %3742 = vmatprep.subr.mxu0 0.0
    %3743 = vmatpush2.msra.mxu0 0.0
    %3744 = vmatprep.subr.mxu0 0.0
    %3745 = vmatpush2.msra.mxu0 0.0
    %3746 = vmatprep.subr.mxu0 0.0
    %3747 = vmatpush2.msra.mxu0 0.0
    %3748 = vmatprep.subr.mxu0 0.0
    %3749 = vmatpush2.msra.mxu0 0.0
    %3750 = vmatprep.subr.mxu0 0.0
    %3751 = vmatpush2.msra.mxu0 0.0
    %3752 = vmatprep.subr.mxu0 0.0
    %3753 = vmatpush2.msra.mxu0 0.0
    %3754 = vmatprep.subr.mxu0 0.0
    %3755 = vmatpush2.msra.mxu0 0.0
    %3756 = vmatprep.subr.mxu0 0.0
    %3757 = vmatpush2.msra.mxu0 0.0
    %3758 = vmatprep.subr.mxu0 0.0
    %3759 = vmatpush2.msra.mxu0 0.0
    %3760 = vmatprep.mubr.f32.mxu0 0.0
    %3761 = vmatmul.mubr.f32.gmra.mxu0 %v3546
    %v3762 = vpop.f32.mrf.mxu0
    %v3763 = vadd.f32 0.0, %v3762
    %v3764 = vpop.f32.mrf.mxu0
    %v3765 = vadd.f32 0.0, %v3764
    %3766 = vdwg.mxu0
    %v3767 = vadd.f32 %v3557, %v3692
    %v3768 = vadd.f32 %v3558, %v3694
    %v3769 = vadd.f32 %v3559, %v3763
    %v3770 = vadd.f32 %v3560, %v3765
    %v3771 = vxor.u32 %v3767, 2147483648
    %v3772 = vmul.f32 %v3771, 1.442695
    %v3773 = vpow.pop %v3772
    %v3774 = vadd.f32 %v3773, 1.0
    %v3775 = vrcp.pop %v3774
    %v3776 = vmul.f32 1.0, %v3775
    %v3777 = vxor.u32 %v3768, 2147483648
    %v3778 = vmul.f32 %v3777, 1.442695
    %v3779 = vpow.pop %v3778
    %v3780 = vadd.f32 %v3779, 1.0
    %v3781 = vrcp.pop %v3780
    %v3782 = vmul.f32 1.0, %v3781
    %v3783 = vtanh.pop %v3769
    %v3784 = vxor.u32 %v3770, 2147483648
    %v3785 = vmul.f32 %v3784, 1.442695
    %v3786 = vpow.pop %v3785
    %v3787 = vadd.f32 %v3786, 1.0
    %v3788 = vrcp.pop %v3787
    %v3789 = vmul.f32 1.0, %v3788
    %v3790 = vmul.f32 %v3782, %v3544
    %v3791 = vmul.f32 %v3776, %v3783
    %v3792 = vadd.f32 %v3790, %v3791
    %v3793 = vtanh.pop %v3792
    %v3794 = vmul.f32 %v3789, %v3793
    %3795 = vst.msk [vmem:[#allocation3 + $0x58] sm:$0xff] %vm328, %v3794
    %3796 = vst.msk [vmem:[#allocation3 + $0x20] sm:$0xff] %vm1067, %v3794
    %v3797 = vld [vmem:[#allocation2 + $0x180] sm:$0xff]
    %v3798 = vld [vmem:[#allocation2 + $0x188] sm:$0xff]
    %v3799 = vld [vmem:[#allocation2 + $0x190] sm:$0xff]
    %v3800 = vld [vmem:[#allocation2 + $0x198] sm:$0xff]
    %v3801 = vld [vmem:[#allocation2 + $0x60] sm:$0xff]
    %v3802 = vld [vmem:[#allocation2 + $0x68] sm:$0xff]
    %v3803 = vld [vmem:[#allocation2 + $0x70] sm:$0xff]
    %v3804 = vld [vmem:[#allocation2 + $0x78] sm:$0xff]
    %v3805 = vsel %vm816, %v3797, %v3801
    %v3806 = vsel %vm817, %v3798, %v3802
    %v3807 = vsel %vm818, %v3799, %v3803
    %v3808 = vsel %vm819, %v3800, %v3804
    %v3809 = vld [vmem:[%s4] sm:$0xff]
    %v3810 = vld [vmem:[%s4 + $0x8] sm:$0xff]
    %v3811 = vld [vmem:[%s4 + $0x10] sm:$0xff]
    %v3812 = vld [vmem:[%s4 + $0x18] sm:$0xff]
    %v3813 = vld [vmem:[%s4 + $0x20] sm:$0xff]
    %v3814 = vld [vmem:[%s4 + $0x28] sm:$0xff]
    %v3815 = vld [vmem:[%s4 + $0x30] sm:$0xff]
    %v3816 = vld [vmem:[%s4 + $0x38] sm:$0xff]
    %v3817 = vld [vmem:[%s4 + $0x40] sm:$0xff]
    %v3818 = vld [vmem:[%s4 + $0x48] sm:$0xff]
    %v3819 = vld [vmem:[%s4 + $0x50] sm:$0xff]
    %v3820 = vld [vmem:[%s4 + $0x58] sm:$0xff]
    %v3821 = vld [vmem:[%s4 + $0x60] sm:$0xff]
    %v3822 = vld [vmem:[%s4 + $0x68] sm:$0xff]
    %v3823 = vld [vmem:[%s4 + $0x70] sm:$0xff]
    %v3824 = vld [vmem:[%s4 + $0x78] sm:$0xff]
    %v3825 = vld [vmem:[%s4 + $0x80] sm:$0xff]
    %v3826 = vld [vmem:[%s4 + $0x88] sm:$0xff]
    %v3827 = vld [vmem:[%s4 + $0x90] sm:$0xff]
    %v3828 = vld [vmem:[%s4 + $0x98] sm:$0xff]
    %v3829 = vld [vmem:[%s4 + $0xa0] sm:$0xff]
    %v3830 = vld [vmem:[%s4 + $0xa8] sm:$0xff]
    %v3831 = vld [vmem:[%s4 + $0xb0] sm:$0xff]
    %v3832 = vld [vmem:[%s4 + $0xb8] sm:$0xff]
    %v3833 = vld [vmem:[%s4 + $0xc0] sm:$0xff]
    %v3834 = vld [vmem:[%s4 + $0xc8] sm:$0xff]
    %v3835 = vld [vmem:[%s4 + $0xd0] sm:$0xff]
    %v3836 = vld [vmem:[%s4 + $0xd8] sm:$0xff]
    %v3837 = vld [vmem:[%s4 + $0xe0] sm:$0xff]
    %v3838 = vld [vmem:[%s4 + $0xe8] sm:$0xff]
    %v3839 = vld [vmem:[%s4 + $0xf0] sm:$0xff]
    %v3840 = vld [vmem:[%s4 + $0xf8] sm:$0xff]
    %v3841 = vld [vmem:[%s4 + $0x100] sm:$0xff]
    %v3842 = vld [vmem:[%s4 + $0x108] sm:$0xff]
    %v3843 = vld [vmem:[%s4 + $0x110] sm:$0xff]
    %v3844 = vld [vmem:[%s4 + $0x118] sm:$0xff]
    %v3845 = vld [vmem:[%s4 + $0x120] sm:$0xff]
    %v3846 = vld [vmem:[%s4 + $0x128] sm:$0xff]
    %v3847 = vld [vmem:[%s4 + $0x130] sm:$0xff]
    %v3848 = vld [vmem:[%s4 + $0x138] sm:$0xff]
    %v3849 = vld [vmem:[%s4 + $0x140] sm:$0xff]
    %v3850 = vld [vmem:[%s4 + $0x148] sm:$0xff]
    %v3851 = vld [vmem:[%s4 + $0x150] sm:$0xff]
    %v3852 = vld [vmem:[%s4 + $0x158] sm:$0xff]
    %v3853 = vld [vmem:[%s4 + $0x160] sm:$0xff]
    %v3854 = vld [vmem:[%s4 + $0x168] sm:$0xff]
    %v3855 = vld [vmem:[%s4 + $0x170] sm:$0xff]
    %v3856 = vld [vmem:[%s4 + $0x178] sm:$0xff]
    %v3857 = vld [vmem:[%s4 + $0x180] sm:$0xff]
    %v3858 = vld [vmem:[%s4 + $0x188] sm:$0xff]
    %v3859 = vld [vmem:[%s4 + $0x190] sm:$0xff]
    %v3860 = vld [vmem:[%s4 + $0x198] sm:$0xff]
    %v3861 = vld [vmem:[%s4 + $0x1a0] sm:$0xff]
    %v3862 = vld [vmem:[%s4 + $0x1a8] sm:$0xff]
    %v3863 = vld [vmem:[%s4 + $0x1b0] sm:$0xff]
    %v3864 = vld [vmem:[%s4 + $0x1b8] sm:$0xff]
    %v3865 = vld [vmem:[%s4 + $0x1c0] sm:$0xff]
    %v3866 = vld [vmem:[%s4 + $0x1c8] sm:$0xff]
    %v3867 = vld [vmem:[%s4 + $0x1d0] sm:$0xff]
    %v3868 = vld [vmem:[%s4 + $0x1d8] sm:$0xff]
    %v3869 = vld [vmem:[%s4 + $0x1e0] sm:$0xff]
    %v3870 = vld [vmem:[%s4 + $0x1e8] sm:$0xff]
    %v3871 = vld [vmem:[%s4 + $0x1f0] sm:$0xff]
    %v3872 = vld [vmem:[%s4 + $0x1f8] sm:$0xff]
    %3873 = vmatprep.subr.mxu0 %v3870
    %3874 = vmatpush1.msra.mxu0 %v3869
    %3875 = vmatprep.subr.mxu0 %v3866
    %3876 = vmatpush1.msra.mxu0 %v3865
    %3877 = vmatprep.subr.mxu0 %v3862
    %3878 = vmatpush1.msra.mxu0 %v3861
    %3879 = vmatprep.subr.mxu0 %v3858
    %3880 = vmatpush1.msra.mxu0 %v3857
    %3881 = vmatprep.subr.mxu0 %v3854
    %3882 = vmatpush1.msra.mxu0 %v3853
    %3883 = vmatprep.subr.mxu0 %v3850
    %3884 = vmatpush1.msra.mxu0 %v3849
    %3885 = vmatprep.subr.mxu0 %v3846
    %3886 = vmatpush1.msra.mxu0 %v3845
    %3887 = vmatprep.subr.mxu0 %v3842
    %3888 = vmatpush1.msra.mxu0 %v3841
    %3889 = vmatprep.subr.mxu0 %v3838
    %3890 = vmatpush1.msra.mxu0 %v3837
    %3891 = vmatprep.subr.mxu0 %v3834
    %3892 = vmatpush1.msra.mxu0 %v3833
    %3893 = vmatprep.subr.mxu0 %v3830
    %3894 = vmatpush1.msra.mxu0 %v3829
    %3895 = vmatprep.subr.mxu0 %v3826
    %3896 = vmatpush1.msra.mxu0 %v3825
    %3897 = vmatprep.subr.mxu0 %v3822
    %3898 = vmatpush1.msra.mxu0 %v3821
    %3899 = vmatprep.subr.mxu0 %v3818
    %3900 = vmatpush1.msra.mxu0 %v3817
    %3901 = vmatprep.subr.mxu0 %v3814
    %3902 = vmatpush1.msra.mxu0 %v3813
    %3903 = vmatprep.subr.mxu0 %v3810
    %3904 = vmatpush1.msra.mxu0 %v3809
    %3905 = vmatprep.subr.mxu0 0.0
    %3906 = vmatpush2.msra.mxu0 0.0
    %3907 = vmatprep.subr.mxu0 0.0
    %3908 = vmatpush2.msra.mxu0 0.0
    %3909 = vmatprep.subr.mxu0 0.0
    %3910 = vmatpush2.msra.mxu0 0.0
    %3911 = vmatprep.subr.mxu0 0.0
    %3912 = vmatpush2.msra.mxu0 0.0
    %3913 = vmatprep.subr.mxu0 0.0
    %3914 = vmatpush2.msra.mxu0 0.0
    %3915 = vmatprep.subr.mxu0 0.0
    %3916 = vmatpush2.msra.mxu0 0.0
    %3917 = vmatprep.subr.mxu0 0.0
    %3918 = vmatpush2.msra.mxu0 0.0
    %3919 = vmatprep.subr.mxu0 0.0
    %3920 = vmatpush2.msra.mxu0 0.0
    %3921 = vmatprep.subr.mxu0 0.0
    %3922 = vmatpush2.msra.mxu0 0.0
    %3923 = vmatprep.subr.mxu0 0.0
    %3924 = vmatpush2.msra.mxu0 0.0
    %3925 = vmatprep.subr.mxu0 0.0
    %3926 = vmatpush2.msra.mxu0 0.0
    %3927 = vmatprep.subr.mxu0 0.0
    %3928 = vmatpush2.msra.mxu0 0.0
    %3929 = vmatprep.subr.mxu0 0.0
    %3930 = vmatpush2.msra.mxu0 0.0
    %3931 = vmatprep.subr.mxu0 0.0
    %3932 = vmatpush2.msra.mxu0 0.0
    %3933 = vmatprep.subr.mxu0 0.0
    %3934 = vmatpush2.msra.mxu0 0.0
    %3935 = vmatprep.subr.mxu0 0.0
    %3936 = vmatpush2.msra.mxu0 0.0
    %3937 = vmatprep.mubr.f32.mxu0 0.0
    %3938 = vmatmul.mubr.f32.gmra.mxu0 %v3794
    %v3939 = vpop.f32.mrf.mxu0
    %v3940 = vadd.f32 0.0, %v3939
    %v3941 = vpop.f32.mrf.mxu0
    %v3942 = vadd.f32 0.0, %v3941
    %3943 = vdwg.mxu0
    %3944 = vmatprep.subr.mxu0 %v3872
    %3945 = vmatpush1.msra.mxu0 %v3871
    %3946 = vmatprep.subr.mxu0 %v3868
    %3947 = vmatpush1.msra.mxu0 %v3867
    %3948 = vmatprep.subr.mxu0 %v3864
    %3949 = vmatpush1.msra.mxu0 %v3863
    %3950 = vmatprep.subr.mxu0 %v3860
    %3951 = vmatpush1.msra.mxu0 %v3859
    %3952 = vmatprep.subr.mxu0 %v3856
    %3953 = vmatpush1.msra.mxu0 %v3855
    %3954 = vmatprep.subr.mxu0 %v3852
    %3955 = vmatpush1.msra.mxu0 %v3851
    %3956 = vmatprep.subr.mxu0 %v3848
    %3957 = vmatpush1.msra.mxu0 %v3847
    %3958 = vmatprep.subr.mxu0 %v3844
    %3959 = vmatpush1.msra.mxu0 %v3843
    %3960 = vmatprep.subr.mxu0 %v3840
    %3961 = vmatpush1.msra.mxu0 %v3839
    %3962 = vmatprep.subr.mxu0 %v3836
    %3963 = vmatpush1.msra.mxu0 %v3835
    %3964 = vmatprep.subr.mxu0 %v3832
    %3965 = vmatpush1.msra.mxu0 %v3831
    %3966 = vmatprep.subr.mxu0 %v3828
    %3967 = vmatpush1.msra.mxu0 %v3827
    %3968 = vmatprep.subr.mxu0 %v3824
    %3969 = vmatpush1.msra.mxu0 %v3823
    %3970 = vmatprep.subr.mxu0 %v3820
    %3971 = vmatpush1.msra.mxu0 %v3819
    %3972 = vmatprep.subr.mxu0 %v3816
    %3973 = vmatpush1.msra.mxu0 %v3815
    %3974 = vmatprep.subr.mxu0 %v3812
    %3975 = vmatpush1.msra.mxu0 %v3811
    %3976 = vmatprep.subr.mxu0 0.0
    %3977 = vmatpush2.msra.mxu0 0.0
    %3978 = vmatprep.subr.mxu0 0.0
    %3979 = vmatpush2.msra.mxu0 0.0
    %3980 = vmatprep.subr.mxu0 0.0
    %3981 = vmatpush2.msra.mxu0 0.0
    %3982 = vmatprep.subr.mxu0 0.0
    %3983 = vmatpush2.msra.mxu0 0.0
    %3984 = vmatprep.subr.mxu0 0.0
    %3985 = vmatpush2.msra.mxu0 0.0
    %3986 = vmatprep.subr.mxu0 0.0
    %3987 = vmatpush2.msra.mxu0 0.0
    %3988 = vmatprep.subr.mxu0 0.0
    %3989 = vmatpush2.msra.mxu0 0.0
    %3990 = vmatprep.subr.mxu0 0.0
    %3991 = vmatpush2.msra.mxu0 0.0
    %3992 = vmatprep.subr.mxu0 0.0
    %3993 = vmatpush2.msra.mxu0 0.0
    %3994 = vmatprep.subr.mxu0 0.0
    %3995 = vmatpush2.msra.mxu0 0.0
    %3996 = vmatprep.subr.mxu0 0.0
    %3997 = vmatpush2.msra.mxu0 0.0
    %3998 = vmatprep.subr.mxu0 0.0
    %3999 = vmatpush2.msra.mxu0 0.0
    %4000 = vmatprep.subr.mxu0 0.0
    %4001 = vmatpush2.msra.mxu0 0.0
    %4002 = vmatprep.subr.mxu0 0.0
    %4003 = vmatpush2.msra.mxu0 0.0
    %4004 = vmatprep.subr.mxu0 0.0
    %4005 = vmatpush2.msra.mxu0 0.0
    %4006 = vmatprep.subr.mxu0 0.0
    %4007 = vmatpush2.msra.mxu0 0.0
    %4008 = vmatprep.mubr.f32.mxu0 0.0
    %4009 = vmatmul.mubr.f32.gmra.mxu0 %v3794
    %v4010 = vpop.f32.mrf.mxu0
    %v4011 = vadd.f32 0.0, %v4010
    %v4012 = vpop.f32.mrf.mxu0
    %v4013 = vadd.f32 0.0, %v4012
    %4014 = vdwg.mxu0
    %v4015 = vadd.f32 %v3805, %v3940
    %v4016 = vadd.f32 %v3806, %v3942
    %v4017 = vadd.f32 %v3807, %v4011
    %v4018 = vadd.f32 %v3808, %v4013
    %v4019 = vxor.u32 %v4015, 2147483648
    %v4020 = vmul.f32 %v4019, 1.442695
    %v4021 = vpow.pop %v4020
    %v4022 = vadd.f32 %v4021, 1.0
    %v4023 = vrcp.pop %v4022
    %v4024 = vmul.f32 1.0, %v4023
    %v4025 = vxor.u32 %v4016, 2147483648
    %v4026 = vmul.f32 %v4025, 1.442695
    %v4027 = vpow.pop %v4026
    %v4028 = vadd.f32 %v4027, 1.0
    %v4029 = vrcp.pop %v4028
    %v4030 = vmul.f32 1.0, %v4029
    %v4031 = vtanh.pop %v4017
    %v4032 = vxor.u32 %v4018, 2147483648
    %v4033 = vmul.f32 %v4032, 1.442695
    %v4034 = vpow.pop %v4033
    %v4035 = vadd.f32 %v4034, 1.0
    %v4036 = vrcp.pop %v4035
    %v4037 = vmul.f32 1.0, %v4036
    %v4038 = vmul.f32 %v4030, %v3792
    %v4039 = vmul.f32 %v4024, %v4031
    %v4040 = vadd.f32 %v4038, %v4039
    %v4041 = vtanh.pop %v4040
    %v4042 = vmul.f32 %v4037, %v4041
    %4043 = vst.msk [vmem:[#allocation3 + $0x60] sm:$0xff] %vm328, %v4042
    %4044 = vst.msk [vmem:[#allocation3 + $0x18] sm:$0xff] %vm1067, %v4042
    %v4045 = vld [vmem:[#allocation2 + $0x1a0] sm:$0xff]
    %v4046 = vld [vmem:[#allocation2 + $0x1a8] sm:$0xff]
    %v4047 = vld [vmem:[#allocation2 + $0x1b0] sm:$0xff]
    %v4048 = vld [vmem:[#allocation2 + $0x1b8] sm:$0xff]
    %v4049 = vld [vmem:[#allocation2 + $0x40] sm:$0xff]
    %v4050 = vld [vmem:[#allocation2 + $0x48] sm:$0xff]
    %v4051 = vld [vmem:[#allocation2 + $0x50] sm:$0xff]
    %v4052 = vld [vmem:[#allocation2 + $0x58] sm:$0xff]
    %v4053 = vsel %vm816, %v4045, %v4049
    %v4054 = vsel %vm817, %v4046, %v4050
    %v4055 = vsel %vm818, %v4047, %v4051
    %v4056 = vsel %vm819, %v4048, %v4052
    %v4057 = vld [vmem:[%s4] sm:$0xff]
    %v4058 = vld [vmem:[%s4 + $0x8] sm:$0xff]
    %v4059 = vld [vmem:[%s4 + $0x10] sm:$0xff]
    %v4060 = vld [vmem:[%s4 + $0x18] sm:$0xff]
    %v4061 = vld [vmem:[%s4 + $0x20] sm:$0xff]
    %v4062 = vld [vmem:[%s4 + $0x28] sm:$0xff]
    %v4063 = vld [vmem:[%s4 + $0x30] sm:$0xff]
    %v4064 = vld [vmem:[%s4 + $0x38] sm:$0xff]
    %v4065 = vld [vmem:[%s4 + $0x40] sm:$0xff]
    %v4066 = vld [vmem:[%s4 + $0x48] sm:$0xff]
    %v4067 = vld [vmem:[%s4 + $0x50] sm:$0xff]
    %v4068 = vld [vmem:[%s4 + $0x58] sm:$0xff]
    %v4069 = vld [vmem:[%s4 + $0x60] sm:$0xff]
    %v4070 = vld [vmem:[%s4 + $0x68] sm:$0xff]
    %v4071 = vld [vmem:[%s4 + $0x70] sm:$0xff]
    %v4072 = vld [vmem:[%s4 + $0x78] sm:$0xff]
    %v4073 = vld [vmem:[%s4 + $0x80] sm:$0xff]
    %v4074 = vld [vmem:[%s4 + $0x88] sm:$0xff]
    %v4075 = vld [vmem:[%s4 + $0x90] sm:$0xff]
    %v4076 = vld [vmem:[%s4 + $0x98] sm:$0xff]
    %v4077 = vld [vmem:[%s4 + $0xa0] sm:$0xff]
    %v4078 = vld [vmem:[%s4 + $0xa8] sm:$0xff]
    %v4079 = vld [vmem:[%s4 + $0xb0] sm:$0xff]
    %v4080 = vld [vmem:[%s4 + $0xb8] sm:$0xff]
    %v4081 = vld [vmem:[%s4 + $0xc0] sm:$0xff]
    %v4082 = vld [vmem:[%s4 + $0xc8] sm:$0xff]
    %v4083 = vld [vmem:[%s4 + $0xd0] sm:$0xff]
    %v4084 = vld [vmem:[%s4 + $0xd8] sm:$0xff]
    %v4085 = vld [vmem:[%s4 + $0xe0] sm:$0xff]
    %v4086 = vld [vmem:[%s4 + $0xe8] sm:$0xff]
    %v4087 = vld [vmem:[%s4 + $0xf0] sm:$0xff]
    %v4088 = vld [vmem:[%s4 + $0xf8] sm:$0xff]
    %v4089 = vld [vmem:[%s4 + $0x100] sm:$0xff]
    %v4090 = vld [vmem:[%s4 + $0x108] sm:$0xff]
    %v4091 = vld [vmem:[%s4 + $0x110] sm:$0xff]
    %v4092 = vld [vmem:[%s4 + $0x118] sm:$0xff]
    %v4093 = vld [vmem:[%s4 + $0x120] sm:$0xff]
    %v4094 = vld [vmem:[%s4 + $0x128] sm:$0xff]
    %v4095 = vld [vmem:[%s4 + $0x130] sm:$0xff]
    %v4096 = vld [vmem:[%s4 + $0x138] sm:$0xff]
    %v4097 = vld [vmem:[%s4 + $0x140] sm:$0xff]
    %v4098 = vld [vmem:[%s4 + $0x148] sm:$0xff]
    %v4099 = vld [vmem:[%s4 + $0x150] sm:$0xff]
    %v4100 = vld [vmem:[%s4 + $0x158] sm:$0xff]
    %v4101 = vld [vmem:[%s4 + $0x160] sm:$0xff]
    %v4102 = vld [vmem:[%s4 + $0x168] sm:$0xff]
    %v4103 = vld [vmem:[%s4 + $0x170] sm:$0xff]
    %v4104 = vld [vmem:[%s4 + $0x178] sm:$0xff]
    %v4105 = vld [vmem:[%s4 + $0x180] sm:$0xff]
    %v4106 = vld [vmem:[%s4 + $0x188] sm:$0xff]
    %v4107 = vld [vmem:[%s4 + $0x190] sm:$0xff]
    %v4108 = vld [vmem:[%s4 + $0x198] sm:$0xff]
    %v4109 = vld [vmem:[%s4 + $0x1a0] sm:$0xff]
    %v4110 = vld [vmem:[%s4 + $0x1a8] sm:$0xff]
    %v4111 = vld [vmem:[%s4 + $0x1b0] sm:$0xff]
    %v4112 = vld [vmem:[%s4 + $0x1b8] sm:$0xff]
    %v4113 = vld [vmem:[%s4 + $0x1c0] sm:$0xff]
    %v4114 = vld [vmem:[%s4 + $0x1c8] sm:$0xff]
    %v4115 = vld [vmem:[%s4 + $0x1d0] sm:$0xff]
    %v4116 = vld [vmem:[%s4 + $0x1d8] sm:$0xff]
    %v4117 = vld [vmem:[%s4 + $0x1e0] sm:$0xff]
    %v4118 = vld [vmem:[%s4 + $0x1e8] sm:$0xff]
    %v4119 = vld [vmem:[%s4 + $0x1f0] sm:$0xff]
    %v4120 = vld [vmem:[%s4 + $0x1f8] sm:$0xff]
    %4121 = vmatprep.subr.mxu0 %v4118
    %4122 = vmatpush1.msra.mxu0 %v4117
    %4123 = vmatprep.subr.mxu0 %v4114
    %4124 = vmatpush1.msra.mxu0 %v4113
    %4125 = vmatprep.subr.mxu0 %v4110
    %4126 = vmatpush1.msra.mxu0 %v4109
    %4127 = vmatprep.subr.mxu0 %v4106
    %4128 = vmatpush1.msra.mxu0 %v4105
    %4129 = vmatprep.subr.mxu0 %v4102
    %4130 = vmatpush1.msra.mxu0 %v4101
    %4131 = vmatprep.subr.mxu0 %v4098
    %4132 = vmatpush1.msra.mxu0 %v4097
    %4133 = vmatprep.subr.mxu0 %v4094
    %4134 = vmatpush1.msra.mxu0 %v4093
    %4135 = vmatprep.subr.mxu0 %v4090
    %4136 = vmatpush1.msra.mxu0 %v4089
    %4137 = vmatprep.subr.mxu0 %v4086
    %4138 = vmatpush1.msra.mxu0 %v4085
    %4139 = vmatprep.subr.mxu0 %v4082
    %4140 = vmatpush1.msra.mxu0 %v4081
    %4141 = vmatprep.subr.mxu0 %v4078
    %4142 = vmatpush1.msra.mxu0 %v4077
    %4143 = vmatprep.subr.mxu0 %v4074
    %4144 = vmatpush1.msra.mxu0 %v4073
    %4145 = vmatprep.subr.mxu0 %v4070
    %4146 = vmatpush1.msra.mxu0 %v4069
    %4147 = vmatprep.subr.mxu0 %v4066
    %4148 = vmatpush1.msra.mxu0 %v4065
    %4149 = vmatprep.subr.mxu0 %v4062
    %4150 = vmatpush1.msra.mxu0 %v4061
    %4151 = vmatprep.subr.mxu0 %v4058
    %4152 = vmatpush1.msra.mxu0 %v4057
    %4153 = vmatprep.subr.mxu0 0.0
    %4154 = vmatpush2.msra.mxu0 0.0
    %4155 = vmatprep.subr.mxu0 0.0
    %4156 = vmatpush2.msra.mxu0 0.0
    %4157 = vmatprep.subr.mxu0 0.0
    %4158 = vmatpush2.msra.mxu0 0.0
    %4159 = vmatprep.subr.mxu0 0.0
    %4160 = vmatpush2.msra.mxu0 0.0
    %4161 = vmatprep.subr.mxu0 0.0
    %4162 = vmatpush2.msra.mxu0 0.0
    %4163 = vmatprep.subr.mxu0 0.0
    %4164 = vmatpush2.msra.mxu0 0.0
    %4165 = vmatprep.subr.mxu0 0.0
    %4166 = vmatpush2.msra.mxu0 0.0
    %4167 = vmatprep.subr.mxu0 0.0
    %4168 = vmatpush2.msra.mxu0 0.0
    %4169 = vmatprep.subr.mxu0 0.0
    %4170 = vmatpush2.msra.mxu0 0.0
    %4171 = vmatprep.subr.mxu0 0.0
    %4172 = vmatpush2.msra.mxu0 0.0
    %4173 = vmatprep.subr.mxu0 0.0
    %4174 = vmatpush2.msra.mxu0 0.0
    %4175 = vmatprep.subr.mxu0 0.0
    %4176 = vmatpush2.msra.mxu0 0.0
    %4177 = vmatprep.subr.mxu0 0.0
    %4178 = vmatpush2.msra.mxu0 0.0
    %4179 = vmatprep.subr.mxu0 0.0
    %4180 = vmatpush2.msra.mxu0 0.0
    %4181 = vmatprep.subr.mxu0 0.0
    %4182 = vmatpush2.msra.mxu0 0.0
    %4183 = vmatprep.subr.mxu0 0.0
    %4184 = vmatpush2.msra.mxu0 0.0
    %4185 = vmatprep.mubr.f32.mxu0 0.0
    %4186 = vmatmul.mubr.f32.gmra.mxu0 %v4042
    %v4187 = vpop.f32.mrf.mxu0
    %v4188 = vadd.f32 0.0, %v4187
    %v4189 = vpop.f32.mrf.mxu0
    %v4190 = vadd.f32 0.0, %v4189
    %4191 = vdwg.mxu0
    %4192 = vmatprep.subr.mxu0 %v4120
    %4193 = vmatpush1.msra.mxu0 %v4119
    %4194 = vmatprep.subr.mxu0 %v4116
    %4195 = vmatpush1.msra.mxu0 %v4115
    %4196 = vmatprep.subr.mxu0 %v4112
    %4197 = vmatpush1.msra.mxu0 %v4111
    %4198 = vmatprep.subr.mxu0 %v4108
    %4199 = vmatpush1.msra.mxu0 %v4107
    %4200 = vmatprep.subr.mxu0 %v4104
    %4201 = vmatpush1.msra.mxu0 %v4103
    %4202 = vmatprep.subr.mxu0 %v4100
    %4203 = vmatpush1.msra.mxu0 %v4099
    %4204 = vmatprep.subr.mxu0 %v4096
    %4205 = vmatpush1.msra.mxu0 %v4095
    %4206 = vmatprep.subr.mxu0 %v4092
    %4207 = vmatpush1.msra.mxu0 %v4091
    %4208 = vmatprep.subr.mxu0 %v4088
    %4209 = vmatpush1.msra.mxu0 %v4087
    %4210 = vmatprep.subr.mxu0 %v4084
    %4211 = vmatpush1.msra.mxu0 %v4083
    %4212 = vmatprep.subr.mxu0 %v4080
    %4213 = vmatpush1.msra.mxu0 %v4079
    %4214 = vmatprep.subr.mxu0 %v4076
    %4215 = vmatpush1.msra.mxu0 %v4075
    %4216 = vmatprep.subr.mxu0 %v4072
    %4217 = vmatpush1.msra.mxu0 %v4071
    %4218 = vmatprep.subr.mxu0 %v4068
    %4219 = vmatpush1.msra.mxu0 %v4067
    %4220 = vmatprep.subr.mxu0 %v4064
    %4221 = vmatpush1.msra.mxu0 %v4063
    %4222 = vmatprep.subr.mxu0 %v4060
    %4223 = vmatpush1.msra.mxu0 %v4059
    %4224 = vmatprep.subr.mxu0 0.0
    %4225 = vmatpush2.msra.mxu0 0.0
    %4226 = vmatprep.subr.mxu0 0.0
    %4227 = vmatpush2.msra.mxu0 0.0
    %4228 = vmatprep.subr.mxu0 0.0
    %4229 = vmatpush2.msra.mxu0 0.0
    %4230 = vmatprep.subr.mxu0 0.0
    %4231 = vmatpush2.msra.mxu0 0.0
    %4232 = vmatprep.subr.mxu0 0.0
    %4233 = vmatpush2.msra.mxu0 0.0
    %4234 = vmatprep.subr.mxu0 0.0
    %4235 = vmatpush2.msra.mxu0 0.0
    %4236 = vmatprep.subr.mxu0 0.0
    %4237 = vmatpush2.msra.mxu0 0.0
    %4238 = vmatprep.subr.mxu0 0.0
    %4239 = vmatpush2.msra.mxu0 0.0
    %4240 = vmatprep.subr.mxu0 0.0
    %4241 = vmatpush2.msra.mxu0 0.0
    %4242 = vmatprep.subr.mxu0 0.0
    %4243 = vmatpush2.msra.mxu0 0.0
    %4244 = vmatprep.subr.mxu0 0.0
    %4245 = vmatpush2.msra.mxu0 0.0
    %4246 = vmatprep.subr.mxu0 0.0
    %4247 = vmatpush2.msra.mxu0 0.0
    %4248 = vmatprep.subr.mxu0 0.0
    %4249 = vmatpush2.msra.mxu0 0.0
    %4250 = vmatprep.subr.mxu0 0.0
    %4251 = vmatpush2.msra.mxu0 0.0
    %4252 = vmatprep.subr.mxu0 0.0
    %4253 = vmatpush2.msra.mxu0 0.0
    %4254 = vmatprep.subr.mxu0 0.0
    %4255 = vmatpush2.msra.mxu0 0.0
    %4256 = vmatprep.mubr.f32.mxu0 0.0
    %4257 = vmatmul.mubr.f32.gmra.mxu0 %v4042
    %v4258 = vpop.f32.mrf.mxu0
    %v4259 = vadd.f32 0.0, %v4258
    %v4260 = vpop.f32.mrf.mxu0
    %v4261 = vadd.f32 0.0, %v4260
    %4262 = vdwg.mxu0
    %v4263 = vadd.f32 %v4053, %v4188
    %v4264 = vadd.f32 %v4054, %v4190
    %v4265 = vadd.f32 %v4055, %v4259
    %v4266 = vadd.f32 %v4056, %v4261
    %v4267 = vxor.u32 %v4263, 2147483648
    %v4268 = vmul.f32 %v4267, 1.442695
    %v4269 = vpow.pop %v4268
    %v4270 = vadd.f32 %v4269, 1.0
    %v4271 = vrcp.pop %v4270
    %v4272 = vmul.f32 1.0, %v4271
    %v4273 = vxor.u32 %v4264, 2147483648
    %v4274 = vmul.f32 %v4273, 1.442695
    %v4275 = vpow.pop %v4274
    %v4276 = vadd.f32 %v4275, 1.0
    %v4277 = vrcp.pop %v4276
    %v4278 = vmul.f32 1.0, %v4277
    %v4279 = vtanh.pop %v4265
    %v4280 = vxor.u32 %v4266, 2147483648
    %v4281 = vmul.f32 %v4280, 1.442695
    %v4282 = vpow.pop %v4281
    %v4283 = vadd.f32 %v4282, 1.0
    %v4284 = vrcp.pop %v4283
    %v4285 = vmul.f32 1.0, %v4284
    %v4286 = vmul.f32 %v4278, %v4040
    %v4287 = vmul.f32 %v4272, %v4279
    %v4288 = vadd.f32 %v4286, %v4287
    %v4289 = vtanh.pop %v4288
    %v4290 = vmul.f32 %v4285, %v4289
    %4291 = vst.msk [vmem:[#allocation3 + $0x68] sm:$0xff] %vm328, %v4290
    %4292 = vst.msk [vmem:[#allocation3 + $0x10] sm:$0xff] %vm1067, %v4290
    %v4293 = vld [vmem:[#allocation2 + $0x1c0] sm:$0xff]
    %v4294 = vld [vmem:[#allocation2 + $0x1c8] sm:$0xff]
    %v4295 = vld [vmem:[#allocation2 + $0x1d0] sm:$0xff]
    %v4296 = vld [vmem:[#allocation2 + $0x1d8] sm:$0xff]
    %v4297 = vld [vmem:[#allocation2 + $0x20] sm:$0xff]
    %v4298 = vld [vmem:[#allocation2 + $0x28] sm:$0xff]
    %v4299 = vld [vmem:[#allocation2 + $0x30] sm:$0xff]
    %v4300 = vld [vmem:[#allocation2 + $0x38] sm:$0xff]
    %v4301 = vsel %vm816, %v4293, %v4297
    %v4302 = vsel %vm817, %v4294, %v4298
    %v4303 = vsel %vm818, %v4295, %v4299
    %v4304 = vsel %vm819, %v4296, %v4300
    %v4305 = vld [vmem:[%s4] sm:$0xff]
    %v4306 = vld [vmem:[%s4 + $0x8] sm:$0xff]
    %v4307 = vld [vmem:[%s4 + $0x10] sm:$0xff]
    %v4308 = vld [vmem:[%s4 + $0x18] sm:$0xff]
    %v4309 = vld [vmem:[%s4 + $0x20] sm:$0xff]
    %v4310 = vld [vmem:[%s4 + $0x28] sm:$0xff]
    %v4311 = vld [vmem:[%s4 + $0x30] sm:$0xff]
    %v4312 = vld [vmem:[%s4 + $0x38] sm:$0xff]
    %v4313 = vld [vmem:[%s4 + $0x40] sm:$0xff]
    %v4314 = vld [vmem:[%s4 + $0x48] sm:$0xff]
    %v4315 = vld [vmem:[%s4 + $0x50] sm:$0xff]
    %v4316 = vld [vmem:[%s4 + $0x58] sm:$0xff]
    %v4317 = vld [vmem:[%s4 + $0x60] sm:$0xff]
    %v4318 = vld [vmem:[%s4 + $0x68] sm:$0xff]
    %v4319 = vld [vmem:[%s4 + $0x70] sm:$0xff]
    %v4320 = vld [vmem:[%s4 + $0x78] sm:$0xff]
    %v4321 = vld [vmem:[%s4 + $0x80] sm:$0xff]
    %v4322 = vld [vmem:[%s4 + $0x88] sm:$0xff]
    %v4323 = vld [vmem:[%s4 + $0x90] sm:$0xff]
    %v4324 = vld [vmem:[%s4 + $0x98] sm:$0xff]
    %v4325 = vld [vmem:[%s4 + $0xa0] sm:$0xff]
    %v4326 = vld [vmem:[%s4 + $0xa8] sm:$0xff]
    %v4327 = vld [vmem:[%s4 + $0xb0] sm:$0xff]
    %v4328 = vld [vmem:[%s4 + $0xb8] sm:$0xff]
    %v4329 = vld [vmem:[%s4 + $0xc0] sm:$0xff]
    %v4330 = vld [vmem:[%s4 + $0xc8] sm:$0xff]
    %v4331 = vld [vmem:[%s4 + $0xd0] sm:$0xff]
    %v4332 = vld [vmem:[%s4 + $0xd8] sm:$0xff]
    %v4333 = vld [vmem:[%s4 + $0xe0] sm:$0xff]
    %v4334 = vld [vmem:[%s4 + $0xe8] sm:$0xff]
    %v4335 = vld [vmem:[%s4 + $0xf0] sm:$0xff]
    %v4336 = vld [vmem:[%s4 + $0xf8] sm:$0xff]
    %v4337 = vld [vmem:[%s4 + $0x100] sm:$0xff]
    %v4338 = vld [vmem:[%s4 + $0x108] sm:$0xff]
    %v4339 = vld [vmem:[%s4 + $0x110] sm:$0xff]
    %v4340 = vld [vmem:[%s4 + $0x118] sm:$0xff]
    %v4341 = vld [vmem:[%s4 + $0x120] sm:$0xff]
    %v4342 = vld [vmem:[%s4 + $0x128] sm:$0xff]
    %v4343 = vld [vmem:[%s4 + $0x130] sm:$0xff]
    %v4344 = vld [vmem:[%s4 + $0x138] sm:$0xff]
    %v4345 = vld [vmem:[%s4 + $0x140] sm:$0xff]
    %v4346 = vld [vmem:[%s4 + $0x148] sm:$0xff]
    %v4347 = vld [vmem:[%s4 + $0x150] sm:$0xff]
    %v4348 = vld [vmem:[%s4 + $0x158] sm:$0xff]
    %v4349 = vld [vmem:[%s4 + $0x160] sm:$0xff]
    %v4350 = vld [vmem:[%s4 + $0x168] sm:$0xff]
    %v4351 = vld [vmem:[%s4 + $0x170] sm:$0xff]
    %v4352 = vld [vmem:[%s4 + $0x178] sm:$0xff]
    %v4353 = vld [vmem:[%s4 + $0x180] sm:$0xff]
    %v4354 = vld [vmem:[%s4 + $0x188] sm:$0xff]
    %v4355 = vld [vmem:[%s4 + $0x190] sm:$0xff]
    %v4356 = vld [vmem:[%s4 + $0x198] sm:$0xff]
    %v4357 = vld [vmem:[%s4 + $0x1a0] sm:$0xff]
    %v4358 = vld [vmem:[%s4 + $0x1a8] sm:$0xff]
    %v4359 = vld [vmem:[%s4 + $0x1b0] sm:$0xff]
    %v4360 = vld [vmem:[%s4 + $0x1b8] sm:$0xff]
    %v4361 = vld [vmem:[%s4 + $0x1c0] sm:$0xff]
    %v4362 = vld [vmem:[%s4 + $0x1c8] sm:$0xff]
    %v4363 = vld [vmem:[%s4 + $0x1d0] sm:$0xff]
    %v4364 = vld [vmem:[%s4 + $0x1d8] sm:$0xff]
    %v4365 = vld [vmem:[%s4 + $0x1e0] sm:$0xff]
    %v4366 = vld [vmem:[%s4 + $0x1e8] sm:$0xff]
    %v4367 = vld [vmem:[%s4 + $0x1f0] sm:$0xff]
    %v4368 = vld [vmem:[%s4 + $0x1f8] sm:$0xff]
    %4369 = vmatprep.subr.mxu0 %v4366
    %4370 = vmatpush1.msra.mxu0 %v4365
    %4371 = vmatprep.subr.mxu0 %v4362
    %4372 = vmatpush1.msra.mxu0 %v4361
    %4373 = vmatprep.subr.mxu0 %v4358
    %4374 = vmatpush1.msra.mxu0 %v4357
    %4375 = vmatprep.subr.mxu0 %v4354
    %4376 = vmatpush1.msra.mxu0 %v4353
    %4377 = vmatprep.subr.mxu0 %v4350
    %4378 = vmatpush1.msra.mxu0 %v4349
    %4379 = vmatprep.subr.mxu0 %v4346
    %4380 = vmatpush1.msra.mxu0 %v4345
    %4381 = vmatprep.subr.mxu0 %v4342
    %4382 = vmatpush1.msra.mxu0 %v4341
    %4383 = vmatprep.subr.mxu0 %v4338
    %4384 = vmatpush1.msra.mxu0 %v4337
    %4385 = vmatprep.subr.mxu0 %v4334
    %4386 = vmatpush1.msra.mxu0 %v4333
    %4387 = vmatprep.subr.mxu0 %v4330
    %4388 = vmatpush1.msra.mxu0 %v4329
    %4389 = vmatprep.subr.mxu0 %v4326
    %4390 = vmatpush1.msra.mxu0 %v4325
    %4391 = vmatprep.subr.mxu0 %v4322
    %4392 = vmatpush1.msra.mxu0 %v4321
    %4393 = vmatprep.subr.mxu0 %v4318
    %4394 = vmatpush1.msra.mxu0 %v4317
    %4395 = vmatprep.subr.mxu0 %v4314
    %4396 = vmatpush1.msra.mxu0 %v4313
    %4397 = vmatprep.subr.mxu0 %v4310
    %4398 = vmatpush1.msra.mxu0 %v4309
    %4399 = vmatprep.subr.mxu0 %v4306
    %4400 = vmatpush1.msra.mxu0 %v4305
    %4401 = vmatprep.subr.mxu0 0.0
    %4402 = vmatpush2.msra.mxu0 0.0
    %4403 = vmatprep.subr.mxu0 0.0
    %4404 = vmatpush2.msra.mxu0 0.0
    %4405 = vmatprep.subr.mxu0 0.0
    %4406 = vmatpush2.msra.mxu0 0.0
    %4407 = vmatprep.subr.mxu0 0.0
    %4408 = vmatpush2.msra.mxu0 0.0
    %4409 = vmatprep.subr.mxu0 0.0
    %4410 = vmatpush2.msra.mxu0 0.0
    %4411 = vmatprep.subr.mxu0 0.0
    %4412 = vmatpush2.msra.mxu0 0.0
    %4413 = vmatprep.subr.mxu0 0.0
    %4414 = vmatpush2.msra.mxu0 0.0
    %4415 = vmatprep.subr.mxu0 0.0
    %4416 = vmatpush2.msra.mxu0 0.0
    %4417 = vmatprep.subr.mxu0 0.0
    %4418 = vmatpush2.msra.mxu0 0.0
    %4419 = vmatprep.subr.mxu0 0.0
    %4420 = vmatpush2.msra.mxu0 0.0
    %4421 = vmatprep.subr.mxu0 0.0
    %4422 = vmatpush2.msra.mxu0 0.0
    %4423 = vmatprep.subr.mxu0 0.0
    %4424 = vmatpush2.msra.mxu0 0.0
    %4425 = vmatprep.subr.mxu0 0.0
    %4426 = vmatpush2.msra.mxu0 0.0
    %4427 = vmatprep.subr.mxu0 0.0
    %4428 = vmatpush2.msra.mxu0 0.0
    %4429 = vmatprep.subr.mxu0 0.0
    %4430 = vmatpush2.msra.mxu0 0.0
    %4431 = vmatprep.subr.mxu0 0.0
    %4432 = vmatpush2.msra.mxu0 0.0
    %4433 = vmatprep.mubr.f32.mxu0 0.0
    %4434 = vmatmul.mubr.f32.gmra.mxu0 %v4290
    %v4435 = vpop.f32.mrf.mxu0
    %v4436 = vadd.f32 0.0, %v4435
    %v4437 = vpop.f32.mrf.mxu0
    %v4438 = vadd.f32 0.0, %v4437
    %4439 = vdwg.mxu0
    %4440 = vmatprep.subr.mxu0 %v4368
    %4441 = vmatpush1.msra.mxu0 %v4367
    %4442 = vmatprep.subr.mxu0 %v4364
    %4443 = vmatpush1.msra.mxu0 %v4363
    %4444 = vmatprep.subr.mxu0 %v4360
    %4445 = vmatpush1.msra.mxu0 %v4359
    %4446 = vmatprep.subr.mxu0 %v4356
    %4447 = vmatpush1.msra.mxu0 %v4355
    %4448 = vmatprep.subr.mxu0 %v4352
    %4449 = vmatpush1.msra.mxu0 %v4351
    %4450 = vmatprep.subr.mxu0 %v4348
    %4451 = vmatpush1.msra.mxu0 %v4347
    %4452 = vmatprep.subr.mxu0 %v4344
    %4453 = vmatpush1.msra.mxu0 %v4343
    %4454 = vmatprep.subr.mxu0 %v4340
    %4455 = vmatpush1.msra.mxu0 %v4339
    %4456 = vmatprep.subr.mxu0 %v4336
    %4457 = vmatpush1.msra.mxu0 %v4335
    %4458 = vmatprep.subr.mxu0 %v4332
    %4459 = vmatpush1.msra.mxu0 %v4331
    %4460 = vmatprep.subr.mxu0 %v4328
    %4461 = vmatpush1.msra.mxu0 %v4327
    %4462 = vmatprep.subr.mxu0 %v4324
    %4463 = vmatpush1.msra.mxu0 %v4323
    %4464 = vmatprep.subr.mxu0 %v4320
    %4465 = vmatpush1.msra.mxu0 %v4319
    %4466 = vmatprep.subr.mxu0 %v4316
    %4467 = vmatpush1.msra.mxu0 %v4315
    %4468 = vmatprep.subr.mxu0 %v4312
    %4469 = vmatpush1.msra.mxu0 %v4311
    %4470 = vmatprep.subr.mxu0 %v4308
    %4471 = vmatpush1.msra.mxu0 %v4307
    %4472 = vmatprep.subr.mxu0 0.0
    %4473 = vmatpush2.msra.mxu0 0.0
    %4474 = vmatprep.subr.mxu0 0.0
    %4475 = vmatpush2.msra.mxu0 0.0
    %4476 = vmatprep.subr.mxu0 0.0
    %4477 = vmatpush2.msra.mxu0 0.0
    %4478 = vmatprep.subr.mxu0 0.0
    %4479 = vmatpush2.msra.mxu0 0.0
    %4480 = vmatprep.subr.mxu0 0.0
    %4481 = vmatpush2.msra.mxu0 0.0
    %4482 = vmatprep.subr.mxu0 0.0
    %4483 = vmatpush2.msra.mxu0 0.0
    %4484 = vmatprep.subr.mxu0 0.0
    %4485 = vmatpush2.msra.mxu0 0.0
    %4486 = vmatprep.subr.mxu0 0.0
    %4487 = vmatpush2.msra.mxu0 0.0
    %4488 = vmatprep.subr.mxu0 0.0
    %4489 = vmatpush2.msra.mxu0 0.0
    %4490 = vmatprep.subr.mxu0 0.0
    %4491 = vmatpush2.msra.mxu0 0.0
    %4492 = vmatprep.subr.mxu0 0.0
    %4493 = vmatpush2.msra.mxu0 0.0
    %4494 = vmatprep.subr.mxu0 0.0
    %4495 = vmatpush2.msra.mxu0 0.0
    %4496 = vmatprep.subr.mxu0 0.0
    %4497 = vmatpush2.msra.mxu0 0.0
    %4498 = vmatprep.subr.mxu0 0.0
    %4499 = vmatpush2.msra.mxu0 0.0
    %4500 = vmatprep.subr.mxu0 0.0
    %4501 = vmatpush2.msra.mxu0 0.0
    %4502 = vmatprep.subr.mxu0 0.0
    %4503 = vmatpush2.msra.mxu0 0.0
    %4504 = vmatprep.mubr.f32.mxu0 0.0
    %4505 = vmatmul.mubr.f32.gmra.mxu0 %v4290
    %v4506 = vpop.f32.mrf.mxu0
    %v4507 = vadd.f32 0.0, %v4506
    %v4508 = vpop.f32.mrf.mxu0
    %v4509 = vadd.f32 0.0, %v4508
    %4510 = vdwg.mxu0
    %v4511 = vadd.f32 %v4301, %v4436
    %v4512 = vadd.f32 %v4302, %v4438
    %v4513 = vadd.f32 %v4303, %v4507
    %v4514 = vadd.f32 %v4304, %v4509
    %v4515 = vxor.u32 %v4511, 2147483648
    %v4516 = vmul.f32 %v4515, 1.442695
    %v4517 = vpow.pop %v4516
    %v4518 = vadd.f32 %v4517, 1.0
    %v4519 = vrcp.pop %v4518
    %v4520 = vmul.f32 1.0, %v4519
    %v4521 = vxor.u32 %v4512, 2147483648
    %v4522 = vmul.f32 %v4521, 1.442695
    %v4523 = vpow.pop %v4522
    %v4524 = vadd.f32 %v4523, 1.0
    %v4525 = vrcp.pop %v4524
    %v4526 = vmul.f32 1.0, %v4525
    %v4527 = vtanh.pop %v4513
    %v4528 = vxor.u32 %v4514, 2147483648
    %v4529 = vmul.f32 %v4528, 1.442695
    %v4530 = vpow.pop %v4529
    %v4531 = vadd.f32 %v4530, 1.0
    %v4532 = vrcp.pop %v4531
    %v4533 = vmul.f32 1.0, %v4532
    %v4534 = vmul.f32 %v4526, %v4288
    %v4535 = vmul.f32 %v4520, %v4527
    %v4536 = vadd.f32 %v4534, %v4535
    %v4537 = vtanh.pop %v4536
    %v4538 = vmul.f32 %v4533, %v4537
    %4539 = vst.msk [vmem:[#allocation3 + $0x70] sm:$0xff] %vm328, %v4538
    %4540 = vst.msk [vmem:[#allocation3 + $0x8] sm:$0xff] %vm1067, %v4538
    %v4541 = vld [vmem:[#allocation2 + $0x1e0] sm:$0xff]
    %v4542 = vld [vmem:[#allocation2 + $0x1e8] sm:$0xff]
    %v4543 = vld [vmem:[#allocation2 + $0x1f0] sm:$0xff]
    %v4544 = vld [vmem:[#allocation2 + $0x1f8] sm:$0xff]
    %v4545 = vld [vmem:[#allocation2] sm:$0xff]
    %v4546 = vld [vmem:[#allocation2 + $0x8] sm:$0xff]
    %v4547 = vld [vmem:[#allocation2 + $0x10] sm:$0xff]
    %v4548 = vld [vmem:[#allocation2 + $0x18] sm:$0xff]
    %v4549 = vsel %vm816, %v4541, %v4545
    %v4550 = vsel %vm817, %v4542, %v4546
    %v4551 = vsel %vm818, %v4543, %v4547
    %v4552 = vsel %vm819, %v4544, %v4548
    %v4553 = vld [vmem:[%s4] sm:$0xff]
    %v4554 = vld [vmem:[%s4 + $0x8] sm:$0xff]
    %v4555 = vld [vmem:[%s4 + $0x10] sm:$0xff]
    %v4556 = vld [vmem:[%s4 + $0x18] sm:$0xff]
    %v4557 = vld [vmem:[%s4 + $0x20] sm:$0xff]
    %v4558 = vld [vmem:[%s4 + $0x28] sm:$0xff]
    %v4559 = vld [vmem:[%s4 + $0x30] sm:$0xff]
    %v4560 = vld [vmem:[%s4 + $0x38] sm:$0xff]
    %v4561 = vld [vmem:[%s4 + $0x40] sm:$0xff]
    %v4562 = vld [vmem:[%s4 + $0x48] sm:$0xff]
    %v4563 = vld [vmem:[%s4 + $0x50] sm:$0xff]
    %v4564 = vld [vmem:[%s4 + $0x58] sm:$0xff]
    %v4565 = vld [vmem:[%s4 + $0x60] sm:$0xff]
    %v4566 = vld [vmem:[%s4 + $0x68] sm:$0xff]
    %v4567 = vld [vmem:[%s4 + $0x70] sm:$0xff]
    %v4568 = vld [vmem:[%s4 + $0x78] sm:$0xff]
    %v4569 = vld [vmem:[%s4 + $0x80] sm:$0xff]
    %v4570 = vld [vmem:[%s4 + $0x88] sm:$0xff]
    %v4571 = vld [vmem:[%s4 + $0x90] sm:$0xff]
    %v4572 = vld [vmem:[%s4 + $0x98] sm:$0xff]
    %v4573 = vld [vmem:[%s4 + $0xa0] sm:$0xff]
    %v4574 = vld [vmem:[%s4 + $0xa8] sm:$0xff]
    %v4575 = vld [vmem:[%s4 + $0xb0] sm:$0xff]
    %v4576 = vld [vmem:[%s4 + $0xb8] sm:$0xff]
    %v4577 = vld [vmem:[%s4 + $0xc0] sm:$0xff]
    %v4578 = vld [vmem:[%s4 + $0xc8] sm:$0xff]
    %v4579 = vld [vmem:[%s4 + $0xd0] sm:$0xff]
    %v4580 = vld [vmem:[%s4 + $0xd8] sm:$0xff]
    %v4581 = vld [vmem:[%s4 + $0xe0] sm:$0xff]
    %v4582 = vld [vmem:[%s4 + $0xe8] sm:$0xff]
    %v4583 = vld [vmem:[%s4 + $0xf0] sm:$0xff]
    %v4584 = vld [vmem:[%s4 + $0xf8] sm:$0xff]
    %v4585 = vld [vmem:[%s4 + $0x100] sm:$0xff]
    %v4586 = vld [vmem:[%s4 + $0x108] sm:$0xff]
    %v4587 = vld [vmem:[%s4 + $0x110] sm:$0xff]
    %v4588 = vld [vmem:[%s4 + $0x118] sm:$0xff]
    %v4589 = vld [vmem:[%s4 + $0x120] sm:$0xff]
    %v4590 = vld [vmem:[%s4 + $0x128] sm:$0xff]
    %v4591 = vld [vmem:[%s4 + $0x130] sm:$0xff]
    %v4592 = vld [vmem:[%s4 + $0x138] sm:$0xff]
    %v4593 = vld [vmem:[%s4 + $0x140] sm:$0xff]
    %v4594 = vld [vmem:[%s4 + $0x148] sm:$0xff]
    %v4595 = vld [vmem:[%s4 + $0x150] sm:$0xff]
    %v4596 = vld [vmem:[%s4 + $0x158] sm:$0xff]
    %v4597 = vld [vmem:[%s4 + $0x160] sm:$0xff]
    %v4598 = vld [vmem:[%s4 + $0x168] sm:$0xff]
    %v4599 = vld [vmem:[%s4 + $0x170] sm:$0xff]
    %v4600 = vld [vmem:[%s4 + $0x178] sm:$0xff]
    %v4601 = vld [vmem:[%s4 + $0x180] sm:$0xff]
    %v4602 = vld [vmem:[%s4 + $0x188] sm:$0xff]
    %v4603 = vld [vmem:[%s4 + $0x190] sm:$0xff]
    %v4604 = vld [vmem:[%s4 + $0x198] sm:$0xff]
    %v4605 = vld [vmem:[%s4 + $0x1a0] sm:$0xff]
    %v4606 = vld [vmem:[%s4 + $0x1a8] sm:$0xff]
    %v4607 = vld [vmem:[%s4 + $0x1b0] sm:$0xff]
    %v4608 = vld [vmem:[%s4 + $0x1b8] sm:$0xff]
    %v4609 = vld [vmem:[%s4 + $0x1c0] sm:$0xff]
    %v4610 = vld [vmem:[%s4 + $0x1c8] sm:$0xff]
    %v4611 = vld [vmem:[%s4 + $0x1d0] sm:$0xff]
    %v4612 = vld [vmem:[%s4 + $0x1d8] sm:$0xff]
    %v4613 = vld [vmem:[%s4 + $0x1e0] sm:$0xff]
    %v4614 = vld [vmem:[%s4 + $0x1e8] sm:$0xff]
    %v4615 = vld [vmem:[%s4 + $0x1f0] sm:$0xff]
    %v4616 = vld [vmem:[%s4 + $0x1f8] sm:$0xff]
    %4617 = vmatprep.subr.mxu0 %v4614
    %4618 = vmatpush1.msra.mxu0 %v4613
    %4619 = vmatprep.subr.mxu0 %v4610
    %4620 = vmatpush1.msra.mxu0 %v4609
    %4621 = vmatprep.subr.mxu0 %v4606
    %4622 = vmatpush1.msra.mxu0 %v4605
    %4623 = vmatprep.subr.mxu0 %v4602
    %4624 = vmatpush1.msra.mxu0 %v4601
    %4625 = vmatprep.subr.mxu0 %v4598
    %4626 = vmatpush1.msra.mxu0 %v4597
    %4627 = vmatprep.subr.mxu0 %v4594
    %4628 = vmatpush1.msra.mxu0 %v4593
    %4629 = vmatprep.subr.mxu0 %v4590
    %4630 = vmatpush1.msra.mxu0 %v4589
    %4631 = vmatprep.subr.mxu0 %v4586
    %4632 = vmatpush1.msra.mxu0 %v4585
    %4633 = vmatprep.subr.mxu0 %v4582
    %4634 = vmatpush1.msra.mxu0 %v4581
    %4635 = vmatprep.subr.mxu0 %v4578
    %4636 = vmatpush1.msra.mxu0 %v4577
    %4637 = vmatprep.subr.mxu0 %v4574
    %4638 = vmatpush1.msra.mxu0 %v4573
    %4639 = vmatprep.subr.mxu0 %v4570
    %4640 = vmatpush1.msra.mxu0 %v4569
    %4641 = vmatprep.subr.mxu0 %v4566
    %4642 = vmatpush1.msra.mxu0 %v4565
    %4643 = vmatprep.subr.mxu0 %v4562
    %4644 = vmatpush1.msra.mxu0 %v4561
    %4645 = vmatprep.subr.mxu0 %v4558
    %4646 = vmatpush1.msra.mxu0 %v4557
    %4647 = vmatprep.subr.mxu0 %v4554
    %4648 = vmatpush1.msra.mxu0 %v4553
    %4649 = vmatprep.subr.mxu0 0.0
    %4650 = vmatpush2.msra.mxu0 0.0
    %4651 = vmatprep.subr.mxu0 0.0
    %4652 = vmatpush2.msra.mxu0 0.0
    %4653 = vmatprep.subr.mxu0 0.0
    %4654 = vmatpush2.msra.mxu0 0.0
    %4655 = vmatprep.subr.mxu0 0.0
    %4656 = vmatpush2.msra.mxu0 0.0
    %4657 = vmatprep.subr.mxu0 0.0
    %4658 = vmatpush2.msra.mxu0 0.0
    %4659 = vmatprep.subr.mxu0 0.0
    %4660 = vmatpush2.msra.mxu0 0.0
    %4661 = vmatprep.subr.mxu0 0.0
    %4662 = vmatpush2.msra.mxu0 0.0
    %4663 = vmatprep.subr.mxu0 0.0
    %4664 = vmatpush2.msra.mxu0 0.0
    %4665 = vmatprep.subr.mxu0 0.0
    %4666 = vmatpush2.msra.mxu0 0.0
    %4667 = vmatprep.subr.mxu0 0.0
    %4668 = vmatpush2.msra.mxu0 0.0
    %4669 = vmatprep.subr.mxu0 0.0
    %4670 = vmatpush2.msra.mxu0 0.0
    %4671 = vmatprep.subr.mxu0 0.0
    %4672 = vmatpush2.msra.mxu0 0.0
    %4673 = vmatprep.subr.mxu0 0.0
    %4674 = vmatpush2.msra.mxu0 0.0
    %4675 = vmatprep.subr.mxu0 0.0
    %4676 = vmatpush2.msra.mxu0 0.0
    %4677 = vmatprep.subr.mxu0 0.0
    %4678 = vmatpush2.msra.mxu0 0.0
    %4679 = vmatprep.subr.mxu0 0.0
    %4680 = vmatpush2.msra.mxu0 0.0
    %4681 = vmatprep.mubr.f32.mxu0 0.0
    %4682 = vmatmul.mubr.f32.gmra.mxu0 %v4538
    %v4683 = vpop.f32.mrf.mxu0
    %v4684 = vadd.f32 0.0, %v4683
    %v4685 = vpop.f32.mrf.mxu0
    %v4686 = vadd.f32 0.0, %v4685
    %4687 = vdwg.mxu0
    %4688 = vmatprep.subr.mxu0 %v4616
    %4689 = vmatpush1.msra.mxu0 %v4615
    %4690 = vmatprep.subr.mxu0 %v4612
    %4691 = vmatpush1.msra.mxu0 %v4611
    %4692 = vmatprep.subr.mxu0 %v4608
    %4693 = vmatpush1.msra.mxu0 %v4607
    %4694 = vmatprep.subr.mxu0 %v4604
    %4695 = vmatpush1.msra.mxu0 %v4603
    %4696 = vmatprep.subr.mxu0 %v4600
    %4697 = vmatpush1.msra.mxu0 %v4599
    %4698 = vmatprep.subr.mxu0 %v4596
    %4699 = vmatpush1.msra.mxu0 %v4595
    %4700 = vmatprep.subr.mxu0 %v4592
    %4701 = vmatpush1.msra.mxu0 %v4591
    %4702 = vmatprep.subr.mxu0 %v4588
    %4703 = vmatpush1.msra.mxu0 %v4587
    %4704 = vmatprep.subr.mxu0 %v4584
    %4705 = vmatpush1.msra.mxu0 %v4583
    %4706 = vmatprep.subr.mxu0 %v4580
    %4707 = vmatpush1.msra.mxu0 %v4579
    %4708 = vmatprep.subr.mxu0 %v4576
    %4709 = vmatpush1.msra.mxu0 %v4575
    %4710 = vmatprep.subr.mxu0 %v4572
    %4711 = vmatpush1.msra.mxu0 %v4571
    %4712 = vmatprep.subr.mxu0 %v4568
    %4713 = vmatpush1.msra.mxu0 %v4567
    %4714 = vmatprep.subr.mxu0 %v4564
    %4715 = vmatpush1.msra.mxu0 %v4563
    %4716 = vmatprep.subr.mxu0 %v4560
    %4717 = vmatpush1.msra.mxu0 %v4559
    %4718 = vmatprep.subr.mxu0 %v4556
    %4719 = vmatpush1.msra.mxu0 %v4555
    %4720 = vmatprep.subr.mxu0 0.0
    %4721 = vmatpush2.msra.mxu0 0.0
    %4722 = vmatprep.subr.mxu0 0.0
    %4723 = vmatpush2.msra.mxu0 0.0
    %4724 = vmatprep.subr.mxu0 0.0
    %4725 = vmatpush2.msra.mxu0 0.0
    %4726 = vmatprep.subr.mxu0 0.0
    %4727 = vmatpush2.msra.mxu0 0.0
    %4728 = vmatprep.subr.mxu0 0.0
    %4729 = vmatpush2.msra.mxu0 0.0
    %4730 = vmatprep.subr.mxu0 0.0
    %4731 = vmatpush2.msra.mxu0 0.0
    %4732 = vmatprep.subr.mxu0 0.0
    %4733 = vmatpush2.msra.mxu0 0.0
    %4734 = vmatprep.subr.mxu0 0.0
    %4735 = vmatpush2.msra.mxu0 0.0
    %4736 = vmatprep.subr.mxu0 0.0
    %4737 = vmatpush2.msra.mxu0 0.0
    %4738 = vmatprep.subr.mxu0 0.0
    %4739 = vmatpush2.msra.mxu0 0.0
    %4740 = vmatprep.subr.mxu0 0.0
    %4741 = vmatpush2.msra.mxu0 0.0
    %4742 = vmatprep.subr.mxu0 0.0
    %4743 = vmatpush2.msra.mxu0 0.0
    %4744 = vmatprep.subr.mxu0 0.0
    %4745 = vmatpush2.msra.mxu0 0.0
    %4746 = vmatprep.subr.mxu0 0.0
    %4747 = vmatpush2.msra.mxu0 0.0
    %4748 = vmatprep.subr.mxu0 0.0
    %4749 = vmatpush2.msra.mxu0 0.0
    %4750 = vmatprep.subr.mxu0 0.0
    %4751 = vmatpush2.msra.mxu0 0.0
    %4752 = vmatprep.mubr.f32.mxu0 0.0
    %4753 = vmatmul.mubr.f32.gmra.mxu0 %v4538
    %v4754 = vpop.f32.mrf.mxu0
    %v4755 = vadd.f32 0.0, %v4754
    %v4756 = vpop.f32.mrf.mxu0
    %v4757 = vadd.f32 0.0, %v4756
    %4758 = vdwg.mxu0
    %v4759 = vadd.f32 %v4549, %v4684
    %v4760 = vadd.f32 %v4550, %v4686
    %v4761 = vadd.f32 %v4551, %v4755
    %v4762 = vadd.f32 %v4552, %v4757
    %v4763 = vxor.u32 %v4759, 2147483648
    %v4764 = vmul.f32 %v4763, 1.442695
    %v4765 = vpow.pop %v4764
    %v4766 = vadd.f32 %v4765, 1.0
    %v4767 = vrcp.pop %v4766
    %v4768 = vmul.f32 1.0, %v4767
    %v4769 = vxor.u32 %v4760, 2147483648
    %v4770 = vmul.f32 %v4769, 1.442695
    %v4771 = vpow.pop %v4770
    %v4772 = vadd.f32 %v4771, 1.0
    %v4773 = vrcp.pop %v4772
    %v4774 = vmul.f32 1.0, %v4773
    %v4775 = vtanh.pop %v4761
    %v4776 = vxor.u32 %v4762, 2147483648
    %v4777 = vmul.f32 %v4776, 1.442695
    %v4778 = vpow.pop %v4777
    %v4779 = vadd.f32 %v4778, 1.0
    %v4780 = vrcp.pop %v4779
    %v4781 = vmul.f32 1.0, %v4780
    %v4782 = vmul.f32 %v4774, %v4536
    %v4783 = vmul.f32 %v4768, %v4775
    %v4784 = vadd.f32 %v4782, %v4783
    %v4785 = vtanh.pop %v4784
    %v4786 = vmul.f32 %v4781, %v4785
    %4787 = vst.msk [vmem:[#allocation3 + $0x78] sm:$0xff] %vm328, %v4786
    %4788 = vst.msk [vmem:[#allocation3] sm:$0xff] %vm1067, %v4786
    %v4789 = vld [vmem:[%s6] sm:$0xff]
    %v4790 = vld [vmem:[%s6 + $0x8] sm:$0xff]
    %v4791 = vld [vmem:[%s6 + $0x10] sm:$0xff]
    %v4792 = vld [vmem:[%s6 + $0x18] sm:$0xff]
    %v4793 = vld [vmem:[%s6 + $0x20] sm:$0xff]
    %v4794 = vld [vmem:[%s6 + $0x28] sm:$0xff]
    %v4795 = vld [vmem:[%s6 + $0x30] sm:$0xff]
    %v4796 = vld [vmem:[%s6 + $0x38] sm:$0xff]
    %v4797 = vld [vmem:[%s6 + $0x40] sm:$0xff]
    %v4798 = vld [vmem:[%s6 + $0x48] sm:$0xff]
    %v4799 = vld [vmem:[%s6 + $0x50] sm:$0xff]
    %v4800 = vld [vmem:[%s6 + $0x58] sm:$0xff]
    %v4801 = vld [vmem:[%s6 + $0x60] sm:$0xff]
    %v4802 = vld [vmem:[%s6 + $0x68] sm:$0xff]
    %v4803 = vld [vmem:[%s6 + $0x70] sm:$0xff]
    %v4804 = vld [vmem:[%s6 + $0x78] sm:$0xff]
    %v4805 = vld [vmem:[#allocation3] sm:$0xff]
    %v4806 = vld [vmem:[#allocation3 + $0x8] sm:$0xff]
    %v4807 = vld [vmem:[#allocation3 + $0x10] sm:$0xff]
    %v4808 = vld [vmem:[#allocation3 + $0x18] sm:$0xff]
    %v4809 = vld [vmem:[#allocation3 + $0x20] sm:$0xff]
    %v4810 = vld [vmem:[#allocation3 + $0x28] sm:$0xff]
    %v4811 = vld [vmem:[#allocation3 + $0x30] sm:$0xff]
    %v4812 = vld [vmem:[#allocation3 + $0x38] sm:$0xff]
    %v4813 = vld [vmem:[#allocation3 + $0x40] sm:$0xff]
    %v4814 = vld [vmem:[#allocation3 + $0x48] sm:$0xff]
    %v4815 = vld [vmem:[#allocation3 + $0x50] sm:$0xff]
    %v4816 = vld [vmem:[#allocation3 + $0x58] sm:$0xff]
    %v4817 = vld [vmem:[#allocation3 + $0x60] sm:$0xff]
    %v4818 = vld [vmem:[#allocation3 + $0x68] sm:$0xff]
    %v4819 = vld [vmem:[#allocation3 + $0x70] sm:$0xff]
    %v4820 = vld [vmem:[#allocation3 + $0x78] sm:$0xff]
    %4821 = vmatprep.subr.mxu0 0.0
    %4822 = vmatpush1.msra.mxu0 %v4820
    %4823 = vmatprep.subr.mxu0 0.0
    %4824 = vmatpush1.msra.mxu0 %v4819
    %4825 = vmatprep.subr.mxu0 0.0
    %4826 = vmatpush1.msra.mxu0 %v4818
    %4827 = vmatprep.subr.mxu0 0.0
    %4828 = vmatpush1.msra.mxu0 %v4817
    %4829 = vmatprep.subr.mxu0 0.0
    %4830 = vmatpush1.msra.mxu0 %v4816
    %4831 = vmatprep.subr.mxu0 0.0
    %4832 = vmatpush1.msra.mxu0 %v4815
    %4833 = vmatprep.subr.mxu0 0.0
    %4834 = vmatpush1.msra.mxu0 %v4814
    %4835 = vmatprep.subr.mxu0 0.0
    %4836 = vmatpush1.msra.mxu0 %v4813
    %4837 = vmatprep.subr.mxu0 0.0
    %4838 = vmatpush1.msra.mxu0 %v4812
    %4839 = vmatprep.subr.mxu0 0.0
    %4840 = vmatpush1.msra.mxu0 %v4811
    %4841 = vmatprep.subr.mxu0 0.0
    %4842 = vmatpush1.msra.mxu0 %v4810
    %4843 = vmatprep.subr.mxu0 0.0
    %4844 = vmatpush1.msra.mxu0 %v4809
    %4845 = vmatprep.subr.mxu0 0.0
    %4846 = vmatpush1.msra.mxu0 %v4808
    %4847 = vmatprep.subr.mxu0 0.0
    %4848 = vmatpush1.msra.mxu0 %v4807
    %4849 = vmatprep.subr.mxu0 0.0
    %4850 = vmatpush1.msra.mxu0 %v4806
    %4851 = vmatprep.subr.mxu0 0.0
    %4852 = vmatpush1.msra.mxu0 %v4805
    %4853 = vmatprep.subr.mxu0 0.0
    %4854 = vmatpush2.msra.mxu0 0.0
    %4855 = vmatprep.subr.mxu0 0.0
    %4856 = vmatpush2.msra.mxu0 0.0
    %4857 = vmatprep.subr.mxu0 0.0
    %4858 = vmatpush2.msra.mxu0 0.0
    %4859 = vmatprep.subr.mxu0 0.0
    %4860 = vmatpush2.msra.mxu0 0.0
    %4861 = vmatprep.subr.mxu0 0.0
    %4862 = vmatpush2.msra.mxu0 0.0
    %4863 = vmatprep.subr.mxu0 0.0
    %4864 = vmatpush2.msra.mxu0 0.0
    %4865 = vmatprep.subr.mxu0 0.0
    %4866 = vmatpush2.msra.mxu0 0.0
    %4867 = vmatprep.subr.mxu0 0.0
    %4868 = vmatpush2.msra.mxu0 0.0
    %4869 = vmatprep.subr.mxu0 0.0
    %4870 = vmatpush2.msra.mxu0 0.0
    %4871 = vmatprep.subr.mxu0 0.0
    %4872 = vmatpush2.msra.mxu0 0.0
    %4873 = vmatprep.subr.mxu0 0.0
    %4874 = vmatpush2.msra.mxu0 0.0
    %4875 = vmatprep.subr.mxu0 0.0
    %4876 = vmatpush2.msra.mxu0 0.0
    %4877 = vmatprep.subr.mxu0 0.0
    %4878 = vmatpush2.msra.mxu0 0.0
    %4879 = vmatprep.subr.mxu0 0.0
    %4880 = vmatpush2.msra.mxu0 0.0
    %4881 = vmatprep.subr.mxu0 0.0
    %4882 = vmatpush2.msra.mxu0 0.0
    %4883 = vmatprep.subr.mxu0 0.0
    %4884 = vmatpush2.msra.mxu0 0.0
    %4885 = vmatprep.mubr.f32.mxu0 0.0
    %4886 = vmatmul.mubr.f32.gmra.mxu0 %v4789
    %v4887 = vpop.f32.mrf.mxu0
    %v4888 = vadd.f32 0.0, %v4887
    %v4889 = vpop.f32.mrf.mxu0
    %4890 = vmatprep.mubr.f32.mxu0 0.0
    %4891 = vmatmul.mubr.f32.gmra.mxu0 %v4790
    %v4892 = vpop.f32.mrf.mxu0
    %v4893 = vadd.f32 0.0, %v4892
    %v4894 = vpop.f32.mrf.mxu0
    %4895 = vmatprep.mubr.f32.mxu0 0.0
    %4896 = vmatmul.mubr.f32.gmra.mxu0 %v4791
    %v4897 = vpop.f32.mrf.mxu0
    %v4898 = vadd.f32 0.0, %v4897
    %v4899 = vpop.f32.mrf.mxu0
    %4900 = vmatprep.mubr.f32.mxu0 0.0
    %4901 = vmatmul.mubr.f32.gmra.mxu0 %v4792
    %v4902 = vpop.f32.mrf.mxu0
    %v4903 = vadd.f32 0.0, %v4902
    %v4904 = vpop.f32.mrf.mxu0
    %4905 = vmatprep.mubr.f32.mxu0 0.0
    %4906 = vmatmul.mubr.f32.gmra.mxu0 %v4793
    %v4907 = vpop.f32.mrf.mxu0
    %v4908 = vadd.f32 0.0, %v4907
    %v4909 = vpop.f32.mrf.mxu0
    %4910 = vmatprep.mubr.f32.mxu0 0.0
    %4911 = vmatmul.mubr.f32.gmra.mxu0 %v4794
    %v4912 = vpop.f32.mrf.mxu0
    %v4913 = vadd.f32 0.0, %v4912
    %v4914 = vpop.f32.mrf.mxu0
    %4915 = vmatprep.mubr.f32.mxu0 0.0
    %4916 = vmatmul.mubr.f32.gmra.mxu0 %v4795
    %v4917 = vpop.f32.mrf.mxu0
    %v4918 = vadd.f32 0.0, %v4917
    %v4919 = vpop.f32.mrf.mxu0
    %4920 = vmatprep.mubr.f32.mxu0 0.0
    %4921 = vmatmul.mubr.f32.gmra.mxu0 %v4796
    %v4922 = vpop.f32.mrf.mxu0
    %v4923 = vadd.f32 0.0, %v4922
    %v4924 = vpop.f32.mrf.mxu0
    %4925 = vmatprep.mubr.f32.mxu0 0.0
    %4926 = vmatmul.mubr.f32.gmra.mxu0 %v4797
    %v4927 = vpop.f32.mrf.mxu0
    %v4928 = vadd.f32 0.0, %v4927
    %v4929 = vpop.f32.mrf.mxu0
    %4930 = vmatprep.mubr.f32.mxu0 0.0
    %4931 = vmatmul.mubr.f32.gmra.mxu0 %v4798
    %v4932 = vpop.f32.mrf.mxu0
    %v4933 = vadd.f32 0.0, %v4932
    %v4934 = vpop.f32.mrf.mxu0
    %4935 = vmatprep.mubr.f32.mxu0 0.0
    %4936 = vmatmul.mubr.f32.gmra.mxu0 %v4799
    %v4937 = vpop.f32.mrf.mxu0
    %v4938 = vadd.f32 0.0, %v4937
    %v4939 = vpop.f32.mrf.mxu0
    %4940 = vmatprep.mubr.f32.mxu0 0.0
    %4941 = vmatmul.mubr.f32.gmra.mxu0 %v4800
    %v4942 = vpop.f32.mrf.mxu0
    %v4943 = vadd.f32 0.0, %v4942
    %v4944 = vpop.f32.mrf.mxu0
    %4945 = vmatprep.mubr.f32.mxu0 0.0
    %4946 = vmatmul.mubr.f32.gmra.mxu0 %v4801
    %v4947 = vpop.f32.mrf.mxu0
    %v4948 = vadd.f32 0.0, %v4947
    %v4949 = vpop.f32.mrf.mxu0
    %4950 = vmatprep.mubr.f32.mxu0 0.0
    %4951 = vmatmul.mubr.f32.gmra.mxu0 %v4802
    %v4952 = vpop.f32.mrf.mxu0
    %v4953 = vadd.f32 0.0, %v4952
    %v4954 = vpop.f32.mrf.mxu0
    %4955 = vmatprep.mubr.f32.mxu0 0.0
    %4956 = vmatmul.mubr.f32.gmra.mxu0 %v4803
    %v4957 = vpop.f32.mrf.mxu0
    %v4958 = vadd.f32 0.0, %v4957
    %v4959 = vpop.f32.mrf.mxu0
    %4960 = vmatprep.mubr.f32.mxu0 0.0
    %4961 = vmatmul.mubr.f32.gmra.mxu0 %v4804
    %v4962 = vpop.f32.mrf.mxu0
    %v4963 = vadd.f32 0.0, %v4962
    %v4964 = vpop.f32.mrf.mxu0
    %4965 = vdwg.mxu0
    %4966 = vmatprep.subr.mxu0 0.0
    %4967 = vmatpush1.xpose.msra.mxu0 0.0
    %4968 = vmatprep.subr.mxu0 0.0
    %4969 = vmatpush1.xpose.msra.mxu0 0.0
    %4970 = vmatprep.subr.mxu0 0.0
    %4971 = vmatpush1.xpose.msra.mxu0 0.0
    %4972 = vmatprep.subr.mxu0 0.0
    %4973 = vmatpush1.xpose.msra.mxu0 0.0
    %4974 = vmatprep.subr.mxu0 0.0
    %4975 = vmatpush1.xpose.msra.mxu0 0.0
    %4976 = vmatprep.subr.mxu0 0.0
    %4977 = vmatpush1.xpose.msra.mxu0 0.0
    %4978 = vmatprep.subr.mxu0 0.0
    %4979 = vmatpush1.xpose.msra.mxu0 0.0
    %4980 = vmatprep.subr.mxu0 0.0
    %4981 = vmatpush1.xpose.msra.mxu0 0.0
    %4982 = vmatprep.subr.mxu0 0.0
    %4983 = vmatpush1.xpose.msra.mxu0 0.0
    %4984 = vmatprep.subr.mxu0 0.0
    %4985 = vmatpush1.xpose.msra.mxu0 0.0
    %4986 = vmatprep.subr.mxu0 0.0
    %4987 = vmatpush1.xpose.msra.mxu0 0.0
    %4988 = vmatprep.subr.mxu0 0.0
    %4989 = vmatpush1.xpose.msra.mxu0 0.0
    %4990 = vmatprep.subr.mxu0 0.0
    %4991 = vmatpush1.xpose.msra.mxu0 0.0
    %4992 = vmatprep.subr.mxu0 0.0
    %4993 = vmatpush1.xpose.msra.mxu0 0.0
    %4994 = vmatprep.subr.mxu0 0.0
    %4995 = vmatpush1.xpose.msra.mxu0 %v4893
    %4996 = vmatprep.subr.mxu0 0.0
    %4997 = vmatpush1.xpose.msra.mxu0 %v4888
    %4998 = vmatprep.subr.mxu0 0.0
    %4999 = vmatpush2.xpose.msra.mxu0 0.0
    %5000 = vmatprep.subr.mxu0 0.0
    %5001 = vmatpush2.xpose.msra.mxu0 0.0
    %5002 = vmatprep.subr.mxu0 0.0
    %5003 = vmatpush2.xpose.msra.mxu0 0.0
    %5004 = vmatprep.subr.mxu0 0.0
    %5005 = vmatpush2.xpose.msra.mxu0 0.0
    %5006 = vmatprep.subr.mxu0 0.0
    %5007 = vmatpush2.xpose.msra.mxu0 0.0
    %5008 = vmatprep.subr.mxu0 0.0
    %5009 = vmatpush2.xpose.msra.mxu0 0.0
    %5010 = vmatprep.subr.mxu0 0.0
    %5011 = vmatpush2.xpose.msra.mxu0 0.0
    %5012 = vmatprep.subr.mxu0 0.0
    %5013 = vmatpush2.xpose.msra.mxu0 0.0
    %5014 = vmatprep.subr.mxu0 0.0
    %5015 = vmatpush2.xpose.msra.mxu0 0.0
    %5016 = vmatprep.subr.mxu0 0.0
    %5017 = vmatpush2.xpose.msra.mxu0 0.0
    %5018 = vmatprep.subr.mxu0 0.0
    %5019 = vmatpush2.xpose.msra.mxu0 0.0
    %5020 = vmatprep.subr.mxu0 0.0
    %5021 = vmatpush2.xpose.msra.mxu0 0.0
    %5022 = vmatprep.subr.mxu0 0.0
    %5023 = vmatpush2.xpose.msra.mxu0 0.0
    %5024 = vmatprep.subr.mxu0 0.0
    %5025 = vmatpush2.xpose.msra.mxu0 0.0
    %5026 = vmatprep.subr.mxu0 0.0
    %5027 = vmatpush2.xpose.msra.mxu0 0.0
    %5028 = vmatprep.subr.mxu0 0.0
    %5029 = vmatpush2.xpose.msra.mxu0 0.0
    %5030 = vmatprep.mubr.f32.mxu0 0.0
    %5031 = vmatmul.mubr.f32.gmra.mxu0 %v4888
    %v5032 = vpop.f32.mrf.mxu0
    %v5033 = vadd.f32 0.0, %v5032
    %v5034 = vpop.f32.mrf.mxu0
    %5035 = vmatprep.mubr.f32.mxu0 0.0
    %5036 = vmatmul.mubr.f32.gmra.mxu0 %v4893
    %v5037 = vpop.f32.mrf.mxu0
    %v5038 = vadd.f32 0.0, %v5037
    %v5039 = vpop.f32.mrf.mxu0
    %5040 = vdwg.mxu0
    %5041 = vmatprep.subr.mxu0 0.0
    %5042 = vmatpush1.xpose.msra.mxu0 0.0
    %5043 = vmatprep.subr.mxu0 0.0
    %5044 = vmatpush1.xpose.msra.mxu0 0.0
    %5045 = vmatprep.subr.mxu0 0.0
    %5046 = vmatpush1.xpose.msra.mxu0 0.0
    %5047 = vmatprep.subr.mxu0 0.0
    %5048 = vmatpush1.xpose.msra.mxu0 0.0
    %5049 = vmatprep.subr.mxu0 0.0
    %5050 = vmatpush1.xpose.msra.mxu0 0.0
    %5051 = vmatprep.subr.mxu0 0.0
    %5052 = vmatpush1.xpose.msra.mxu0 0.0
    %5053 = vmatprep.subr.mxu0 0.0
    %5054 = vmatpush1.xpose.msra.mxu0 0.0
    %5055 = vmatprep.subr.mxu0 0.0
    %5056 = vmatpush1.xpose.msra.mxu0 0.0
    %5057 = vmatprep.subr.mxu0 0.0
    %5058 = vmatpush1.xpose.msra.mxu0 0.0
    %5059 = vmatprep.subr.mxu0 0.0
    %5060 = vmatpush1.xpose.msra.mxu0 0.0
    %5061 = vmatprep.subr.mxu0 0.0
    %5062 = vmatpush1.xpose.msra.mxu0 0.0
    %5063 = vmatprep.subr.mxu0 0.0
    %5064 = vmatpush1.xpose.msra.mxu0 0.0
    %5065 = vmatprep.subr.mxu0 0.0
    %5066 = vmatpush1.xpose.msra.mxu0 0.0
    %5067 = vmatprep.subr.mxu0 0.0
    %5068 = vmatpush1.xpose.msra.mxu0 0.0
    %5069 = vmatprep.subr.mxu0 0.0
    %5070 = vmatpush1.xpose.msra.mxu0 %v4903
    %5071 = vmatprep.subr.mxu0 0.0
    %5072 = vmatpush1.xpose.msra.mxu0 %v4898
    %5073 = vmatprep.subr.mxu0 0.0
    %5074 = vmatpush2.xpose.msra.mxu0 0.0
    %5075 = vmatprep.subr.mxu0 0.0
    %5076 = vmatpush2.xpose.msra.mxu0 0.0
    %5077 = vmatprep.subr.mxu0 0.0
    %5078 = vmatpush2.xpose.msra.mxu0 0.0
    %5079 = vmatprep.subr.mxu0 0.0
    %5080 = vmatpush2.xpose.msra.mxu0 0.0
    %5081 = vmatprep.subr.mxu0 0.0
    %5082 = vmatpush2.xpose.msra.mxu0 0.0
    %5083 = vmatprep.subr.mxu0 0.0
    %5084 = vmatpush2.xpose.msra.mxu0 0.0
    %5085 = vmatprep.subr.mxu0 0.0
    %5086 = vmatpush2.xpose.msra.mxu0 0.0
    %5087 = vmatprep.subr.mxu0 0.0
    %5088 = vmatpush2.xpose.msra.mxu0 0.0
    %5089 = vmatprep.subr.mxu0 0.0
    %5090 = vmatpush2.xpose.msra.mxu0 0.0
    %5091 = vmatprep.subr.mxu0 0.0
    %5092 = vmatpush2.xpose.msra.mxu0 0.0
    %5093 = vmatprep.subr.mxu0 0.0
    %5094 = vmatpush2.xpose.msra.mxu0 0.0
    %5095 = vmatprep.subr.mxu0 0.0
    %5096 = vmatpush2.xpose.msra.mxu0 0.0
    %5097 = vmatprep.subr.mxu0 0.0
    %5098 = vmatpush2.xpose.msra.mxu0 0.0
    %5099 = vmatprep.subr.mxu0 0.0
    %5100 = vmatpush2.xpose.msra.mxu0 0.0
    %5101 = vmatprep.subr.mxu0 0.0
    %5102 = vmatpush2.xpose.msra.mxu0 0.0
    %5103 = vmatprep.subr.mxu0 0.0
    %5104 = vmatpush2.xpose.msra.mxu0 0.0
    %5105 = vmatprep.mubr.f32.mxu0 0.0
    %5106 = vmatmul.mubr.f32.gmra.mxu0 %v4898
    %v5107 = vpop.f32.mrf.mxu0
    %v5108 = vadd.f32 0.0, %v5107
    %v5109 = vpop.f32.mrf.mxu0
    %5110 = vmatprep.mubr.f32.mxu0 0.0
    %5111 = vmatmul.mubr.f32.gmra.mxu0 %v4903
    %v5112 = vpop.f32.mrf.mxu0
    %v5113 = vadd.f32 0.0, %v5112
    %v5114 = vpop.f32.mrf.mxu0
    %5115 = vdwg.mxu0
    %5116 = vmatprep.subr.mxu0 0.0
    %5117 = vmatpush1.xpose.msra.mxu0 0.0
    %5118 = vmatprep.subr.mxu0 0.0
    %5119 = vmatpush1.xpose.msra.mxu0 0.0
    %5120 = vmatprep.subr.mxu0 0.0
    %5121 = vmatpush1.xpose.msra.mxu0 0.0
    %5122 = vmatprep.subr.mxu0 0.0
    %5123 = vmatpush1.xpose.msra.mxu0 0.0
    %5124 = vmatprep.subr.mxu0 0.0
    %5125 = vmatpush1.xpose.msra.mxu0 0.0
    %5126 = vmatprep.subr.mxu0 0.0
    %5127 = vmatpush1.xpose.msra.mxu0 0.0
    %5128 = vmatprep.subr.mxu0 0.0
    %5129 = vmatpush1.xpose.msra.mxu0 0.0
    %5130 = vmatprep.subr.mxu0 0.0
    %5131 = vmatpush1.xpose.msra.mxu0 0.0
    %5132 = vmatprep.subr.mxu0 0.0
    %5133 = vmatpush1.xpose.msra.mxu0 0.0
    %5134 = vmatprep.subr.mxu0 0.0
    %5135 = vmatpush1.xpose.msra.mxu0 0.0
    %5136 = vmatprep.subr.mxu0 0.0
    %5137 = vmatpush1.xpose.msra.mxu0 0.0
    %5138 = vmatprep.subr.mxu0 0.0
    %5139 = vmatpush1.xpose.msra.mxu0 0.0
    %5140 = vmatprep.subr.mxu0 0.0
    %5141 = vmatpush1.xpose.msra.mxu0 0.0
    %5142 = vmatprep.subr.mxu0 0.0
    %5143 = vmatpush1.xpose.msra.mxu0 0.0
    %5144 = vmatprep.subr.mxu0 0.0
    %5145 = vmatpush1.xpose.msra.mxu0 %v4913
    %5146 = vmatprep.subr.mxu0 0.0
    %5147 = vmatpush1.xpose.msra.mxu0 %v4908
    %5148 = vmatprep.subr.mxu0 0.0
    %5149 = vmatpush2.xpose.msra.mxu0 0.0
    %5150 = vmatprep.subr.mxu0 0.0
    %5151 = vmatpush2.xpose.msra.mxu0 0.0
    %5152 = vmatprep.subr.mxu0 0.0
    %5153 = vmatpush2.xpose.msra.mxu0 0.0
    %5154 = vmatprep.subr.mxu0 0.0
    %5155 = vmatpush2.xpose.msra.mxu0 0.0
    %5156 = vmatprep.subr.mxu0 0.0
    %5157 = vmatpush2.xpose.msra.mxu0 0.0
    %5158 = vmatprep.subr.mxu0 0.0
    %5159 = vmatpush2.xpose.msra.mxu0 0.0
    %5160 = vmatprep.subr.mxu0 0.0
    %5161 = vmatpush2.xpose.msra.mxu0 0.0
    %5162 = vmatprep.subr.mxu0 0.0
    %5163 = vmatpush2.xpose.msra.mxu0 0.0
    %5164 = vmatprep.subr.mxu0 0.0
    %5165 = vmatpush2.xpose.msra.mxu0 0.0
    %5166 = vmatprep.subr.mxu0 0.0
    %5167 = vmatpush2.xpose.msra.mxu0 0.0
    %5168 = vmatprep.subr.mxu0 0.0
    %5169 = vmatpush2.xpose.msra.mxu0 0.0
    %5170 = vmatprep.subr.mxu0 0.0
    %5171 = vmatpush2.xpose.msra.mxu0 0.0
    %5172 = vmatprep.subr.mxu0 0.0
    %5173 = vmatpush2.xpose.msra.mxu0 0.0
    %5174 = vmatprep.subr.mxu0 0.0
    %5175 = vmatpush2.xpose.msra.mxu0 0.0
    %5176 = vmatprep.subr.mxu0 0.0
    %5177 = vmatpush2.xpose.msra.mxu0 0.0
    %5178 = vmatprep.subr.mxu0 0.0
    %5179 = vmatpush2.xpose.msra.mxu0 0.0
    %5180 = vmatprep.mubr.f32.mxu0 0.0
    %5181 = vmatmul.mubr.f32.gmra.mxu0 %v4908
    %v5182 = vpop.f32.mrf.mxu0
    %v5183 = vadd.f32 0.0, %v5182
    %v5184 = vpop.f32.mrf.mxu0
    %5185 = vmatprep.mubr.f32.mxu0 0.0
    %5186 = vmatmul.mubr.f32.gmra.mxu0 %v4913
    %v5187 = vpop.f32.mrf.mxu0
    %v5188 = vadd.f32 0.0, %v5187
    %v5189 = vpop.f32.mrf.mxu0
    %5190 = vdwg.mxu0
    %5191 = vmatprep.subr.mxu0 0.0
    %5192 = vmatpush1.xpose.msra.mxu0 0.0
    %5193 = vmatprep.subr.mxu0 0.0
    %5194 = vmatpush1.xpose.msra.mxu0 0.0
    %5195 = vmatprep.subr.mxu0 0.0
    %5196 = vmatpush1.xpose.msra.mxu0 0.0
    %5197 = vmatprep.subr.mxu0 0.0
    %5198 = vmatpush1.xpose.msra.mxu0 0.0
    %5199 = vmatprep.subr.mxu0 0.0
    %5200 = vmatpush1.xpose.msra.mxu0 0.0
    %5201 = vmatprep.subr.mxu0 0.0
    %5202 = vmatpush1.xpose.msra.mxu0 0.0
    %5203 = vmatprep.subr.mxu0 0.0
    %5204 = vmatpush1.xpose.msra.mxu0 0.0
    %5205 = vmatprep.subr.mxu0 0.0
    %5206 = vmatpush1.xpose.msra.mxu0 0.0
    %5207 = vmatprep.subr.mxu0 0.0
    %5208 = vmatpush1.xpose.msra.mxu0 0.0
    %5209 = vmatprep.subr.mxu0 0.0
    %5210 = vmatpush1.xpose.msra.mxu0 0.0
    %5211 = vmatprep.subr.mxu0 0.0
    %5212 = vmatpush1.xpose.msra.mxu0 0.0
    %5213 = vmatprep.subr.mxu0 0.0
    %5214 = vmatpush1.xpose.msra.mxu0 0.0
    %5215 = vmatprep.subr.mxu0 0.0
    %5216 = vmatpush1.xpose.msra.mxu0 0.0
    %5217 = vmatprep.subr.mxu0 0.0
    %5218 = vmatpush1.xpose.msra.mxu0 0.0
    %5219 = vmatprep.subr.mxu0 0.0
    %5220 = vmatpush1.xpose.msra.mxu0 %v4923
    %5221 = vmatprep.subr.mxu0 0.0
    %5222 = vmatpush1.xpose.msra.mxu0 %v4918
    %5223 = vmatprep.subr.mxu0 0.0
    %5224 = vmatpush2.xpose.msra.mxu0 0.0
    %5225 = vmatprep.subr.mxu0 0.0
    %5226 = vmatpush2.xpose.msra.mxu0 0.0
    %5227 = vmatprep.subr.mxu0 0.0
    %5228 = vmatpush2.xpose.msra.mxu0 0.0
    %5229 = vmatprep.subr.mxu0 0.0
    %5230 = vmatpush2.xpose.msra.mxu0 0.0
    %5231 = vmatprep.subr.mxu0 0.0
    %5232 = vmatpush2.xpose.msra.mxu0 0.0
    %5233 = vmatprep.subr.mxu0 0.0
    %5234 = vmatpush2.xpose.msra.mxu0 0.0
    %5235 = vmatprep.subr.mxu0 0.0
    %5236 = vmatpush2.xpose.msra.mxu0 0.0
    %5237 = vmatprep.subr.mxu0 0.0
    %5238 = vmatpush2.xpose.msra.mxu0 0.0
    %5239 = vmatprep.subr.mxu0 0.0
    %5240 = vmatpush2.xpose.msra.mxu0 0.0
    %5241 = vmatprep.subr.mxu0 0.0
    %5242 = vmatpush2.xpose.msra.mxu0 0.0
    %5243 = vmatprep.subr.mxu0 0.0
    %5244 = vmatpush2.xpose.msra.mxu0 0.0
    %5245 = vmatprep.subr.mxu0 0.0
    %5246 = vmatpush2.xpose.msra.mxu0 0.0
    %5247 = vmatprep.subr.mxu0 0.0
    %5248 = vmatpush2.xpose.msra.mxu0 0.0
    %5249 = vmatprep.subr.mxu0 0.0
    %5250 = vmatpush2.xpose.msra.mxu0 0.0
    %5251 = vmatprep.subr.mxu0 0.0
    %5252 = vmatpush2.xpose.msra.mxu0 0.0
    %5253 = vmatprep.subr.mxu0 0.0
    %5254 = vmatpush2.xpose.msra.mxu0 0.0
    %5255 = vmatprep.mubr.f32.mxu0 0.0
    %5256 = vmatmul.mubr.f32.gmra.mxu0 %v4918
    %v5257 = vpop.f32.mrf.mxu0
    %v5258 = vadd.f32 0.0, %v5257
    %v5259 = vpop.f32.mrf.mxu0
    %5260 = vmatprep.mubr.f32.mxu0 0.0
    %5261 = vmatmul.mubr.f32.gmra.mxu0 %v4923
    %v5262 = vpop.f32.mrf.mxu0
    %v5263 = vadd.f32 0.0, %v5262
    %v5264 = vpop.f32.mrf.mxu0
    %5265 = vdwg.mxu0
    %5266 = vmatprep.subr.mxu0 0.0
    %5267 = vmatpush1.xpose.msra.mxu0 0.0
    %5268 = vmatprep.subr.mxu0 0.0
    %5269 = vmatpush1.xpose.msra.mxu0 0.0
    %5270 = vmatprep.subr.mxu0 0.0
    %5271 = vmatpush1.xpose.msra.mxu0 0.0
    %5272 = vmatprep.subr.mxu0 0.0
    %5273 = vmatpush1.xpose.msra.mxu0 0.0
    %5274 = vmatprep.subr.mxu0 0.0
    %5275 = vmatpush1.xpose.msra.mxu0 0.0
    %5276 = vmatprep.subr.mxu0 0.0
    %5277 = vmatpush1.xpose.msra.mxu0 0.0
    %5278 = vmatprep.subr.mxu0 0.0
    %5279 = vmatpush1.xpose.msra.mxu0 0.0
    %5280 = vmatprep.subr.mxu0 0.0
    %5281 = vmatpush1.xpose.msra.mxu0 0.0
    %5282 = vmatprep.subr.mxu0 0.0
    %5283 = vmatpush1.xpose.msra.mxu0 0.0
    %5284 = vmatprep.subr.mxu0 0.0
    %5285 = vmatpush1.xpose.msra.mxu0 0.0
    %5286 = vmatprep.subr.mxu0 0.0
    %5287 = vmatpush1.xpose.msra.mxu0 0.0
    %5288 = vmatprep.subr.mxu0 0.0
    %5289 = vmatpush1.xpose.msra.mxu0 0.0
    %5290 = vmatprep.subr.mxu0 0.0
    %5291 = vmatpush1.xpose.msra.mxu0 0.0
    %5292 = vmatprep.subr.mxu0 0.0
    %5293 = vmatpush1.xpose.msra.mxu0 0.0
    %5294 = vmatprep.subr.mxu0 0.0
    %5295 = vmatpush1.xpose.msra.mxu0 %v4933
    %5296 = vmatprep.subr.mxu0 0.0
    %5297 = vmatpush1.xpose.msra.mxu0 %v4928
    %5298 = vmatprep.subr.mxu0 0.0
    %5299 = vmatpush2.xpose.msra.mxu0 0.0
    %5300 = vmatprep.subr.mxu0 0.0
    %5301 = vmatpush2.xpose.msra.mxu0 0.0
    %5302 = vmatprep.subr.mxu0 0.0
    %5303 = vmatpush2.xpose.msra.mxu0 0.0
    %5304 = vmatprep.subr.mxu0 0.0
    %5305 = vmatpush2.xpose.msra.mxu0 0.0
    %5306 = vmatprep.subr.mxu0 0.0
    %5307 = vmatpush2.xpose.msra.mxu0 0.0
    %5308 = vmatprep.subr.mxu0 0.0
    %5309 = vmatpush2.xpose.msra.mxu0 0.0
    %5310 = vmatprep.subr.mxu0 0.0
    %5311 = vmatpush2.xpose.msra.mxu0 0.0
    %5312 = vmatprep.subr.mxu0 0.0
    %5313 = vmatpush2.xpose.msra.mxu0 0.0
    %5314 = vmatprep.subr.mxu0 0.0
    %5315 = vmatpush2.xpose.msra.mxu0 0.0
    %5316 = vmatprep.subr.mxu0 0.0
    %5317 = vmatpush2.xpose.msra.mxu0 0.0
    %5318 = vmatprep.subr.mxu0 0.0
    %5319 = vmatpush2.xpose.msra.mxu0 0.0
    %5320 = vmatprep.subr.mxu0 0.0
    %5321 = vmatpush2.xpose.msra.mxu0 0.0
    %5322 = vmatprep.subr.mxu0 0.0
    %5323 = vmatpush2.xpose.msra.mxu0 0.0
    %5324 = vmatprep.subr.mxu0 0.0
    %5325 = vmatpush2.xpose.msra.mxu0 0.0
    %5326 = vmatprep.subr.mxu0 0.0
    %5327 = vmatpush2.xpose.msra.mxu0 0.0
    %5328 = vmatprep.subr.mxu0 0.0
    %5329 = vmatpush2.xpose.msra.mxu0 0.0
    %5330 = vmatprep.mubr.f32.mxu0 0.0
    %5331 = vmatmul.mubr.f32.gmra.mxu0 %v4928
    %v5332 = vpop.f32.mrf.mxu0
    %v5333 = vadd.f32 0.0, %v5332
    %v5334 = vpop.f32.mrf.mxu0
    %5335 = vmatprep.mubr.f32.mxu0 0.0
    %5336 = vmatmul.mubr.f32.gmra.mxu0 %v4933
    %v5337 = vpop.f32.mrf.mxu0
    %v5338 = vadd.f32 0.0, %v5337
    %v5339 = vpop.f32.mrf.mxu0
    %5340 = vdwg.mxu0
    %5341 = vmatprep.subr.mxu0 0.0
    %5342 = vmatpush1.xpose.msra.mxu0 0.0
    %5343 = vmatprep.subr.mxu0 0.0
    %5344 = vmatpush1.xpose.msra.mxu0 0.0
    %5345 = vmatprep.subr.mxu0 0.0
    %5346 = vmatpush1.xpose.msra.mxu0 0.0
    %5347 = vmatprep.subr.mxu0 0.0
    %5348 = vmatpush1.xpose.msra.mxu0 0.0
    %5349 = vmatprep.subr.mxu0 0.0
    %5350 = vmatpush1.xpose.msra.mxu0 0.0
    %5351 = vmatprep.subr.mxu0 0.0
    %5352 = vmatpush1.xpose.msra.mxu0 0.0
    %5353 = vmatprep.subr.mxu0 0.0
    %5354 = vmatpush1.xpose.msra.mxu0 0.0
    %5355 = vmatprep.subr.mxu0 0.0
    %5356 = vmatpush1.xpose.msra.mxu0 0.0
    %5357 = vmatprep.subr.mxu0 0.0
    %5358 = vmatpush1.xpose.msra.mxu0 0.0
    %5359 = vmatprep.subr.mxu0 0.0
    %5360 = vmatpush1.xpose.msra.mxu0 0.0
    %5361 = vmatprep.subr.mxu0 0.0
    %5362 = vmatpush1.xpose.msra.mxu0 0.0
    %5363 = vmatprep.subr.mxu0 0.0
    %5364 = vmatpush1.xpose.msra.mxu0 0.0
    %5365 = vmatprep.subr.mxu0 0.0
    %5366 = vmatpush1.xpose.msra.mxu0 0.0
    %5367 = vmatprep.subr.mxu0 0.0
    %5368 = vmatpush1.xpose.msra.mxu0 0.0
    %5369 = vmatprep.subr.mxu0 0.0
    %5370 = vmatpush1.xpose.msra.mxu0 %v4943
    %5371 = vmatprep.subr.mxu0 0.0
    %5372 = vmatpush1.xpose.msra.mxu0 %v4938
    %5373 = vmatprep.subr.mxu0 0.0
    %5374 = vmatpush2.xpose.msra.mxu0 0.0
    %5375 = vmatprep.subr.mxu0 0.0
    %5376 = vmatpush2.xpose.msra.mxu0 0.0
    %5377 = vmatprep.subr.mxu0 0.0
    %5378 = vmatpush2.xpose.msra.mxu0 0.0
    %5379 = vmatprep.subr.mxu0 0.0
    %5380 = vmatpush2.xpose.msra.mxu0 0.0
    %5381 = vmatprep.subr.mxu0 0.0
    %5382 = vmatpush2.xpose.msra.mxu0 0.0
    %5383 = vmatprep.subr.mxu0 0.0
    %5384 = vmatpush2.xpose.msra.mxu0 0.0
    %5385 = vmatprep.subr.mxu0 0.0
    %5386 = vmatpush2.xpose.msra.mxu0 0.0
    %5387 = vmatprep.subr.mxu0 0.0
    %5388 = vmatpush2.xpose.msra.mxu0 0.0
    %5389 = vmatprep.subr.mxu0 0.0
    %5390 = vmatpush2.xpose.msra.mxu0 0.0
    %5391 = vmatprep.subr.mxu0 0.0
    %5392 = vmatpush2.xpose.msra.mxu0 0.0
    %5393 = vmatprep.subr.mxu0 0.0
    %5394 = vmatpush2.xpose.msra.mxu0 0.0
    %5395 = vmatprep.subr.mxu0 0.0
    %5396 = vmatpush2.xpose.msra.mxu0 0.0
    %5397 = vmatprep.subr.mxu0 0.0
    %5398 = vmatpush2.xpose.msra.mxu0 0.0
    %5399 = vmatprep.subr.mxu0 0.0
    %5400 = vmatpush2.xpose.msra.mxu0 0.0
    %5401 = vmatprep.subr.mxu0 0.0
    %5402 = vmatpush2.xpose.msra.mxu0 0.0
    %5403 = vmatprep.subr.mxu0 0.0
    %5404 = vmatpush2.xpose.msra.mxu0 0.0
    %5405 = vmatprep.mubr.f32.mxu0 0.0
    %5406 = vmatmul.mubr.f32.gmra.mxu0 %v4938
    %v5407 = vpop.f32.mrf.mxu0
    %v5408 = vadd.f32 0.0, %v5407
    %v5409 = vpop.f32.mrf.mxu0
    %5410 = vmatprep.mubr.f32.mxu0 0.0
    %5411 = vmatmul.mubr.f32.gmra.mxu0 %v4943
    %v5412 = vpop.f32.mrf.mxu0
    %v5413 = vadd.f32 0.0, %v5412
    %v5414 = vpop.f32.mrf.mxu0
    %5415 = vdwg.mxu0
    %5416 = vmatprep.subr.mxu0 0.0
    %5417 = vmatpush1.xpose.msra.mxu0 0.0
    %5418 = vmatprep.subr.mxu0 0.0
    %5419 = vmatpush1.xpose.msra.mxu0 0.0
    %5420 = vmatprep.subr.mxu0 0.0
    %5421 = vmatpush1.xpose.msra.mxu0 0.0
    %5422 = vmatprep.subr.mxu0 0.0
    %5423 = vmatpush1.xpose.msra.mxu0 0.0
    %5424 = vmatprep.subr.mxu0 0.0
    %5425 = vmatpush1.xpose.msra.mxu0 0.0
    %5426 = vmatprep.subr.mxu0 0.0
    %5427 = vmatpush1.xpose.msra.mxu0 0.0
    %5428 = vmatprep.subr.mxu0 0.0
    %5429 = vmatpush1.xpose.msra.mxu0 0.0
    %5430 = vmatprep.subr.mxu0 0.0
    %5431 = vmatpush1.xpose.msra.mxu0 0.0
    %5432 = vmatprep.subr.mxu0 0.0
    %5433 = vmatpush1.xpose.msra.mxu0 0.0
    %5434 = vmatprep.subr.mxu0 0.0
    %5435 = vmatpush1.xpose.msra.mxu0 0.0
    %5436 = vmatprep.subr.mxu0 0.0
    %5437 = vmatpush1.xpose.msra.mxu0 0.0
    %5438 = vmatprep.subr.mxu0 0.0
    %5439 = vmatpush1.xpose.msra.mxu0 0.0
    %5440 = vmatprep.subr.mxu0 0.0
    %5441 = vmatpush1.xpose.msra.mxu0 0.0
    %5442 = vmatprep.subr.mxu0 0.0
    %5443 = vmatpush1.xpose.msra.mxu0 0.0
    %5444 = vmatprep.subr.mxu0 0.0
    %5445 = vmatpush1.xpose.msra.mxu0 %v4953
    %5446 = vmatprep.subr.mxu0 0.0
    %5447 = vmatpush1.xpose.msra.mxu0 %v4948
    %5448 = vmatprep.subr.mxu0 0.0
    %5449 = vmatpush2.xpose.msra.mxu0 0.0
    %5450 = vmatprep.subr.mxu0 0.0
    %5451 = vmatpush2.xpose.msra.mxu0 0.0
    %5452 = vmatprep.subr.mxu0 0.0
    %5453 = vmatpush2.xpose.msra.mxu0 0.0
    %5454 = vmatprep.subr.mxu0 0.0
    %5455 = vmatpush2.xpose.msra.mxu0 0.0
    %5456 = vmatprep.subr.mxu0 0.0
    %5457 = vmatpush2.xpose.msra.mxu0 0.0
    %5458 = vmatprep.subr.mxu0 0.0
    %5459 = vmatpush2.xpose.msra.mxu0 0.0
    %5460 = vmatprep.subr.mxu0 0.0
    %5461 = vmatpush2.xpose.msra.mxu0 0.0
    %5462 = vmatprep.subr.mxu0 0.0
    %5463 = vmatpush2.xpose.msra.mxu0 0.0
    %5464 = vmatprep.subr.mxu0 0.0
    %5465 = vmatpush2.xpose.msra.mxu0 0.0
    %5466 = vmatprep.subr.mxu0 0.0
    %5467 = vmatpush2.xpose.msra.mxu0 0.0
    %5468 = vmatprep.subr.mxu0 0.0
    %5469 = vmatpush2.xpose.msra.mxu0 0.0
    %5470 = vmatprep.subr.mxu0 0.0
    %5471 = vmatpush2.xpose.msra.mxu0 0.0
    %5472 = vmatprep.subr.mxu0 0.0
    %5473 = vmatpush2.xpose.msra.mxu0 0.0
    %5474 = vmatprep.subr.mxu0 0.0
    %5475 = vmatpush2.xpose.msra.mxu0 0.0
    %5476 = vmatprep.subr.mxu0 0.0
    %5477 = vmatpush2.xpose.msra.mxu0 0.0
    %5478 = vmatprep.subr.mxu0 0.0
    %5479 = vmatpush2.xpose.msra.mxu0 0.0
    %5480 = vmatprep.mubr.f32.mxu0 0.0
    %5481 = vmatmul.mubr.f32.gmra.mxu0 %v4948
    %v5482 = vpop.f32.mrf.mxu0
    %v5483 = vadd.f32 0.0, %v5482
    %v5484 = vpop.f32.mrf.mxu0
    %5485 = vmatprep.mubr.f32.mxu0 0.0
    %5486 = vmatmul.mubr.f32.gmra.mxu0 %v4953
    %v5487 = vpop.f32.mrf.mxu0
    %v5488 = vadd.f32 0.0, %v5487
    %v5489 = vpop.f32.mrf.mxu0
    %5490 = vdwg.mxu0
    %5491 = vmatprep.subr.mxu0 0.0
    %5492 = vmatpush1.xpose.msra.mxu0 0.0
    %5493 = vmatprep.subr.mxu0 0.0
    %5494 = vmatpush1.xpose.msra.mxu0 0.0
    %5495 = vmatprep.subr.mxu0 0.0
    %5496 = vmatpush1.xpose.msra.mxu0 0.0
    %5497 = vmatprep.subr.mxu0 0.0
    %5498 = vmatpush1.xpose.msra.mxu0 0.0
    %5499 = vmatprep.subr.mxu0 0.0
    %5500 = vmatpush1.xpose.msra.mxu0 0.0
    %5501 = vmatprep.subr.mxu0 0.0
    %5502 = vmatpush1.xpose.msra.mxu0 0.0
    %5503 = vmatprep.subr.mxu0 0.0
    %5504 = vmatpush1.xpose.msra.mxu0 0.0
    %5505 = vmatprep.subr.mxu0 0.0
    %5506 = vmatpush1.xpose.msra.mxu0 0.0
    %5507 = vmatprep.subr.mxu0 0.0
    %5508 = vmatpush1.xpose.msra.mxu0 0.0
    %5509 = vmatprep.subr.mxu0 0.0
    %5510 = vmatpush1.xpose.msra.mxu0 0.0
    %5511 = vmatprep.subr.mxu0 0.0
    %5512 = vmatpush1.xpose.msra.mxu0 0.0
    %5513 = vmatprep.subr.mxu0 0.0
    %5514 = vmatpush1.xpose.msra.mxu0 0.0
    %5515 = vmatprep.subr.mxu0 0.0
    %5516 = vmatpush1.xpose.msra.mxu0 0.0
    %5517 = vmatprep.subr.mxu0 0.0
    %5518 = vmatpush1.xpose.msra.mxu0 0.0
    %5519 = vmatprep.subr.mxu0 0.0
    %5520 = vmatpush1.xpose.msra.mxu0 %v4963
    %5521 = vmatprep.subr.mxu0 0.0
    %5522 = vmatpush1.xpose.msra.mxu0 %v4958
    %5523 = vmatprep.subr.mxu0 0.0
    %5524 = vmatpush2.xpose.msra.mxu0 0.0
    %5525 = vmatprep.subr.mxu0 0.0
    %5526 = vmatpush2.xpose.msra.mxu0 0.0
    %5527 = vmatprep.subr.mxu0 0.0
    %5528 = vmatpush2.xpose.msra.mxu0 0.0
    %5529 = vmatprep.subr.mxu0 0.0
    %5530 = vmatpush2.xpose.msra.mxu0 0.0
    %5531 = vmatprep.subr.mxu0 0.0
    %5532 = vmatpush2.xpose.msra.mxu0 0.0
    %5533 = vmatprep.subr.mxu0 0.0
    %5534 = vmatpush2.xpose.msra.mxu0 0.0
    %5535 = vmatprep.subr.mxu0 0.0
    %5536 = vmatpush2.xpose.msra.mxu0 0.0
    %5537 = vmatprep.subr.mxu0 0.0
    %5538 = vmatpush2.xpose.msra.mxu0 0.0
    %5539 = vmatprep.subr.mxu0 0.0
    %5540 = vmatpush2.xpose.msra.mxu0 0.0
    %5541 = vmatprep.subr.mxu0 0.0
    %5542 = vmatpush2.xpose.msra.mxu0 0.0
    %5543 = vmatprep.subr.mxu0 0.0
    %5544 = vmatpush2.xpose.msra.mxu0 0.0
    %5545 = vmatprep.subr.mxu0 0.0
    %5546 = vmatpush2.xpose.msra.mxu0 0.0
    %5547 = vmatprep.subr.mxu0 0.0
    %5548 = vmatpush2.xpose.msra.mxu0 0.0
    %5549 = vmatprep.subr.mxu0 0.0
    %5550 = vmatpush2.xpose.msra.mxu0 0.0
    %5551 = vmatprep.subr.mxu0 0.0
    %5552 = vmatpush2.xpose.msra.mxu0 0.0
    %5553 = vmatprep.subr.mxu0 0.0
    %5554 = vmatpush2.xpose.msra.mxu0 0.0
    %5555 = vmatprep.mubr.f32.mxu0 0.0
    %5556 = vmatmul.mubr.f32.gmra.mxu0 %v4958
    %v5557 = vpop.f32.mrf.mxu0
    %v5558 = vadd.f32 0.0, %v5557
    %v5559 = vpop.f32.mrf.mxu0
    %5560 = vmatprep.mubr.f32.mxu0 0.0
    %5561 = vmatmul.mubr.f32.gmra.mxu0 %v4963
    %v5562 = vpop.f32.mrf.mxu0
    %v5563 = vadd.f32 0.0, %v5562
    %v5564 = vpop.f32.mrf.mxu0
    %5565 = vdwg.mxu0
    %v5566 = vmul.f32 %v5033, 0.088388346
    %v5567 = vmul.f32 %v5038, 0.088388346
    %v5568 = vmul.f32 %v5108, 0.088388346
    %v5569 = vmul.f32 %v5113, 0.088388346
    %v5570 = vmul.f32 %v5183, 0.088388346
    %v5571 = vmul.f32 %v5188, 0.088388346
    %v5572 = vmul.f32 %v5258, 0.088388346
    %v5573 = vmul.f32 %v5263, 0.088388346
    %v5574 = vmul.f32 %v5333, 0.088388346
    %v5575 = vmul.f32 %v5338, 0.088388346
    %v5576 = vmul.f32 %v5408, 0.088388346
    %v5577 = vmul.f32 %v5413, 0.088388346
    %v5578 = vmul.f32 %v5483, 0.088388346
    %v5579 = vmul.f32 %v5488, 0.088388346
    %v5580 = vmul.f32 %v5558, 0.088388346
    %v5581 = vmul.f32 %v5563, 0.088388346
    %vm5582 = vcmask 130048
    %v5583 = vsel %vm5582, %v5566, -inf
    %5584 = vmax.xlane.f32.xlu0 %v5583
    %v5585 = vpop.xlane.xlu0 %5584
    %v5586 = vsel %vm5582, %v5567, -inf
    %5587 = vmax.xlane.f32.xlu0 %v5586
    %v5588 = vpop.xlane.xlu0 %5587
    %v5589 = vsel %vm5582, %v5568, -inf
    %5590 = vmax.xlane.f32.xlu0 %v5589
    %v5591 = vpop.xlane.xlu0 %5590
    %v5592 = vsel %vm5582, %v5569, -inf
    %5593 = vmax.xlane.f32.xlu0 %v5592
    %v5594 = vpop.xlane.xlu0 %5593
    %v5595 = vsel %vm5582, %v5570, -inf
    %5596 = vmax.xlane.f32.xlu0 %v5595
    %v5597 = vpop.xlane.xlu0 %5596
    %v5598 = vsel %vm5582, %v5571, -inf
    %5599 = vmax.xlane.f32.xlu0 %v5598
    %v5600 = vpop.xlane.xlu0 %5599
    %v5601 = vsel %vm5582, %v5572, -inf
    %5602 = vmax.xlane.f32.xlu0 %v5601
    %v5603 = vpop.xlane.xlu0 %5602
    %v5604 = vsel %vm5582, %v5573, -inf
    %5605 = vmax.xlane.f32.xlu0 %v5604
    %v5606 = vpop.xlane.xlu0 %5605
    %v5607 = vsel %vm5582, %v5574, -inf
    %5608 = vmax.xlane.f32.xlu0 %v5607
    %v5609 = vpop.xlane.xlu0 %5608
    %v5610 = vsel %vm5582, %v5575, -inf
    %5611 = vmax.xlane.f32.xlu0 %v5610
    %v5612 = vpop.xlane.xlu0 %5611
    %v5613 = vsel %vm5582, %v5576, -inf
    %5614 = vmax.xlane.f32.xlu0 %v5613
    %v5615 = vpop.xlane.xlu0 %5614
    %v5616 = vsel %vm5582, %v5577, -inf
    %5617 = vmax.xlane.f32.xlu0 %v5616
    %v5618 = vpop.xlane.xlu0 %5617
    %v5619 = vsel %vm5582, %v5578, -inf
    %5620 = vmax.xlane.f32.xlu0 %v5619
    %v5621 = vpop.xlane.xlu0 %5620
    %v5622 = vsel %vm5582, %v5579, -inf
    %5623 = vmax.xlane.f32.xlu0 %v5622
    %v5624 = vpop.xlane.xlu0 %5623
    %v5625 = vsel %vm5582, %v5580, -inf
    %5626 = vmax.xlane.f32.xlu0 %v5625
    %v5627 = vpop.xlane.xlu0 %5626
    %v5628 = vsel %vm5582, %v5581, -inf
    %5629 = vmax.xlane.f32.xlu0 %v5628
    %v5630 = vpop.xlane.xlu0 %5629
    %v5631 = vsub.f32 %v5566, %v5585
    %v5632 = vsub.f32 %v5567, %v5588
    %v5633 = vsub.f32 %v5568, %v5591
    %v5634 = vsub.f32 %v5569, %v5594
    %v5635 = vsub.f32 %v5570, %v5597
    %v5636 = vsub.f32 %v5571, %v5600
    %v5637 = vsub.f32 %v5572, %v5603
    %v5638 = vsub.f32 %v5573, %v5606
    %v5639 = vsub.f32 %v5574, %v5609
    %v5640 = vsub.f32 %v5575, %v5612
    %v5641 = vsub.f32 %v5576, %v5615
    %v5642 = vsub.f32 %v5577, %v5618
    %v5643 = vsub.f32 %v5578, %v5621
    %v5644 = vsub.f32 %v5579, %v5624
    %v5645 = vsub.f32 %v5580, %v5627
    %v5646 = vsub.f32 %v5581, %v5630
    %v5647 = vmul.f32 %v5631, 1.442695
    %v5648 = vpow.pop %v5647
    %v5649 = vmul.f32 %v5632, 1.442695
    %v5650 = vpow.pop %v5649
    %v5651 = vmul.f32 %v5633, 1.442695
    %v5652 = vpow.pop %v5651
    %v5653 = vmul.f32 %v5634, 1.442695
    %v5654 = vpow.pop %v5653
    %v5655 = vmul.f32 %v5635, 1.442695
    %v5656 = vpow.pop %v5655
    %v5657 = vmul.f32 %v5636, 1.442695
    %v5658 = vpow.pop %v5657
    %v5659 = vmul.f32 %v5637, 1.442695
    %v5660 = vpow.pop %v5659
    %v5661 = vmul.f32 %v5638, 1.442695
    %v5662 = vpow.pop %v5661
    %v5663 = vmul.f32 %v5639, 1.442695
    %v5664 = vpow.pop %v5663
    %v5665 = vmul.f32 %v5640, 1.442695
    %v5666 = vpow.pop %v5665
    %v5667 = vmul.f32 %v5641, 1.442695
    %v5668 = vpow.pop %v5667
    %v5669 = vmul.f32 %v5642, 1.442695
    %v5670 = vpow.pop %v5669
    %v5671 = vmul.f32 %v5643, 1.442695
    %v5672 = vpow.pop %v5671
    %v5673 = vmul.f32 %v5644, 1.442695
    %v5674 = vpow.pop %v5673
    %v5675 = vmul.f32 %v5645, 1.442695
    %v5676 = vpow.pop %v5675
    %v5677 = vmul.f32 %v5646, 1.442695
    %v5678 = vpow.pop %v5677
    %v5679 = vsel %vm5582, %v5648, 0.0
    %5680 = vadd.xlane.f32.xlu0 %v5679
    %v5681 = vpop.xlane.xlu0 %5680
    %v5682 = vsel %vm5582, %v5650, 0.0
    %5683 = vadd.xlane.f32.xlu0 %v5682
    %v5684 = vpop.xlane.xlu0 %5683
    %v5685 = vsel %vm5582, %v5652, 0.0
    %5686 = vadd.xlane.f32.xlu0 %v5685
    %v5687 = vpop.xlane.xlu0 %5686
    %v5688 = vsel %vm5582, %v5654, 0.0
    %5689 = vadd.xlane.f32.xlu0 %v5688
    %v5690 = vpop.xlane.xlu0 %5689
    %v5691 = vsel %vm5582, %v5656, 0.0
    %5692 = vadd.xlane.f32.xlu0 %v5691
    %v5693 = vpop.xlane.xlu0 %5692
    %v5694 = vsel %vm5582, %v5658, 0.0
    %5695 = vadd.xlane.f32.xlu0 %v5694
    %v5696 = vpop.xlane.xlu0 %5695
    %v5697 = vsel %vm5582, %v5660, 0.0
    %5698 = vadd.xlane.f32.xlu0 %v5697
    %v5699 = vpop.xlane.xlu0 %5698
    %v5700 = vsel %vm5582, %v5662, 0.0
    %5701 = vadd.xlane.f32.xlu0 %v5700
    %v5702 = vpop.xlane.xlu0 %5701
    %v5703 = vsel %vm5582, %v5664, 0.0
    %5704 = vadd.xlane.f32.xlu0 %v5703
    %v5705 = vpop.xlane.xlu0 %5704
    %v5706 = vsel %vm5582, %v5666, 0.0
    %5707 = vadd.xlane.f32.xlu0 %v5706
    %v5708 = vpop.xlane.xlu0 %5707
    %v5709 = vsel %vm5582, %v5668, 0.0
    %5710 = vadd.xlane.f32.xlu0 %v5709
    %v5711 = vpop.xlane.xlu0 %5710
    %v5712 = vsel %vm5582, %v5670, 0.0
    %5713 = vadd.xlane.f32.xlu0 %v5712
    %v5714 = vpop.xlane.xlu0 %5713
    %v5715 = vsel %vm5582, %v5672, 0.0
    %5716 = vadd.xlane.f32.xlu0 %v5715
    %v5717 = vpop.xlane.xlu0 %5716
    %v5718 = vsel %vm5582, %v5674, 0.0
    %5719 = vadd.xlane.f32.xlu0 %v5718
    %v5720 = vpop.xlane.xlu0 %5719
    %v5721 = vsel %vm5582, %v5676, 0.0
    %5722 = vadd.xlane.f32.xlu0 %v5721
    %v5723 = vpop.xlane.xlu0 %5722
    %v5724 = vsel %vm5582, %v5678, 0.0
    %5725 = vadd.xlane.f32.xlu0 %v5724
    %v5726 = vpop.xlane.xlu0 %5725
    %v5727 = vrcp.pop %v5681
    %v5728 = vrcp.pop %v5684
    %v5729 = vrcp.pop %v5687
    %v5730 = vrcp.pop %v5690
    %v5731 = vrcp.pop %v5693
    %v5732 = vrcp.pop %v5696
    %v5733 = vrcp.pop %v5699
    %v5734 = vrcp.pop %v5702
    %v5735 = vrcp.pop %v5705
    %v5736 = vrcp.pop %v5708
    %v5737 = vrcp.pop %v5711
    %v5738 = vrcp.pop %v5714
    %v5739 = vrcp.pop %v5717
    %v5740 = vrcp.pop %v5720
    %v5741 = vrcp.pop %v5723
    %v5742 = vrcp.pop %v5726
    %v5743 = vmul.f32 %v5648, %v5727
    %v5744 = vmul.f32 %v5650, %v5728
    %v5745 = vmul.f32 %v5652, %v5729
    %v5746 = vmul.f32 %v5654, %v5730
    %v5747 = vmul.f32 %v5656, %v5731
    %v5748 = vmul.f32 %v5658, %v5732
    %v5749 = vmul.f32 %v5660, %v5733
    %v5750 = vmul.f32 %v5662, %v5734
    %v5751 = vmul.f32 %v5664, %v5735
    %v5752 = vmul.f32 %v5666, %v5736
    %v5753 = vmul.f32 %v5668, %v5737
    %v5754 = vmul.f32 %v5670, %v5738
    %v5755 = vmul.f32 %v5672, %v5739
    %v5756 = vmul.f32 %v5674, %v5740
    %v5757 = vmul.f32 %v5676, %v5741
    %v5758 = vmul.f32 %v5678, %v5742
    %v5759 = vld [vmem:[%s7] sm:$0x1]
    %v5761 = vlaneseq
    %v5762 = vshrl.u32 %v5761, 7
    %v5763 = vsub.s32 0, %v5762
    %v5764 = vrot.slane %v5759, %v5763
    %v5766 = vmul.f32 %v4888, %v5764
    %v5767 = vmul.f32 %v4893, %v5764
    %v5768 = vmul.f32 %v4898, %v5764
    %v5769 = vmul.f32 %v4903, %v5764
    %v5770 = vmul.f32 %v4908, %v5764
    %v5771 = vmul.f32 %v4913, %v5764
    %v5772 = vmul.f32 %v4918, %v5764
    %v5773 = vmul.f32 %v4923, %v5764
    %v5774 = vmul.f32 %v4928, %v5764
    %v5775 = vmul.f32 %v4933, %v5764
    %v5776 = vmul.f32 %v4938, %v5764
    %v5777 = vmul.f32 %v4943, %v5764
    %v5778 = vmul.f32 %v4948, %v5764
    %v5779 = vmul.f32 %v4953, %v5764
    %v5780 = vmul.f32 %v4958, %v5764
    %v5781 = vmul.f32 %v4963, %v5764
    %5782 = vadd.xlane.f32.xlu0 %v5766
    %v5783 = vpop.xlane.xlu0 %5782
    %5784 = vadd.xlane.f32.xlu0 %v5767
    %v5785 = vpop.xlane.xlu0 %5784
    %5786 = vadd.xlane.f32.xlu0 %v5768
    %v5787 = vpop.xlane.xlu0 %5786
    %5788 = vadd.xlane.f32.xlu0 %v5769
    %v5789 = vpop.xlane.xlu0 %5788
    %5790 = vadd.xlane.f32.xlu0 %v5770
    %v5791 = vpop.xlane.xlu0 %5790
    %5792 = vadd.xlane.f32.xlu0 %v5771
    %v5793 = vpop.xlane.xlu0 %5792
    %5794 = vadd.xlane.f32.xlu0 %v5772
    %v5795 = vpop.xlane.xlu0 %5794
    %5796 = vadd.xlane.f32.xlu0 %v5773
    %v5797 = vpop.xlane.xlu0 %5796
    %5798 = vadd.xlane.f32.xlu0 %v5774
    %v5799 = vpop.xlane.xlu0 %5798
    %5800 = vadd.xlane.f32.xlu0 %v5775
    %v5801 = vpop.xlane.xlu0 %5800
    %5802 = vadd.xlane.f32.xlu0 %v5776
    %v5803 = vpop.xlane.xlu0 %5802
    %5804 = vadd.xlane.f32.xlu0 %v5777
    %v5805 = vpop.xlane.xlu0 %5804
    %5806 = vadd.xlane.f32.xlu0 %v5778
    %v5807 = vpop.xlane.xlu0 %5806
    %5808 = vadd.xlane.f32.xlu0 %v5779
    %v5809 = vpop.xlane.xlu0 %5808
    %5810 = vadd.xlane.f32.xlu0 %v5780
    %v5811 = vpop.xlane.xlu0 %5810
    %5812 = vadd.xlane.f32.xlu0 %v5781
    %v5813 = vpop.xlane.xlu0 %5812
    %v5830 = vlaneseq
    %v5831 = vshrl.u32 %v5830, 7
    %v5832 = vsub.s32 %v764, %v5831
    %v5833 = vrot.slane %v5783, %v5832
    %v5834 = vadd.s32 %v764, 4294967288
    %v5835 = vlaneseq
    %v5836 = vshrl.u32 %v5835, 7
    %v5837 = vsub.s32 %v5834, %v5836
    %v5838 = vrot.slane %v5785, %v5837
    %vm5839 = vcmask 130112
    %v5840 = vsel %vm5839, %v5838, %v5833
    %v5841 = vlaneseq
    %v5842 = vshrl.u32 %v5841, 7
    %v5843 = vsub.s32 %v764, %v5842
    %v5844 = vrot.slane %v5787, %v5843
    %v5845 = vlaneseq
    %v5846 = vshrl.u32 %v5845, 7
    %v5847 = vsub.s32 %v5834, %v5846
    %v5848 = vrot.slane %v5789, %v5847
    %v5849 = vsel %vm5839, %v5848, %v5844
    %v5850 = vlaneseq
    %v5851 = vshrl.u32 %v5850, 7
    %v5852 = vsub.s32 %v764, %v5851
    %v5853 = vrot.slane %v5791, %v5852
    %v5854 = vlaneseq
    %v5855 = vshrl.u32 %v5854, 7
    %v5856 = vsub.s32 %v5834, %v5855
    %v5857 = vrot.slane %v5793, %v5856
    %v5858 = vsel %vm5839, %v5857, %v5853
    %v5859 = vlaneseq
    %v5860 = vshrl.u32 %v5859, 7
    %v5861 = vsub.s32 %v764, %v5860
    %v5862 = vrot.slane %v5795, %v5861
    %v5863 = vlaneseq
    %v5864 = vshrl.u32 %v5863, 7
    %v5865 = vsub.s32 %v5834, %v5864
    %v5866 = vrot.slane %v5797, %v5865
    %v5867 = vsel %vm5839, %v5866, %v5862
    %v5868 = vlaneseq
    %v5869 = vshrl.u32 %v5868, 7
    %v5870 = vsub.s32 %v764, %v5869
    %v5871 = vrot.slane %v5799, %v5870
    %v5872 = vlaneseq
    %v5873 = vshrl.u32 %v5872, 7
    %v5874 = vsub.s32 %v5834, %v5873
    %v5875 = vrot.slane %v5801, %v5874
    %v5876 = vsel %vm5839, %v5875, %v5871
    %v5877 = vlaneseq
    %v5878 = vshrl.u32 %v5877, 7
    %v5879 = vsub.s32 %v764, %v5878
    %v5880 = vrot.slane %v5803, %v5879
    %v5881 = vlaneseq
    %v5882 = vshrl.u32 %v5881, 7
    %v5883 = vsub.s32 %v5834, %v5882
    %v5884 = vrot.slane %v5805, %v5883
    %v5885 = vsel %vm5839, %v5884, %v5880
    %v5886 = vlaneseq
    %v5887 = vshrl.u32 %v5886, 7
    %v5888 = vsub.s32 %v764, %v5887
    %v5889 = vrot.slane %v5807, %v5888
    %v5890 = vlaneseq
    %v5891 = vshrl.u32 %v5890, 7
    %v5892 = vsub.s32 %v5834, %v5891
    %v5893 = vrot.slane %v5809, %v5892
    %v5894 = vsel %vm5839, %v5893, %v5889
    %v5895 = vlaneseq
    %v5896 = vshrl.u32 %v5895, 7
    %v5897 = vsub.s32 %v764, %v5896
    %v5898 = vrot.slane %v5811, %v5897
    %v5899 = vlaneseq
    %v5900 = vshrl.u32 %v5899, 7
    %v5901 = vsub.s32 %v5834, %v5900
    %v5902 = vrot.slane %v5813, %v5901
    %v5903 = vsel %vm5839, %v5902, %v5898
    %vm5904 = vcmask 1041409
    %vm5905 = vcmask 1042434
    %v5906 = vsel %vm5905, %v5840, %v5840
    %vm5907 = vcmask 1043459
    %v5908 = vsel %vm5907, %v5840, %v5906
    %vm5909 = vcmask 1044484
    %v5910 = vsel %vm5909, %v5840, %v5908
    %vm5911 = vcmask 1045509
    %v5912 = vsel %vm5911, %v5840, %v5910
    %vm5913 = vcmask 1046534
    %v5914 = vsel %vm5913, %v5840, %v5912
    %vm5915 = vcmask 1047559
    %v5916 = vsel %vm5915, %v5840, %v5914
    %v5917 = vsel %vm5905, %v5849, %v5849
    %v5918 = vsel %vm5907, %v5849, %v5917
    %v5919 = vsel %vm5909, %v5849, %v5918
    %v5920 = vsel %vm5911, %v5849, %v5919
    %v5921 = vsel %vm5913, %v5849, %v5920
    %v5922 = vsel %vm5915, %v5849, %v5921
    %v5923 = vsel %vm5905, %v5858, %v5858
    %v5924 = vsel %vm5907, %v5858, %v5923
    %v5925 = vsel %vm5909, %v5858, %v5924
    %v5926 = vsel %vm5911, %v5858, %v5925
    %v5927 = vsel %vm5913, %v5858, %v5926
    %v5928 = vsel %vm5915, %v5858, %v5927
    %v5929 = vsel %vm5905, %v5867, %v5867
    %v5930 = vsel %vm5907, %v5867, %v5929
    %v5931 = vsel %vm5909, %v5867, %v5930
    %v5932 = vsel %vm5911, %v5867, %v5931
    %v5933 = vsel %vm5913, %v5867, %v5932
    %v5934 = vsel %vm5915, %v5867, %v5933
    %v5935 = vsel %vm5905, %v5876, %v5876
    %v5936 = vsel %vm5907, %v5876, %v5935
    %v5937 = vsel %vm5909, %v5876, %v5936
    %v5938 = vsel %vm5911, %v5876, %v5937
    %v5939 = vsel %vm5913, %v5876, %v5938
    %v5940 = vsel %vm5915, %v5876, %v5939
    %v5941 = vsel %vm5905, %v5885, %v5885
    %v5942 = vsel %vm5907, %v5885, %v5941
    %v5943 = vsel %vm5909, %v5885, %v5942
    %v5944 = vsel %vm5911, %v5885, %v5943
    %v5945 = vsel %vm5913, %v5885, %v5944
    %v5946 = vsel %vm5915, %v5885, %v5945
    %v5947 = vsel %vm5905, %v5894, %v5894
    %v5948 = vsel %vm5907, %v5894, %v5947
    %v5949 = vsel %vm5909, %v5894, %v5948
    %v5950 = vsel %vm5911, %v5894, %v5949
    %v5951 = vsel %vm5913, %v5894, %v5950
    %v5952 = vsel %vm5915, %v5894, %v5951
    %v5953 = vsel %vm5905, %v5903, %v5903
    %v5954 = vsel %vm5907, %v5903, %v5953
    %v5955 = vsel %vm5909, %v5903, %v5954
    %v5956 = vsel %vm5911, %v5903, %v5955
    %v5957 = vsel %vm5913, %v5903, %v5956
    %v5958 = vsel %vm5915, %v5903, %v5957
    %v5967 = vmul.f32 %v5743, %v5916
    %v5968 = vmul.f32 %v5744, %v5916
    %v5969 = vmul.f32 %v5745, %v5922
    %v5970 = vmul.f32 %v5746, %v5922
    %v5971 = vmul.f32 %v5747, %v5928
    %v5972 = vmul.f32 %v5748, %v5928
    %v5973 = vmul.f32 %v5749, %v5934
    %v5974 = vmul.f32 %v5750, %v5934
    %v5975 = vmul.f32 %v5751, %v5940
    %v5976 = vmul.f32 %v5752, %v5940
    %v5977 = vmul.f32 %v5753, %v5946
    %v5978 = vmul.f32 %v5754, %v5946
    %v5979 = vmul.f32 %v5755, %v5952
    %v5980 = vmul.f32 %v5756, %v5952
    %v5981 = vmul.f32 %v5757, %v5958
    %v5982 = vmul.f32 %v5758, %v5958
    %v5983 = vsel %vm5582, %v5967, 0.0
    %5984 = vadd.xlane.f32.xlu0 %v5983
    %v5985 = vpop.xlane.xlu0 %5984
    %v5986 = vsel %vm5582, %v5968, 0.0
    %5987 = vadd.xlane.f32.xlu0 %v5986
    %v5988 = vpop.xlane.xlu0 %5987
    %v5989 = vsel %vm5582, %v5969, 0.0
    %5990 = vadd.xlane.f32.xlu0 %v5989
    %v5991 = vpop.xlane.xlu0 %5990
    %v5992 = vsel %vm5582, %v5970, 0.0
    %5993 = vadd.xlane.f32.xlu0 %v5992
    %v5994 = vpop.xlane.xlu0 %5993
    %v5995 = vsel %vm5582, %v5971, 0.0
    %5996 = vadd.xlane.f32.xlu0 %v5995
    %v5997 = vpop.xlane.xlu0 %5996
    %v5998 = vsel %vm5582, %v5972, 0.0
    %5999 = vadd.xlane.f32.xlu0 %v5998
    %v6000 = vpop.xlane.xlu0 %5999
    %v6001 = vsel %vm5582, %v5973, 0.0
    %6002 = vadd.xlane.f32.xlu0 %v6001
    %v6003 = vpop.xlane.xlu0 %6002
    %v6004 = vsel %vm5582, %v5974, 0.0
    %6005 = vadd.xlane.f32.xlu0 %v6004
    %v6006 = vpop.xlane.xlu0 %6005
    %v6007 = vsel %vm5582, %v5975, 0.0
    %6008 = vadd.xlane.f32.xlu0 %v6007
    %v6009 = vpop.xlane.xlu0 %6008
    %v6010 = vsel %vm5582, %v5976, 0.0
    %6011 = vadd.xlane.f32.xlu0 %v6010
    %v6012 = vpop.xlane.xlu0 %6011
    %v6013 = vsel %vm5582, %v5977, 0.0
    %6014 = vadd.xlane.f32.xlu0 %v6013
    %v6015 = vpop.xlane.xlu0 %6014
    %v6016 = vsel %vm5582, %v5978, 0.0
    %6017 = vadd.xlane.f32.xlu0 %v6016
    %v6018 = vpop.xlane.xlu0 %6017
    %v6019 = vsel %vm5582, %v5979, 0.0
    %6020 = vadd.xlane.f32.xlu0 %v6019
    %v6021 = vpop.xlane.xlu0 %6020
    %v6022 = vsel %vm5582, %v5980, 0.0
    %6023 = vadd.xlane.f32.xlu0 %v6022
    %v6024 = vpop.xlane.xlu0 %6023
    %v6025 = vsel %vm5582, %v5981, 0.0
    %6026 = vadd.xlane.f32.xlu0 %v6025
    %v6027 = vpop.xlane.xlu0 %6026
    %v6028 = vsel %vm5582, %v5982, 0.0
    %6029 = vadd.xlane.f32.xlu0 %v6028
    %v6030 = vpop.xlane.xlu0 %6029
    %v6031 = vld [vmem:[#allocation4] sm:$0x1]
    %v6033 = vlaneseq
    %v6034 = vshrl.u32 %v6033, 7
    %v6035 = vsub.s32 0, %v6034
    %v6036 = vrot.slane %v6031, %v6035
    %6037 = vset.pattern.permute.xlu0 0
    %6038 = vperm.xlu0 %6037, %v6036
    %v6039 = vpop.permute.xlu0 %6038
    %v6041 = vadd.f32 %v5985, %v6039
    %v6042 = vadd.f32 %v5988, %v6039
    %v6043 = vadd.f32 %v5991, %v6039
    %v6044 = vadd.f32 %v5994, %v6039
    %v6045 = vadd.f32 %v5997, %v6039
    %v6046 = vadd.f32 %v6000, %v6039
    %v6047 = vadd.f32 %v6003, %v6039
    %v6048 = vadd.f32 %v6006, %v6039
    %v6049 = vadd.f32 %v6009, %v6039
    %v6050 = vadd.f32 %v6012, %v6039
    %v6051 = vadd.f32 %v6015, %v6039
    %v6052 = vadd.f32 %v6018, %v6039
    %v6053 = vadd.f32 %v6021, %v6039
    %v6054 = vadd.f32 %v6024, %v6039
    %v6055 = vadd.f32 %v6027, %v6039
    %v6056 = vadd.f32 %v6030, %v6039
    %v6057 = vxor.u32 %v6041, 2147483648
    %v6058 = vxor.u32 %v6042, 2147483648
    %v6059 = vxor.u32 %v6043, 2147483648
    %v6060 = vxor.u32 %v6044, 2147483648
    %v6061 = vxor.u32 %v6045, 2147483648
    %v6062 = vxor.u32 %v6046, 2147483648
    %v6063 = vxor.u32 %v6047, 2147483648
    %v6064 = vxor.u32 %v6048, 2147483648
    %v6065 = vxor.u32 %v6049, 2147483648
    %v6066 = vxor.u32 %v6050, 2147483648
    %v6067 = vxor.u32 %v6051, 2147483648
    %v6068 = vxor.u32 %v6052, 2147483648
    %v6069 = vxor.u32 %v6053, 2147483648
    %v6070 = vxor.u32 %v6054, 2147483648
    %v6071 = vxor.u32 %v6055, 2147483648
    %v6072 = vxor.u32 %v6056, 2147483648
    %v6073 = vmul.f32 %v6057, 1.442695
    %v6074 = vpow.pop %v6073
    %v6075 = vmul.f32 %v6058, 1.442695
    %v6076 = vpow.pop %v6075
    %v6077 = vmul.f32 %v6059, 1.442695
    %v6078 = vpow.pop %v6077
    %v6079 = vmul.f32 %v6060, 1.442695
    %v6080 = vpow.pop %v6079
    %v6081 = vmul.f32 %v6061, 1.442695
    %v6082 = vpow.pop %v6081
    %v6083 = vmul.f32 %v6062, 1.442695
    %v6084 = vpow.pop %v6083
    %v6085 = vmul.f32 %v6063, 1.442695
    %v6086 = vpow.pop %v6085
    %v6087 = vmul.f32 %v6064, 1.442695
    %v6088 = vpow.pop %v6087
    %v6089 = vmul.f32 %v6065, 1.442695
    %v6090 = vpow.pop %v6089
    %v6091 = vmul.f32 %v6066, 1.442695
    %v6092 = vpow.pop %v6091
    %v6093 = vmul.f32 %v6067, 1.442695
    %v6094 = vpow.pop %v6093
    %v6095 = vmul.f32 %v6068, 1.442695
    %v6096 = vpow.pop %v6095
    %v6097 = vmul.f32 %v6069, 1.442695
    %v6098 = vpow.pop %v6097
    %v6099 = vmul.f32 %v6070, 1.442695
    %v6100 = vpow.pop %v6099
    %v6101 = vmul.f32 %v6071, 1.442695
    %v6102 = vpow.pop %v6101
    %v6103 = vmul.f32 %v6072, 1.442695
    %v6104 = vpow.pop %v6103
    %v6105 = vadd.f32 %v6074, 1.0
    %v6106 = vadd.f32 %v6076, 1.0
    %v6107 = vadd.f32 %v6078, 1.0
    %v6108 = vadd.f32 %v6080, 1.0
    %v6109 = vadd.f32 %v6082, 1.0
    %v6110 = vadd.f32 %v6084, 1.0
    %v6111 = vadd.f32 %v6086, 1.0
    %v6112 = vadd.f32 %v6088, 1.0
    %v6113 = vadd.f32 %v6090, 1.0
    %v6114 = vadd.f32 %v6092, 1.0
    %v6115 = vadd.f32 %v6094, 1.0
    %v6116 = vadd.f32 %v6096, 1.0
    %v6117 = vadd.f32 %v6098, 1.0
    %v6118 = vadd.f32 %v6100, 1.0
    %v6119 = vadd.f32 %v6102, 1.0
    %v6120 = vadd.f32 %v6104, 1.0
    %v6121 = vrcp.pop %v6105
    %v6122 = vmul.f32 1.0, %v6121
    %v6123 = vrcp.pop %v6106
    %v6124 = vmul.f32 1.0, %v6123
    %v6125 = vrcp.pop %v6107
    %v6126 = vmul.f32 1.0, %v6125
    %v6127 = vrcp.pop %v6108
    %v6128 = vmul.f32 1.0, %v6127
    %v6129 = vrcp.pop %v6109
    %v6130 = vmul.f32 1.0, %v6129
    %v6131 = vrcp.pop %v6110
    %v6132 = vmul.f32 1.0, %v6131
    %v6133 = vrcp.pop %v6111
    %v6134 = vmul.f32 1.0, %v6133
    %v6135 = vrcp.pop %v6112
    %v6136 = vmul.f32 1.0, %v6135
    %v6137 = vrcp.pop %v6113
    %v6138 = vmul.f32 1.0, %v6137
    %v6139 = vrcp.pop %v6114
    %v6140 = vmul.f32 1.0, %v6139
    %v6141 = vrcp.pop %v6115
    %v6142 = vmul.f32 1.0, %v6141
    %v6143 = vrcp.pop %v6116
    %v6144 = vmul.f32 1.0, %v6143
    %v6145 = vrcp.pop %v6117
    %v6146 = vmul.f32 1.0, %v6145
    %v6147 = vrcp.pop %v6118
    %v6148 = vmul.f32 1.0, %v6147
    %v6149 = vrcp.pop %v6119
    %v6150 = vmul.f32 1.0, %v6149
    %v6151 = vrcp.pop %v6120
    %v6152 = vmul.f32 1.0, %v6151
    %v6169 = vlaneseq
    %v6170 = vshrl.u32 %v6169, 7
    %v6171 = vsub.s32 %v764, %v6170
    %v6172 = vrot.slane %v6122, %v6171
    %v6173 = vlaneseq
    %v6174 = vshrl.u32 %v6173, 7
    %v6175 = vsub.s32 %v5834, %v6174
    %v6176 = vrot.slane %v6124, %v6175
    %v6177 = vsel %vm5839, %v6176, %v6172
    %v6178 = vlaneseq
    %v6179 = vshrl.u32 %v6178, 7
    %v6180 = vsub.s32 %v764, %v6179
    %v6181 = vrot.slane %v6126, %v6180
    %v6182 = vlaneseq
    %v6183 = vshrl.u32 %v6182, 7
    %v6184 = vsub.s32 %v5834, %v6183
    %v6185 = vrot.slane %v6128, %v6184
    %v6186 = vsel %vm5839, %v6185, %v6181
    %v6187 = vlaneseq
    %v6188 = vshrl.u32 %v6187, 7
    %v6189 = vsub.s32 %v764, %v6188
    %v6190 = vrot.slane %v6130, %v6189
    %v6191 = vlaneseq
    %v6192 = vshrl.u32 %v6191, 7
    %v6193 = vsub.s32 %v5834, %v6192
    %v6194 = vrot.slane %v6132, %v6193
    %v6195 = vsel %vm5839, %v6194, %v6190
    %v6196 = vlaneseq
    %v6197 = vshrl.u32 %v6196, 7
    %v6198 = vsub.s32 %v764, %v6197
    %v6199 = vrot.slane %v6134, %v6198
    %v6200 = vlaneseq
    %v6201 = vshrl.u32 %v6200, 7
    %v6202 = vsub.s32 %v5834, %v6201
    %v6203 = vrot.slane %v6136, %v6202
    %v6204 = vsel %vm5839, %v6203, %v6199
    %v6205 = vlaneseq
    %v6206 = vshrl.u32 %v6205, 7
    %v6207 = vsub.s32 %v764, %v6206
    %v6208 = vrot.slane %v6138, %v6207
    %v6209 = vlaneseq
    %v6210 = vshrl.u32 %v6209, 7
    %v6211 = vsub.s32 %v5834, %v6210
    %v6212 = vrot.slane %v6140, %v6211
    %v6213 = vsel %vm5839, %v6212, %v6208
    %v6214 = vlaneseq
    %v6215 = vshrl.u32 %v6214, 7
    %v6216 = vsub.s32 %v764, %v6215
    %v6217 = vrot.slane %v6142, %v6216
    %v6218 = vlaneseq
    %v6219 = vshrl.u32 %v6218, 7
    %v6220 = vsub.s32 %v5834, %v6219
    %v6221 = vrot.slane %v6144, %v6220
    %v6222 = vsel %vm5839, %v6221, %v6217
    %v6223 = vlaneseq
    %v6224 = vshrl.u32 %v6223, 7
    %v6225 = vsub.s32 %v764, %v6224
    %v6226 = vrot.slane %v6146, %v6225
    %v6227 = vlaneseq
    %v6228 = vshrl.u32 %v6227, 7
    %v6229 = vsub.s32 %v5834, %v6228
    %v6230 = vrot.slane %v6148, %v6229
    %v6231 = vsel %vm5839, %v6230, %v6226
    %v6232 = vlaneseq
    %v6233 = vshrl.u32 %v6232, 7
    %v6234 = vsub.s32 %v764, %v6233
    %v6235 = vrot.slane %v6150, %v6234
    %v6236 = vlaneseq
    %v6237 = vshrl.u32 %v6236, 7
    %v6238 = vsub.s32 %v5834, %v6237
    %v6239 = vrot.slane %v6152, %v6238
    %v6240 = vsel %vm5839, %v6239, %v6235
    %v6241 = vsel %vm5904, %v6186, %v6177
    %v6242 = vsel %vm5905, %v6195, %v6241
    %v6243 = vsel %vm5907, %v6204, %v6242
    %v6244 = vsel %vm5909, %v6213, %v6243
    %v6245 = vsel %vm5911, %v6222, %v6244
    %v6246 = vsel %vm5913, %v6231, %v6245
    %v6247 = vsel %vm5915, %v6240, %v6246
    %6249 = vst.msk [vmem:[#allocation5] sm:$0xff] %vm5582, %v6247
    // Predicated region
    $region38: #{attention_model_pallas.1} parent=1 // pred_check
      _
    $region39: #{attention_model_pallas.1} parent=1 // pred_check_branch
      %6251 = sbr.rel (0) target = $region41
    $region40: #{attention_model_pallas.1} parent=1 // pred_region
      %s6253 = ssub.s32 128, 128
      %6254 = vsyncadd [#allocation6], %s6253
      %s6256 = sshll.u32 [#allocation5], 4
      %s6257 = int_to_ptr.vmem [resolvable:$true] %s6256
      %6259 = dma.vmem_to_hbm [thread:$0]  %s6257, 128, %s9, [#allocation6]
    $region41: #{attention_model_pallas.1} parent=1 // pred_fallthru
      _
    // Predicated region
    $region42: #{attention_model_pallas.1} parent=1 // pred_check
      _
    $region43: #{attention_model_pallas.1} parent=1 // pred_check_branch
      %6261 = sbr.rel (0) target = $region45
    $region44: #{attention_model_pallas.1} parent=1 // pred_region
      %6262 = dma.done [#allocation6], 128
    $region45: #{attention_model_pallas.1} parent=1 // pred_fallthru
      _
    %6263 = vsyncpa [#allocation6], 1

</llo_original>
